<compile_context>
chip_gen: v6e
topology: v6e:2x2x1
jax: 0.10.0
libtpu: 0.0.40
codegen_flags: <defaults>
</compile_context>

<pallas_src>
import math
import functools

import jax
import jax.numpy as jnp
from jax.experimental import pallas as pl
from jax.experimental.pallas import tpu as pltpu


_MXU_DTYPE = jnp.bfloat16   # MXU operand dtype (f32 accumulation)
_ACT_DTYPE = jnp.bfloat16   # inter-kernel activation storage dtype


def _layernorm(x, w, b, eps=1e-5):
    mu = jnp.mean(x, axis=-1, keepdims=True)
    xc = x - mu
    var = jnp.mean(xc * xc, axis=-1, keepdims=True)
    return xc * jax.lax.rsqrt(var + eps) * w + b


# ---------------------------------------------------------------------------
# Transformer encoder layer kernel (post-norm, gelu FFN, eval semantics)
# ---------------------------------------------------------------------------
# Block layout: (T, C) with T = nb * seq_len tokens (nb whole sequences).
# Big matmuls (QKV, out-proj, FFN) run on the full T-row operand; attention is
# batched over the nb sequences so softmax work is (seq_len x seq_len) each.

def _transformer_kernel(*refs, nheads, seq_len, nb, has_pre, out_cmajor):
    if has_pre:
        (x_ref, wqkv_ref, bqkv_ref, wo_ref, w1_ref, b1_ref, w2_ref, vec_ref,
         pre_ref, o_ref) = refs
    else:
        (x_ref, wqkv_ref, bqkv_ref, wo_ref, w1_ref, b1_ref, w2_ref, vec_ref,
         o_ref) = refs
        pre_ref = None

    x = x_ref[...].astype(jnp.float32)                       # (T, C)
    T, C = x.shape
    hd = C // nheads
    scale = 1.0 / math.sqrt(hd)

    if has_pre:
        # fused diffusion-embedding add: one row per sequence, broadcast over
        # that sequence's tokens (no (Ntok, C) stream from HBM).
        x = (x.reshape(nb, seq_len, C) + pre_ref[...]).reshape(T, C)

    # packed small vectors: [out_b, b2, n1w, n1b, n2w, n2b]
    bo = vec_ref[0:1, :]
    b2 = vec_ref[1:2, :]
    n1w = vec_ref[2:3, :]
    n1b = vec_ref[3:4, :]
    n2w = vec_ref[4:5, :]
    n2b = vec_ref[5:6, :]

    # fused QKV projection over all T tokens (weights pre-cast to bf16)
    qkv = jnp.dot(x.astype(_MXU_DTYPE), wqkv_ref[...],
                  preferred_element_type=jnp.float32) + bqkv_ref[...]
    qkv3 = qkv.reshape(nb, seq_len, 3 * C)

    # Per-sequence attention: sequences are the dot_general batch dim, so the
    # score/softmax/PV work covers (seq_len x seq_len) per sequence instead of
    # a block-diagonal-masked (T x T).  Head outputs are accumulated directly
    # into the output projection (no lane-axis concat of heads).
    attn = None
    for h in range(nheads):                                   # static unroll
        lo = h * hd
        q = qkv3[:, :, lo:lo + hd]
        k = qkv3[:, :, C + lo:C + lo + hd]
        v = qkv3[:, :, 2 * C + lo:2 * C + lo + hd]
        s = jnp.einsum('bqd,bkd->bqk', q.astype(_MXU_DTYPE),
                       k.astype(_MXU_DTYPE),
                       preferred_element_type=jnp.float32) * scale
        s = s - jnp.max(s, axis=-1, keepdims=True)
        p = jnp.exp(s)
        p = p * pl.reciprocal(jnp.sum(p, axis=-1, keepdims=True), approx=True)
        oh = jnp.einsum('bqk,bkd->bqd', p.astype(_MXU_DTYPE),
                        v.astype(_MXU_DTYPE),
                        preferred_element_type=jnp.float32)
        contrib = jnp.dot(oh.reshape(T, hd).astype(_MXU_DTYPE),
                          wo_ref[lo:lo + hd, :],
                          preferred_element_type=jnp.float32)
        attn = contrib if attn is None else attn + contrib
    attn = attn + bo

    x = _layernorm(x + attn, n1w, n1b)

    h1 = jnp.dot(x.astype(_MXU_DTYPE), w1_ref[...],
                 preferred_element_type=jnp.float32) + b1_ref[...]
    # TODO(synk): PyTorch activation='gelu' is exact erf; tanh approximation is
    # used for guaranteed Mosaic lowering (~1e-3 relative difference).
    h1 = jax.nn.gelu(h1, approximate=True)
    h2 = jnp.dot(h1.astype(_MXU_DTYPE), w2_ref[...],
                 preferred_element_type=jnp.float32) + b2

    x = _layernorm(x + h2, n2w, n2b)
    if out_cmajor:
        o_ref[...] = x.T.astype(o_ref.dtype)    # lane-dense (C, T) store
    else:
        o_ref[...] = x.astype(o_ref.dtype)


def _pick_block_seqs(nseq, seq_len, lane_out, cap_tokens=512):
    """Sequences per grid step.

    Constraints: nb divides nseq; a tokens-major (T, C) block needs T % 8 == 0
    (or T == total); a channels-major (C, T) output block needs T % 128 == 0
    (or T == total).  Prefer the biggest block <= cap_tokens, but take an even
    grid (>= 2 steps) when the block stays >= half the max (v7x's two
    TensorCores both get work).
    """
    cap = max(1, cap_tokens // max(seq_len, 1))
    cands = []
    for nb in range(min(nseq, cap), 0, -1):
        if nseq % nb:
            continue
        T = nb * seq_len
        full = nb == nseq
        ok = full or (T % 128 == 0 if lane_out else T % 8 == 0)
        if ok:
            cands.append(nb)
    if not cands:
        return nseq
    best = cands[0]
    for nb in cands:
        g = nseq // nb
        if g >= 2 and g % 2 == 0 and 2 * nb >= best:
            return nb
    return best


def _full_spec(shape):
    zeros = (0,) * len(shape)
    return pl.BlockSpec(shape, lambda i: zeros)


def transformer_layer_tokens(x_tok, pre_seq, p, nheads, seq_len, out_cmajor):
    """One TransformerEncoderLayer over flat tokens (nseq*seq_len, C).

    pre_seq: optional (nseq, 1, C) per-sequence additive term (diffusion emb),
    broadcast over each sequence inside the kernel.  Returns (NT, C)
    tokens-major, or (C, NT) channels-major when out_cmajor.
    """
    NT, C = x_tok.shape
    nseq = NT // seq_len
    nb = _pick_block_seqs(nseq, seq_len, lane_out=out_cmajor)
    T = nb * seq_len
    grid = (nseq // nb,)
    dff = p["w1"].shape[0]

    # Weights pre-cast to bf16 once at the XLA level: halves weight DMA bytes
    # and removes the per-grid-step cast.  Biases / LN vectors stay f32.
    wqkvT = p["in_w"].T.astype(_MXU_DTYPE)              # (C, 3C)
    bqkv = p["in_b"].reshape(1, 3 * C)
    woT = p["out_w"].T.astype(_MXU_DTYPE)               # (C, C)
    w1T = p["w1"].T.astype(_MXU_DTYPE)                  # (C, dff)
    b1 = p["b1"].reshape(1, dff)
    w2T = p["w2"].T.astype(_MXU_DTYPE)                  # (dff, C)
    vec = jnp.stack([p["out_b"], p["b2"], p["n1w"], p["n1b"],
                     p["n2w"], p["n2b"]], axis=0)       # (6, C) packed slab

    has_pre = pre_seq is not None
    kernel = functools.partial(_transformer_kernel, nheads=nheads,
                               seq_len=seq_len, nb=nb, has_pre=has_pre,
                               out_cmajor=out_cmajor)

    in_specs = [pl.BlockSpec((T, C), lambda i: (i, 0)),
                _full_spec((C, 3 * C)), _full_spec((1, 3 * C)),
                _full_spec((C, C)), _full_spec((C, dff)),
                _full_spec((1, dff)), _full_spec((dff, C)),
                _full_spec((6, C))]
    args = [x_tok, wqkvT, bqkv, woT, w1T, b1, w2T, vec]
    if has_pre:
        in_specs.append(pl.BlockSpec((nb, 1, C), lambda i: (i, 0, 0)))
        args.append(pre_seq)

    if out_cmajor:
        out_shape = jax.ShapeDtypeStruct((C, NT), _ACT_DTYPE)
        out_specs = pl.BlockSpec((C, T), lambda i: (0, i))
    else:
        out_shape = jax.ShapeDtypeStruct((NT, C), _ACT_DTYPE)
        out_specs = pl.BlockSpec((T, C), lambda i: (i, 0))

    return pl.pallas_call(
        kernel,
        out_shape=out_shape,
        grid=grid,
        in_specs=in_specs,
        out_specs=out_specs,
        compiler_params=pltpu.CompilerParams(dimension_semantics=("parallel",)),
    )(*args)


# ---------------------------------------------------------------------------
# Fused pointwise chain kernel (channels-major, tokens on the lane axis)
# ---------------------------------------------------------------------------

def _conv_chain_kernel(y_ref, cond_ref, x_ref, aft_w_ref, mid_w_ref,
                       cond_w_ref, out_w_ref, bias_ref, res_ref, skip_ref):
    # y_ref:    (C, Tt) channels-major activation from the feature transformer
    # cond_ref: (Cs, Tt); x_ref/res_ref/skip_ref: (C, Tt).  All lane-dense.
    C = x_ref.shape[0]

    # afternn_conv (1x1)
    aft_b = bias_ref[0:C, 0:1]
    y = jnp.dot(aft_w_ref[...], y_ref[...].astype(_MXU_DTYPE),
                preferred_element_type=jnp.float32) + aft_b

    # TODO(synk): S41/S42 (S4 layers), the GCGRUCell recurrence and
    # SpatialConvOrderK are external modules whose source was not provided;
    # they are treated as identity here.

    # mid_projection + cond_projection: two MXU pushes summed into one f32
    # tile (no sublane concat / per-step VMEM copy).
    mc_b = bias_ref[:, 1:2]
    z = (jnp.dot(mid_w_ref[...], y.astype(_MXU_DTYPE),
                 preferred_element_type=jnp.float32)
         + jnp.dot(cond_w_ref[...], cond_ref[...].astype(_MXU_DTYPE),
                   preferred_element_type=jnp.float32)
         + mc_b)                                               # (2C, Tt)

    g = jax.nn.sigmoid(z[:C, :]) * jnp.tanh(z[C:, :])          # f32 VPU/EUP

    out_b = bias_ref[:, 2:3]
    out = jnp.dot(out_w_ref[...], g.astype(_MXU_DTYPE),
                  preferred_element_type=jnp.float32) + out_b  # (2C, Tt)

    inv_sqrt2 = 1.0 / math.sqrt(2.0)
    res_ref[...] = ((x_ref[...] + out[:C, :]) * inv_sqrt2).astype(res_ref.dtype)
    skip_ref[...] = out[C:, :].astype(skip_ref.dtype)


def _pick_token_tile(ntok):
    cands = [c for c in (1024, 512, 256, 128) if ntok % c == 0]
    if not cands:
        return ntok
    for c in cands:               # prefer an even grid for v7x megacore
        g = ntok // c
        if g >= 2 and g % 2 == 0:
            return c
    return cands[0]


def conv_chain(y_c, cond_c, x_c, params):
    C, Ntok = x_c.shape
    Cs = cond_c.shape[0]
    C2 = 2 * C

    aft_w = params["aft_w"].astype(_MXU_DTYPE)
    mid_w = params["mid_w"].astype(_MXU_DTYPE)
    cond_w = params["cond_w"].astype(_MXU_DTYPE)
    out_w = params["out_w"].astype(_MXU_DTYPE)
    aft_b_col = jnp.concatenate([params["aft_b"], jnp.zeros((C,), jnp.float32)])
    bias = jnp.stack([aft_b_col,
                      params["mid_b"] + params["cond_b"],
                      params["out_b"]], axis=1)                # (2C, 3)

    t_tile = _pick_token_tile(Ntok)
    grid = (Ntok // t_tile,)

    return pl.pallas_call(
        _conv_chain_kernel,
        out_shape=(jax.ShapeDtypeStruct((C, Ntok), jnp.float32),
                   jax.ShapeDtypeStruct((C, Ntok), jnp.float32)),
        grid=grid,
        in_specs=[pl.BlockSpec((C, t_tile), lambda i: (0, i)),
                  pl.BlockSpec((Cs, t_tile), lambda i: (0, i)),
                  pl.BlockSpec((C, t_tile), lambda i: (0, i)),
                  _full_spec((C, C)), _full_spec((C2, C)),
                  _full_spec((C2, Cs)), _full_spec((C2, C)),
                  _full_spec((C2, 3))],
        out_specs=(pl.BlockSpec((C, t_tile), lambda i: (0, i)),
                   pl.BlockSpec((C, t_tile), lambda i: (0, i))),
        compiler_params=pltpu.CompilerParams(dimension_semantics=("parallel",)),
    )(y_c, cond_c, x_c, aft_w, mid_w, cond_w, out_w, bias)


# ---------------------------------------------------------------------------
# ResidualBlock forward
# ---------------------------------------------------------------------------

def residual_block_forward(x, cond_info, diffusion_emb, cond_mask, spa_x,
                           support, params, nheads):
    B, C, K, L = x.shape
    Ntok = B * K * L

    # diffusion_projection: tiny (B,E)@(E,C) linear at the XLA level; its
    # broadcast-add is fused into the time kernel via a per-sequence table —
    # the (Ntok, C) broadcast is never materialized in HBM.
    dproj = diffusion_emb @ params["diff_w"].T + params["diff_b"]      # (B, C)

    # --- forward_time: sequences over L for each (b, k); token order (b, k, l)
    x_time = jnp.transpose(x, (0, 2, 3, 1)).reshape(Ntok, C)
    if L > 1:
        pre_seq = jnp.broadcast_to(dproj[:, None, :],
                                   (B, K, C)).reshape(B * K, 1, C)
        y = transformer_layer_tokens(x_time, pre_seq, params["time_layer"],
                                     nheads, L, out_cmajor=False)
    else:
        y = (x_time + jnp.repeat(dproj, K * L, axis=0)).astype(_ACT_DTYPE)

    # --- forward_feature: sequences over K for each (b, l); token order (b, l, k)
    # TODO(synk): this relayout could be folded into the feature layer's
    # in_spec, but with small C the strided DMA would be inefficient, so it
    # stays one XLA transpose on a bf16 activation.
    y = y.reshape(B, K, L, C).transpose(0, 2, 1, 3).reshape(Ntok, C)
    if K > 1:
        y_c = transformer_layer_tokens(y, None, params["feature_layer"],
                                       nheads, K, out_cmajor=True)   # (C, Ntok)
    else:
        y_c = y.T

    # TODO(synk): S41/S42, the GCGRUCell recurrence and SpatialConvOrderK are
    # undefined in the provided source; treated as identity, so cond_mask /
    # spa_x / support are unused.

    # --- fused pointwise chain (channels-major slab, token order (b, l, k))
    cond_c = jnp.transpose(cond_info, (1, 0, 3, 2)).reshape(
        cond_info.shape[1], Ntok)
    x_c = jnp.transpose(x, (1, 0, 3, 2)).reshape(C, Ntok)
    res_c, skip_c = conv_chain(y_c, cond_c, x_c, params)

    residual = jnp.transpose(res_c.reshape(C, B, L, K), (1, 0, 3, 2))
    skip = jnp.transpose(skip_c.reshape(C, B, L, K), (1, 0, 3, 2))
    return residual, skip


# ---------------------------------------------------------------------------
# Deterministic parameter construction
# ---------------------------------------------------------------------------

def _transformer_params(key, C, dff):
    ks = jax.random.split(key, 6)
    return dict(
        in_w=0.1 * jax.random.normal(ks[0], (3 * C, C), jnp.float32),
        in_b=0.05 * jax.random.normal(ks[1], (3 * C,), jnp.float32),
        out_w=0.1 * jax.random.normal(ks[2], (C, C), jnp.float32),
        out_b=jnp.zeros((C,), jnp.float32),
        w1=0.1 * jax.random.normal(ks[3], (dff, C), jnp.float32),
        b1=0.05 * jax.random.normal(ks[4], (dff,), jnp.float32),
        w2=0.1 * jax.random.normal(ks[5], (C, dff), jnp.float32),
        b2=jnp.zeros((C,), jnp.float32),
        n1w=jnp.ones((C,), jnp.float32), n1b=jnp.zeros((C,), jnp.float32),
        n2w=jnp.ones((C,), jnp.float32), n2b=jnp.zeros((C,), jnp.float32),
    )


def make_params(key, side_dim, C, E, nheads, dff=64):
    ks = jax.random.split(key, 12)

    def kaiming(k, shape, fan_in):
        return jax.random.normal(k, shape, jnp.float32) * jnp.sqrt(2.0 / fan_in)

    return dict(
        diff_w=kaiming(ks[0], (C, E), E),
        diff_b=0.02 * jax.random.normal(ks[1], (C,), jnp.float32),
        time_layer=_transformer_params(ks[2], C, dff),
        feature_layer=_transformer_params(ks[3], C, dff),
        aft_w=kaiming(ks[4], (C, C), C),
        aft_b=0.02 * jax.random.normal(ks[5], (C,), jnp.float32),
        mid_w=kaiming(ks[6], (2 * C, C), C),
        mid_b=0.02 * jax.random.normal(ks[7], (2 * C,), jnp.float32),
        cond_w=kaiming(ks[8], (2 * C, side_dim), side_dim),
        cond_b=0.02 * jax.random.normal(ks[9], (2 * C,), jnp.float32),
        out_w=kaiming(ks[10], (2 * C, C), C),
        out_b=0.02 * jax.random.normal(ks[11], (2 * C,), jnp.float32),
    )


# ---------------------------------------------------------------------------

if __name__ == "__main__":
    B, C, K, L = 2, 8, 8, 8
    side_dim, demb_dim, nheads = 4, 16, 2

    key = jax.random.PRNGKey(0)
    keys = jax.random.split(key, 8)
    x = jax.random.normal(keys[0], (B, C, K, L), jnp.float32)
    cond_info = jax.random.normal(keys[1], (B, side_dim, K, L), jnp.float32)
    diffusion_emb = jax.random.normal(keys[2], (B, demb_dim), jnp.float32)
    cond_mask = (jax.random.uniform(keys[3], (B, K, L)) > 0.5).astype(jnp.float32)
    spa_x = jax.random.normal(keys[4], (B, 1, K, L), jnp.float32)
    support = [jnp.eye(K, dtype=jnp.float32) for _ in range(4)]

    params = make_params(keys[5], side_dim, C, demb_dim, nheads)

    fwd = jax.jit(functools.partial(residual_block_forward, nheads=nheads))
    res, skip = fwd(x, cond_info, diffusion_emb, cond_mask, spa_x, support,
                    params)
    jax.block_until_ready((res, skip))
    assert res.shape == (B, C, K, L) and skip.shape == (B, C, K, L)
    assert bool(jnp.all(jnp.isfinite(res))) and bool(jnp.all(jnp.isfinite(skip)))
    print("KERNEL_OK")
</pallas_src>

<mosaic_0001>
module attributes {stable_mosaic.version = 11 : i64} {
  func.func @_transformer_kernel(%arg0: i32, %arg1: memref<128x8xbf16, #tpu.memory_space<vmem>>, %arg2: memref<8x24xbf16, #tpu.memory_space<vmem>>, %arg3: memref<1x24xf32, #tpu.memory_space<vmem>>, %arg4: memref<8x8xbf16, #tpu.memory_space<vmem>>, %arg5: memref<8x64xbf16, #tpu.memory_space<vmem>>, %arg6: memref<1x64xf32, #tpu.memory_space<vmem>>, %arg7: memref<64x8xbf16, #tpu.memory_space<vmem>>, %arg8: memref<6x8xf32, #tpu.memory_space<vmem>>, %arg9: memref<8x128xbf16, #tpu.memory_space<vmem>>) attributes {dimension_semantics = [#tpu.dimension_semantics<parallel>], iteration_bounds = array<i64: 1>, scalar_prefetch = 0 : i64, scratch_operands = 0 : i64, tpu.core_type = #tpu.core_type<tc>, window_params = [{transform_indices = @transform_0, window_bounds = array<i64: 128, 8>}, {pipeline_mode = #tpu.pipeline_mode<synchronous>, transform_indices = @transform_1, window_bounds = array<i64: 8, 24>}, {pipeline_mode = #tpu.pipeline_mode<synchronous>, transform_indices = @transform_2, window_bounds = array<i64: 1, 24>}, {pipeline_mode = #tpu.pipeline_mode<synchronous>, transform_indices = @transform_3, window_bounds = array<i64: 8, 8>}, {pipeline_mode = #tpu.pipeline_mode<synchronous>, transform_indices = @transform_4, window_bounds = array<i64: 8, 64>}, {pipeline_mode = #tpu.pipeline_mode<synchronous>, transform_indices = @transform_5, window_bounds = array<i64: 1, 64>}, {pipeline_mode = #tpu.pipeline_mode<synchronous>, transform_indices = @transform_6, window_bounds = array<i64: 64, 8>}, {pipeline_mode = #tpu.pipeline_mode<synchronous>, transform_indices = @transform_7, window_bounds = array<i64: 6, 8>}, {transform_indices = @transform_8, window_bounds = array<i64: 8, 128>}]} {
    %c0 = arith.constant 0 : index
    %c0_0 = arith.constant 0 : index
    %0 = vector.load %arg1[%c0, %c0_0] : memref<128x8xbf16, #tpu.memory_space<vmem>>, vector<128x8xbf16>
    %1 = arith.extf %0 : vector<128x8xbf16> to vector<128x8xf32>
    %c0_1 = arith.constant 0 : index
    %c0_2 = arith.constant 0 : index
    %2 = vector.load %arg8[%c0_1, %c0_2] : memref<6x8xf32, #tpu.memory_space<vmem>>, vector<1x8xf32>
    %c1 = arith.constant 1 : index
    %c0_3 = arith.constant 0 : index
    %3 = vector.load %arg8[%c1, %c0_3] : memref<6x8xf32, #tpu.memory_space<vmem>>, vector<1x8xf32>
    %c2 = arith.constant 2 : index
    %c0_4 = arith.constant 0 : index
    %4 = vector.load %arg8[%c2, %c0_4] : memref<6x8xf32, #tpu.memory_space<vmem>>, vector<1x8xf32>
    %c3 = arith.constant 3 : index
    %c0_5 = arith.constant 0 : index
    %5 = vector.load %arg8[%c3, %c0_5] : memref<6x8xf32, #tpu.memory_space<vmem>>, vector<1x8xf32>
    %c4 = arith.constant 4 : index
    %c0_6 = arith.constant 0 : index
    %6 = vector.load %arg8[%c4, %c0_6] : memref<6x8xf32, #tpu.memory_space<vmem>>, vector<1x8xf32>
    %c5 = arith.constant 5 : index
    %c0_7 = arith.constant 0 : index
    %7 = vector.load %arg8[%c5, %c0_7] : memref<6x8xf32, #tpu.memory_space<vmem>>, vector<1x8xf32>
    %8 = arith.truncf %1 : vector<128x8xf32> to vector<128x8xbf16>
    %c0_8 = arith.constant 0 : index
    %c0_9 = arith.constant 0 : index
    %9 = vector.load %arg2[%c0_8, %c0_9] : memref<8x24xbf16, #tpu.memory_space<vmem>>, vector<8x24xbf16>
    %cst = arith.constant dense<0.000000e+00> : vector<128x24xf32>
    %10 = tpu.matmul %8, %9, %cst {dimension_numbers = #tpu.dot_dimension_numbers<[1], [0], [0], [1], [0, 0, 1, 1], [], []>} : vector<128x8xbf16>, vector<8x24xbf16>, vector<128x24xf32> -> vector<128x24xf32>
    %c0_10 = arith.constant 0 : index
    %c0_11 = arith.constant 0 : index
    %11 = vector.load %arg3[%c0_10, %c0_11] : memref<1x24xf32, #tpu.memory_space<vmem>>, vector<1x24xf32>
    %12 = vector.broadcast %11 : vector<1x24xf32> to vector<128x24xf32>
    %13 = arith.addf %10, %12 : vector<128x24xf32>
    %14 = vector.shape_cast %13 : vector<128x24xf32> to vector<16x8x24xf32>
    %15 = vector.extract_strided_slice %14 {offsets = [0, 0, 0], sizes = [16, 8, 4], strides = [1, 1, 1]} : vector<16x8x24xf32> to vector<16x8x4xf32>
    %16 = vector.extract_strided_slice %14 {offsets = [0, 0, 8], sizes = [16, 8, 4], strides = [1, 1, 1]} : vector<16x8x24xf32> to vector<16x8x4xf32>
    %17 = vector.extract_strided_slice %14 {offsets = [0, 0, 16], sizes = [16, 8, 4], strides = [1, 1, 1]} : vector<16x8x24xf32> to vector<16x8x4xf32>
    %18 = arith.truncf %15 : vector<16x8x4xf32> to vector<16x8x4xbf16>
    %19 = arith.truncf %16 : vector<16x8x4xf32> to vector<16x8x4xbf16>
    "tpu.trace_start"() <{level = 10 : i32, message = "bqd,bkd->bqk"}> : () -> ()
    %cst_12 = arith.constant dense<0.000000e+00> : vector<16x8x8xf32>
    %20 = tpu.matmul %18, %19, %cst_12 {dimension_numbers = #tpu.dot_dimension_numbers<[2], [2], [1], [1], [0, 0, 0, 1, 1, 1], [0], [0]>} : vector<16x8x4xbf16>, vector<16x8x4xbf16>, vector<16x8x8xf32> -> vector<16x8x8xf32>
    "tpu.trace_stop"() : () -> ()
    %cst_13 = arith.constant 5.000000e-01 : f32
    %21 = vector.broadcast %cst_13 : f32 to vector<16x8x8xf32>
    %22 = arith.mulf %20, %21 : vector<16x8x8xf32>
    %cst_14 = arith.constant dense<0xFF800000> : vector<16x8xf32>
    %23 = vector.multi_reduction <maximumf>, %22, %cst_14 [2] : vector<16x8x8xf32> to vector<16x8xf32>
    %24 = vector.shape_cast %23 : vector<16x8xf32> to vector<16x8x1xf32>
    %25 = vector.broadcast %24 : vector<16x8x1xf32> to vector<16x8x8xf32>
    %26 = arith.subf %22, %25 : vector<16x8x8xf32>
    %27 = math.exp %26 : vector<16x8x8xf32>
    %cst_15 = arith.constant dense<0.000000e+00> : vector<16x8xf32>
    %28 = vector.multi_reduction <add>, %27, %cst_15 [2] : vector<16x8x8xf32> to vector<16x8xf32>
    %29 = vector.shape_cast %28 : vector<16x8xf32> to vector<16x8x1xf32>
    %30 = tpu.reciprocal %29 {approx = true} : vector<16x8x1xf32> -> vector<16x8x1xf32>
    %31 = vector.broadcast %30 : vector<16x8x1xf32> to vector<16x8x8xf32>
    %32 = arith.mulf %27, %31 : vector<16x8x8xf32>
    %33 = arith.truncf %32 : vector<16x8x8xf32> to vector<16x8x8xbf16>
    %34 = arith.truncf %17 : vector<16x8x4xf32> to vector<16x8x4xbf16>
    "tpu.trace_start"() <{level = 10 : i32, message = "bqk,bkd->bqd"}> : () -> ()
    %cst_16 = arith.constant dense<0.000000e+00> : vector<16x8x4xf32>
    %35 = tpu.matmul %33, %34, %cst_16 {dimension_numbers = #tpu.dot_dimension_numbers<[2], [1], [1], [2], [0, 0, 0, 1, 1, 2], [0], [0]>} : vector<16x8x8xbf16>, vector<16x8x4xbf16>, vector<16x8x4xf32> -> vector<16x8x4xf32>
    "tpu.trace_stop"() : () -> ()
    %36 = vector.shape_cast %35 : vector<16x8x4xf32> to vector<128x4xf32>
    %37 = arith.truncf %36 : vector<128x4xf32> to vector<128x4xbf16>
    %c0_17 = arith.constant 0 : index
    %c0_18 = arith.constant 0 : index
    %38 = vector.load %arg4[%c0_17, %c0_18] : memref<8x8xbf16, #tpu.memory_space<vmem>>, vector<4x8xbf16>
    %cst_19 = arith.constant dense<0.000000e+00> : vector<128x8xf32>
    %39 = tpu.matmul %37, %38, %cst_19 {dimension_numbers = #tpu.dot_dimension_numbers<[1], [0], [0], [1], [0, 0, 1, 1], [], []>} : vector<128x4xbf16>, vector<4x8xbf16>, vector<128x8xf32> -> vector<128x8xf32>
    %40 = vector.extract_strided_slice %14 {offsets = [0, 0, 4], sizes = [16, 8, 4], strides = [1, 1, 1]} : vector<16x8x24xf32> to vector<16x8x4xf32>
    %41 = vector.extract_strided_slice %14 {offsets = [0, 0, 12], sizes = [16, 8, 4], strides = [1, 1, 1]} : vector<16x8x24xf32> to vector<16x8x4xf32>
    %42 = vector.extract_strided_slice %14 {offsets = [0, 0, 20], sizes = [16, 8, 4], strides = [1, 1, 1]} : vector<16x8x24xf32> to vector<16x8x4xf32>
    %43 = arith.truncf %40 : vector<16x8x4xf32> to vector<16x8x4xbf16>
    %44 = arith.truncf %41 : vector<16x8x4xf32> to vector<16x8x4xbf16>
    "tpu.trace_start"() <{level = 10 : i32, message = "bqd,bkd->bqk"}> : () -> ()
    %cst_20 = arith.constant dense<0.000000e+00> : vector<16x8x8xf32>
    %45 = tpu.matmul %43, %44, %cst_20 {dimension_numbers = #tpu.dot_dimension_numbers<[2], [2], [1], [1], [0, 0, 0, 1, 1, 1], [0], [0]>} : vector<16x8x4xbf16>, vector<16x8x4xbf16>, vector<16x8x8xf32> -> vector<16x8x8xf32>
    "tpu.trace_stop"() : () -> ()
    %cst_21 = arith.constant 5.000000e-01 : f32
    %46 = vector.broadcast %cst_21 : f32 to vector<16x8x8xf32>
    %47 = arith.mulf %45, %46 : vector<16x8x8xf32>
    %cst_22 = arith.constant dense<0xFF800000> : vector<16x8xf32>
    %48 = vector.multi_reduction <maximumf>, %47, %cst_22 [2] : vector<16x8x8xf32> to vector<16x8xf32>
    %49 = vector.shape_cast %48 : vector<16x8xf32> to vector<16x8x1xf32>
    %50 = vector.broadcast %49 : vector<16x8x1xf32> to vector<16x8x8xf32>
    %51 = arith.subf %47, %50 : vector<16x8x8xf32>
    %52 = math.exp %51 : vector<16x8x8xf32>
    %cst_23 = arith.constant dense<0.000000e+00> : vector<16x8xf32>
    %53 = vector.multi_reduction <add>, %52, %cst_23 [2] : vector<16x8x8xf32> to vector<16x8xf32>
    %54 = vector.shape_cast %53 : vector<16x8xf32> to vector<16x8x1xf32>
    %55 = tpu.reciprocal %54 {approx = true} : vector<16x8x1xf32> -> vector<16x8x1xf32>
    %56 = vector.broadcast %55 : vector<16x8x1xf32> to vector<16x8x8xf32>
    %57 = arith.mulf %52, %56 : vector<16x8x8xf32>
    %58 = arith.truncf %57 : vector<16x8x8xf32> to vector<16x8x8xbf16>
    %59 = arith.truncf %42 : vector<16x8x4xf32> to vector<16x8x4xbf16>
    "tpu.trace_start"() <{level = 10 : i32, message = "bqk,bkd->bqd"}> : () -> ()
    %cst_24 = arith.constant dense<0.000000e+00> : vector<16x8x4xf32>
    %60 = tpu.matmul %58, %59, %cst_24 {dimension_numbers = #tpu.dot_dimension_numbers<[2], [1], [1], [2], [0, 0, 0, 1, 1, 2], [0], [0]>} : vector<16x8x8xbf16>, vector<16x8x4xbf16>, vector<16x8x4xf32> -> vector<16x8x4xf32>
    "tpu.trace_stop"() : () -> ()
    %61 = vector.shape_cast %60 : vector<16x8x4xf32> to vector<128x4xf32>
    %62 = arith.truncf %61 : vector<128x4xf32> to vector<128x4xbf16>
    %c4_25 = arith.constant 4 : index
    %c0_26 = arith.constant 0 : index
    %63 = vector.load %arg4[%c4_25, %c0_26] : memref<8x8xbf16, #tpu.memory_space<vmem>>, vector<4x8xbf16>
    %cst_27 = arith.constant dense<0.000000e+00> : vector<128x8xf32>
    %64 = tpu.matmul %62, %63, %cst_27 {dimension_numbers = #tpu.dot_dimension_numbers<[1], [0], [0], [1], [0, 0, 1, 1], [], []>} : vector<128x4xbf16>, vector<4x8xbf16>, vector<128x8xf32> -> vector<128x8xf32>
    %65 = arith.addf %39, %64 : vector<128x8xf32>
    %66 = vector.broadcast %2 : vector<1x8xf32> to vector<128x8xf32>
    %67 = arith.addf %65, %66 : vector<128x8xf32>
    %68 = arith.addf %1, %67 : vector<128x8xf32>
    %cst_28 = arith.constant dense<0.000000e+00> : vector<128xf32>
    %69 = vector.multi_reduction <add>, %68, %cst_28 [1] : vector<128x8xf32> to vector<128xf32>
    %70 = vector.shape_cast %69 : vector<128xf32> to vector<128x1xf32>
    %cst_29 = arith.constant 8.000000e+00 : f32
    %71 = vector.broadcast %cst_29 : f32 to vector<128x1xf32>
    %72 = arith.divf %70, %71 : vector<128x1xf32>
    %73 = vector.broadcast %72 : vector<128x1xf32> to vector<128x8xf32>
    %74 = arith.subf %68, %73 : vector<128x8xf32>
    %75 = arith.mulf %74, %74 : vector<128x8xf32>
    %cst_30 = arith.constant dense<0.000000e+00> : vector<128xf32>
    %76 = vector.multi_reduction <add>, %75, %cst_30 [1] : vector<128x8xf32> to vector<128xf32>
    %77 = vector.shape_cast %76 : vector<128xf32> to vector<128x1xf32>
    %cst_31 = arith.constant 8.000000e+00 : f32
    %78 = vector.broadcast %cst_31 : f32 to vector<128x1xf32>
    %79 = arith.divf %77, %78 : vector<128x1xf32>
    %cst_32 = arith.constant 9.99999974E-6 : f32
    %80 = vector.broadcast %cst_32 : f32 to vector<128x1xf32>
    %81 = arith.addf %79, %80 : vector<128x1xf32>
    %82 = math.rsqrt %81 : vector<128x1xf32>
    %83 = vector.broadcast %82 : vector<128x1xf32> to vector<128x8xf32>
    %84 = arith.mulf %74, %83 : vector<128x8xf32>
    %85 = vector.broadcast %4 : vector<1x8xf32> to vector<128x8xf32>
    %86 = arith.mulf %84, %85 : vector<128x8xf32>
    %87 = vector.broadcast %5 : vector<1x8xf32> to vector<128x8xf32>
    %88 = arith.addf %86, %87 : vector<128x8xf32>
    %89 = arith.truncf %88 : vector<128x8xf32> to vector<128x8xbf16>
    %c0_33 = arith.constant 0 : index
    %c0_34 = arith.constant 0 : index
    %90 = vector.load %arg5[%c0_33, %c0_34] : memref<8x64xbf16, #tpu.memory_space<vmem>>, vector<8x64xbf16>
    %cst_35 = arith.constant dense<0.000000e+00> : vector<128x64xf32>
    %91 = tpu.matmul %89, %90, %cst_35 {dimension_numbers = #tpu.dot_dimension_numbers<[1], [0], [0], [1], [0, 0, 1, 1], [], []>} : vector<128x8xbf16>, vector<8x64xbf16>, vector<128x64xf32> -> vector<128x64xf32>
    %c0_36 = arith.constant 0 : index
    %c0_37 = arith.constant 0 : index
    %92 = vector.load %arg6[%c0_36, %c0_37] : memref<1x64xf32, #tpu.memory_space<vmem>>, vector<1x64xf32>
    %93 = vector.broadcast %92 : vector<1x64xf32> to vector<128x64xf32>
    %94 = arith.addf %91, %93 : vector<128x64xf32>
    %95 = arith.mulf %94, %94 : vector<128x64xf32>
    %96 = arith.mulf %94, %95 : vector<128x64xf32>
    %cst_38 = arith.constant 4.471500e-02 : f32
    %97 = vector.broadcast %cst_38 : f32 to vector<128x64xf32>
    %98 = arith.mulf %97, %96 : vector<128x64xf32>
    %99 = arith.addf %94, %98 : vector<128x64xf32>
    %cst_39 = arith.constant 0.797884583 : f32
    %100 = vector.broadcast %cst_39 : f32 to vector<128x64xf32>
    %101 = arith.mulf %100, %99 : vector<128x64xf32>
    %102 = math.tanh %101 : vector<128x64xf32>
    %cst_40 = arith.constant 1.000000e+00 : f32
    %103 = vector.broadcast %cst_40 : f32 to vector<128x64xf32>
    %104 = arith.addf %103, %102 : vector<128x64xf32>
    %cst_41 = arith.constant 5.000000e-01 : f32
    %105 = vector.broadcast %cst_41 : f32 to vector<128x64xf32>
    %106 = arith.mulf %105, %104 : vector<128x64xf32>
    %107 = arith.mulf %94, %106 : vector<128x64xf32>
    %108 = arith.truncf %107 : vector<128x64xf32> to vector<128x64xbf16>
    %c0_42 = arith.constant 0 : index
    %c0_43 = arith.constant 0 : index
    %109 = vector.load %arg7[%c0_42, %c0_43] : memref<64x8xbf16, #tpu.memory_space<vmem>>, vector<64x8xbf16>
    %cst_44 = arith.constant dense<0.000000e+00> : vector<128x8xf32>
    %110 = tpu.matmul %108, %109, %cst_44 {dimension_numbers = #tpu.dot_dimension_numbers<[1], [0], [0], [1], [0, 0, 1, 1], [], []>} : vector<128x64xbf16>, vector<64x8xbf16>, vector<128x8xf32> -> vector<128x8xf32>
    %111 = vector.broadcast %3 : vector<1x8xf32> to vector<128x8xf32>
    %112 = arith.addf %110, %111 : vector<128x8xf32>
    %113 = arith.addf %88, %112 : vector<128x8xf32>
    %cst_45 = arith.constant dense<0.000000e+00> : vector<128xf32>
    %114 = vector.multi_reduction <add>, %113, %cst_45 [1] : vector<128x8xf32> to vector<128xf32>
    %115 = vector.shape_cast %114 : vector<128xf32> to vector<128x1xf32>
    %cst_46 = arith.constant 8.000000e+00 : f32
    %116 = vector.broadcast %cst_46 : f32 to vector<128x1xf32>
    %117 = arith.divf %115, %116 : vector<128x1xf32>
    %118 = vector.broadcast %117 : vector<128x1xf32> to vector<128x8xf32>
    %119 = arith.subf %113, %118 : vector<128x8xf32>
    %120 = arith.mulf %119, %119 : vector<128x8xf32>
    %cst_47 = arith.constant dense<0.000000e+00> : vector<128xf32>
    %121 = vector.multi_reduction <add>, %120, %cst_47 [1] : vector<128x8xf32> to vector<128xf32>
    %122 = vector.shape_cast %121 : vector<128xf32> to vector<128x1xf32>
    %cst_48 = arith.constant 8.000000e+00 : f32
    %123 = vector.broadcast %cst_48 : f32 to vector<128x1xf32>
    %124 = arith.divf %122, %123 : vector<128x1xf32>
    %cst_49 = arith.constant 9.99999974E-6 : f32
    %125 = vector.broadcast %cst_49 : f32 to vector<128x1xf32>
    %126 = arith.addf %124, %125 : vector<128x1xf32>
    %127 = math.rsqrt %126 : vector<128x1xf32>
    %128 = vector.broadcast %127 : vector<128x1xf32> to vector<128x8xf32>
    %129 = arith.mulf %119, %128 : vector<128x8xf32>
    %130 = vector.broadcast %6 : vector<1x8xf32> to vector<128x8xf32>
    %131 = arith.mulf %129, %130 : vector<128x8xf32>
    %132 = vector.broadcast %7 : vector<1x8xf32> to vector<128x8xf32>
    %133 = arith.addf %131, %132 : vector<128x8xf32>
    %134 = tpu.transpose %133, [1, 0] : vector<128x8xf32> -> vector<8x128xf32>
    %135 = arith.truncf %134 : vector<8x128xf32> to vector<8x128xbf16>
    %c0_50 = arith.constant 0 : index
    %c0_51 = arith.constant 0 : index
    %136 = vector.load %arg9[%c0_50, %c0_51] : memref<8x128xbf16, #tpu.memory_space<vmem>>, vector<8x128xbf16>
    tpu.vector_store %arg9[%c0_50, %c0_51], %135 {strides = array<i32>} : memref<8x128xbf16, #tpu.memory_space<vmem>>, vector<8x128xbf16>,
    return
  }
  func.func @transform_0(%arg0: i32) -> (i32, i32) {
    %c0_i32 = arith.constant 0 : i32
    %c0_i32_0 = arith.constant 0 : i32
    return %arg0, %c0_i32 : i32, i32
  }
  func.func @transform_1(%arg0: i32) -> (i32, i32) {
    %c0_i32 = arith.constant 0 : i32
    %c0_i32_0 = arith.constant 0 : i32
    %c0_i32_1 = arith.constant 0 : i32
    return %c0_i32, %c0_i32_0 : i32, i32
  }
  func.func @transform_2(%arg0: i32) -> (i32, i32) {
    %c0_i32 = arith.constant 0 : i32
    %c0_i32_0 = arith.constant 0 : i32
    %c0_i32_1 = arith.constant 0 : i32
    return %c0_i32, %c0_i32_0 : i32, i32
  }
  func.func @transform_3(%arg0: i32) -> (i32, i32) {
    %c0_i32 = arith.constant 0 : i32
    %c0_i32_0 = arith.constant 0 : i32
    %c0_i32_1 = arith.constant 0 : i32
    return %c0_i32, %c0_i32_0 : i32, i32
  }
  func.func @transform_4(%arg0: i32) -> (i32, i32) {
    %c0_i32 = arith.constant 0 : i32
    %c0_i32_0 = arith.constant 0 : i32
    %c0_i32_1 = arith.constant 0 : i32
    return %c0_i32, %c0_i32_0 : i32, i32
  }
  func.func @transform_5(%arg0: i32) -> (i32, i32) {
    %c0_i32 = arith.constant 0 : i32
    %c0_i32_0 = arith.constant 0 : i32
    %c0_i32_1 = arith.constant 0 : i32
    return %c0_i32, %c0_i32_0 : i32, i32
  }
  func.func @transform_6(%arg0: i32) -> (i32, i32) {
    %c0_i32 = arith.constant 0 : i32
    %c0_i32_0 = arith.constant 0 : i32
    %c0_i32_1 = arith.constant 0 : i32
    return %c0_i32, %c0_i32_0 : i32, i32
  }
  func.func @transform_7(%arg0: i32) -> (i32, i32) {
    %c0_i32 = arith.constant 0 : i32
    %c0_i32_0 = arith.constant 0 : i32
    %c0_i32_1 = arith.constant 0 : i32
    return %c0_i32, %c0_i32_0 : i32, i32
  }
  func.func @transform_8(%arg0: i32) -> (i32, i32) {
    %c0_i32 = arith.constant 0 : i32
    %c0_i32_0 = arith.constant 0 : i32
    return %c0_i32, %arg0 : i32, i32
  }
}

module attributes {stable_mosaic.version = 11 : i64} {
  func.func @_transformer_kernel(%arg0: i32, %arg1: memref<64x8xf32, #tpu.memory_space<vmem>>, %arg2: memref<8x24xbf16, #tpu.memory_space<vmem>>, %arg3: memref<1x24xf32, #tpu.memory_space<vmem>>, %arg4: memref<8x8xbf16, #tpu.memory_space<vmem>>, %arg5: memref<8x64xbf16, #tpu.memory_space<vmem>>, %arg6: memref<1x64xf32, #tpu.memory_space<vmem>>, %arg7: memref<64x8xbf16, #tpu.memory_space<vmem>>, %arg8: memref<6x8xf32, #tpu.memory_space<vmem>>, %arg9: memref<8x1x8xf32, #tpu.memory_space<vmem>>, %arg10: memref<64x8xbf16, #tpu.memory_space<vmem>>) attributes {dimension_semantics = [#tpu.dimension_semantics<parallel>], iteration_bounds = array<i64: 2>, scalar_prefetch = 0 : i64, scratch_operands = 0 : i64, tpu.core_type = #tpu.core_type<tc>, window_params = [{transform_indices = @transform_0, window_bounds = array<i64: 64, 8>}, {pipeline_mode = #tpu.pipeline_mode<synchronous>, transform_indices = @transform_1, window_bounds = array<i64: 8, 24>}, {pipeline_mode = #tpu.pipeline_mode<synchronous>, transform_indices = @transform_2, window_bounds = array<i64: 1, 24>}, {pipeline_mode = #tpu.pipeline_mode<synchronous>, transform_indices = @transform_3, window_bounds = array<i64: 8, 8>}, {pipeline_mode = #tpu.pipeline_mode<synchronous>, transform_indices = @transform_4, window_bounds = array<i64: 8, 64>}, {pipeline_mode = #tpu.pipeline_mode<synchronous>, transform_indices = @transform_5, window_bounds = array<i64: 1, 64>}, {pipeline_mode = #tpu.pipeline_mode<synchronous>, transform_indices = @transform_6, window_bounds = array<i64: 64, 8>}, {pipeline_mode = #tpu.pipeline_mode<synchronous>, transform_indices = @transform_7, window_bounds = array<i64: 6, 8>}, {transform_indices = @transform_8, window_bounds = array<i64: 8, 1, 8>}, {transform_indices = @transform_9, window_bounds = array<i64: 64, 8>}]} {
    %c0 = arith.constant 0 : index
    %c0_0 = arith.constant 0 : index
    %0 = vector.load %arg1[%c0, %c0_0] : memref<64x8xf32, #tpu.memory_space<vmem>>, vector<64x8xf32>
    %1 = vector.shape_cast %0 : vector<64x8xf32> to vector<8x8x8xf32>
    %c0_1 = arith.constant 0 : index
    %c0_2 = arith.constant 0 : index
    %c0_3 = arith.constant 0 : index
    %2 = vector.load %arg9[%c0_1, %c0_2, %c0_3] : memref<8x1x8xf32, #tpu.memory_space<vmem>>, vector<8x1x8xf32>
    %3 = vector.broadcast %2 : vector<8x1x8xf32> to vector<8x8x8xf32>
    %4 = arith.addf %1, %3 : vector<8x8x8xf32>
    %5 = vector.shape_cast %4 : vector<8x8x8xf32> to vector<64x8xf32>
    %c0_4 = arith.constant 0 : index
    %c0_5 = arith.constant 0 : index
    %6 = vector.load %arg8[%c0_4, %c0_5] : memref<6x8xf32, #tpu.memory_space<vmem>>, vector<1x8xf32>
    %c1 = arith.constant 1 : index
    %c0_6 = arith.constant 0 : index
    %7 = vector.load %arg8[%c1, %c0_6] : memref<6x8xf32, #tpu.memory_space<vmem>>, vector<1x8xf32>
    %c2 = arith.constant 2 : index
    %c0_7 = arith.constant 0 : index
    %8 = vector.load %arg8[%c2, %c0_7] : memref<6x8xf32, #tpu.memory_space<vmem>>, vector<1x8xf32>
    %c3 = arith.constant 3 : index
    %c0_8 = arith.constant 0 : index
    %9 = vector.load %arg8[%c3, %c0_8] : memref<6x8xf32, #tpu.memory_space<vmem>>, vector<1x8xf32>
    %c4 = arith.constant 4 : index
    %c0_9 = arith.constant 0 : index
    %10 = vector.load %arg8[%c4, %c0_9] : memref<6x8xf32, #tpu.memory_space<vmem>>, vector<1x8xf32>
    %c5 = arith.constant 5 : index
    %c0_10 = arith.constant 0 : index
    %11 = vector.load %arg8[%c5, %c0_10] : memref<6x8xf32, #tpu.memory_space<vmem>>, vector<1x8xf32>
    %12 = arith.truncf %5 : vector<64x8xf32> to vector<64x8xbf16>
    %c0_11 = arith.constant 0 : index
    %c0_12 = arith.constant 0 : index
    %13 = vector.load %arg2[%c0_11, %c0_12] : memref<8x24xbf16, #tpu.memory_space<vmem>>, vector<8x24xbf16>
    %cst = arith.constant dense<0.000000e+00> : vector<64x24xf32>
    %14 = tpu.matmul %12, %13, %cst {dimension_numbers = #tpu.dot_dimension_numbers<[1], [0], [0], [1], [0, 0, 1, 1], [], []>} : vector<64x8xbf16>, vector<8x24xbf16>, vector<64x24xf32> -> vector<64x24xf32>
    %c0_13 = arith.constant 0 : index
    %c0_14 = arith.constant 0 : index
    %15 = vector.load %arg3[%c0_13, %c0_14] : memref<1x24xf32, #tpu.memory_space<vmem>>, vector<1x24xf32>
    %16 = vector.broadcast %15 : vector<1x24xf32> to vector<64x24xf32>
    %17 = arith.addf %14, %16 : vector<64x24xf32>
    %18 = vector.shape_cast %17 : vector<64x24xf32> to vector<8x8x24xf32>
    %19 = vector.extract_strided_slice %18 {offsets = [0, 0, 0], sizes = [8, 8, 4], strides = [1, 1, 1]} : vector<8x8x24xf32> to vector<8x8x4xf32>
    %20 = vector.extract_strided_slice %18 {offsets = [0, 0, 8], sizes = [8, 8, 4], strides = [1, 1, 1]} : vector<8x8x24xf32> to vector<8x8x4xf32>
    %21 = vector.extract_strided_slice %18 {offsets = [0, 0, 16], sizes = [8, 8, 4], strides = [1, 1, 1]} : vector<8x8x24xf32> to vector<8x8x4xf32>
    %22 = arith.truncf %19 : vector<8x8x4xf32> to vector<8x8x4xbf16>
    %23 = arith.truncf %20 : vector<8x8x4xf32> to vector<8x8x4xbf16>
    "tpu.trace_start"() <{level = 10 : i32, message = "bqd,bkd->bqk"}> : () -> ()
    %cst_15 = arith.constant dense<0.000000e+00> : vector<8x8x8xf32>
    %24 = tpu.matmul %22, %23, %cst_15 {dimension_numbers = #tpu.dot_dimension_numbers<[2], [2], [1], [1], [0, 0, 0, 1, 1, 1], [0], [0]>} : vector<8x8x4xbf16>, vector<8x8x4xbf16>, vector<8x8x8xf32> -> vector<8x8x8xf32>
    "tpu.trace_stop"() : () -> ()
    %cst_16 = arith.constant 5.000000e-01 : f32
    %25 = vector.broadcast %cst_16 : f32 to vector<8x8x8xf32>
    %26 = arith.mulf %24, %25 : vector<8x8x8xf32>
    %cst_17 = arith.constant dense<0xFF800000> : vector<8x8xf32>
    %27 = vector.multi_reduction <maximumf>, %26, %cst_17 [2] : vector<8x8x8xf32> to vector<8x8xf32>
    %28 = vector.shape_cast %27 : vector<8x8xf32> to vector<8x8x1xf32>
    %29 = vector.broadcast %28 : vector<8x8x1xf32> to vector<8x8x8xf32>
    %30 = arith.subf %26, %29 : vector<8x8x8xf32>
    %31 = math.exp %30 : vector<8x8x8xf32>
    %cst_18 = arith.constant dense<0.000000e+00> : vector<8x8xf32>
    %32 = vector.multi_reduction <add>, %31, %cst_18 [2] : vector<8x8x8xf32> to vector<8x8xf32>
    %33 = vector.shape_cast %32 : vector<8x8xf32> to vector<8x8x1xf32>
    %34 = tpu.reciprocal %33 {approx = true} : vector<8x8x1xf32> -> vector<8x8x1xf32>
    %35 = vector.broadcast %34 : vector<8x8x1xf32> to vector<8x8x8xf32>
    %36 = arith.mulf %31, %35 : vector<8x8x8xf32>
    %37 = arith.truncf %36 : vector<8x8x8xf32> to vector<8x8x8xbf16>
    %38 = arith.truncf %21 : vector<8x8x4xf32> to vector<8x8x4xbf16>
    "tpu.trace_start"() <{level = 10 : i32, message = "bqk,bkd->bqd"}> : () -> ()
    %cst_19 = arith.constant dense<0.000000e+00> : vector<8x8x4xf32>
    %39 = tpu.matmul %37, %38, %cst_19 {dimension_numbers = #tpu.dot_dimension_numbers<[2], [1], [1], [2], [0, 0, 0, 1, 1, 2], [0], [0]>} : vector<8x8x8xbf16>, vector<8x8x4xbf16>, vector<8x8x4xf32> -> vector<8x8x4xf32>
    "tpu.trace_stop"() : () -> ()
    %40 = vector.shape_cast %39 : vector<8x8x4xf32> to vector<64x4xf32>
    %41 = arith.truncf %40 : vector<64x4xf32> to vector<64x4xbf16>
    %c0_20 = arith.constant 0 : index
    %c0_21 = arith.constant 0 : index
    %42 = vector.load %arg4[%c0_20, %c0_21] : memref<8x8xbf16, #tpu.memory_space<vmem>>, vector<4x8xbf16>
    %cst_22 = arith.constant dense<0.000000e+00> : vector<64x8xf32>
    %43 = tpu.matmul %41, %42, %cst_22 {dimension_numbers = #tpu.dot_dimension_numbers<[1], [0], [0], [1], [0, 0, 1, 1], [], []>} : vector<64x4xbf16>, vector<4x8xbf16>, vector<64x8xf32> -> vector<64x8xf32>
    %44 = vector.extract_strided_slice %18 {offsets = [0, 0, 4], sizes = [8, 8, 4], strides = [1, 1, 1]} : vector<8x8x24xf32> to vector<8x8x4xf32>
    %45 = vector.extract_strided_slice %18 {offsets = [0, 0, 12], sizes = [8, 8, 4], strides = [1, 1, 1]} : vector<8x8x24xf32> to vector<8x8x4xf32>
    %46 = vector.extract_strided_slice %18 {offsets = [0, 0, 20], sizes = [8, 8, 4], strides = [1, 1, 1]} : vector<8x8x24xf32> to vector<8x8x4xf32>
    %47 = arith.truncf %44 : vector<8x8x4xf32> to vector<8x8x4xbf16>
    %48 = arith.truncf %45 : vector<8x8x4xf32> to vector<8x8x4xbf16>
    "tpu.trace_start"() <{level = 10 : i32, message = "bqd,bkd->bqk"}> : () -> ()
    %cst_23 = arith.constant dense<0.000000e+00> : vector<8x8x8xf32>
    %49 = tpu.matmul %47, %48, %cst_23 {dimension_numbers = #tpu.dot_dimension_numbers<[2], [2], [1], [1], [0, 0, 0, 1, 1, 1], [0], [0]>} : vector<8x8x4xbf16>, vector<8x8x4xbf16>, vector<8x8x8xf32> -> vector<8x8x8xf32>
    "tpu.trace_stop"() : () -> ()
    %cst_24 = arith.constant 5.000000e-01 : f32
    %50 = vector.broadcast %cst_24 : f32 to vector<8x8x8xf32>
    %51 = arith.mulf %49, %50 : vector<8x8x8xf32>
    %cst_25 = arith.constant dense<0xFF800000> : vector<8x8xf32>
    %52 = vector.multi_reduction <maximumf>, %51, %cst_25 [2] : vector<8x8x8xf32> to vector<8x8xf32>
    %53 = vector.shape_cast %52 : vector<8x8xf32> to vector<8x8x1xf32>
    %54 = vector.broadcast %53 : vector<8x8x1xf32> to vector<8x8x8xf32>
    %55 = arith.subf %51, %54 : vector<8x8x8xf32>
    %56 = math.exp %55 : vector<8x8x8xf32>
    %cst_26 = arith.constant dense<0.000000e+00> : vector<8x8xf32>
    %57 = vector.multi_reduction <add>, %56, %cst_26 [2] : vector<8x8x8xf32> to vector<8x8xf32>
    %58 = vector.shape_cast %57 : vector<8x8xf32> to vector<8x8x1xf32>
    %59 = tpu.reciprocal %58 {approx = true} : vector<8x8x1xf32> -> vector<8x8x1xf32>
    %60 = vector.broadcast %59 : vector<8x8x1xf32> to vector<8x8x8xf32>
    %61 = arith.mulf %56, %60 : vector<8x8x8xf32>
    %62 = arith.truncf %61 : vector<8x8x8xf32> to vector<8x8x8xbf16>
    %63 = arith.truncf %46 : vector<8x8x4xf32> to vector<8x8x4xbf16>
    "tpu.trace_start"() <{level = 10 : i32, message = "bqk,bkd->bqd"}> : () -> ()
    %cst_27 = arith.constant dense<0.000000e+00> : vector<8x8x4xf32>
    %64 = tpu.matmul %62, %63, %cst_27 {dimension_numbers = #tpu.dot_dimension_numbers<[2], [1], [1], [2], [0, 0, 0, 1, 1, 2], [0], [0]>} : vector<8x8x8xbf16>, vector<8x8x4xbf16>, vector<8x8x4xf32> -> vector<8x8x4xf32>
    "tpu.trace_stop"() : () -> ()
    %65 = vector.shape_cast %64 : vector<8x8x4xf32> to vector<64x4xf32>
    %66 = arith.truncf %65 : vector<64x4xf32> to vector<64x4xbf16>
    %c4_28 = arith.constant 4 : index
    %c0_29 = arith.constant 0 : index
    %67 = vector.load %arg4[%c4_28, %c0_29] : memref<8x8xbf16, #tpu.memory_space<vmem>>, vector<4x8xbf16>
    %cst_30 = arith.constant dense<0.000000e+00> : vector<64x8xf32>
    %68 = tpu.matmul %66, %67, %cst_30 {dimension_numbers = #tpu.dot_dimension_numbers<[1], [0], [0], [1], [0, 0, 1, 1], [], []>} : vector<64x4xbf16>, vector<4x8xbf16>, vector<64x8xf32> -> vector<64x8xf32>
    %69 = arith.addf %43, %68 : vector<64x8xf32>
    %70 = vector.broadcast %6 : vector<1x8xf32> to vector<64x8xf32>
    %71 = arith.addf %69, %70 : vector<64x8xf32>
    %72 = arith.addf %5, %71 : vector<64x8xf32>
    %cst_31 = arith.constant dense<0.000000e+00> : vector<64xf32>
    %73 = vector.multi_reduction <add>, %72, %cst_31 [1] : vector<64x8xf32> to vector<64xf32>
    %74 = vector.shape_cast %73 : vector<64xf32> to vector<64x1xf32>
    %cst_32 = arith.constant 8.000000e+00 : f32
    %75 = vector.broadcast %cst_32 : f32 to vector<64x1xf32>
    %76 = arith.divf %74, %75 : vector<64x1xf32>
    %77 = vector.broadcast %76 : vector<64x1xf32> to vector<64x8xf32>
    %78 = arith.subf %72, %77 : vector<64x8xf32>
    %79 = arith.mulf %78, %78 : vector<64x8xf32>
    %cst_33 = arith.constant dense<0.000000e+00> : vector<64xf32>
    %80 = vector.multi_reduction <add>, %79, %cst_33 [1] : vector<64x8xf32> to vector<64xf32>
    %81 = vector.shape_cast %80 : vector<64xf32> to vector<64x1xf32>
    %cst_34 = arith.constant 8.000000e+00 : f32
    %82 = vector.broadcast %cst_34 : f32 to vector<64x1xf32>
    %83 = arith.divf %81, %82 : vector<64x1xf32>
    %cst_35 = arith.constant 9.99999974E-6 : f32
    %84 = vector.broadcast %cst_35 : f32 to vector<64x1xf32>
    %85 = arith.addf %83, %84 : vector<64x1xf32>
    %86 = math.rsqrt %85 : vector<64x1xf32>
    %87 = vector.broadcast %86 : vector<64x1xf32> to vector<64x8xf32>
    %88 = arith.mulf %78, %87 : vector<64x8xf32>
    %89 = vector.broadcast %8 : vector<1x8xf32> to vector<64x8xf32>
    %90 = arith.mulf %88, %89 : vector<64x8xf32>
    %91 = vector.broadcast %9 : vector<1x8xf32> to vector<64x8xf32>
    %92 = arith.addf %90, %91 : vector<64x8xf32>
    %93 = arith.truncf %92 : vector<64x8xf32> to vector<64x8xbf16>
    %c0_36 = arith.constant 0 : index
    %c0_37 = arith.constant 0 : index
    %94 = vector.load %arg5[%c0_36, %c0_37] : memref<8x64xbf16, #tpu.memory_space<vmem>>, vector<8x64xbf16>
    %cst_38 = arith.constant dense<0.000000e+00> : vector<64x64xf32>
    %95 = tpu.matmul %93, %94, %cst_38 {dimension_numbers = #tpu.dot_dimension_numbers<[1], [0], [0], [1], [0, 0, 1, 1], [], []>} : vector<64x8xbf16>, vector<8x64xbf16>, vector<64x64xf32> -> vector<64x64xf32>
    %c0_39 = arith.constant 0 : index
    %c0_40 = arith.constant 0 : index
    %96 = vector.load %arg6[%c0_39, %c0_40] : memref<1x64xf32, #tpu.memory_space<vmem>>, vector<1x64xf32>
    %97 = vector.broadcast %96 : vector<1x64xf32> to vector<64x64xf32>
    %98 = arith.addf %95, %97 : vector<64x64xf32>
    %99 = arith.mulf %98, %98 : vector<64x64xf32>
    %100 = arith.mulf %98, %99 : vector<64x64xf32>
    %cst_41 = arith.constant 4.471500e-02 : f32
    %101 = vector.broadcast %cst_41 : f32 to vector<64x64xf32>
    %102 = arith.mulf %101, %100 : vector<64x64xf32>
    %103 = arith.addf %98, %102 : vector<64x64xf32>
    %cst_42 = arith.constant 0.797884583 : f32
    %104 = vector.broadcast %cst_42 : f32 to vector<64x64xf32>
    %105 = arith.mulf %104, %103 : vector<64x64xf32>
    %106 = math.tanh %105 : vector<64x64xf32>
    %cst_43 = arith.constant 1.000000e+00 : f32
    %107 = vector.broadcast %cst_43 : f32 to vector<64x64xf32>
    %108 = arith.addf %107, %106 : vector<64x64xf32>
    %cst_44 = arith.constant 5.000000e-01 : f32
    %109 = vector.broadcast %cst_44 : f32 to vector<64x64xf32>
    %110 = arith.mulf %109, %108 : vector<64x64xf32>
    %111 = arith.mulf %98, %110 : vector<64x64xf32>
    %112 = arith.truncf %111 : vector<64x64xf32> to vector<64x64xbf16>
    %c0_45 = arith.constant 0 : index
    %c0_46 = arith.constant 0 : index
    %113 = vector.load %arg7[%c0_45, %c0_46] : memref<64x8xbf16, #tpu.memory_space<vmem>>, vector<64x8xbf16>
    %cst_47 = arith.constant dense<0.000000e+00> : vector<64x8xf32>
    %114 = tpu.matmul %112, %113, %cst_47 {dimension_numbers = #tpu.dot_dimension_numbers<[1], [0], [0], [1], [0, 0, 1, 1], [], []>} : vector<64x64xbf16>, vector<64x8xbf16>, vector<64x8xf32> -> vector<64x8xf32>
    %115 = vector.broadcast %7 : vector<1x8xf32> to vector<64x8xf32>
    %116 = arith.addf %114, %115 : vector<64x8xf32>
    %117 = arith.addf %92, %116 : vector<64x8xf32>
    %cst_48 = arith.constant dense<0.000000e+00> : vector<64xf32>
    %118 = vector.multi_reduction <add>, %117, %cst_48 [1] : vector<64x8xf32> to vector<64xf32>
    %119 = vector.shape_cast %118 : vector<64xf32> to vector<64x1xf32>
    %cst_49 = arith.constant 8.000000e+00 : f32
    %120 = vector.broadcast %cst_49 : f32 to vector<64x1xf32>
    %121 = arith.divf %119, %120 : vector<64x1xf32>
    %122 = vector.broadcast %121 : vector<64x1xf32> to vector<64x8xf32>
    %123 = arith.subf %117, %122 : vector<64x8xf32>
    %124 = arith.mulf %123, %123 : vector<64x8xf32>
    %cst_50 = arith.constant dense<0.000000e+00> : vector<64xf32>
    %125 = vector.multi_reduction <add>, %124, %cst_50 [1] : vector<64x8xf32> to vector<64xf32>
    %126 = vector.shape_cast %125 : vector<64xf32> to vector<64x1xf32>
    %cst_51 = arith.constant 8.000000e+00 : f32
    %127 = vector.broadcast %cst_51 : f32 to vector<64x1xf32>
    %128 = arith.divf %126, %127 : vector<64x1xf32>
    %cst_52 = arith.constant 9.99999974E-6 : f32
    %129 = vector.broadcast %cst_52 : f32 to vector<64x1xf32>
    %130 = arith.addf %128, %129 : vector<64x1xf32>
    %131 = math.rsqrt %130 : vector<64x1xf32>
    %132 = vector.broadcast %131 : vector<64x1xf32> to vector<64x8xf32>
    %133 = arith.mulf %123, %132 : vector<64x8xf32>
    %134 = vector.broadcast %10 : vector<1x8xf32> to vector<64x8xf32>
    %135 = arith.mulf %133, %134 : vector<64x8xf32>
    %136 = vector.broadcast %11 : vector<1x8xf32> to vector<64x8xf32>
    %137 = arith.addf %135, %136 : vector<64x8xf32>
    %138 = arith.truncf %137 : vector<64x8xf32> to vector<64x8xbf16>
    %c0_53 = arith.constant 0 : index
    %c0_54 = arith.constant 0 : index
    %139 = vector.load %arg10[%c0_53, %c0_54] : memref<64x8xbf16, #tpu.memory_space<vmem>>, vector<64x8xbf16>
    tpu.vector_store %arg10[%c0_53, %c0_54], %138 {strides = array<i32>} : memref<64x8xbf16, #tpu.memory_space<vmem>>, vector<64x8xbf16>,
    return
  }
  func.func @transform_0(%arg0: i32) -> (i32, i32) {
    %c0_i32 = arith.constant 0 : i32
    %c0_i32_0 = arith.constant 0 : i32
    return %arg0, %c0_i32 : i32, i32
  }
  func.func @transform_1(%arg0: i32) -> (i32, i32) {
    %c0_i32 = arith.constant 0 : i32
    %c0_i32_0 = arith.constant 0 : i32
    %c0_i32_1 = arith.constant 0 : i32
    return %c0_i32, %c0_i32_0 : i32, i32
  }
  func.func @transform_2(%arg0: i32) -> (i32, i32) {
    %c0_i32 = arith.constant 0 : i32
    %c0_i32_0 = arith.constant 0 : i32
    %c0_i32_1 = arith.constant 0 : i32
    return %c0_i32, %c0_i32_0 : i32, i32
  }
  func.func @transform_3(%arg0: i32) -> (i32, i32) {
    %c0_i32 = arith.constant 0 : i32
    %c0_i32_0 = arith.constant 0 : i32
    %c0_i32_1 = arith.constant 0 : i32
    return %c0_i32, %c0_i32_0 : i32, i32
  }
  func.func @transform_4(%arg0: i32) -> (i32, i32) {
    %c0_i32 = arith.constant 0 : i32
    %c0_i32_0 = arith.constant 0 : i32
    %c0_i32_1 = arith.constant 0 : i32
    return %c0_i32, %c0_i32_0 : i32, i32
  }
  func.func @transform_5(%arg0: i32) -> (i32, i32) {
    %c0_i32 = arith.constant 0 : i32
    %c0_i32_0 = arith.constant 0 : i32
    %c0_i32_1 = arith.constant 0 : i32
    return %c0_i32, %c0_i32_0 : i32, i32
  }
  func.func @transform_6(%arg0: i32) -> (i32, i32) {
    %c0_i32 = arith.constant 0 : i32
    %c0_i32_0 = arith.constant 0 : i32
    %c0_i32_1 = arith.constant 0 : i32
    return %c0_i32, %c0_i32_0 : i32, i32
  }
  func.func @transform_7(%arg0: i32) -> (i32, i32) {
    %c0_i32 = arith.constant 0 : i32
    %c0_i32_0 = arith.constant 0 : i32
    %c0_i32_1 = arith.constant 0 : i32
    return %c0_i32, %c0_i32_0 : i32, i32
  }
  func.func @transform_8(%arg0: i32) -> (i32, i32, i32) {
    %c0_i32 = arith.constant 0 : i32
    %c0_i32_0 = arith.constant 0 : i32
    %c0_i32_1 = arith.constant 0 : i32
    return %arg0, %c0_i32, %c0_i32_0 : i32, i32, i32
  }
  func.func @transform_9(%arg0: i32) -> (i32, i32) {
    %c0_i32 = arith.constant 0 : i32
    %c0_i32_0 = arith.constant 0 : i32
    return %arg0, %c0_i32 : i32, i32
  }
}

module attributes {stable_mosaic.version = 11 : i64} {
  func.func @_conv_chain_kernel(%arg0: i32, %arg1: memref<8x128xbf16, #tpu.memory_space<vmem>>, %arg2: memref<4x128xf32, #tpu.memory_space<vmem>>, %arg3: memref<8x128xf32, #tpu.memory_space<vmem>>, %arg4: memref<8x8xbf16, #tpu.memory_space<vmem>>, %arg5: memref<16x8xbf16, #tpu.memory_space<vmem>>, %arg6: memref<16x4xbf16, #tpu.memory_space<vmem>>, %arg7: memref<16x8xbf16, #tpu.memory_space<vmem>>, %arg8: memref<16x3xf32, #tpu.memory_space<vmem>>, %arg9: memref<8x128xf32, #tpu.memory_space<vmem>>, %arg10: memref<8x128xf32, #tpu.memory_space<vmem>>) attributes {dimension_semantics = [#tpu.dimension_semantics<parallel>], iteration_bounds = array<i64: 1>, scalar_prefetch = 0 : i64, scratch_operands = 0 : i64, tpu.core_type = #tpu.core_type<tc>, window_params = [{transform_indices = @transform_0, window_bounds = array<i64: 8, 128>}, {transform_indices = @transform_1, window_bounds = array<i64: 4, 128>}, {transform_indices = @transform_2, window_bounds = array<i64: 8, 128>}, {pipeline_mode = #tpu.pipeline_mode<synchronous>, transform_indices = @transform_3, window_bounds = array<i64: 8, 8>}, {pipeline_mode = #tpu.pipeline_mode<synchronous>, transform_indices = @transform_4, window_bounds = array<i64: 16, 8>}, {pipeline_mode = #tpu.pipeline_mode<synchronous>, transform_indices = @transform_5, window_bounds = array<i64: 16, 4>}, {pipeline_mode = #tpu.pipeline_mode<synchronous>, transform_indices = @transform_6, window_bounds = array<i64: 16, 8>}, {pipeline_mode = #tpu.pipeline_mode<synchronous>, transform_indices = @transform_7, window_bounds = array<i64: 16, 3>}, {transform_indices = @transform_8, window_bounds = array<i64: 8, 128>}, {transform_indices = @transform_9, window_bounds = array<i64: 8, 128>}]} {
    %c0 = arith.constant 0 : index
    %c0_0 = arith.constant 0 : index
    %0 = vector.load %arg8[%c0, %c0_0] : memref<16x3xf32, #tpu.memory_space<vmem>>, vector<8x1xf32>
    %c0_1 = arith.constant 0 : index
    %c0_2 = arith.constant 0 : index
    %1 = vector.load %arg4[%c0_1, %c0_2] : memref<8x8xbf16, #tpu.memory_space<vmem>>, vector<8x8xbf16>
    %c0_3 = arith.constant 0 : index
    %c0_4 = arith.constant 0 : index
    %2 = vector.load %arg1[%c0_3, %c0_4] : memref<8x128xbf16, #tpu.memory_space<vmem>>, vector<8x128xbf16>
    %cst = arith.constant dense<0.000000e+00> : vector<8x128xf32>
    %3 = tpu.matmul %1, %2, %cst {dimension_numbers = #tpu.dot_dimension_numbers<[1], [0], [0], [1], [0, 0, 1, 1], [], []>} : vector<8x8xbf16>, vector<8x128xbf16>, vector<8x128xf32> -> vector<8x128xf32>
    %4 = vector.broadcast %0 : vector<8x1xf32> to vector<8x128xf32>
    %5 = arith.addf %3, %4 : vector<8x128xf32>
    %c0_5 = arith.constant 0 : index
    %c1 = arith.constant 1 : index
    %6 = vector.load %arg8[%c0_5, %c1] : memref<16x3xf32, #tpu.memory_space<vmem>>, vector<16x1xf32>
    %c0_6 = arith.constant 0 : index
    %c0_7 = arith.constant 0 : index
    %7 = vector.load %arg5[%c0_6, %c0_7] : memref<16x8xbf16, #tpu.memory_space<vmem>>, vector<16x8xbf16>
    %8 = arith.truncf %5 : vector<8x128xf32> to vector<8x128xbf16>
    %cst_8 = arith.constant dense<0.000000e+00> : vector<16x128xf32>
    %9 = tpu.matmul %7, %8, %cst_8 {dimension_numbers = #tpu.dot_dimension_numbers<[1], [0], [0], [1], [0, 0, 1, 1], [], []>} : vector<16x8xbf16>, vector<8x128xbf16>, vector<16x128xf32> -> vector<16x128xf32>
    %c0_9 = arith.constant 0 : index
    %c0_10 = arith.constant 0 : index
    %10 = vector.load %arg6[%c0_9, %c0_10] : memref<16x4xbf16, #tpu.memory_space<vmem>>, vector<16x4xbf16>
    %c0_11 = arith.constant 0 : index
    %c0_12 = arith.constant 0 : index
    %11 = vector.load %arg2[%c0_11, %c0_12] : memref<4x128xf32, #tpu.memory_space<vmem>>, vector<4x128xf32>
    %12 = arith.truncf %11 : vector<4x128xf32> to vector<4x128xbf16>
    %cst_13 = arith.constant dense<0.000000e+00> : vector<16x128xf32>
    %13 = tpu.matmul %10, %12, %cst_13 {dimension_numbers = #tpu.dot_dimension_numbers<[1], [0], [0], [1], [0, 0, 1, 1], [], []>} : vector<16x4xbf16>, vector<4x128xbf16>, vector<16x128xf32> -> vector<16x128xf32>
    %14 = arith.addf %9, %13 : vector<16x128xf32>
    %15 = vector.broadcast %6 : vector<16x1xf32> to vector<16x128xf32>
    %16 = arith.addf %14, %15 : vector<16x128xf32>
    %17 = vector.extract_strided_slice %16 {offsets = [0, 0], sizes = [8, 128], strides = [1, 1]} : vector<16x128xf32> to vector<8x128xf32>
    %18 = arith.negf %17 : vector<8x128xf32>
    %19 = math.exp %18 : vector<8x128xf32>
    %cst_14 = arith.constant 1.000000e+00 : f32
    %20 = vector.broadcast %cst_14 : f32 to vector<8x128xf32>
    %21 = arith.addf %20, %19 : vector<8x128xf32>
    %22 = arith.divf %20, %21 : vector<8x128xf32>
    %23 = vector.extract_strided_slice %16 {offsets = [8, 0], sizes = [8, 128], strides = [1, 1]} : vector<16x128xf32> to vector<8x128xf32>
    %24 = math.tanh %23 : vector<8x128xf32>
    %25 = arith.mulf %22, %24 : vector<8x128xf32>
    %c0_15 = arith.constant 0 : index
    %c2 = arith.constant 2 : index
    %26 = vector.load %arg8[%c0_15, %c2] : memref<16x3xf32, #tpu.memory_space<vmem>>, vector<16x1xf32>
    %c0_16 = arith.constant 0 : index
    %c0_17 = arith.constant 0 : index
    %27 = vector.load %arg7[%c0_16, %c0_17] : memref<16x8xbf16, #tpu.memory_space<vmem>>, vector<16x8xbf16>
    %28 = arith.truncf %25 : vector<8x128xf32> to vector<8x128xbf16>
    %cst_18 = arith.constant dense<0.000000e+00> : vector<16x128xf32>
    %29 = tpu.matmul %27, %28, %cst_18 {dimension_numbers = #tpu.dot_dimension_numbers<[1], [0], [0], [1], [0, 0, 1, 1], [], []>} : vector<16x8xbf16>, vector<8x128xbf16>, vector<16x128xf32> -> vector<16x128xf32>
    %30 = vector.broadcast %26 : vector<16x1xf32> to vector<16x128xf32>
    %31 = arith.addf %29, %30 : vector<16x128xf32>
    %c0_19 = arith.constant 0 : index
    %c0_20 = arith.constant 0 : index
    %32 = vector.load %arg3[%c0_19, %c0_20] : memref<8x128xf32, #tpu.memory_space<vmem>>, vector<8x128xf32>
    %33 = vector.extract_strided_slice %31 {offsets = [0, 0], sizes = [8, 128], strides = [1, 1]} : vector<16x128xf32> to vector<8x128xf32>
    %34 = arith.addf %32, %33 : vector<8x128xf32>
    %cst_21 = arith.constant 0.707106769 : f32
    %35 = vector.broadcast %cst_21 : f32 to vector<8x128xf32>
    %36 = arith.mulf %34, %35 : vector<8x128xf32>
    %c0_22 = arith.constant 0 : index
    %c0_23 = arith.constant 0 : index
    %37 = vector.load %arg9[%c0_22, %c0_23] : memref<8x128xf32, #tpu.memory_space<vmem>>, vector<8x128xf32>
    tpu.vector_store %arg9[%c0_22, %c0_23], %36 {strides = array<i32>} : memref<8x128xf32, #tpu.memory_space<vmem>>, vector<8x128xf32>,
    %38 = vector.extract_strided_slice %31 {offsets = [8, 0], sizes = [8, 128], strides = [1, 1]} : vector<16x128xf32> to vector<8x128xf32>
    %c0_24 = arith.constant 0 : index
    %c0_25 = arith.constant 0 : index
    %39 = vector.load %arg10[%c0_24, %c0_25] : memref<8x128xf32, #tpu.memory_space<vmem>>, vector<8x128xf32>
    tpu.vector_store %arg10[%c0_24, %c0_25], %38 {strides = array<i32>} : memref<8x128xf32, #tpu.memory_space<vmem>>, vector<8x128xf32>,
    return
  }
  func.func @transform_0(%arg0: i32) -> (i32, i32) {
    %c0_i32 = arith.constant 0 : i32
    %c0_i32_0 = arith.constant 0 : i32
    return %c0_i32, %arg0 : i32, i32
  }
  func.func @transform_1(%arg0: i32) -> (i32, i32) {
    %c0_i32 = arith.constant 0 : i32
    %c0_i32_0 = arith.constant 0 : i32
    return %c0_i32, %arg0 : i32, i32
  }
  func.func @transform_2(%arg0: i32) -> (i32, i32) {
    %c0_i32 = arith.constant 0 : i32
    %c0_i32_0 = arith.constant 0 : i32
    return %c0_i32, %arg0 : i32, i32
  }
  func.func @transform_3(%arg0: i32) -> (i32, i32) {
    %c0_i32 = arith.constant 0 : i32
    %c0_i32_0 = arith.constant 0 : i32
    %c0_i32_1 = arith.constant 0 : i32
    return %c0_i32, %c0_i32_0 : i32, i32
  }
  func.func @transform_4(%arg0: i32) -> (i32, i32) {
    %c0_i32 = arith.constant 0 : i32
    %c0_i32_0 = arith.constant 0 : i32
    %c0_i32_1 = arith.constant 0 : i32
    return %c0_i32, %c0_i32_0 : i32, i32
  }
  func.func @transform_5(%arg0: i32) -> (i32, i32) {
    %c0_i32 = arith.constant 0 : i32
    %c0_i32_0 = arith.constant 0 : i32
    %c0_i32_1 = arith.constant 0 : i32
    return %c0_i32, %c0_i32_0 : i32, i32
  }
  func.func @transform_6(%arg0: i32) -> (i32, i32) {
    %c0_i32 = arith.constant 0 : i32
    %c0_i32_0 = arith.constant 0 : i32
    %c0_i32_1 = arith.constant 0 : i32
    return %c0_i32, %c0_i32_0 : i32, i32
  }
  func.func @transform_7(%arg0: i32) -> (i32, i32) {
    %c0_i32 = arith.constant 0 : i32
    %c0_i32_0 = arith.constant 0 : i32
    %c0_i32_1 = arith.constant 0 : i32
    return %c0_i32, %c0_i32_0 : i32, i32
  }
  func.func @transform_8(%arg0: i32) -> (i32, i32) {
    %c0_i32 = arith.constant 0 : i32
    %c0_i32_0 = arith.constant 0 : i32
    return %c0_i32, %arg0 : i32, i32
  }
  func.func @transform_9(%arg0: i32) -> (i32, i32) {
    %c0_i32 = arith.constant 0 : i32
    %c0_i32_0 = arith.constant 0 : i32
    return %c0_i32, %arg0 : i32, i32
  }
}

</mosaic_0001>

<llo_original>
// kernel: residual_block_forward.5
$region0: #{residual_block_forward.5}
  #allocation0 [shape = 'u32[]', space=smem, size = 0x4, offset = 0x4, fixed_abs, tag = 'smem constant byte address 0x4 - core index']
  #allocation1 [shape = 'u32[144,128]{1,0:T(1,128)}', space=vmem, size = 0x12000, scoped, tag = 'internal scratch']
  %s0 = inlined_call_operand.vmem [shape: bf16[8,128], index: 0, kind: input, shape index: {}]
  %s1 = inlined_call_operand.vmem [shape: f32[4,128], index: 1, kind: input, shape index: {}]
  %s2 = inlined_call_operand.vmem [shape: f32[8,128], index: 2, kind: input, shape index: {}]
  %s3 = inlined_call_operand.vmem [shape: bf16[8,8], index: 3, kind: input, shape index: {}]
  %s4 = inlined_call_operand.vmem [shape: bf16[16,8], index: 4, kind: input, shape index: {}]
  %s5 = inlined_call_operand.vmem [shape: bf16[16,4], index: 5, kind: input, shape index: {}]
  %s6 = inlined_call_operand.vmem [shape: bf16[16,8], index: 6, kind: input, shape index: {}]
  %s7 = inlined_call_operand.vmem [shape: f32[16,3], index: 7, kind: input, shape index: {}]
  %s8 = inlined_call_operand.vmem [shape: f32[8,128], index: 8, kind: output, shape index: {0}]
  %s9 = inlined_call_operand.vmem [shape: f32[8,128], index: 9, kind: output, shape index: {1}]
  %10 = xla_tuple %s8, %s9
  %s11 = sld [smem:[#allocation0]]
  $region50: #{residual_block_forward.5} parent=0
    _
  %s13 = ssub.s32 1, %s11
  %s14 = scalar_select 0, %s13, %s11
  // Predicated region
  $region2: #{residual_block_forward.5} parent=0 // pred_check
    _
  $region3: #{residual_block_forward.5} parent=0 // pred_check_branch
    %16 = sbr.rel (0) target = $region5
  $region4: #{residual_block_forward.5} parent=0 // pred_region
    _
  $region5: #{residual_block_forward.5} parent=0 // pred_fallthru
    _
  // Predicated region
  $region6: #{residual_block_forward.5} parent=0 // pred_check
    _
  $region7: #{residual_block_forward.5} parent=0 // pred_check_branch
    %18 = sbr.rel (0) target = $region9
  $region8: #{residual_block_forward.5} parent=0 // pred_region
    _
  $region9: #{residual_block_forward.5} parent=0 // pred_fallthru
    _
  // Predicated region
  $region10: #{residual_block_forward.5} parent=0 // pred_check
    _
  $region11: #{residual_block_forward.5} parent=0 // pred_check_branch
    %20 = sbr.rel (0) target = $region13
  $region12: #{residual_block_forward.5} parent=0 // pred_region
    _
  $region13: #{residual_block_forward.5} parent=0 // pred_fallthru
    _
  // Predicated region
  $region14: #{residual_block_forward.5} parent=0 // pred_check
    _
  $region15: #{residual_block_forward.5} parent=0 // pred_check_branch
    %22 = sbr.rel (0) target = $region17
  $region16: #{residual_block_forward.5} parent=0 // pred_region
    _
  $region17: #{residual_block_forward.5} parent=0 // pred_fallthru
    _
  // Predicated region
  $region18: #{residual_block_forward.5} parent=0 // pred_check
    _
  $region19: #{residual_block_forward.5} parent=0 // pred_check_branch
    %24 = sbr.rel (0) target = $region21
  $region20: #{residual_block_forward.5} parent=0 // pred_region
    _
  $region21: #{residual_block_forward.5} parent=0 // pred_fallthru
    _
  // Predicated region
  $region22: #{residual_block_forward.5} parent=0 // pred_check
    _
  $region23: #{residual_block_forward.5} parent=0 // pred_check_branch
    %26 = sbr.rel (0) target = $region25
  $region24: #{residual_block_forward.5} parent=0 // pred_region
    _
  $region25: #{residual_block_forward.5} parent=0 // pred_fallthru
    _
  // Predicated region
  $region26: #{residual_block_forward.5} parent=0 // pred_check
    _
  $region27: #{residual_block_forward.5} parent=0 // pred_check_branch
    %28 = sbr.rel (0) target = $region29
  $region28: #{residual_block_forward.5} parent=0 // pred_region
    _
  $region29: #{residual_block_forward.5} parent=0 // pred_fallthru
    _
  // Predicated region
  $region30: #{residual_block_forward.5} parent=0 // pred_check
    _
  $region31: #{residual_block_forward.5} parent=0 // pred_check_branch
    %30 = sbr.rel (0) target = $region33
  $region32: #{residual_block_forward.5} parent=0 // pred_region
    _
  $region33: #{residual_block_forward.5} parent=0 // pred_fallthru
    _
  %v32 = vld [vmem:[%s7] sm:$0xff]
  %v33 = vld [vmem:[%s3] sm:$0xf]
  %v34 = vld [vmem:[%s0] sm:$0xf]
  %36 = vset.pattern.permute.xlu0 0
  %37 = vperm.xlu0 %36, %v32
  %v38 = vpop.permute.xlu0 %37
  %vm40 = vcmask 64512
  %v42 = vsel %vm40, %v33, 0
  %vm44 = vcmask 1043456
  %v46 = vsel %vm44, %v34, 0
  %48 = vmatprep.subr.bf16.mxu0 0
  %49 = vmatpush1.bf16.msra.mxu0 0
  %50 = vmatprep.subr.bf16.mxu0 0
  %51 = vmatpush1.bf16.msra.mxu0 0
  %52 = vmatprep.subr.bf16.mxu0 0
  %53 = vmatpush1.bf16.msra.mxu0 0
  %54 = vmatprep.subr.bf16.mxu0 0
  %55 = vmatpush1.bf16.msra.mxu0 0
  %56 = vmatprep.subr.bf16.mxu0 0
  %57 = vmatpush1.bf16.msra.mxu0 0
  %58 = vmatprep.subr.bf16.mxu0 0
  %59 = vmatpush1.bf16.msra.mxu0 0
  %60 = vmatprep.subr.bf16.mxu0 0
  %61 = vmatpush1.bf16.msra.mxu0 0
  %62 = vmatprep.subr.bf16.mxu0 0
  %63 = vmatpush1.bf16.msra.mxu0 %v46
  %64 = vmatprep.subr.bf16.mxu0 0
  %65 = vmatpush2.bf16.msra.mxu0 0
  %66 = vmatprep.subr.bf16.mxu0 0
  %67 = vmatpush2.bf16.msra.mxu0 0
  %68 = vmatprep.subr.bf16.mxu0 0
  %69 = vmatpush2.bf16.msra.mxu0 0
  %70 = vmatprep.subr.bf16.mxu0 0
  %71 = vmatpush2.bf16.msra.mxu0 0
  %72 = vmatprep.subr.bf16.mxu0 0
  %73 = vmatpush2.bf16.msra.mxu0 0
  %74 = vmatprep.subr.bf16.mxu0 0
  %75 = vmatpush2.bf16.msra.mxu0 0
  %76 = vmatprep.subr.bf16.mxu0 0
  %77 = vmatpush2.bf16.msra.mxu0 0
  %78 = vmatprep.subr.bf16.mxu0 0
  %79 = vmatpush2.bf16.msra.mxu0 0
  %80 = vmatprep.mubr.bf16.mxu0 0
  %81 = vmatmul.mubr.bf16.gmra.mxu0 %v42
  %v82 = vpop.f32.mrf.mxu0
  %v83 = vadd.f32 %v38, %v82
  %v84 = vpop.f32.mrf.mxu0
  %v85 = vpop.f32.mrf.mxu0
  %v86 = vpop.f32.mrf.mxu0
  %87 = vdwg.mxu0
  %v88 = vld [vmem:[%s7] sm:$0xff]
  %v89 = vld [vmem:[%s7 + $0x8] sm:$0xff]
  %v90 = vld [vmem:[%s4] sm:$0xf]
  %v91 = vld [vmem:[%s4 + $0x4] sm:$0xf]
  %v92 = vpack.c.bf16 %v83, %v83
  %v93 = vld [vmem:[%s5] sm:$0xf]
  %v94 = vld [vmem:[%s5 + $0x4] sm:$0xf]
  %v95 = vld [vmem:[%s1] sm:$0xf]
  %v96 = vpack.c.bf16 %v95, %v95
  %v99 = vunpack.c.l.b16 %v93
  %v100 = vunpack.c.l.b16 %v94
  %v101 = vpack.c.b16 %v100, %v99
  %vm102 = vcmask 31744
  %v104 = vsel %vm102, %v101, 0
  %vm106 = vcmask 1041408
  %v108 = vsel %vm106, %v96, 0
  %110 = vmatprep.subr.bf16.mxu0 0
  %111 = vmatpush1.bf16.msra.mxu0 0
  %112 = vmatprep.subr.bf16.mxu0 0
  %113 = vmatpush1.bf16.msra.mxu0 0
  %114 = vmatprep.subr.bf16.mxu0 0
  %115 = vmatpush1.bf16.msra.mxu0 0
  %116 = vmatprep.subr.bf16.mxu0 0
  %117 = vmatpush1.bf16.msra.mxu0 0
  %118 = vmatprep.subr.bf16.mxu0 0
  %119 = vmatpush1.bf16.msra.mxu0 0
  %120 = vmatprep.subr.bf16.mxu0 0
  %121 = vmatpush1.bf16.msra.mxu0 0
  %122 = vmatprep.subr.bf16.mxu0 0
  %123 = vmatpush1.bf16.msra.mxu0 0
  %124 = vmatprep.subr.bf16.mxu0 0
  %125 = vmatpush1.bf16.msra.mxu0 %v108
  %126 = vmatprep.subr.bf16.mxu0 0
  %127 = vmatpush2.bf16.msra.mxu0 0
  %128 = vmatprep.subr.bf16.mxu0 0
  %129 = vmatpush2.bf16.msra.mxu0 0
  %130 = vmatprep.subr.bf16.mxu0 0
  %131 = vmatpush2.bf16.msra.mxu0 0
  %132 = vmatprep.subr.bf16.mxu0 0
  %133 = vmatpush2.bf16.msra.mxu0 0
  %134 = vmatprep.subr.bf16.mxu0 0
  %135 = vmatpush2.bf16.msra.mxu0 0
  %136 = vmatprep.subr.bf16.mxu0 0
  %137 = vmatpush2.bf16.msra.mxu0 0
  %138 = vmatprep.subr.bf16.mxu0 0
  %139 = vmatpush2.bf16.msra.mxu0 0
  %140 = vmatprep.subr.bf16.mxu0 0
  %141 = vmatpush2.bf16.msra.mxu0 0
  %142 = vmatprep.mubr.bf16.mxu0 0
  %143 = vmatmul.mubr.bf16.gmra.mxu0 %v104
  %v144 = vpop.f32.mrf.mxu0
  %v145 = vadd.f32 0.0, %v144
  %v146 = vpop.f32.mrf.mxu0
  %v147 = vpop.f32.mrf.mxu0
  %v148 = vadd.f32 0.0, %v147
  %v149 = vpop.f32.mrf.mxu0
  %150 = vdwg.mxu0
  %v153 = vunpack.c.l.b16 %v90
  %v154 = vunpack.c.l.b16 %v91
  %v155 = vpack.c.b16 %v154, %v153
  %v157 = vsel %vm40, %v155, 0
  %v160 = vsel %vm44, %v92, 0
  %162 = vmatprep.subr.bf16.mxu0 0
  %163 = vmatpush1.bf16.msra.mxu0 0
  %164 = vmatprep.subr.bf16.mxu0 0
  %165 = vmatpush1.bf16.msra.mxu0 0
  %166 = vmatprep.subr.bf16.mxu0 0
  %167 = vmatpush1.bf16.msra.mxu0 0
  %168 = vmatprep.subr.bf16.mxu0 0
  %169 = vmatpush1.bf16.msra.mxu0 0
  %170 = vmatprep.subr.bf16.mxu0 0
  %171 = vmatpush1.bf16.msra.mxu0 0
  %172 = vmatprep.subr.bf16.mxu0 0
  %173 = vmatpush1.bf16.msra.mxu0 0
  %174 = vmatprep.subr.bf16.mxu0 0
  %175 = vmatpush1.bf16.msra.mxu0 0
  %176 = vmatprep.subr.bf16.mxu0 0
  %177 = vmatpush1.bf16.msra.mxu0 %v160
  %178 = vmatprep.subr.bf16.mxu0 0
  %179 = vmatpush2.bf16.msra.mxu0 0
  %180 = vmatprep.subr.bf16.mxu0 0
  %181 = vmatpush2.bf16.msra.mxu0 0
  %182 = vmatprep.subr.bf16.mxu0 0
  %183 = vmatpush2.bf16.msra.mxu0 0
  %184 = vmatprep.subr.bf16.mxu0 0
  %185 = vmatpush2.bf16.msra.mxu0 0
  %186 = vmatprep.subr.bf16.mxu0 0
  %187 = vmatpush2.bf16.msra.mxu0 0
  %188 = vmatprep.subr.bf16.mxu0 0
  %189 = vmatpush2.bf16.msra.mxu0 0
  %190 = vmatprep.subr.bf16.mxu0 0
  %191 = vmatpush2.bf16.msra.mxu0 0
  %192 = vmatprep.subr.bf16.mxu0 0
  %193 = vmatpush2.bf16.msra.mxu0 0
  %194 = vmatprep.mubr.bf16.mxu0 0
  %195 = vmatmul.mubr.bf16.gmra.mxu0 %v157
  %v196 = vpop.f32.mrf.mxu0
  %v197 = vadd.f32 %v145, %v196
  %v198 = vpop.f32.mrf.mxu0
  %v199 = vpop.f32.mrf.mxu0
  %v200 = vadd.f32 %v148, %v199
  %v201 = vpop.f32.mrf.mxu0
  %202 = vdwg.mxu0
  %204 = vset.pattern.permute.xlu0 1
  %205 = vperm.xlu0 %204, %v88
  %v206 = vpop.permute.xlu0 %205
  %209 = vset.pattern.permute.xlu0 1
  %210 = vperm.xlu0 %209, %v89
  %v211 = vpop.permute.xlu0 %210
  %v213 = vadd.f32 %v197, %v206
  %v214 = vadd.f32 %v200, %v211
  %v215 = vxor.u32 %v213, 2147483648
  %v216 = vmul.f32 %v215, 1.442695
  %v217 = vpow.pop %v216
  %v218 = vadd.f32 %v217, 1.0
  %v219 = vrcp.pop %v218
  %v220 = vmul.f32 1.0, %v219
  %v221 = vtanh.pop %v214
  %v222 = vmul.f32 %v220, %v221
  %v223 = vld [vmem:[%s6] sm:$0xf]
  %v224 = vld [vmem:[%s6 + $0x4] sm:$0xf]
  %v225 = vpack.c.bf16 %v222, %v222
  %226 = vset.pattern.permute.xlu0 2
  %227 = vperm.xlu0 %226, %v88
  %v228 = vpop.permute.xlu0 %227
  %230 = vset.pattern.permute.xlu0 2
  %231 = vperm.xlu0 %230, %v89
  %v232 = vpop.permute.xlu0 %231
  %v236 = vunpack.c.l.b16 %v223
  %v237 = vunpack.c.l.b16 %v224
  %v238 = vpack.c.b16 %v237, %v236
  %v240 = vsel %vm40, %v238, 0
  %v243 = vsel %vm44, %v225, 0
  %245 = vmatprep.subr.bf16.mxu0 0
  %246 = vmatpush1.bf16.msra.mxu0 0
  %247 = vmatprep.subr.bf16.mxu0 0
  %248 = vmatpush1.bf16.msra.mxu0 0
  %249 = vmatprep.subr.bf16.mxu0 0
  %250 = vmatpush1.bf16.msra.mxu0 0
  %251 = vmatprep.subr.bf16.mxu0 0
  %252 = vmatpush1.bf16.msra.mxu0 0
  %253 = vmatprep.subr.bf16.mxu0 0
  %254 = vmatpush1.bf16.msra.mxu0 0
  %255 = vmatprep.subr.bf16.mxu0 0
  %256 = vmatpush1.bf16.msra.mxu0 0
  %257 = vmatprep.subr.bf16.mxu0 0
  %258 = vmatpush1.bf16.msra.mxu0 0
  %259 = vmatprep.subr.bf16.mxu0 0
  %260 = vmatpush1.bf16.msra.mxu0 %v243
  %261 = vmatprep.subr.bf16.mxu0 0
  %262 = vmatpush2.bf16.msra.mxu0 0
  %263 = vmatprep.subr.bf16.mxu0 0
  %264 = vmatpush2.bf16.msra.mxu0 0
  %265 = vmatprep.subr.bf16.mxu0 0
  %266 = vmatpush2.bf16.msra.mxu0 0
  %267 = vmatprep.subr.bf16.mxu0 0
  %268 = vmatpush2.bf16.msra.mxu0 0
  %269 = vmatprep.subr.bf16.mxu0 0
  %270 = vmatpush2.bf16.msra.mxu0 0
  %271 = vmatprep.subr.bf16.mxu0 0
  %272 = vmatpush2.bf16.msra.mxu0 0
  %273 = vmatprep.subr.bf16.mxu0 0
  %274 = vmatpush2.bf16.msra.mxu0 0
  %275 = vmatprep.subr.bf16.mxu0 0
  %276 = vmatpush2.bf16.msra.mxu0 0
  %277 = vmatprep.mubr.bf16.mxu0 0
  %278 = vmatmul.mubr.bf16.gmra.mxu0 %v240
  %v279 = vpop.f32.mrf.mxu0
  %v280 = vadd.f32 %v228, %v279
  %v281 = vpop.f32.mrf.mxu0
  %v282 = vpop.f32.mrf.mxu0
  %v283 = vadd.f32 %v232, %v282
  %v284 = vpop.f32.mrf.mxu0
  %285 = vdwg.mxu0
  %v286 = vld [vmem:[%s2] sm:$0xff]
  %v287 = vadd.f32 %v286, %v280
  %v288 = vmul.f32 %v287, 0.70710677
  %289 = vst [vmem:[%s8] sm:$0xff] %v288
  %290 = vst [vmem:[%s9] sm:$0xff] %v283
  // Predicated region
  $region34: #{residual_block_forward.5} parent=0 // pred_check
    _
  $region35: #{residual_block_forward.5} parent=0 // pred_check_branch
    %292 = sbr.rel (0) target = $region37
  $region36: #{residual_block_forward.5} parent=0 // pred_region
    _
  $region37: #{residual_block_forward.5} parent=0 // pred_fallthru
    _
  // Predicated region
  $region38: #{residual_block_forward.5} parent=0 // pred_check
    _
  $region39: #{residual_block_forward.5} parent=0 // pred_check_branch
    %294 = sbr.rel (0) target = $region41
  $region40: #{residual_block_forward.5} parent=0 // pred_region
    _
  $region41: #{residual_block_forward.5} parent=0 // pred_fallthru
    _
  // Predicated region
  $region42: #{residual_block_forward.5} parent=0 // pred_check
    _
  $region43: #{residual_block_forward.5} parent=0 // pred_check_branch
    %296 = sbr.rel (0) target = $region45
  $region44: #{residual_block_forward.5} parent=0 // pred_region
    _
  $region45: #{residual_block_forward.5} parent=0 // pred_fallthru
    _
  // Predicated region
  $region46: #{residual_block_forward.5} parent=0 // pred_check
    _
  $region47: #{residual_block_forward.5} parent=0 // pred_check_branch
    %298 = sbr.rel (0) target = $region49
  $region48: #{residual_block_forward.5} parent=0 // pred_region
    _
  $region49: #{residual_block_forward.5} parent=0 // pred_fallthru
    _

// kernel: residual_block_forward.3
$region0: #{residual_block_forward.3}
  #allocation0 [shape = 'u32[]', space=smem, size = 0x4, offset = 0x4, fixed_abs, tag = 'smem constant byte address 0x4 - core index']
  #allocation1 [shape = 'u32[144,128]{1,0:T(1,128)}', space=vmem, size = 0x12000, scoped, tag = 'internal scratch']
  %s0 = inlined_call_operand.vmem [shape: f32[128,8], index: 0, kind: input, shape index: {}]
  %s1 = inlined_call_operand.vmem [shape: bf16[8,24], index: 1, kind: input, shape index: {}]
  %s2 = inlined_call_operand.vmem [shape: f32[1,24], index: 2, kind: input, shape index: {}]
  %s3 = inlined_call_operand.vmem [shape: bf16[8,8], index: 3, kind: input, shape index: {}]
  %s4 = inlined_call_operand.vmem [shape: bf16[8,64], index: 4, kind: input, shape index: {}]
  %s5 = inlined_call_operand.vmem [shape: f32[1,64], index: 5, kind: input, shape index: {}]
  %s6 = inlined_call_operand.vmem [shape: bf16[64,8], index: 6, kind: input, shape index: {}]
  %s7 = inlined_call_operand.vmem [shape: f32[6,8], index: 7, kind: input, shape index: {}]
  %s8 = inlined_call_operand.vmem [shape: f32[16,1,8], index: 8, kind: input, shape index: {}]
  %s9 = inlined_call_operand.vmem [shape: bf16[128,8], index: 9, kind: output, shape index: {}]
  %s10 = sld [smem:[#allocation0]]
  $region69: #{residual_block_forward.3} parent=0
    _
  %s12 = ssub.s32 1, %s10
  %s13 = scalar_select 0, %s12, %s10
  loop: start=0, step=1, limit=4
  $region2: #{residual_block_forward.3} parent=0 // loop_pre_header
    _
  $region3: #{residual_block_forward.3} parent=0 // loop_header
    %s15 = sphi 0, %s19
    %p16 = scmp.ge.s32.totalorder %s15, 4
    %s25 = sphi 0, %s27
    %s28 = sphi 0, %s25
    %s29 = sphi 0, %s28
    %s45 = sphi 0, %s29
    %s49 = sphi 0, %s49
    %s51 = sphi 0, %s49
    %s52 = sphi 0, %s51
    %s66 = sphi 0, %s52
    %s70 = sphi 0, %s70
    %s72 = sphi 0, %s70
    %s73 = sphi 0, %s72
    %s87 = sphi 0, %s73
    %s91 = sphi 0, %s91
    %s93 = sphi 0, %s91
    %s94 = sphi 0, %s93
    %s108 = sphi 0, %s94
    %s112 = sphi 0, %s112
    %s114 = sphi 0, %s112
    %s115 = sphi 0, %s114
    %s129 = sphi 0, %s115
    %s133 = sphi 0, %s133
    %s135 = sphi 0, %s133
    %s136 = sphi 0, %s135
    %s150 = sphi 0, %s136
    %s154 = sphi 0, %s154
    %s156 = sphi 0, %s154
    %s157 = sphi 0, %s156
    %s171 = sphi 0, %s157
    %s175 = sphi 0, %s175
    %s177 = sphi 0, %s175
    %s178 = sphi 0, %s177
    %s192 = sphi 0, %s178
    %s198 = sphi 0, %s200
    %s201 = sphi 0, %s198
    %s202 = sphi 0, %s201
    %s218 = sphi 0, %s202
    %s224 = sphi 0, %s226
    %s227 = sphi 0, %s224
    %s228 = sphi 0, %s227
    %s244 = sphi 0, %s228
  $region4: #{residual_block_forward.3} parent=0 // loop_header_branch
    %18 = sbr.rel (%p16) target = $region8
  $region5: #{residual_block_forward.3} parent=0 // loop_body
    %s20 = ssub.s32 %s15, 1
    %s21 = ssub.s32 %s15, 2
    %s22 = sadd.s32 %s15, 1
    %s23 = ssub.s32 %s15, %s22
    %p24 = scmp.eq.s32.totalorder %s23, 0
    %s26 = sadd.s32 %s25, 1
    %s27 = scalar_select %p24, %s25, %s26
    %p30 = pneg %p24
    %p31 = scmp.eq.s32.totalorder %s15, 1
    %p32 = por %p30, %p31
    %p33 = scmp.ne.s32.totalorder %s25, %s28
    %p34 = scmp.eq.s32.totalorder %s15, 0
    %p35 = por %p33, %p34
    %p36 = scmp.ne.s32.totalorder %s25, %s28
    %p37 = scmp.eq.s32.totalorder %s20, 1
    %p38 = por %p36, %p37
    %p39 = scmp.ne.s32.totalorder %s28, %s29
    %p40 = scmp.eq.s32.totalorder %s20, 0
    %p41 = por %p39, %p40
    %p42 = scmp.ne.s32.totalorder %s28, %s29
    %p43 = scmp.eq.s32.totalorder %s21, 1
    %p44 = por %p42, %p43
    %p46 = scmp.ne.s32.totalorder %s29, %s45
    %p47 = scmp.eq.s32.totalorder %s21, 0
    %p48 = por %p46, %p47
    %s50 = sadd.s32 %s49, 1
    %p53 = scmp.eq.s32.totalorder %s15, 1
    %p54 = scmp.ne.s32.totalorder %s49, %s51
    %p55 = scmp.eq.s32.totalorder %s15, 0
    %p56 = por %p54, %p55
    %p57 = scmp.ne.s32.totalorder %s49, %s51
    %p58 = scmp.eq.s32.totalorder %s20, 1
    %p59 = por %p57, %p58
    %p60 = scmp.ne.s32.totalorder %s51, %s52
    %p61 = scmp.eq.s32.totalorder %s20, 0
    %p62 = por %p60, %p61
    %p63 = scmp.ne.s32.totalorder %s51, %s52
    %p64 = scmp.eq.s32.totalorder %s21, 1
    %p65 = por %p63, %p64
    %p67 = scmp.ne.s32.totalorder %s52, %s66
    %p68 = scmp.eq.s32.totalorder %s21, 0
    %p69 = por %p67, %p68
    %s71 = sadd.s32 %s70, 1
    %p74 = scmp.eq.s32.totalorder %s15, 1
    %p75 = scmp.ne.s32.totalorder %s70, %s72
    %p76 = scmp.eq.s32.totalorder %s15, 0
    %p77 = por %p75, %p76
    %p78 = scmp.ne.s32.totalorder %s70, %s72
    %p79 = scmp.eq.s32.totalorder %s20, 1
    %p80 = por %p78, %p79
    %p81 = scmp.ne.s32.totalorder %s72, %s73
    %p82 = scmp.eq.s32.totalorder %s20, 0
    %p83 = por %p81, %p82
    %p84 = scmp.ne.s32.totalorder %s72, %s73
    %p85 = scmp.eq.s32.totalorder %s21, 1
    %p86 = por %p84, %p85
    %p88 = scmp.ne.s32.totalorder %s73, %s87
    %p89 = scmp.eq.s32.totalorder %s21, 0
    %p90 = por %p88, %p89
    %s92 = sadd.s32 %s91, 1
    %p95 = scmp.eq.s32.totalorder %s15, 1
    %p96 = scmp.ne.s32.totalorder %s91, %s93
    %p97 = scmp.eq.s32.totalorder %s15, 0
    %p98 = por %p96, %p97
    %p99 = scmp.ne.s32.totalorder %s91, %s93
    %p100 = scmp.eq.s32.totalorder %s20, 1
    %p101 = por %p99, %p100
    %p102 = scmp.ne.s32.totalorder %s93, %s94
    %p103 = scmp.eq.s32.totalorder %s20, 0
    %p104 = por %p102, %p103
    %p105 = scmp.ne.s32.totalorder %s93, %s94
    %p106 = scmp.eq.s32.totalorder %s21, 1
    %p107 = por %p105, %p106
    %p109 = scmp.ne.s32.totalorder %s94, %s108
    %p110 = scmp.eq.s32.totalorder %s21, 0
    %p111 = por %p109, %p110
    %s113 = sadd.s32 %s112, 1
    %p116 = scmp.eq.s32.totalorder %s15, 1
    %p117 = scmp.ne.s32.totalorder %s112, %s114
    %p118 = scmp.eq.s32.totalorder %s15, 0
    %p119 = por %p117, %p118
    %p120 = scmp.ne.s32.totalorder %s112, %s114
    %p121 = scmp.eq.s32.totalorder %s20, 1
    %p122 = por %p120, %p121
    %p123 = scmp.ne.s32.totalorder %s114, %s115
    %p124 = scmp.eq.s32.totalorder %s20, 0
    %p125 = por %p123, %p124
    %p126 = scmp.ne.s32.totalorder %s114, %s115
    %p127 = scmp.eq.s32.totalorder %s21, 1
    %p128 = por %p126, %p127
    %p130 = scmp.ne.s32.totalorder %s115, %s129
    %p131 = scmp.eq.s32.totalorder %s21, 0
    %p132 = por %p130, %p131
    %s134 = sadd.s32 %s133, 1
    %p137 = scmp.eq.s32.totalorder %s15, 1
    %p138 = scmp.ne.s32.totalorder %s133, %s135
    %p139 = scmp.eq.s32.totalorder %s15, 0
    %p140 = por %p138, %p139
    %p141 = scmp.ne.s32.totalorder %s133, %s135
    %p142 = scmp.eq.s32.totalorder %s20, 1
    %p143 = por %p141, %p142
    %p144 = scmp.ne.s32.totalorder %s135, %s136
    %p145 = scmp.eq.s32.totalorder %s20, 0
    %p146 = por %p144, %p145
    %p147 = scmp.ne.s32.totalorder %s135, %s136
    %p148 = scmp.eq.s32.totalorder %s21, 1
    %p149 = por %p147, %p148
    %p151 = scmp.ne.s32.totalorder %s136, %s150
    %p152 = scmp.eq.s32.totalorder %s21, 0
    %p153 = por %p151, %p152
    %s155 = sadd.s32 %s154, 1
    %p158 = scmp.eq.s32.totalorder %s15, 1
    %p159 = scmp.ne.s32.totalorder %s154, %s156
    %p160 = scmp.eq.s32.totalorder %s15, 0
    %p161 = por %p159, %p160
    %p162 = scmp.ne.s32.totalorder %s154, %s156
    %p163 = scmp.eq.s32.totalorder %s20, 1
    %p164 = por %p162, %p163
    %p165 = scmp.ne.s32.totalorder %s156, %s157
    %p166 = scmp.eq.s32.totalorder %s20, 0
    %p167 = por %p165, %p166
    %p168 = scmp.ne.s32.totalorder %s156, %s157
    %p169 = scmp.eq.s32.totalorder %s21, 1
    %p170 = por %p168, %p169
    %p172 = scmp.ne.s32.totalorder %s157, %s171
    %p173 = scmp.eq.s32.totalorder %s21, 0
    %p174 = por %p172, %p173
    %s176 = sadd.s32 %s175, 1
    %p179 = scmp.eq.s32.totalorder %s15, 1
    %p180 = scmp.ne.s32.totalorder %s175, %s177
    %p181 = scmp.eq.s32.totalorder %s15, 0
    %p182 = por %p180, %p181
    %p183 = scmp.ne.s32.totalorder %s175, %s177
    %p184 = scmp.eq.s32.totalorder %s20, 1
    %p185 = por %p183, %p184
    %p186 = scmp.ne.s32.totalorder %s177, %s178
    %p187 = scmp.eq.s32.totalorder %s20, 0
    %p188 = por %p186, %p187
    %p189 = scmp.ne.s32.totalorder %s177, %s178
    %p190 = scmp.eq.s32.totalorder %s21, 1
    %p191 = por %p189, %p190
    %p193 = scmp.ne.s32.totalorder %s178, %s192
    %p194 = scmp.eq.s32.totalorder %s21, 0
    %p195 = por %p193, %p194
    %s196 = ssub.s32 %s15, %s22
    %p197 = scmp.eq.s32.totalorder %s196, 0
    %s199 = sadd.s32 %s198, 1
    %s200 = scalar_select %p197, %s198, %s199
    %p203 = pneg %p197
    %p204 = scmp.eq.s32.totalorder %s15, 1
    %p205 = por %p203, %p204
    %p206 = scmp.ne.s32.totalorder %s198, %s201
    %p207 = scmp.eq.s32.totalorder %s15, 0
    %p208 = por %p206, %p207
    %p209 = scmp.ne.s32.totalorder %s198, %s201
    %p210 = scmp.eq.s32.totalorder %s20, 1
    %p211 = por %p209, %p210
    %p212 = scmp.ne.s32.totalorder %s201, %s202
    %p213 = scmp.eq.s32.totalorder %s20, 0
    %p214 = por %p212, %p213
    %p215 = scmp.ne.s32.totalorder %s201, %s202
    %p216 = scmp.eq.s32.totalorder %s21, 1
    %p217 = por %p215, %p216
    %p219 = scmp.ne.s32.totalorder %s202, %s218
    %p220 = scmp.eq.s32.totalorder %s21, 0
    %p221 = por %p219, %p220
    %s222 = ssub.s32 %s15, %s22
    %p223 = scmp.eq.s32.totalorder %s222, 0
    %s225 = sadd.s32 %s224, 1
    %s226 = scalar_select %p223, %s224, %s225
    %p229 = pneg %p223
    %p230 = scmp.eq.s32.totalorder %s15, 1
    %p231 = por %p229, %p230
    %p232 = scmp.ne.s32.totalorder %s224, %s227
    %p233 = scmp.eq.s32.totalorder %s15, 0
    %p234 = por %p232, %p233
    %p235 = scmp.ne.s32.totalorder %s224, %s227
    %p236 = scmp.eq.s32.totalorder %s20, 1
    %p237 = por %p235, %p236
    %p238 = scmp.ne.s32.totalorder %s227, %s228
    %p239 = scmp.eq.s32.totalorder %s20, 0
    %p240 = por %p238, %p239
    %p241 = scmp.ne.s32.totalorder %s227, %s228
    %p242 = scmp.eq.s32.totalorder %s21, 1
    %p243 = por %p241, %p242
    %p245 = scmp.ne.s32.totalorder %s228, %s244
    %p246 = scmp.eq.s32.totalorder %s21, 0
    %p247 = por %p245, %p246
    %p248 = scmp.le.s32.totalorder 1, %s15
    %p249 = scmp.lt.s32.totalorder %s15, 3
    %p250 = pnand %p248, %p249
    %p251 = pneg %p250
    // Predicated region
    $region9: #{residual_block_forward.3} parent=5 // pred_check
      _
    $region10: #{residual_block_forward.3} parent=5 // pred_check_branch
      %253 = sbr.rel (%p250) target = $region12
    $region11: #{residual_block_forward.3} parent=5 // pred_region
      %s254 = ssub.s32 %s15, 1
      // Predicated region
      $region13: #{residual_block_forward.3} parent=11 // pred_check
        %p255 = pneg %p62
      $region14: #{residual_block_forward.3} parent=11 // pred_check_branch
        %257 = sbr.rel (%p255) target = $region16
      $region15: #{residual_block_forward.3} parent=11 // pred_region
        _
      $region16: #{residual_block_forward.3} parent=11 // pred_fallthru
        _
      // Predicated region
      $region17: #{residual_block_forward.3} parent=11 // pred_check
        %p258 = pneg %p83
      $region18: #{residual_block_forward.3} parent=11 // pred_check_branch
        %260 = sbr.rel (%p258) target = $region20
      $region19: #{residual_block_forward.3} parent=11 // pred_region
        _
      $region20: #{residual_block_forward.3} parent=11 // pred_fallthru
        _
      // Predicated region
      $region21: #{residual_block_forward.3} parent=11 // pred_check
        %p261 = pneg %p104
      $region22: #{residual_block_forward.3} parent=11 // pred_check_branch
        %263 = sbr.rel (%p261) target = $region24
      $region23: #{residual_block_forward.3} parent=11 // pred_region
        _
      $region24: #{residual_block_forward.3} parent=11 // pred_fallthru
        _
      // Predicated region
      $region25: #{residual_block_forward.3} parent=11 // pred_check
        %p264 = pneg %p125
      $region26: #{residual_block_forward.3} parent=11 // pred_check_branch
        %266 = sbr.rel (%p264) target = $region28
      $region27: #{residual_block_forward.3} parent=11 // pred_region
        _
      $region28: #{residual_block_forward.3} parent=11 // pred_fallthru
        _
      // Predicated region
      $region29: #{residual_block_forward.3} parent=11 // pred_check
        %p267 = pneg %p146
      $region30: #{residual_block_forward.3} parent=11 // pred_check_branch
        %269 = sbr.rel (%p267) target = $region32
      $region31: #{residual_block_forward.3} parent=11 // pred_region
        _
      $region32: #{residual_block_forward.3} parent=11 // pred_fallthru
        _
      // Predicated region
      $region33: #{residual_block_forward.3} parent=11 // pred_check
        %p270 = pneg %p167
      $region34: #{residual_block_forward.3} parent=11 // pred_check_branch
        %272 = sbr.rel (%p270) target = $region36
      $region35: #{residual_block_forward.3} parent=11 // pred_region
        _
      $region36: #{residual_block_forward.3} parent=11 // pred_fallthru
        _
      // Predicated region
      $region37: #{residual_block_forward.3} parent=11 // pred_check
        %p273 = pneg %p188
      $region38: #{residual_block_forward.3} parent=11 // pred_check_branch
        %275 = sbr.rel (%p273) target = $region40
      $region39: #{residual_block_forward.3} parent=11 // pred_region
        _
      $region40: #{residual_block_forward.3} parent=11 // pred_fallthru
        _
    $region12: #{residual_block_forward.3} parent=5 // pred_fallthru
      _
    %p276 = scmp.lt.s32.totalorder %s15, 2
    // Predicated region
    $region41: #{residual_block_forward.3} parent=5 // pred_check
      %p277 = pneg %p276
    $region42: #{residual_block_forward.3} parent=5 // pred_check_branch
      %279 = sbr.rel (%p277) target = $region44
    $region43: #{residual_block_forward.3} parent=5 // pred_region
      // Predicated region
      $region45: #{residual_block_forward.3} parent=43 // pred_check
        %p280 = pneg %p35
      $region46: #{residual_block_forward.3} parent=43 // pred_check_branch
        %282 = sbr.rel (%p280) target = $region48
      $region47: #{residual_block_forward.3} parent=43 // pred_region
        %s283 = smul.u32 8, %s15
        %p284 = scmp.lt.s32.totalorder %s283, 15
        %s285 = scalar_select %p284, %s283, 15
        %s286 = smul.addr %s285, 8
        %s287 = scalar_lea.vmem %s0, %s286
        %s288 = smul.u32 8, %s15
      $region48: #{residual_block_forward.3} parent=43 // pred_fallthru
        _
      // Predicated region
      $region49: #{residual_block_forward.3} parent=43 // pred_check
        %p289 = pneg %p208
      $region50: #{residual_block_forward.3} parent=43 // pred_check_branch
        %291 = sbr.rel (%p289) target = $region52
      $region51: #{residual_block_forward.3} parent=43 // pred_region
        %s292 = smul.u32 8, %s15
        %p293 = scmp.lt.s32.totalorder %s292, 15
        %s294 = scalar_select %p293, %s292, 15
        %s295 = scalar_lea.vmem %s8, %s294
        %s296 = smul.u32 8, %s15
      $region52: #{residual_block_forward.3} parent=43 // pred_fallthru
        _
    $region44: #{residual_block_forward.3} parent=5 // pred_fallthru
      _
    %p297 = scmp.le.s32.totalorder 1, %s15
    %p298 = scmp.lt.s32.totalorder %s15, 3
    %p299 = pnand %p297, %p298
    %p300 = pneg %p299
    // Predicated region
    $region53: #{residual_block_forward.3} parent=5 // pred_check
      _
    $region54: #{residual_block_forward.3} parent=5 // pred_check_branch
      %302 = sbr.rel (%p299) target = $region56
    $region55: #{residual_block_forward.3} parent=5 // pred_region
      %s303 = ssub.s32 %s15, 1
      %s304 = smul.u32 8, %s20
      %p305 = scmp.lt.s32.totalorder %s304, 15
      %s306 = scalar_select %p305, %s304, 15
      %s307 = smul.addr %s306, 8
      %s308 = scalar_lea.vmem %s0, %s307
      %p309 = pneg %p41
      %p310 = pneg %p38
      %p311 = pneg %p62
      %p312 = pneg %p59
      %p313 = pneg %p83
      %p314 = pneg %p80
      %p315 = pneg %p104
      %p316 = pneg %p101
      %p317 = pneg %p125
      %p318 = pneg %p122
      %p319 = pneg %p146
      %p320 = pneg %p143
      %p321 = pneg %p167
      %p322 = pneg %p164
      %p323 = pneg %p188
      %p324 = pneg %p185
      %s325 = smul.u32 8, %s20
      %p326 = scmp.lt.s32.totalorder %s325, 15
      %s327 = scalar_select %p326, %s325, 15
      %s328 = scalar_lea.vmem %s8, %s327
      %p329 = pneg %p214
      %p330 = pneg %p211
      %p331 = pneg %p240
      %p332 = pneg %p237
      %s333 = smul.u32 8, %s20
      %p334 = scmp.lt.s32.totalorder %s333, 15
      %s335 = scalar_select %p334, %s333, 15
      %s336 = smul.addr %s335, 4
      %s337 = scalar_lea.vmem %s9, %s336
      %s338 = smul.u32 8, %s20
      %p339 = scmp.lt.s32.totalorder %s338, 15
      %s340 = scalar_select %p339, %s338, 15
      %s341 = smul.addr %s340, 8
      %s342 = scalar_lea.vmem %s0, %s341
      %s343 = smul.u32 8, %s20
      %s344 = smul.u32 8, %s20
      %p345 = scmp.lt.s32.totalorder %s344, 15
      %s346 = scalar_select %p345, %s344, 15
      %s347 = scalar_lea.vmem %s8, %s346
      %s348 = smul.u32 8, %s20
      %s349 = smul.u32 8, %s20
      %p350 = scmp.lt.s32.totalorder %s349, 15
      %s351 = scalar_select %p350, %s349, 15
      %s352 = smul.addr %s351, 4
      %s353 = scalar_lea.vmem %s9, %s352
      %s354 = smul.u32 8, %s20
      %v356 = vld [vmem:[%s342] sm:$0xff]
      %v357 = vld [vmem:[%s342 + $0x8] sm:$0xff]
      %v358 = vld [vmem:[%s342 + $0x10] sm:$0xff]
      %v359 = vld [vmem:[%s342 + $0x18] sm:$0xff]
      %v360 = vld [vmem:[%s342 + $0x20] sm:$0xff]
      %v361 = vld [vmem:[%s342 + $0x28] sm:$0xff]
      %v362 = vld [vmem:[%s342 + $0x30] sm:$0xff]
      %v363 = vld [vmem:[%s342 + $0x38] sm:$0xff]
      %v364 = vld [vmem:[%s347] sm:$0x1]
      %v365 = vld [vmem:[%s347 + $0x1] sm:$0x1]
      %v366 = vld [vmem:[%s347 + $0x2] sm:$0x1]
      %v367 = vld [vmem:[%s347 + $0x3] sm:$0x1]
      %v368 = vld [vmem:[%s347 + $0x4] sm:$0x1]
      %v369 = vld [vmem:[%s347 + $0x5] sm:$0x1]
      %v370 = vld [vmem:[%s347 + $0x6] sm:$0x1]
      %v371 = vld [vmem:[%s347 + $0x7] sm:$0x1]
      %v380 = vlaneseq
      %v381 = vshrl.u32 %v380, 7
      %v382 = vsub.s32 0, %v381
      %v383 = vrot.slane %v364, %v382
      %v384 = vlaneseq
      %v385 = vshrl.u32 %v384, 7
      %v386 = vsub.s32 0, %v385
      %v387 = vrot.slane %v365, %v386
      %v388 = vlaneseq
      %v389 = vshrl.u32 %v388, 7
      %v390 = vsub.s32 0, %v389
      %v391 = vrot.slane %v366, %v390
      %v392 = vlaneseq
      %v393 = vshrl.u32 %v392, 7
      %v394 = vsub.s32 0, %v393
      %v395 = vrot.slane %v367, %v394
      %v396 = vlaneseq
      %v397 = vshrl.u32 %v396, 7
      %v398 = vsub.s32 0, %v397
      %v399 = vrot.slane %v368, %v398
      %v400 = vlaneseq
      %v401 = vshrl.u32 %v400, 7
      %v402 = vsub.s32 0, %v401
      %v403 = vrot.slane %v369, %v402
      %v404 = vlaneseq
      %v405 = vshrl.u32 %v404, 7
      %v406 = vsub.s32 0, %v405
      %v407 = vrot.slane %v370, %v406
      %v408 = vlaneseq
      %v409 = vshrl.u32 %v408, 7
      %v410 = vsub.s32 0, %v409
      %v411 = vrot.slane %v371, %v410
      %v420 = vadd.f32 %v356, %v383
      %v421 = vadd.f32 %v357, %v387
      %v422 = vadd.f32 %v358, %v391
      %v423 = vadd.f32 %v359, %v395
      %v424 = vadd.f32 %v360, %v399
      %v425 = vadd.f32 %v361, %v403
      %v426 = vadd.f32 %v362, %v407
      %v427 = vadd.f32 %v363, %v411
      %v428 = vld [vmem:[%s7] sm:$0x1]
      %v429 = vld [vmem:[%s7 + $0x1] sm:$0x1]
      %v430 = vld [vmem:[%s7 + $0x2] sm:$0x1]
      %v431 = vld [vmem:[%s7 + $0x3] sm:$0x1]
      %v432 = vld [vmem:[%s7 + $0x4] sm:$0x1]
      %v433 = vld [vmem:[%s7 + $0x5] sm:$0x1]
      %v434 = vpack.c.bf16 %v421, %v420
      %v435 = vpack.c.bf16 %v423, %v422
      %v436 = vpack.c.bf16 %v425, %v424
      %v437 = vpack.c.bf16 %v427, %v426
      %v438 = vld [vmem:[%s1] sm:$0xf]
      %v439 = vld [vmem:[%s2] sm:$0x1]
      %v441 = vlaneseq
      %v442 = vshrl.u32 %v441, 7
      %v443 = vsub.s32 0, %v442
      %v444 = vrot.slane %v439, %v443
      %vm446 = vcmask 64512
      %v448 = vsel %vm446, %v434, 0
      %v451 = vsel %vm446, %v435, 0
      %v454 = vsel %vm446, %v436, 0
      %v457 = vsel %vm446, %v437, 0
      %vm459 = vcmask 1043456
      %v461 = vsel %vm459, %v438, 0
      %463 = vmatprep.subr.bf16.mxu0 0
      %464 = vmatpush1.bf16.msra.mxu0 0
      %465 = vmatprep.subr.bf16.mxu0 0
      %466 = vmatpush1.bf16.msra.mxu0 0
      %467 = vmatprep.subr.bf16.mxu0 0
      %468 = vmatpush1.bf16.msra.mxu0 0
      %469 = vmatprep.subr.bf16.mxu0 0
      %470 = vmatpush1.bf16.msra.mxu0 0
      %471 = vmatprep.subr.bf16.mxu0 0
      %472 = vmatpush1.bf16.msra.mxu0 0
      %473 = vmatprep.subr.bf16.mxu0 0
      %474 = vmatpush1.bf16.msra.mxu0 0
      %475 = vmatprep.subr.bf16.mxu0 0
      %476 = vmatpush1.bf16.msra.mxu0 0
      %477 = vmatprep.subr.bf16.mxu0 0
      %478 = vmatpush1.bf16.msra.mxu0 %v461
      %479 = vmatprep.subr.bf16.mxu0 0
      %480 = vmatpush2.bf16.msra.mxu0 0
      %481 = vmatprep.subr.bf16.mxu0 0
      %482 = vmatpush2.bf16.msra.mxu0 0
      %483 = vmatprep.subr.bf16.mxu0 0
      %484 = vmatpush2.bf16.msra.mxu0 0
      %485 = vmatprep.subr.bf16.mxu0 0
      %486 = vmatpush2.bf16.msra.mxu0 0
      %487 = vmatprep.subr.bf16.mxu0 0
      %488 = vmatpush2.bf16.msra.mxu0 0
      %489 = vmatprep.subr.bf16.mxu0 0
      %490 = vmatpush2.bf16.msra.mxu0 0
      %491 = vmatprep.subr.bf16.mxu0 0
      %492 = vmatpush2.bf16.msra.mxu0 0
      %493 = vmatprep.subr.bf16.mxu0 0
      %494 = vmatpush2.bf16.msra.mxu0 0
      %495 = vmatprep.mubr.bf16.mxu0 0
      %496 = vmatmul.mubr.bf16.gmra.mxu0 %v448
      %v497 = vpop.f32.mrf.mxu0
      %v498 = vadd.f32 %v444, %v497
      %v499 = vpop.f32.mrf.mxu0
      %v500 = vpop.f32.mrf.mxu0
      %v501 = vadd.f32 %v444, %v500
      %v502 = vpop.f32.mrf.mxu0
      %503 = vmatprep.mubr.bf16.mxu0 0
      %504 = vmatmul.mubr.bf16.gmra.mxu0 %v451
      %v505 = vpop.f32.mrf.mxu0
      %v506 = vadd.f32 %v444, %v505
      %v507 = vpop.f32.mrf.mxu0
      %v508 = vpop.f32.mrf.mxu0
      %v509 = vadd.f32 %v444, %v508
      %v510 = vpop.f32.mrf.mxu0
      %511 = vmatprep.mubr.bf16.mxu0 0
      %512 = vmatmul.mubr.bf16.gmra.mxu0 %v454
      %v513 = vpop.f32.mrf.mxu0
      %v514 = vadd.f32 %v444, %v513
      %v515 = vpop.f32.mrf.mxu0
      %v516 = vpop.f32.mrf.mxu0
      %v517 = vadd.f32 %v444, %v516
      %v518 = vpop.f32.mrf.mxu0
      %519 = vmatprep.mubr.bf16.mxu0 0
      %520 = vmatmul.mubr.bf16.gmra.mxu0 %v457
      %v521 = vpop.f32.mrf.mxu0
      %v522 = vadd.f32 %v444, %v521
      %v523 = vpop.f32.mrf.mxu0
      %v524 = vpop.f32.mrf.mxu0
      %v525 = vadd.f32 %v444, %v524
      %v526 = vpop.f32.mrf.mxu0
      %527 = vdwg.mxu0
      %v528 = vpack.c.bf16 %v498, %v498
      %v529 = vpack.c.bf16 %v501, %v501
      %v530 = vpack.c.bf16 %v506, %v506
      %v531 = vpack.c.bf16 %v509, %v509
      %v532 = vpack.c.bf16 %v514, %v514
      %v533 = vpack.c.bf16 %v517, %v517
      %v534 = vpack.c.bf16 %v522, %v522
      %v535 = vpack.c.bf16 %v525, %v525
      %537 = vrot.lane.b32.xlu0 %v528, 120
      %v538 = vpop.permute.xlu0 %537
      %vm539 = vcmask 31744
      %v541 = vsel %vm539, %v528, 0
      %v544 = vsel %vm539, %v538, 0
      %546 = vmatprep.subr.bf16.mxu0 0
      %547 = vmatpush1.bf16.xpose.msra.mxu0 0
      %548 = vmatprep.subr.bf16.mxu0 0
      %549 = vmatpush1.bf16.xpose.msra.mxu0 0
      %550 = vmatprep.subr.bf16.mxu0 0
      %551 = vmatpush1.bf16.xpose.msra.mxu0 0
      %552 = vmatprep.subr.bf16.mxu0 0
      %553 = vmatpush1.bf16.xpose.msra.mxu0 0
      %554 = vmatprep.subr.bf16.mxu0 0
      %555 = vmatpush1.bf16.xpose.msra.mxu0 0
      %556 = vmatprep.subr.bf16.mxu0 0
      %557 = vmatpush1.bf16.xpose.msra.mxu0 0
      %558 = vmatprep.subr.bf16.mxu0 0
      %559 = vmatpush1.bf16.xpose.msra.mxu0 0
      %560 = vmatprep.subr.bf16.mxu0 0
      %561 = vmatpush1.bf16.xpose.msra.mxu0 %v544
      %562 = vmatprep.subr.bf16.mxu0 0
      %563 = vmatpush2.bf16.xpose.msra.mxu0 0
      %564 = vmatprep.subr.bf16.mxu0 0
      %565 = vmatpush2.bf16.xpose.msra.mxu0 0
      %566 = vmatprep.subr.bf16.mxu0 0
      %567 = vmatpush2.bf16.xpose.msra.mxu0 0
      %568 = vmatprep.subr.bf16.mxu0 0
      %569 = vmatpush2.bf16.xpose.msra.mxu0 0
      %570 = vmatprep.subr.bf16.mxu0 0
      %571 = vmatpush2.bf16.xpose.msra.mxu0 0
      %572 = vmatprep.subr.bf16.mxu0 0
      %573 = vmatpush2.bf16.xpose.msra.mxu0 0
      %574 = vmatprep.subr.bf16.mxu0 0
      %575 = vmatpush2.bf16.xpose.msra.mxu0 0
      %576 = vmatprep.subr.bf16.mxu0 0
      %577 = vmatpush2.bf16.xpose.msra.mxu0 0
      %578 = vmatprep.mubr.bf16.mxu0 0
      %579 = vmatmul.mubr.bf16.gmra.mxu0 %v541
      %v580 = vpop.f32.mrf.mxu0
      %v581 = vadd.f32 0.0, %v580
      %v582 = vpop.f32.mrf.mxu0
      %v583 = vpop.f32.mrf.mxu0
      %v584 = vpop.f32.mrf.mxu0
      %585 = vdwg.mxu0
      %587 = vrot.lane.b32.xlu0 %v529, 120
      %v588 = vpop.permute.xlu0 %587
      %v590 = vsel %vm539, %v529, 0
      %v593 = vsel %vm539, %v588, 0
      %595 = vmatprep.subr.bf16.mxu0 0
      %596 = vmatpush1.bf16.xpose.msra.mxu0 0
      %597 = vmatprep.subr.bf16.mxu0 0
      %598 = vmatpush1.bf16.xpose.msra.mxu0 0
      %599 = vmatprep.subr.bf16.mxu0 0
      %600 = vmatpush1.bf16.xpose.msra.mxu0 0
      %601 = vmatprep.subr.bf16.mxu0 0
      %602 = vmatpush1.bf16.xpose.msra.mxu0 0
      %603 = vmatprep.subr.bf16.mxu0 0
      %604 = vmatpush1.bf16.xpose.msra.mxu0 0
      %605 = vmatprep.subr.bf16.mxu0 0
      %606 = vmatpush1.bf16.xpose.msra.mxu0 0
      %607 = vmatprep.subr.bf16.mxu0 0
      %608 = vmatpush1.bf16.xpose.msra.mxu0 0
      %609 = vmatprep.subr.bf16.mxu0 0
      %610 = vmatpush1.bf16.xpose.msra.mxu0 %v593
      %611 = vmatprep.subr.bf16.mxu0 0
      %612 = vmatpush2.bf16.xpose.msra.mxu0 0
      %613 = vmatprep.subr.bf16.mxu0 0
      %614 = vmatpush2.bf16.xpose.msra.mxu0 0
      %615 = vmatprep.subr.bf16.mxu0 0
      %616 = vmatpush2.bf16.xpose.msra.mxu0 0
      %617 = vmatprep.subr.bf16.mxu0 0
      %618 = vmatpush2.bf16.xpose.msra.mxu0 0
      %619 = vmatprep.subr.bf16.mxu0 0
      %620 = vmatpush2.bf16.xpose.msra.mxu0 0
      %621 = vmatprep.subr.bf16.mxu0 0
      %622 = vmatpush2.bf16.xpose.msra.mxu0 0
      %623 = vmatprep.subr.bf16.mxu0 0
      %624 = vmatpush2.bf16.xpose.msra.mxu0 0
      %625 = vmatprep.subr.bf16.mxu0 0
      %626 = vmatpush2.bf16.xpose.msra.mxu0 0
      %627 = vmatprep.mubr.bf16.mxu0 0
      %628 = vmatmul.mubr.bf16.gmra.mxu0 %v590
      %v629 = vpop.f32.mrf.mxu0
      %v630 = vadd.f32 0.0, %v629
      %v631 = vpop.f32.mrf.mxu0
      %v632 = vpop.f32.mrf.mxu0
      %v633 = vpop.f32.mrf.mxu0
      %634 = vdwg.mxu0
      %636 = vrot.lane.b32.xlu0 %v530, 120
      %v637 = vpop.permute.xlu0 %636
      %v639 = vsel %vm539, %v530, 0
      %v642 = vsel %vm539, %v637, 0
      %644 = vmatprep.subr.bf16.mxu0 0
      %645 = vmatpush1.bf16.xpose.msra.mxu0 0
      %646 = vmatprep.subr.bf16.mxu0 0
      %647 = vmatpush1.bf16.xpose.msra.mxu0 0
      %648 = vmatprep.subr.bf16.mxu0 0
      %649 = vmatpush1.bf16.xpose.msra.mxu0 0
      %650 = vmatprep.subr.bf16.mxu0 0
      %651 = vmatpush1.bf16.xpose.msra.mxu0 0
      %652 = vmatprep.subr.bf16.mxu0 0
      %653 = vmatpush1.bf16.xpose.msra.mxu0 0
      %654 = vmatprep.subr.bf16.mxu0 0
      %655 = vmatpush1.bf16.xpose.msra.mxu0 0
      %656 = vmatprep.subr.bf16.mxu0 0
      %657 = vmatpush1.bf16.xpose.msra.mxu0 0
      %658 = vmatprep.subr.bf16.mxu0 0
      %659 = vmatpush1.bf16.xpose.msra.mxu0 %v642
      %660 = vmatprep.subr.bf16.mxu0 0
      %661 = vmatpush2.bf16.xpose.msra.mxu0 0
      %662 = vmatprep.subr.bf16.mxu0 0
      %663 = vmatpush2.bf16.xpose.msra.mxu0 0
      %664 = vmatprep.subr.bf16.mxu0 0
      %665 = vmatpush2.bf16.xpose.msra.mxu0 0
      %666 = vmatprep.subr.bf16.mxu0 0
      %667 = vmatpush2.bf16.xpose.msra.mxu0 0
      %668 = vmatprep.subr.bf16.mxu0 0
      %669 = vmatpush2.bf16.xpose.msra.mxu0 0
      %670 = vmatprep.subr.bf16.mxu0 0
      %671 = vmatpush2.bf16.xpose.msra.mxu0 0
      %672 = vmatprep.subr.bf16.mxu0 0
      %673 = vmatpush2.bf16.xpose.msra.mxu0 0
      %674 = vmatprep.subr.bf16.mxu0 0
      %675 = vmatpush2.bf16.xpose.msra.mxu0 0
      %676 = vmatprep.mubr.bf16.mxu0 0
      %677 = vmatmul.mubr.bf16.gmra.mxu0 %v639
      %v678 = vpop.f32.mrf.mxu0
      %v679 = vadd.f32 0.0, %v678
      %v680 = vpop.f32.mrf.mxu0
      %v681 = vpop.f32.mrf.mxu0
      %v682 = vpop.f32.mrf.mxu0
      %683 = vdwg.mxu0
      %685 = vrot.lane.b32.xlu0 %v531, 120
      %v686 = vpop.permute.xlu0 %685
      %v688 = vsel %vm539, %v531, 0
      %v691 = vsel %vm539, %v686, 0
      %693 = vmatprep.subr.bf16.mxu0 0
      %694 = vmatpush1.bf16.xpose.msra.mxu0 0
      %695 = vmatprep.subr.bf16.mxu0 0
      %696 = vmatpush1.bf16.xpose.msra.mxu0 0
      %697 = vmatprep.subr.bf16.mxu0 0
      %698 = vmatpush1.bf16.xpose.msra.mxu0 0
      %699 = vmatprep.subr.bf16.mxu0 0
      %700 = vmatpush1.bf16.xpose.msra.mxu0 0
      %701 = vmatprep.subr.bf16.mxu0 0
      %702 = vmatpush1.bf16.xpose.msra.mxu0 0
      %703 = vmatprep.subr.bf16.mxu0 0
      %704 = vmatpush1.bf16.xpose.msra.mxu0 0
      %705 = vmatprep.subr.bf16.mxu0 0
      %706 = vmatpush1.bf16.xpose.msra.mxu0 0
      %707 = vmatprep.subr.bf16.mxu0 0
      %708 = vmatpush1.bf16.xpose.msra.mxu0 %v691
      %709 = vmatprep.subr.bf16.mxu0 0
      %710 = vmatpush2.bf16.xpose.msra.mxu0 0
      %711 = vmatprep.subr.bf16.mxu0 0
      %712 = vmatpush2.bf16.xpose.msra.mxu0 0
      %713 = vmatprep.subr.bf16.mxu0 0
      %714 = vmatpush2.bf16.xpose.msra.mxu0 0
      %715 = vmatprep.subr.bf16.mxu0 0
      %716 = vmatpush2.bf16.xpose.msra.mxu0 0
      %717 = vmatprep.subr.bf16.mxu0 0
      %718 = vmatpush2.bf16.xpose.msra.mxu0 0
      %719 = vmatprep.subr.bf16.mxu0 0
      %720 = vmatpush2.bf16.xpose.msra.mxu0 0
      %721 = vmatprep.subr.bf16.mxu0 0
      %722 = vmatpush2.bf16.xpose.msra.mxu0 0
      %723 = vmatprep.subr.bf16.mxu0 0
      %724 = vmatpush2.bf16.xpose.msra.mxu0 0
      %725 = vmatprep.mubr.bf16.mxu0 0
      %726 = vmatmul.mubr.bf16.gmra.mxu0 %v688
      %v727 = vpop.f32.mrf.mxu0
      %v728 = vadd.f32 0.0, %v727
      %v729 = vpop.f32.mrf.mxu0
      %v730 = vpop.f32.mrf.mxu0
      %v731 = vpop.f32.mrf.mxu0
      %732 = vdwg.mxu0
      %734 = vrot.lane.b32.xlu0 %v532, 120
      %v735 = vpop.permute.xlu0 %734
      %v737 = vsel %vm539, %v532, 0
      %v740 = vsel %vm539, %v735, 0
      %742 = vmatprep.subr.bf16.mxu0 0
      %743 = vmatpush1.bf16.xpose.msra.mxu0 0
      %744 = vmatprep.subr.bf16.mxu0 0
      %745 = vmatpush1.bf16.xpose.msra.mxu0 0
      %746 = vmatprep.subr.bf16.mxu0 0
      %747 = vmatpush1.bf16.xpose.msra.mxu0 0
      %748 = vmatprep.subr.bf16.mxu0 0
      %749 = vmatpush1.bf16.xpose.msra.mxu0 0
      %750 = vmatprep.subr.bf16.mxu0 0
      %751 = vmatpush1.bf16.xpose.msra.mxu0 0
      %752 = vmatprep.subr.bf16.mxu0 0
      %753 = vmatpush1.bf16.xpose.msra.mxu0 0
      %754 = vmatprep.subr.bf16.mxu0 0
      %755 = vmatpush1.bf16.xpose.msra.mxu0 0
      %756 = vmatprep.subr.bf16.mxu0 0
      %757 = vmatpush1.bf16.xpose.msra.mxu0 %v740
      %758 = vmatprep.subr.bf16.mxu0 0
      %759 = vmatpush2.bf16.xpose.msra.mxu0 0
      %760 = vmatprep.subr.bf16.mxu0 0
      %761 = vmatpush2.bf16.xpose.msra.mxu0 0
      %762 = vmatprep.subr.bf16.mxu0 0
      %763 = vmatpush2.bf16.xpose.msra.mxu0 0
      %764 = vmatprep.subr.bf16.mxu0 0
      %765 = vmatpush2.bf16.xpose.msra.mxu0 0
      %766 = vmatprep.subr.bf16.mxu0 0
      %767 = vmatpush2.bf16.xpose.msra.mxu0 0
      %768 = vmatprep.subr.bf16.mxu0 0
      %769 = vmatpush2.bf16.xpose.msra.mxu0 0
      %770 = vmatprep.subr.bf16.mxu0 0
      %771 = vmatpush2.bf16.xpose.msra.mxu0 0
      %772 = vmatprep.subr.bf16.mxu0 0
      %773 = vmatpush2.bf16.xpose.msra.mxu0 0
      %774 = vmatprep.mubr.bf16.mxu0 0
      %775 = vmatmul.mubr.bf16.gmra.mxu0 %v737
      %v776 = vpop.f32.mrf.mxu0
      %v777 = vadd.f32 0.0, %v776
      %v778 = vpop.f32.mrf.mxu0
      %v779 = vpop.f32.mrf.mxu0
      %v780 = vpop.f32.mrf.mxu0
      %781 = vdwg.mxu0
      %783 = vrot.lane.b32.xlu0 %v533, 120
      %v784 = vpop.permute.xlu0 %783
      %v786 = vsel %vm539, %v533, 0
      %v789 = vsel %vm539, %v784, 0
      %791 = vmatprep.subr.bf16.mxu0 0
      %792 = vmatpush1.bf16.xpose.msra.mxu0 0
      %793 = vmatprep.subr.bf16.mxu0 0
      %794 = vmatpush1.bf16.xpose.msra.mxu0 0
      %795 = vmatprep.subr.bf16.mxu0 0
      %796 = vmatpush1.bf16.xpose.msra.mxu0 0
      %797 = vmatprep.subr.bf16.mxu0 0
      %798 = vmatpush1.bf16.xpose.msra.mxu0 0
      %799 = vmatprep.subr.bf16.mxu0 0
      %800 = vmatpush1.bf16.xpose.msra.mxu0 0
      %801 = vmatprep.subr.bf16.mxu0 0
      %802 = vmatpush1.bf16.xpose.msra.mxu0 0
      %803 = vmatprep.subr.bf16.mxu0 0
      %804 = vmatpush1.bf16.xpose.msra.mxu0 0
      %805 = vmatprep.subr.bf16.mxu0 0
      %806 = vmatpush1.bf16.xpose.msra.mxu0 %v789
      %807 = vmatprep.subr.bf16.mxu0 0
      %808 = vmatpush2.bf16.xpose.msra.mxu0 0
      %809 = vmatprep.subr.bf16.mxu0 0
      %810 = vmatpush2.bf16.xpose.msra.mxu0 0
      %811 = vmatprep.subr.bf16.mxu0 0
      %812 = vmatpush2.bf16.xpose.msra.mxu0 0
      %813 = vmatprep.subr.bf16.mxu0 0
      %814 = vmatpush2.bf16.xpose.msra.mxu0 0
      %815 = vmatprep.subr.bf16.mxu0 0
      %816 = vmatpush2.bf16.xpose.msra.mxu0 0
      %817 = vmatprep.subr.bf16.mxu0 0
      %818 = vmatpush2.bf16.xpose.msra.mxu0 0
      %819 = vmatprep.subr.bf16.mxu0 0
      %820 = vmatpush2.bf16.xpose.msra.mxu0 0
      %821 = vmatprep.subr.bf16.mxu0 0
      %822 = vmatpush2.bf16.xpose.msra.mxu0 0
      %823 = vmatprep.mubr.bf16.mxu0 0
      %824 = vmatmul.mubr.bf16.gmra.mxu0 %v786
      %v825 = vpop.f32.mrf.mxu0
      %v826 = vadd.f32 0.0, %v825
      %v827 = vpop.f32.mrf.mxu0
      %v828 = vpop.f32.mrf.mxu0
      %v829 = vpop.f32.mrf.mxu0
      %830 = vdwg.mxu0
      %832 = vrot.lane.b32.xlu0 %v534, 120
      %v833 = vpop.permute.xlu0 %832
      %v835 = vsel %vm539, %v534, 0
      %v838 = vsel %vm539, %v833, 0
      %840 = vmatprep.subr.bf16.mxu0 0
      %841 = vmatpush1.bf16.xpose.msra.mxu0 0
      %842 = vmatprep.subr.bf16.mxu0 0
      %843 = vmatpush1.bf16.xpose.msra.mxu0 0
      %844 = vmatprep.subr.bf16.mxu0 0
      %845 = vmatpush1.bf16.xpose.msra.mxu0 0
      %846 = vmatprep.subr.bf16.mxu0 0
      %847 = vmatpush1.bf16.xpose.msra.mxu0 0
      %848 = vmatprep.subr.bf16.mxu0 0
      %849 = vmatpush1.bf16.xpose.msra.mxu0 0
      %850 = vmatprep.subr.bf16.mxu0 0
      %851 = vmatpush1.bf16.xpose.msra.mxu0 0
      %852 = vmatprep.subr.bf16.mxu0 0
      %853 = vmatpush1.bf16.xpose.msra.mxu0 0
      %854 = vmatprep.subr.bf16.mxu0 0
      %855 = vmatpush1.bf16.xpose.msra.mxu0 %v838
      %856 = vmatprep.subr.bf16.mxu0 0
      %857 = vmatpush2.bf16.xpose.msra.mxu0 0
      %858 = vmatprep.subr.bf16.mxu0 0
      %859 = vmatpush2.bf16.xpose.msra.mxu0 0
      %860 = vmatprep.subr.bf16.mxu0 0
      %861 = vmatpush2.bf16.xpose.msra.mxu0 0
      %862 = vmatprep.subr.bf16.mxu0 0
      %863 = vmatpush2.bf16.xpose.msra.mxu0 0
      %864 = vmatprep.subr.bf16.mxu0 0
      %865 = vmatpush2.bf16.xpose.msra.mxu0 0
      %866 = vmatprep.subr.bf16.mxu0 0
      %867 = vmatpush2.bf16.xpose.msra.mxu0 0
      %868 = vmatprep.subr.bf16.mxu0 0
      %869 = vmatpush2.bf16.xpose.msra.mxu0 0
      %870 = vmatprep.subr.bf16.mxu0 0
      %871 = vmatpush2.bf16.xpose.msra.mxu0 0
      %872 = vmatprep.mubr.bf16.mxu0 0
      %873 = vmatmul.mubr.bf16.gmra.mxu0 %v835
      %v874 = vpop.f32.mrf.mxu0
      %v875 = vadd.f32 0.0, %v874
      %v876 = vpop.f32.mrf.mxu0
      %v877 = vpop.f32.mrf.mxu0
      %v878 = vpop.f32.mrf.mxu0
      %879 = vdwg.mxu0
      %881 = vrot.lane.b32.xlu0 %v535, 120
      %v882 = vpop.permute.xlu0 %881
      %v884 = vsel %vm539, %v535, 0
      %v887 = vsel %vm539, %v882, 0
      %889 = vmatprep.subr.bf16.mxu0 0
      %890 = vmatpush1.bf16.xpose.msra.mxu0 0
      %891 = vmatprep.subr.bf16.mxu0 0
      %892 = vmatpush1.bf16.xpose.msra.mxu0 0
      %893 = vmatprep.subr.bf16.mxu0 0
      %894 = vmatpush1.bf16.xpose.msra.mxu0 0
      %895 = vmatprep.subr.bf16.mxu0 0
      %896 = vmatpush1.bf16.xpose.msra.mxu0 0
      %897 = vmatprep.subr.bf16.mxu0 0
      %898 = vmatpush1.bf16.xpose.msra.mxu0 0
      %899 = vmatprep.subr.bf16.mxu0 0
      %900 = vmatpush1.bf16.xpose.msra.mxu0 0
      %901 = vmatprep.subr.bf16.mxu0 0
      %902 = vmatpush1.bf16.xpose.msra.mxu0 0
      %903 = vmatprep.subr.bf16.mxu0 0
      %904 = vmatpush1.bf16.xpose.msra.mxu0 %v887
      %905 = vmatprep.subr.bf16.mxu0 0
      %906 = vmatpush2.bf16.xpose.msra.mxu0 0
      %907 = vmatprep.subr.bf16.mxu0 0
      %908 = vmatpush2.bf16.xpose.msra.mxu0 0
      %909 = vmatprep.subr.bf16.mxu0 0
      %910 = vmatpush2.bf16.xpose.msra.mxu0 0
      %911 = vmatprep.subr.bf16.mxu0 0
      %912 = vmatpush2.bf16.xpose.msra.mxu0 0
      %913 = vmatprep.subr.bf16.mxu0 0
      %914 = vmatpush2.bf16.xpose.msra.mxu0 0
      %915 = vmatprep.subr.bf16.mxu0 0
      %916 = vmatpush2.bf16.xpose.msra.mxu0 0
      %917 = vmatprep.subr.bf16.mxu0 0
      %918 = vmatpush2.bf16.xpose.msra.mxu0 0
      %919 = vmatprep.subr.bf16.mxu0 0
      %920 = vmatpush2.bf16.xpose.msra.mxu0 0
      %921 = vmatprep.mubr.bf16.mxu0 0
      %922 = vmatmul.mubr.bf16.gmra.mxu0 %v884
      %v923 = vpop.f32.mrf.mxu0
      %v924 = vadd.f32 0.0, %v923
      %v925 = vpop.f32.mrf.mxu0
      %v926 = vpop.f32.mrf.mxu0
      %v927 = vpop.f32.mrf.mxu0
      %928 = vdwg.mxu0
      %v929 = vmul.f32 %v581, 0.5
      %v930 = vmul.f32 %v630, 0.5
      %v931 = vmul.f32 %v679, 0.5
      %v932 = vmul.f32 %v728, 0.5
      %v933 = vmul.f32 %v777, 0.5
      %v934 = vmul.f32 %v826, 0.5
      %v935 = vmul.f32 %v875, 0.5
      %v936 = vmul.f32 %v924, 0.5
      %v937 = vsel %vm446, %v929, -inf
      %938 = vmax.xlane.f32.xlu0 %v937
      %v939 = vpop.xlane.xlu0 %938
      %v940 = vsel %vm446, %v930, -inf
      %941 = vmax.xlane.f32.xlu0 %v940
      %v942 = vpop.xlane.xlu0 %941
      %v943 = vsel %vm446, %v931, -inf
      %944 = vmax.xlane.f32.xlu0 %v943
      %v945 = vpop.xlane.xlu0 %944
      %v946 = vsel %vm446, %v932, -inf
      %947 = vmax.xlane.f32.xlu0 %v946
      %v948 = vpop.xlane.xlu0 %947
      %v949 = vsel %vm446, %v933, -inf
      %950 = vmax.xlane.f32.xlu0 %v949
      %v951 = vpop.xlane.xlu0 %950
      %v952 = vsel %vm446, %v934, -inf
      %953 = vmax.xlane.f32.xlu0 %v952
      %v954 = vpop.xlane.xlu0 %953
      %v955 = vsel %vm446, %v935, -inf
      %956 = vmax.xlane.f32.xlu0 %v955
      %v957 = vpop.xlane.xlu0 %956
      %v958 = vsel %vm446, %v936, -inf
      %959 = vmax.xlane.f32.xlu0 %v958
      %v960 = vpop.xlane.xlu0 %959
      %v961 = vsub.f32 %v929, %v939
      %v962 = vsub.f32 %v930, %v942
      %v963 = vsub.f32 %v931, %v945
      %v964 = vsub.f32 %v932, %v948
      %v965 = vsub.f32 %v933, %v951
      %v966 = vsub.f32 %v934, %v954
      %v967 = vsub.f32 %v935, %v957
      %v968 = vsub.f32 %v936, %v960
      %v969 = vmul.f32 %v961, 1.442695
      %v970 = vpow.pop %v969
      %v971 = vmul.f32 %v962, 1.442695
      %v972 = vpow.pop %v971
      %v973 = vmul.f32 %v963, 1.442695
      %v974 = vpow.pop %v973
      %v975 = vmul.f32 %v964, 1.442695
      %v976 = vpow.pop %v975
      %v977 = vmul.f32 %v965, 1.442695
      %v978 = vpow.pop %v977
      %v979 = vmul.f32 %v966, 1.442695
      %v980 = vpow.pop %v979
      %v981 = vmul.f32 %v967, 1.442695
      %v982 = vpow.pop %v981
      %v983 = vmul.f32 %v968, 1.442695
      %v984 = vpow.pop %v983
      %v985 = vsel %vm446, %v970, 0.0
      %986 = vadd.xlane.f32.xlu0 %v985
      %v987 = vpop.xlane.xlu0 %986
      %v988 = vsel %vm446, %v972, 0.0
      %989 = vadd.xlane.f32.xlu0 %v988
      %v990 = vpop.xlane.xlu0 %989
      %v991 = vsel %vm446, %v974, 0.0
      %992 = vadd.xlane.f32.xlu0 %v991
      %v993 = vpop.xlane.xlu0 %992
      %v994 = vsel %vm446, %v976, 0.0
      %995 = vadd.xlane.f32.xlu0 %v994
      %v996 = vpop.xlane.xlu0 %995
      %v997 = vsel %vm446, %v978, 0.0
      %998 = vadd.xlane.f32.xlu0 %v997
      %v999 = vpop.xlane.xlu0 %998
      %v1000 = vsel %vm446, %v980, 0.0
      %1001 = vadd.xlane.f32.xlu0 %v1000
      %v1002 = vpop.xlane.xlu0 %1001
      %v1003 = vsel %vm446, %v982, 0.0
      %1004 = vadd.xlane.f32.xlu0 %v1003
      %v1005 = vpop.xlane.xlu0 %1004
      %v1006 = vsel %vm446, %v984, 0.0
      %1007 = vadd.xlane.f32.xlu0 %v1006
      %v1008 = vpop.xlane.xlu0 %1007
      %v1009 = vrcp.pop %v987
      %v1010 = vrcp.pop %v990
      %v1011 = vrcp.pop %v993
      %v1012 = vrcp.pop %v996
      %v1013 = vrcp.pop %v999
      %v1014 = vrcp.pop %v1002
      %v1015 = vrcp.pop %v1005
      %v1016 = vrcp.pop %v1008
      %v1017 = vmul.f32 %v970, %v1009
      %v1018 = vmul.f32 %v972, %v1010
      %v1019 = vmul.f32 %v974, %v1011
      %v1020 = vmul.f32 %v976, %v1012
      %v1021 = vmul.f32 %v978, %v1013
      %v1022 = vmul.f32 %v980, %v1014
      %v1023 = vmul.f32 %v982, %v1015
      %v1024 = vmul.f32 %v984, %v1016
      %v1025 = vpack.c.bf16 %v1017, %v1017
      %v1026 = vpack.c.bf16 %v1018, %v1018
      %v1027 = vpack.c.bf16 %v1019, %v1019
      %v1028 = vpack.c.bf16 %v1020, %v1020
      %v1029 = vpack.c.bf16 %v1021, %v1021
      %v1030 = vpack.c.bf16 %v1022, %v1022
      %v1031 = vpack.c.bf16 %v1023, %v1023
      %v1032 = vpack.c.bf16 %v1024, %v1024
      %1033 = vrot.lane.b32.xlu0 %v528, 112
      %v1034 = vpop.permute.xlu0 %1033
      %v1036 = vsel %vm446, %v1025, 0
      %v1039 = vsel %vm459, %v1034, 0
      %1041 = vmatprep.subr.bf16.mxu0 0
      %1042 = vmatpush1.bf16.msra.mxu0 0
      %1043 = vmatprep.subr.bf16.mxu0 0
      %1044 = vmatpush1.bf16.msra.mxu0 0
      %1045 = vmatprep.subr.bf16.mxu0 0
      %1046 = vmatpush1.bf16.msra.mxu0 0
      %1047 = vmatprep.subr.bf16.mxu0 0
      %1048 = vmatpush1.bf16.msra.mxu0 0
      %1049 = vmatprep.subr.bf16.mxu0 0
      %1050 = vmatpush1.bf16.msra.mxu0 0
      %1051 = vmatprep.subr.bf16.mxu0 0
      %1052 = vmatpush1.bf16.msra.mxu0 0
      %1053 = vmatprep.subr.bf16.mxu0 0
      %1054 = vmatpush1.bf16.msra.mxu0 0
      %1055 = vmatprep.subr.bf16.mxu0 0
      %1056 = vmatpush1.bf16.msra.mxu0 %v1039
      %1057 = vmatprep.subr.bf16.mxu0 0
      %1058 = vmatpush2.bf16.msra.mxu0 0
      %1059 = vmatprep.subr.bf16.mxu0 0
      %1060 = vmatpush2.bf16.msra.mxu0 0
      %1061 = vmatprep.subr.bf16.mxu0 0
      %1062 = vmatpush2.bf16.msra.mxu0 0
      %1063 = vmatprep.subr.bf16.mxu0 0
      %1064 = vmatpush2.bf16.msra.mxu0 0
      %1065 = vmatprep.subr.bf16.mxu0 0
      %1066 = vmatpush2.bf16.msra.mxu0 0
      %1067 = vmatprep.subr.bf16.mxu0 0
      %1068 = vmatpush2.bf16.msra.mxu0 0
      %1069 = vmatprep.subr.bf16.mxu0 0
      %1070 = vmatpush2.bf16.msra.mxu0 0
      %1071 = vmatprep.subr.bf16.mxu0 0
      %1072 = vmatpush2.bf16.msra.mxu0 0
      %1073 = vmatprep.mubr.bf16.mxu0 0
      %1074 = vmatmul.mubr.bf16.gmra.mxu0 %v1036
      %v1075 = vpop.f32.mrf.mxu0
      %v1076 = vadd.f32 0.0, %v1075
      %v1077 = vpop.f32.mrf.mxu0
      %v1078 = vpop.f32.mrf.mxu0
      %v1079 = vpop.f32.mrf.mxu0
      %1080 = vdwg.mxu0
      %1081 = vrot.lane.b32.xlu0 %v529, 112
      %v1082 = vpop.permute.xlu0 %1081
      %v1084 = vsel %vm446, %v1026, 0
      %v1087 = vsel %vm459, %v1082, 0
      %1089 = vmatprep.subr.bf16.mxu0 0
      %1090 = vmatpush1.bf16.msra.mxu0 0
      %1091 = vmatprep.subr.bf16.mxu0 0
      %1092 = vmatpush1.bf16.msra.mxu0 0
      %1093 = vmatprep.subr.bf16.mxu0 0
      %1094 = vmatpush1.bf16.msra.mxu0 0
      %1095 = vmatprep.subr.bf16.mxu0 0
      %1096 = vmatpush1.bf16.msra.mxu0 0
      %1097 = vmatprep.subr.bf16.mxu0 0
      %1098 = vmatpush1.bf16.msra.mxu0 0
      %1099 = vmatprep.subr.bf16.mxu0 0
      %1100 = vmatpush1.bf16.msra.mxu0 0
      %1101 = vmatprep.subr.bf16.mxu0 0
      %1102 = vmatpush1.bf16.msra.mxu0 0
      %1103 = vmatprep.subr.bf16.mxu0 0
      %1104 = vmatpush1.bf16.msra.mxu0 %v1087
      %1105 = vmatprep.subr.bf16.mxu0 0
      %1106 = vmatpush2.bf16.msra.mxu0 0
      %1107 = vmatprep.subr.bf16.mxu0 0
      %1108 = vmatpush2.bf16.msra.mxu0 0
      %1109 = vmatprep.subr.bf16.mxu0 0
      %1110 = vmatpush2.bf16.msra.mxu0 0
      %1111 = vmatprep.subr.bf16.mxu0 0
      %1112 = vmatpush2.bf16.msra.mxu0 0
      %1113 = vmatprep.subr.bf16.mxu0 0
      %1114 = vmatpush2.bf16.msra.mxu0 0
      %1115 = vmatprep.subr.bf16.mxu0 0
      %1116 = vmatpush2.bf16.msra.mxu0 0
      %1117 = vmatprep.subr.bf16.mxu0 0
      %1118 = vmatpush2.bf16.msra.mxu0 0
      %1119 = vmatprep.subr.bf16.mxu0 0
      %1120 = vmatpush2.bf16.msra.mxu0 0
      %1121 = vmatprep.mubr.bf16.mxu0 0
      %1122 = vmatmul.mubr.bf16.gmra.mxu0 %v1084
      %v1123 = vpop.f32.mrf.mxu0
      %v1124 = vadd.f32 0.0, %v1123
      %v1125 = vpop.f32.mrf.mxu0
      %v1126 = vpop.f32.mrf.mxu0
      %v1127 = vpop.f32.mrf.mxu0
      %1128 = vdwg.mxu0
      %1129 = vrot.lane.b32.xlu0 %v530, 112
      %v1130 = vpop.permute.xlu0 %1129
      %v1132 = vsel %vm446, %v1027, 0
      %v1135 = vsel %vm459, %v1130, 0
      %1137 = vmatprep.subr.bf16.mxu0 0
      %1138 = vmatpush1.bf16.msra.mxu0 0
      %1139 = vmatprep.subr.bf16.mxu0 0
      %1140 = vmatpush1.bf16.msra.mxu0 0
      %1141 = vmatprep.subr.bf16.mxu0 0
      %1142 = vmatpush1.bf16.msra.mxu0 0
      %1143 = vmatprep.subr.bf16.mxu0 0
      %1144 = vmatpush1.bf16.msra.mxu0 0
      %1145 = vmatprep.subr.bf16.mxu0 0
      %1146 = vmatpush1.bf16.msra.mxu0 0
      %1147 = vmatprep.subr.bf16.mxu0 0
      %1148 = vmatpush1.bf16.msra.mxu0 0
      %1149 = vmatprep.subr.bf16.mxu0 0
      %1150 = vmatpush1.bf16.msra.mxu0 0
      %1151 = vmatprep.subr.bf16.mxu0 0
      %1152 = vmatpush1.bf16.msra.mxu0 %v1135
      %1153 = vmatprep.subr.bf16.mxu0 0
      %1154 = vmatpush2.bf16.msra.mxu0 0
      %1155 = vmatprep.subr.bf16.mxu0 0
      %1156 = vmatpush2.bf16.msra.mxu0 0
      %1157 = vmatprep.subr.bf16.mxu0 0
      %1158 = vmatpush2.bf16.msra.mxu0 0
      %1159 = vmatprep.subr.bf16.mxu0 0
      %1160 = vmatpush2.bf16.msra.mxu0 0
      %1161 = vmatprep.subr.bf16.mxu0 0
      %1162 = vmatpush2.bf16.msra.mxu0 0
      %1163 = vmatprep.subr.bf16.mxu0 0
      %1164 = vmatpush2.bf16.msra.mxu0 0
      %1165 = vmatprep.subr.bf16.mxu0 0
      %1166 = vmatpush2.bf16.msra.mxu0 0
      %1167 = vmatprep.subr.bf16.mxu0 0
      %1168 = vmatpush2.bf16.msra.mxu0 0
      %1169 = vmatprep.mubr.bf16.mxu0 0
      %1170 = vmatmul.mubr.bf16.gmra.mxu0 %v1132
      %v1171 = vpop.f32.mrf.mxu0
      %v1172 = vadd.f32 0.0, %v1171
      %v1173 = vpop.f32.mrf.mxu0
      %v1174 = vpop.f32.mrf.mxu0
      %v1175 = vpop.f32.mrf.mxu0
      %1176 = vdwg.mxu0
      %1177 = vrot.lane.b32.xlu0 %v531, 112
      %v1178 = vpop.permute.xlu0 %1177
      %v1180 = vsel %vm446, %v1028, 0
      %v1183 = vsel %vm459, %v1178, 0
      %1185 = vmatprep.subr.bf16.mxu0 0
      %1186 = vmatpush1.bf16.msra.mxu0 0
      %1187 = vmatprep.subr.bf16.mxu0 0
      %1188 = vmatpush1.bf16.msra.mxu0 0
      %1189 = vmatprep.subr.bf16.mxu0 0
      %1190 = vmatpush1.bf16.msra.mxu0 0
      %1191 = vmatprep.subr.bf16.mxu0 0
      %1192 = vmatpush1.bf16.msra.mxu0 0
      %1193 = vmatprep.subr.bf16.mxu0 0
      %1194 = vmatpush1.bf16.msra.mxu0 0
      %1195 = vmatprep.subr.bf16.mxu0 0
      %1196 = vmatpush1.bf16.msra.mxu0 0
      %1197 = vmatprep.subr.bf16.mxu0 0
      %1198 = vmatpush1.bf16.msra.mxu0 0
      %1199 = vmatprep.subr.bf16.mxu0 0
      %1200 = vmatpush1.bf16.msra.mxu0 %v1183
      %1201 = vmatprep.subr.bf16.mxu0 0
      %1202 = vmatpush2.bf16.msra.mxu0 0
      %1203 = vmatprep.subr.bf16.mxu0 0
      %1204 = vmatpush2.bf16.msra.mxu0 0
      %1205 = vmatprep.subr.bf16.mxu0 0
      %1206 = vmatpush2.bf16.msra.mxu0 0
      %1207 = vmatprep.subr.bf16.mxu0 0
      %1208 = vmatpush2.bf16.msra.mxu0 0
      %1209 = vmatprep.subr.bf16.mxu0 0
      %1210 = vmatpush2.bf16.msra.mxu0 0
      %1211 = vmatprep.subr.bf16.mxu0 0
      %1212 = vmatpush2.bf16.msra.mxu0 0
      %1213 = vmatprep.subr.bf16.mxu0 0
      %1214 = vmatpush2.bf16.msra.mxu0 0
      %1215 = vmatprep.subr.bf16.mxu0 0
      %1216 = vmatpush2.bf16.msra.mxu0 0
      %1217 = vmatprep.mubr.bf16.mxu0 0
      %1218 = vmatmul.mubr.bf16.gmra.mxu0 %v1180
      %v1219 = vpop.f32.mrf.mxu0
      %v1220 = vadd.f32 0.0, %v1219
      %v1221 = vpop.f32.mrf.mxu0
      %v1222 = vpop.f32.mrf.mxu0
      %v1223 = vpop.f32.mrf.mxu0
      %1224 = vdwg.mxu0
      %1225 = vrot.lane.b32.xlu0 %v532, 112
      %v1226 = vpop.permute.xlu0 %1225
      %v1228 = vsel %vm446, %v1029, 0
      %v1231 = vsel %vm459, %v1226, 0
      %1233 = vmatprep.subr.bf16.mxu0 0
      %1234 = vmatpush1.bf16.msra.mxu0 0
      %1235 = vmatprep.subr.bf16.mxu0 0
      %1236 = vmatpush1.bf16.msra.mxu0 0
      %1237 = vmatprep.subr.bf16.mxu0 0
      %1238 = vmatpush1.bf16.msra.mxu0 0
      %1239 = vmatprep.subr.bf16.mxu0 0
      %1240 = vmatpush1.bf16.msra.mxu0 0
      %1241 = vmatprep.subr.bf16.mxu0 0
      %1242 = vmatpush1.bf16.msra.mxu0 0
      %1243 = vmatprep.subr.bf16.mxu0 0
      %1244 = vmatpush1.bf16.msra.mxu0 0
      %1245 = vmatprep.subr.bf16.mxu0 0
      %1246 = vmatpush1.bf16.msra.mxu0 0
      %1247 = vmatprep.subr.bf16.mxu0 0
      %1248 = vmatpush1.bf16.msra.mxu0 %v1231
      %1249 = vmatprep.subr.bf16.mxu0 0
      %1250 = vmatpush2.bf16.msra.mxu0 0
      %1251 = vmatprep.subr.bf16.mxu0 0
      %1252 = vmatpush2.bf16.msra.mxu0 0
      %1253 = vmatprep.subr.bf16.mxu0 0
      %1254 = vmatpush2.bf16.msra.mxu0 0
      %1255 = vmatprep.subr.bf16.mxu0 0
      %1256 = vmatpush2.bf16.msra.mxu0 0
      %1257 = vmatprep.subr.bf16.mxu0 0
      %1258 = vmatpush2.bf16.msra.mxu0 0
      %1259 = vmatprep.subr.bf16.mxu0 0
      %1260 = vmatpush2.bf16.msra.mxu0 0
      %1261 = vmatprep.subr.bf16.mxu0 0
      %1262 = vmatpush2.bf16.msra.mxu0 0
      %1263 = vmatprep.subr.bf16.mxu0 0
      %1264 = vmatpush2.bf16.msra.mxu0 0
      %1265 = vmatprep.mubr.bf16.mxu0 0
      %1266 = vmatmul.mubr.bf16.gmra.mxu0 %v1228
      %v1267 = vpop.f32.mrf.mxu0
      %v1268 = vadd.f32 0.0, %v1267
      %v1269 = vpop.f32.mrf.mxu0
      %v1270 = vpop.f32.mrf.mxu0
      %v1271 = vpop.f32.mrf.mxu0
      %1272 = vdwg.mxu0
      %1273 = vrot.lane.b32.xlu0 %v533, 112
      %v1274 = vpop.permute.xlu0 %1273
      %v1276 = vsel %vm446, %v1030, 0
      %v1279 = vsel %vm459, %v1274, 0
      %1281 = vmatprep.subr.bf16.mxu0 0
      %1282 = vmatpush1.bf16.msra.mxu0 0
      %1283 = vmatprep.subr.bf16.mxu0 0
      %1284 = vmatpush1.bf16.msra.mxu0 0
      %1285 = vmatprep.subr.bf16.mxu0 0
      %1286 = vmatpush1.bf16.msra.mxu0 0
      %1287 = vmatprep.subr.bf16.mxu0 0
      %1288 = vmatpush1.bf16.msra.mxu0 0
      %1289 = vmatprep.subr.bf16.mxu0 0
      %1290 = vmatpush1.bf16.msra.mxu0 0
      %1291 = vmatprep.subr.bf16.mxu0 0
      %1292 = vmatpush1.bf16.msra.mxu0 0
      %1293 = vmatprep.subr.bf16.mxu0 0
      %1294 = vmatpush1.bf16.msra.mxu0 0
      %1295 = vmatprep.subr.bf16.mxu0 0
      %1296 = vmatpush1.bf16.msra.mxu0 %v1279
      %1297 = vmatprep.subr.bf16.mxu0 0
      %1298 = vmatpush2.bf16.msra.mxu0 0
      %1299 = vmatprep.subr.bf16.mxu0 0
      %1300 = vmatpush2.bf16.msra.mxu0 0
      %1301 = vmatprep.subr.bf16.mxu0 0
      %1302 = vmatpush2.bf16.msra.mxu0 0
      %1303 = vmatprep.subr.bf16.mxu0 0
      %1304 = vmatpush2.bf16.msra.mxu0 0
      %1305 = vmatprep.subr.bf16.mxu0 0
      %1306 = vmatpush2.bf16.msra.mxu0 0
      %1307 = vmatprep.subr.bf16.mxu0 0
      %1308 = vmatpush2.bf16.msra.mxu0 0
      %1309 = vmatprep.subr.bf16.mxu0 0
      %1310 = vmatpush2.bf16.msra.mxu0 0
      %1311 = vmatprep.subr.bf16.mxu0 0
      %1312 = vmatpush2.bf16.msra.mxu0 0
      %1313 = vmatprep.mubr.bf16.mxu0 0
      %1314 = vmatmul.mubr.bf16.gmra.mxu0 %v1276
      %v1315 = vpop.f32.mrf.mxu0
      %v1316 = vadd.f32 0.0, %v1315
      %v1317 = vpop.f32.mrf.mxu0
      %v1318 = vpop.f32.mrf.mxu0
      %v1319 = vpop.f32.mrf.mxu0
      %1320 = vdwg.mxu0
      %1321 = vrot.lane.b32.xlu0 %v534, 112
      %v1322 = vpop.permute.xlu0 %1321
      %v1324 = vsel %vm446, %v1031, 0
      %v1327 = vsel %vm459, %v1322, 0
      %1329 = vmatprep.subr.bf16.mxu0 0
      %1330 = vmatpush1.bf16.msra.mxu0 0
      %1331 = vmatprep.subr.bf16.mxu0 0
      %1332 = vmatpush1.bf16.msra.mxu0 0
      %1333 = vmatprep.subr.bf16.mxu0 0
      %1334 = vmatpush1.bf16.msra.mxu0 0
      %1335 = vmatprep.subr.bf16.mxu0 0
      %1336 = vmatpush1.bf16.msra.mxu0 0
      %1337 = vmatprep.subr.bf16.mxu0 0
      %1338 = vmatpush1.bf16.msra.mxu0 0
      %1339 = vmatprep.subr.bf16.mxu0 0
      %1340 = vmatpush1.bf16.msra.mxu0 0
      %1341 = vmatprep.subr.bf16.mxu0 0
      %1342 = vmatpush1.bf16.msra.mxu0 0
      %1343 = vmatprep.subr.bf16.mxu0 0
      %1344 = vmatpush1.bf16.msra.mxu0 %v1327
      %1345 = vmatprep.subr.bf16.mxu0 0
      %1346 = vmatpush2.bf16.msra.mxu0 0
      %1347 = vmatprep.subr.bf16.mxu0 0
      %1348 = vmatpush2.bf16.msra.mxu0 0
      %1349 = vmatprep.subr.bf16.mxu0 0
      %1350 = vmatpush2.bf16.msra.mxu0 0
      %1351 = vmatprep.subr.bf16.mxu0 0
      %1352 = vmatpush2.bf16.msra.mxu0 0
      %1353 = vmatprep.subr.bf16.mxu0 0
      %1354 = vmatpush2.bf16.msra.mxu0 0
      %1355 = vmatprep.subr.bf16.mxu0 0
      %1356 = vmatpush2.bf16.msra.mxu0 0
      %1357 = vmatprep.subr.bf16.mxu0 0
      %1358 = vmatpush2.bf16.msra.mxu0 0
      %1359 = vmatprep.subr.bf16.mxu0 0
      %1360 = vmatpush2.bf16.msra.mxu0 0
      %1361 = vmatprep.mubr.bf16.mxu0 0
      %1362 = vmatmul.mubr.bf16.gmra.mxu0 %v1324
      %v1363 = vpop.f32.mrf.mxu0
      %v1364 = vadd.f32 0.0, %v1363
      %v1365 = vpop.f32.mrf.mxu0
      %v1366 = vpop.f32.mrf.mxu0
      %v1367 = vpop.f32.mrf.mxu0
      %1368 = vdwg.mxu0
      %1369 = vrot.lane.b32.xlu0 %v535, 112
      %v1370 = vpop.permute.xlu0 %1369
      %v1372 = vsel %vm446, %v1032, 0
      %v1375 = vsel %vm459, %v1370, 0
      %1377 = vmatprep.subr.bf16.mxu0 0
      %1378 = vmatpush1.bf16.msra.mxu0 0
      %1379 = vmatprep.subr.bf16.mxu0 0
      %1380 = vmatpush1.bf16.msra.mxu0 0
      %1381 = vmatprep.subr.bf16.mxu0 0
      %1382 = vmatpush1.bf16.msra.mxu0 0
      %1383 = vmatprep.subr.bf16.mxu0 0
      %1384 = vmatpush1.bf16.msra.mxu0 0
      %1385 = vmatprep.subr.bf16.mxu0 0
      %1386 = vmatpush1.bf16.msra.mxu0 0
      %1387 = vmatprep.subr.bf16.mxu0 0
      %1388 = vmatpush1.bf16.msra.mxu0 0
      %1389 = vmatprep.subr.bf16.mxu0 0
      %1390 = vmatpush1.bf16.msra.mxu0 0
      %1391 = vmatprep.subr.bf16.mxu0 0
      %1392 = vmatpush1.bf16.msra.mxu0 %v1375
      %1393 = vmatprep.subr.bf16.mxu0 0
      %1394 = vmatpush2.bf16.msra.mxu0 0
      %1395 = vmatprep.subr.bf16.mxu0 0
      %1396 = vmatpush2.bf16.msra.mxu0 0
      %1397 = vmatprep.subr.bf16.mxu0 0
      %1398 = vmatpush2.bf16.msra.mxu0 0
      %1399 = vmatprep.subr.bf16.mxu0 0
      %1400 = vmatpush2.bf16.msra.mxu0 0
      %1401 = vmatprep.subr.bf16.mxu0 0
      %1402 = vmatpush2.bf16.msra.mxu0 0
      %1403 = vmatprep.subr.bf16.mxu0 0
      %1404 = vmatpush2.bf16.msra.mxu0 0
      %1405 = vmatprep.subr.bf16.mxu0 0
      %1406 = vmatpush2.bf16.msra.mxu0 0
      %1407 = vmatprep.subr.bf16.mxu0 0
      %1408 = vmatpush2.bf16.msra.mxu0 0
      %1409 = vmatprep.mubr.bf16.mxu0 0
      %1410 = vmatmul.mubr.bf16.gmra.mxu0 %v1372
      %v1411 = vpop.f32.mrf.mxu0
      %v1412 = vadd.f32 0.0, %v1411
      %v1413 = vpop.f32.mrf.mxu0
      %v1414 = vpop.f32.mrf.mxu0
      %v1415 = vpop.f32.mrf.mxu0
      %1416 = vdwg.mxu0
      %v1417 = vpack.c.bf16 %v1124, %v1076
      %v1418 = vpack.c.bf16 %v1220, %v1172
      %v1419 = vpack.c.bf16 %v1316, %v1268
      %v1420 = vpack.c.bf16 %v1412, %v1364
      %v1421 = vld [vmem:[%s3] sm:$0x3]
      %1422 = vrot.lane.b32.xlu0 %v528, 124
      %v1423 = vpop.permute.xlu0 %1422
      %1424 = vrot.lane.b32.xlu0 %v528, 116
      %v1425 = vpop.permute.xlu0 %1424
      %v1427 = vsel %vm539, %v1423, 0
      %v1430 = vsel %vm539, %v1425, 0
      %1432 = vmatprep.subr.bf16.mxu0 0
      %1433 = vmatpush1.bf16.xpose.msra.mxu0 0
      %1434 = vmatprep.subr.bf16.mxu0 0
      %1435 = vmatpush1.bf16.xpose.msra.mxu0 0
      %1436 = vmatprep.subr.bf16.mxu0 0
      %1437 = vmatpush1.bf16.xpose.msra.mxu0 0
      %1438 = vmatprep.subr.bf16.mxu0 0
      %1439 = vmatpush1.bf16.xpose.msra.mxu0 0
      %1440 = vmatprep.subr.bf16.mxu0 0
      %1441 = vmatpush1.bf16.xpose.msra.mxu0 0
      %1442 = vmatprep.subr.bf16.mxu0 0
      %1443 = vmatpush1.bf16.xpose.msra.mxu0 0
      %1444 = vmatprep.subr.bf16.mxu0 0
      %1445 = vmatpush1.bf16.xpose.msra.mxu0 0
      %1446 = vmatprep.subr.bf16.mxu0 0
      %1447 = vmatpush1.bf16.xpose.msra.mxu0 %v1430
      %1448 = vmatprep.subr.bf16.mxu0 0
      %1449 = vmatpush2.bf16.xpose.msra.mxu0 0
      %1450 = vmatprep.subr.bf16.mxu0 0
      %1451 = vmatpush2.bf16.xpose.msra.mxu0 0
      %1452 = vmatprep.subr.bf16.mxu0 0
      %1453 = vmatpush2.bf16.xpose.msra.mxu0 0
      %1454 = vmatprep.subr.bf16.mxu0 0
      %1455 = vmatpush2.bf16.xpose.msra.mxu0 0
      %1456 = vmatprep.subr.bf16.mxu0 0
      %1457 = vmatpush2.bf16.xpose.msra.mxu0 0
      %1458 = vmatprep.subr.bf16.mxu0 0
      %1459 = vmatpush2.bf16.xpose.msra.mxu0 0
      %1460 = vmatprep.subr.bf16.mxu0 0
      %1461 = vmatpush2.bf16.xpose.msra.mxu0 0
      %1462 = vmatprep.subr.bf16.mxu0 0
      %1463 = vmatpush2.bf16.xpose.msra.mxu0 0
      %1464 = vmatprep.mubr.bf16.mxu0 0
      %1465 = vmatmul.mubr.bf16.gmra.mxu0 %v1427
      %v1466 = vpop.f32.mrf.mxu0
      %v1467 = vadd.f32 0.0, %v1466
      %v1468 = vpop.f32.mrf.mxu0
      %v1469 = vpop.f32.mrf.mxu0
      %v1470 = vpop.f32.mrf.mxu0
      %1471 = vdwg.mxu0
      %1472 = vrot.lane.b32.xlu0 %v529, 124
      %v1473 = vpop.permute.xlu0 %1472
      %1474 = vrot.lane.b32.xlu0 %v529, 116
      %v1475 = vpop.permute.xlu0 %1474
      %v1477 = vsel %vm539, %v1473, 0
      %v1480 = vsel %vm539, %v1475, 0
      %1482 = vmatprep.subr.bf16.mxu0 0
      %1483 = vmatpush1.bf16.xpose.msra.mxu0 0
      %1484 = vmatprep.subr.bf16.mxu0 0
      %1485 = vmatpush1.bf16.xpose.msra.mxu0 0
      %1486 = vmatprep.subr.bf16.mxu0 0
      %1487 = vmatpush1.bf16.xpose.msra.mxu0 0
      %1488 = vmatprep.subr.bf16.mxu0 0
      %1489 = vmatpush1.bf16.xpose.msra.mxu0 0
      %1490 = vmatprep.subr.bf16.mxu0 0
      %1491 = vmatpush1.bf16.xpose.msra.mxu0 0
      %1492 = vmatprep.subr.bf16.mxu0 0
      %1493 = vmatpush1.bf16.xpose.msra.mxu0 0
      %1494 = vmatprep.subr.bf16.mxu0 0
      %1495 = vmatpush1.bf16.xpose.msra.mxu0 0
      %1496 = vmatprep.subr.bf16.mxu0 0
      %1497 = vmatpush1.bf16.xpose.msra.mxu0 %v1480
      %1498 = vmatprep.subr.bf16.mxu0 0
      %1499 = vmatpush2.bf16.xpose.msra.mxu0 0
      %1500 = vmatprep.subr.bf16.mxu0 0
      %1501 = vmatpush2.bf16.xpose.msra.mxu0 0
      %1502 = vmatprep.subr.bf16.mxu0 0
      %1503 = vmatpush2.bf16.xpose.msra.mxu0 0
      %1504 = vmatprep.subr.bf16.mxu0 0
      %1505 = vmatpush2.bf16.xpose.msra.mxu0 0
      %1506 = vmatprep.subr.bf16.mxu0 0
      %1507 = vmatpush2.bf16.xpose.msra.mxu0 0
      %1508 = vmatprep.subr.bf16.mxu0 0
      %1509 = vmatpush2.bf16.xpose.msra.mxu0 0
      %1510 = vmatprep.subr.bf16.mxu0 0
      %1511 = vmatpush2.bf16.xpose.msra.mxu0 0
      %1512 = vmatprep.subr.bf16.mxu0 0
      %1513 = vmatpush2.bf16.xpose.msra.mxu0 0
      %1514 = vmatprep.mubr.bf16.mxu0 0
      %1515 = vmatmul.mubr.bf16.gmra.mxu0 %v1477
      %v1516 = vpop.f32.mrf.mxu0
      %v1517 = vadd.f32 0.0, %v1516
      %v1518 = vpop.f32.mrf.mxu0
      %v1519 = vpop.f32.mrf.mxu0
      %v1520 = vpop.f32.mrf.mxu0
      %1521 = vdwg.mxu0
      %1522 = vrot.lane.b32.xlu0 %v530, 124
      %v1523 = vpop.permute.xlu0 %1522
      %1524 = vrot.lane.b32.xlu0 %v530, 116
      %v1525 = vpop.permute.xlu0 %1524
      %v1527 = vsel %vm539, %v1523, 0
      %v1530 = vsel %vm539, %v1525, 0
      %1532 = vmatprep.subr.bf16.mxu0 0
      %1533 = vmatpush1.bf16.xpose.msra.mxu0 0
      %1534 = vmatprep.subr.bf16.mxu0 0
      %1535 = vmatpush1.bf16.xpose.msra.mxu0 0
      %1536 = vmatprep.subr.bf16.mxu0 0
      %1537 = vmatpush1.bf16.xpose.msra.mxu0 0
      %1538 = vmatprep.subr.bf16.mxu0 0
      %1539 = vmatpush1.bf16.xpose.msra.mxu0 0
      %1540 = vmatprep.subr.bf16.mxu0 0
      %1541 = vmatpush1.bf16.xpose.msra.mxu0 0
      %1542 = vmatprep.subr.bf16.mxu0 0
      %1543 = vmatpush1.bf16.xpose.msra.mxu0 0
      %1544 = vmatprep.subr.bf16.mxu0 0
      %1545 = vmatpush1.bf16.xpose.msra.mxu0 0
      %1546 = vmatprep.subr.bf16.mxu0 0
      %1547 = vmatpush1.bf16.xpose.msra.mxu0 %v1530
      %1548 = vmatprep.subr.bf16.mxu0 0
      %1549 = vmatpush2.bf16.xpose.msra.mxu0 0
      %1550 = vmatprep.subr.bf16.mxu0 0
      %1551 = vmatpush2.bf16.xpose.msra.mxu0 0
      %1552 = vmatprep.subr.bf16.mxu0 0
      %1553 = vmatpush2.bf16.xpose.msra.mxu0 0
      %1554 = vmatprep.subr.bf16.mxu0 0
      %1555 = vmatpush2.bf16.xpose.msra.mxu0 0
      %1556 = vmatprep.subr.bf16.mxu0 0
      %1557 = vmatpush2.bf16.xpose.msra.mxu0 0
      %1558 = vmatprep.subr.bf16.mxu0 0
      %1559 = vmatpush2.bf16.xpose.msra.mxu0 0
      %1560 = vmatprep.subr.bf16.mxu0 0
      %1561 = vmatpush2.bf16.xpose.msra.mxu0 0
      %1562 = vmatprep.subr.bf16.mxu0 0
      %1563 = vmatpush2.bf16.xpose.msra.mxu0 0
      %1564 = vmatprep.mubr.bf16.mxu0 0
      %1565 = vmatmul.mubr.bf16.gmra.mxu0 %v1527
      %v1566 = vpop.f32.mrf.mxu0
      %v1567 = vadd.f32 0.0, %v1566
      %v1568 = vpop.f32.mrf.mxu0
      %v1569 = vpop.f32.mrf.mxu0
      %v1570 = vpop.f32.mrf.mxu0
      %1571 = vdwg.mxu0
      %1572 = vrot.lane.b32.xlu0 %v531, 124
      %v1573 = vpop.permute.xlu0 %1572
      %1574 = vrot.lane.b32.xlu0 %v531, 116
      %v1575 = vpop.permute.xlu0 %1574
      %v1577 = vsel %vm539, %v1573, 0
      %v1580 = vsel %vm539, %v1575, 0
      %1582 = vmatprep.subr.bf16.mxu0 0
      %1583 = vmatpush1.bf16.xpose.msra.mxu0 0
      %1584 = vmatprep.subr.bf16.mxu0 0
      %1585 = vmatpush1.bf16.xpose.msra.mxu0 0
      %1586 = vmatprep.subr.bf16.mxu0 0
      %1587 = vmatpush1.bf16.xpose.msra.mxu0 0
      %1588 = vmatprep.subr.bf16.mxu0 0
      %1589 = vmatpush1.bf16.xpose.msra.mxu0 0
      %1590 = vmatprep.subr.bf16.mxu0 0
      %1591 = vmatpush1.bf16.xpose.msra.mxu0 0
      %1592 = vmatprep.subr.bf16.mxu0 0
      %1593 = vmatpush1.bf16.xpose.msra.mxu0 0
      %1594 = vmatprep.subr.bf16.mxu0 0
      %1595 = vmatpush1.bf16.xpose.msra.mxu0 0
      %1596 = vmatprep.subr.bf16.mxu0 0
      %1597 = vmatpush1.bf16.xpose.msra.mxu0 %v1580
      %1598 = vmatprep.subr.bf16.mxu0 0
      %1599 = vmatpush2.bf16.xpose.msra.mxu0 0
      %1600 = vmatprep.subr.bf16.mxu0 0
      %1601 = vmatpush2.bf16.xpose.msra.mxu0 0
      %1602 = vmatprep.subr.bf16.mxu0 0
      %1603 = vmatpush2.bf16.xpose.msra.mxu0 0
      %1604 = vmatprep.subr.bf16.mxu0 0
      %1605 = vmatpush2.bf16.xpose.msra.mxu0 0
      %1606 = vmatprep.subr.bf16.mxu0 0
      %1607 = vmatpush2.bf16.xpose.msra.mxu0 0
      %1608 = vmatprep.subr.bf16.mxu0 0
      %1609 = vmatpush2.bf16.xpose.msra.mxu0 0
      %1610 = vmatprep.subr.bf16.mxu0 0
      %1611 = vmatpush2.bf16.xpose.msra.mxu0 0
      %1612 = vmatprep.subr.bf16.mxu0 0
      %1613 = vmatpush2.bf16.xpose.msra.mxu0 0
      %1614 = vmatprep.mubr.bf16.mxu0 0
      %1615 = vmatmul.mubr.bf16.gmra.mxu0 %v1577
      %v1616 = vpop.f32.mrf.mxu0
      %v1617 = vadd.f32 0.0, %v1616
      %v1618 = vpop.f32.mrf.mxu0
      %v1619 = vpop.f32.mrf.mxu0
      %v1620 = vpop.f32.mrf.mxu0
      %1621 = vdwg.mxu0
      %1622 = vrot.lane.b32.xlu0 %v532, 124
      %v1623 = vpop.permute.xlu0 %1622
      %1624 = vrot.lane.b32.xlu0 %v532, 116
      %v1625 = vpop.permute.xlu0 %1624
      %v1627 = vsel %vm539, %v1623, 0
      %v1630 = vsel %vm539, %v1625, 0
      %1632 = vmatprep.subr.bf16.mxu0 0
      %1633 = vmatpush1.bf16.xpose.msra.mxu0 0
      %1634 = vmatprep.subr.bf16.mxu0 0
      %1635 = vmatpush1.bf16.xpose.msra.mxu0 0
      %1636 = vmatprep.subr.bf16.mxu0 0
      %1637 = vmatpush1.bf16.xpose.msra.mxu0 0
      %1638 = vmatprep.subr.bf16.mxu0 0
      %1639 = vmatpush1.bf16.xpose.msra.mxu0 0
      %1640 = vmatprep.subr.bf16.mxu0 0
      %1641 = vmatpush1.bf16.xpose.msra.mxu0 0
      %1642 = vmatprep.subr.bf16.mxu0 0
      %1643 = vmatpush1.bf16.xpose.msra.mxu0 0
      %1644 = vmatprep.subr.bf16.mxu0 0
      %1645 = vmatpush1.bf16.xpose.msra.mxu0 0
      %1646 = vmatprep.subr.bf16.mxu0 0
      %1647 = vmatpush1.bf16.xpose.msra.mxu0 %v1630
      %1648 = vmatprep.subr.bf16.mxu0 0
      %1649 = vmatpush2.bf16.xpose.msra.mxu0 0
      %1650 = vmatprep.subr.bf16.mxu0 0
      %1651 = vmatpush2.bf16.xpose.msra.mxu0 0
      %1652 = vmatprep.subr.bf16.mxu0 0
      %1653 = vmatpush2.bf16.xpose.msra.mxu0 0
      %1654 = vmatprep.subr.bf16.mxu0 0
      %1655 = vmatpush2.bf16.xpose.msra.mxu0 0
      %1656 = vmatprep.subr.bf16.mxu0 0
      %1657 = vmatpush2.bf16.xpose.msra.mxu0 0
      %1658 = vmatprep.subr.bf16.mxu0 0
      %1659 = vmatpush2.bf16.xpose.msra.mxu0 0
      %1660 = vmatprep.subr.bf16.mxu0 0
      %1661 = vmatpush2.bf16.xpose.msra.mxu0 0
      %1662 = vmatprep.subr.bf16.mxu0 0
      %1663 = vmatpush2.bf16.xpose.msra.mxu0 0
      %1664 = vmatprep.mubr.bf16.mxu0 0
      %1665 = vmatmul.mubr.bf16.gmra.mxu0 %v1627
      %v1666 = vpop.f32.mrf.mxu0
      %v1667 = vadd.f32 0.0, %v1666
      %v1668 = vpop.f32.mrf.mxu0
      %v1669 = vpop.f32.mrf.mxu0
      %v1670 = vpop.f32.mrf.mxu0
      %1671 = vdwg.mxu0
      %1672 = vrot.lane.b32.xlu0 %v533, 124
      %v1673 = vpop.permute.xlu0 %1672
      %1674 = vrot.lane.b32.xlu0 %v533, 116
      %v1675 = vpop.permute.xlu0 %1674
      %v1677 = vsel %vm539, %v1673, 0
      %v1680 = vsel %vm539, %v1675, 0
      %1682 = vmatprep.subr.bf16.mxu0 0
      %1683 = vmatpush1.bf16.xpose.msra.mxu0 0
      %1684 = vmatprep.subr.bf16.mxu0 0
      %1685 = vmatpush1.bf16.xpose.msra.mxu0 0
      %1686 = vmatprep.subr.bf16.mxu0 0
      %1687 = vmatpush1.bf16.xpose.msra.mxu0 0
      %1688 = vmatprep.subr.bf16.mxu0 0
      %1689 = vmatpush1.bf16.xpose.msra.mxu0 0
      %1690 = vmatprep.subr.bf16.mxu0 0
      %1691 = vmatpush1.bf16.xpose.msra.mxu0 0
      %1692 = vmatprep.subr.bf16.mxu0 0
      %1693 = vmatpush1.bf16.xpose.msra.mxu0 0
      %1694 = vmatprep.subr.bf16.mxu0 0
      %1695 = vmatpush1.bf16.xpose.msra.mxu0 0
      %1696 = vmatprep.subr.bf16.mxu0 0
      %1697 = vmatpush1.bf16.xpose.msra.mxu0 %v1680
      %1698 = vmatprep.subr.bf16.mxu0 0
      %1699 = vmatpush2.bf16.xpose.msra.mxu0 0
      %1700 = vmatprep.subr.bf16.mxu0 0
      %1701 = vmatpush2.bf16.xpose.msra.mxu0 0
      %1702 = vmatprep.subr.bf16.mxu0 0
      %1703 = vmatpush2.bf16.xpose.msra.mxu0 0
      %1704 = vmatprep.subr.bf16.mxu0 0
      %1705 = vmatpush2.bf16.xpose.msra.mxu0 0
      %1706 = vmatprep.subr.bf16.mxu0 0
      %1707 = vmatpush2.bf16.xpose.msra.mxu0 0
      %1708 = vmatprep.subr.bf16.mxu0 0
      %1709 = vmatpush2.bf16.xpose.msra.mxu0 0
      %1710 = vmatprep.subr.bf16.mxu0 0
      %1711 = vmatpush2.bf16.xpose.msra.mxu0 0
      %1712 = vmatprep.subr.bf16.mxu0 0
      %1713 = vmatpush2.bf16.xpose.msra.mxu0 0
      %1714 = vmatprep.mubr.bf16.mxu0 0
      %1715 = vmatmul.mubr.bf16.gmra.mxu0 %v1677
      %v1716 = vpop.f32.mrf.mxu0
      %v1717 = vadd.f32 0.0, %v1716
      %v1718 = vpop.f32.mrf.mxu0
      %v1719 = vpop.f32.mrf.mxu0
      %v1720 = vpop.f32.mrf.mxu0
      %1721 = vdwg.mxu0
      %1722 = vrot.lane.b32.xlu0 %v534, 124
      %v1723 = vpop.permute.xlu0 %1722
      %1724 = vrot.lane.b32.xlu0 %v534, 116
      %v1725 = vpop.permute.xlu0 %1724
      %v1727 = vsel %vm539, %v1723, 0
      %v1730 = vsel %vm539, %v1725, 0
      %1732 = vmatprep.subr.bf16.mxu0 0
      %1733 = vmatpush1.bf16.xpose.msra.mxu0 0
      %1734 = vmatprep.subr.bf16.mxu0 0
      %1735 = vmatpush1.bf16.xpose.msra.mxu0 0
      %1736 = vmatprep.subr.bf16.mxu0 0
      %1737 = vmatpush1.bf16.xpose.msra.mxu0 0
      %1738 = vmatprep.subr.bf16.mxu0 0
      %1739 = vmatpush1.bf16.xpose.msra.mxu0 0
      %1740 = vmatprep.subr.bf16.mxu0 0
      %1741 = vmatpush1.bf16.xpose.msra.mxu0 0
      %1742 = vmatprep.subr.bf16.mxu0 0
      %1743 = vmatpush1.bf16.xpose.msra.mxu0 0
      %1744 = vmatprep.subr.bf16.mxu0 0
      %1745 = vmatpush1.bf16.xpose.msra.mxu0 0
      %1746 = vmatprep.subr.bf16.mxu0 0
      %1747 = vmatpush1.bf16.xpose.msra.mxu0 %v1730
      %1748 = vmatprep.subr.bf16.mxu0 0
      %1749 = vmatpush2.bf16.xpose.msra.mxu0 0
      %1750 = vmatprep.subr.bf16.mxu0 0
      %1751 = vmatpush2.bf16.xpose.msra.mxu0 0
      %1752 = vmatprep.subr.bf16.mxu0 0
      %1753 = vmatpush2.bf16.xpose.msra.mxu0 0
      %1754 = vmatprep.subr.bf16.mxu0 0
      %1755 = vmatpush2.bf16.xpose.msra.mxu0 0
      %1756 = vmatprep.subr.bf16.mxu0 0
      %1757 = vmatpush2.bf16.xpose.msra.mxu0 0
      %1758 = vmatprep.subr.bf16.mxu0 0
      %1759 = vmatpush2.bf16.xpose.msra.mxu0 0
      %1760 = vmatprep.subr.bf16.mxu0 0
      %1761 = vmatpush2.bf16.xpose.msra.mxu0 0
      %1762 = vmatprep.subr.bf16.mxu0 0
      %1763 = vmatpush2.bf16.xpose.msra.mxu0 0
      %1764 = vmatprep.mubr.bf16.mxu0 0
      %1765 = vmatmul.mubr.bf16.gmra.mxu0 %v1727
      %v1766 = vpop.f32.mrf.mxu0
      %v1767 = vadd.f32 0.0, %v1766
      %v1768 = vpop.f32.mrf.mxu0
      %v1769 = vpop.f32.mrf.mxu0
      %v1770 = vpop.f32.mrf.mxu0
      %1771 = vdwg.mxu0
      %1772 = vrot.lane.b32.xlu0 %v535, 124
      %v1773 = vpop.permute.xlu0 %1772
      %1774 = vrot.lane.b32.xlu0 %v535, 116
      %v1775 = vpop.permute.xlu0 %1774
      %v1777 = vsel %vm539, %v1773, 0
      %v1780 = vsel %vm539, %v1775, 0
      %1782 = vmatprep.subr.bf16.mxu0 0
      %1783 = vmatpush1.bf16.xpose.msra.mxu0 0
      %1784 = vmatprep.subr.bf16.mxu0 0
      %1785 = vmatpush1.bf16.xpose.msra.mxu0 0
      %1786 = vmatprep.subr.bf16.mxu0 0
      %1787 = vmatpush1.bf16.xpose.msra.mxu0 0
      %1788 = vmatprep.subr.bf16.mxu0 0
      %1789 = vmatpush1.bf16.xpose.msra.mxu0 0
      %1790 = vmatprep.subr.bf16.mxu0 0
      %1791 = vmatpush1.bf16.xpose.msra.mxu0 0
      %1792 = vmatprep.subr.bf16.mxu0 0
      %1793 = vmatpush1.bf16.xpose.msra.mxu0 0
      %1794 = vmatprep.subr.bf16.mxu0 0
      %1795 = vmatpush1.bf16.xpose.msra.mxu0 0
      %1796 = vmatprep.subr.bf16.mxu0 0
      %1797 = vmatpush1.bf16.xpose.msra.mxu0 %v1780
      %1798 = vmatprep.subr.bf16.mxu0 0
      %1799 = vmatpush2.bf16.xpose.msra.mxu0 0
      %1800 = vmatprep.subr.bf16.mxu0 0
      %1801 = vmatpush2.bf16.xpose.msra.mxu0 0
      %1802 = vmatprep.subr.bf16.mxu0 0
      %1803 = vmatpush2.bf16.xpose.msra.mxu0 0
      %1804 = vmatprep.subr.bf16.mxu0 0
      %1805 = vmatpush2.bf16.xpose.msra.mxu0 0
      %1806 = vmatprep.subr.bf16.mxu0 0
      %1807 = vmatpush2.bf16.xpose.msra.mxu0 0
      %1808 = vmatprep.subr.bf16.mxu0 0
      %1809 = vmatpush2.bf16.xpose.msra.mxu0 0
      %1810 = vmatprep.subr.bf16.mxu0 0
      %1811 = vmatpush2.bf16.xpose.msra.mxu0 0
      %1812 = vmatprep.subr.bf16.mxu0 0
      %1813 = vmatpush2.bf16.xpose.msra.mxu0 0
      %1814 = vmatprep.mubr.bf16.mxu0 0
      %1815 = vmatmul.mubr.bf16.gmra.mxu0 %v1777
      %v1816 = vpop.f32.mrf.mxu0
      %v1817 = vadd.f32 0.0, %v1816
      %v1818 = vpop.f32.mrf.mxu0
      %v1819 = vpop.f32.mrf.mxu0
      %v1820 = vpop.f32.mrf.mxu0
      %1821 = vdwg.mxu0
      %v1822 = vmul.f32 %v1467, 0.5
      %v1823 = vmul.f32 %v1517, 0.5
      %v1824 = vmul.f32 %v1567, 0.5
      %v1825 = vmul.f32 %v1617, 0.5
      %v1826 = vmul.f32 %v1667, 0.5
      %v1827 = vmul.f32 %v1717, 0.5
      %v1828 = vmul.f32 %v1767, 0.5
      %v1829 = vmul.f32 %v1817, 0.5
      %v1830 = vsel %vm446, %v1822, -inf
      %1831 = vmax.xlane.f32.xlu0 %v1830
      %v1832 = vpop.xlane.xlu0 %1831
      %v1833 = vsel %vm446, %v1823, -inf
      %1834 = vmax.xlane.f32.xlu0 %v1833
      %v1835 = vpop.xlane.xlu0 %1834
      %v1836 = vsel %vm446, %v1824, -inf
      %1837 = vmax.xlane.f32.xlu0 %v1836
      %v1838 = vpop.xlane.xlu0 %1837
      %v1839 = vsel %vm446, %v1825, -inf
      %1840 = vmax.xlane.f32.xlu0 %v1839
      %v1841 = vpop.xlane.xlu0 %1840
      %v1842 = vsel %vm446, %v1826, -inf
      %1843 = vmax.xlane.f32.xlu0 %v1842
      %v1844 = vpop.xlane.xlu0 %1843
      %v1845 = vsel %vm446, %v1827, -inf
      %1846 = vmax.xlane.f32.xlu0 %v1845
      %v1847 = vpop.xlane.xlu0 %1846
      %v1848 = vsel %vm446, %v1828, -inf
      %1849 = vmax.xlane.f32.xlu0 %v1848
      %v1850 = vpop.xlane.xlu0 %1849
      %v1851 = vsel %vm446, %v1829, -inf
      %1852 = vmax.xlane.f32.xlu0 %v1851
      %v1853 = vpop.xlane.xlu0 %1852
      %v1854 = vsub.f32 %v1822, %v1832
      %v1855 = vsub.f32 %v1823, %v1835
      %v1856 = vsub.f32 %v1824, %v1838
      %v1857 = vsub.f32 %v1825, %v1841
      %v1858 = vsub.f32 %v1826, %v1844
      %v1859 = vsub.f32 %v1827, %v1847
      %v1860 = vsub.f32 %v1828, %v1850
      %v1861 = vsub.f32 %v1829, %v1853
      %v1862 = vmul.f32 %v1854, 1.442695
      %v1863 = vpow.pop %v1862
      %v1864 = vmul.f32 %v1855, 1.442695
      %v1865 = vpow.pop %v1864
      %v1866 = vmul.f32 %v1856, 1.442695
      %v1867 = vpow.pop %v1866
      %v1868 = vmul.f32 %v1857, 1.442695
      %v1869 = vpow.pop %v1868
      %v1870 = vmul.f32 %v1858, 1.442695
      %v1871 = vpow.pop %v1870
      %v1872 = vmul.f32 %v1859, 1.442695
      %v1873 = vpow.pop %v1872
      %v1874 = vmul.f32 %v1860, 1.442695
      %v1875 = vpow.pop %v1874
      %v1876 = vmul.f32 %v1861, 1.442695
      %v1877 = vpow.pop %v1876
      %v1878 = vsel %vm446, %v1863, 0.0
      %1879 = vadd.xlane.f32.xlu0 %v1878
      %v1880 = vpop.xlane.xlu0 %1879
      %v1881 = vsel %vm446, %v1865, 0.0
      %1882 = vadd.xlane.f32.xlu0 %v1881
      %v1883 = vpop.xlane.xlu0 %1882
      %v1884 = vsel %vm446, %v1867, 0.0
      %1885 = vadd.xlane.f32.xlu0 %v1884
      %v1886 = vpop.xlane.xlu0 %1885
      %v1887 = vsel %vm446, %v1869, 0.0
      %1888 = vadd.xlane.f32.xlu0 %v1887
      %v1889 = vpop.xlane.xlu0 %1888
      %v1890 = vsel %vm446, %v1871, 0.0
      %1891 = vadd.xlane.f32.xlu0 %v1890
      %v1892 = vpop.xlane.xlu0 %1891
      %v1893 = vsel %vm446, %v1873, 0.0
      %1894 = vadd.xlane.f32.xlu0 %v1893
      %v1895 = vpop.xlane.xlu0 %1894
      %v1896 = vsel %vm446, %v1875, 0.0
      %1897 = vadd.xlane.f32.xlu0 %v1896
      %v1898 = vpop.xlane.xlu0 %1897
      %v1899 = vsel %vm446, %v1877, 0.0
      %1900 = vadd.xlane.f32.xlu0 %v1899
      %v1901 = vpop.xlane.xlu0 %1900
      %v1902 = vrcp.pop %v1880
      %v1903 = vrcp.pop %v1883
      %v1904 = vrcp.pop %v1886
      %v1905 = vrcp.pop %v1889
      %v1906 = vrcp.pop %v1892
      %v1907 = vrcp.pop %v1895
      %v1908 = vrcp.pop %v1898
      %v1909 = vrcp.pop %v1901
      %v1910 = vmul.f32 %v1863, %v1902
      %v1911 = vmul.f32 %v1865, %v1903
      %v1912 = vmul.f32 %v1867, %v1904
      %v1913 = vmul.f32 %v1869, %v1905
      %v1914 = vmul.f32 %v1871, %v1906
      %v1915 = vmul.f32 %v1873, %v1907
      %v1916 = vmul.f32 %v1875, %v1908
      %v1917 = vmul.f32 %v1877, %v1909
      %v1918 = vpack.c.bf16 %v1910, %v1910
      %v1919 = vpack.c.bf16 %v1911, %v1911
      %v1920 = vpack.c.bf16 %v1912, %v1912
      %v1921 = vpack.c.bf16 %v1913, %v1913
      %v1922 = vpack.c.bf16 %v1914, %v1914
      %v1923 = vpack.c.bf16 %v1915, %v1915
      %v1924 = vpack.c.bf16 %v1916, %v1916
      %v1925 = vpack.c.bf16 %v1917, %v1917
      %1926 = vrot.lane.b32.xlu0 %v528, 108
      %v1927 = vpop.permute.xlu0 %1926
      %v1929 = vsel %vm446, %v1918, 0
      %v1932 = vsel %vm459, %v1927, 0
      %1934 = vmatprep.subr.bf16.mxu0 0
      %1935 = vmatpush1.bf16.msra.mxu0 0
      %1936 = vmatprep.subr.bf16.mxu0 0
      %1937 = vmatpush1.bf16.msra.mxu0 0
      %1938 = vmatprep.subr.bf16.mxu0 0
      %1939 = vmatpush1.bf16.msra.mxu0 0
      %1940 = vmatprep.subr.bf16.mxu0 0
      %1941 = vmatpush1.bf16.msra.mxu0 0
      %1942 = vmatprep.subr.bf16.mxu0 0
      %1943 = vmatpush1.bf16.msra.mxu0 0
      %1944 = vmatprep.subr.bf16.mxu0 0
      %1945 = vmatpush1.bf16.msra.mxu0 0
      %1946 = vmatprep.subr.bf16.mxu0 0
      %1947 = vmatpush1.bf16.msra.mxu0 0
      %1948 = vmatprep.subr.bf16.mxu0 0
      %1949 = vmatpush1.bf16.msra.mxu0 %v1932
      %1950 = vmatprep.subr.bf16.mxu0 0
      %1951 = vmatpush2.bf16.msra.mxu0 0
      %1952 = vmatprep.subr.bf16.mxu0 0
      %1953 = vmatpush2.bf16.msra.mxu0 0
      %1954 = vmatprep.subr.bf16.mxu0 0
      %1955 = vmatpush2.bf16.msra.mxu0 0
      %1956 = vmatprep.subr.bf16.mxu0 0
      %1957 = vmatpush2.bf16.msra.mxu0 0
      %1958 = vmatprep.subr.bf16.mxu0 0
      %1959 = vmatpush2.bf16.msra.mxu0 0
      %1960 = vmatprep.subr.bf16.mxu0 0
      %1961 = vmatpush2.bf16.msra.mxu0 0
      %1962 = vmatprep.subr.bf16.mxu0 0
      %1963 = vmatpush2.bf16.msra.mxu0 0
      %1964 = vmatprep.subr.bf16.mxu0 0
      %1965 = vmatpush2.bf16.msra.mxu0 0
      %1966 = vmatprep.mubr.bf16.mxu0 0
      %1967 = vmatmul.mubr.bf16.gmra.mxu0 %v1929
      %v1968 = vpop.f32.mrf.mxu0
      %v1969 = vadd.f32 0.0, %v1968
      %v1970 = vpop.f32.mrf.mxu0
      %v1971 = vpop.f32.mrf.mxu0
      %v1972 = vpop.f32.mrf.mxu0
      %1973 = vdwg.mxu0
      %1974 = vrot.lane.b32.xlu0 %v529, 108
      %v1975 = vpop.permute.xlu0 %1974
      %v1977 = vsel %vm446, %v1919, 0
      %v1980 = vsel %vm459, %v1975, 0
      %1982 = vmatprep.subr.bf16.mxu0 0
      %1983 = vmatpush1.bf16.msra.mxu0 0
      %1984 = vmatprep.subr.bf16.mxu0 0
      %1985 = vmatpush1.bf16.msra.mxu0 0
      %1986 = vmatprep.subr.bf16.mxu0 0
      %1987 = vmatpush1.bf16.msra.mxu0 0
      %1988 = vmatprep.subr.bf16.mxu0 0
      %1989 = vmatpush1.bf16.msra.mxu0 0
      %1990 = vmatprep.subr.bf16.mxu0 0
      %1991 = vmatpush1.bf16.msra.mxu0 0
      %1992 = vmatprep.subr.bf16.mxu0 0
      %1993 = vmatpush1.bf16.msra.mxu0 0
      %1994 = vmatprep.subr.bf16.mxu0 0
      %1995 = vmatpush1.bf16.msra.mxu0 0
      %1996 = vmatprep.subr.bf16.mxu0 0
      %1997 = vmatpush1.bf16.msra.mxu0 %v1980
      %1998 = vmatprep.subr.bf16.mxu0 0
      %1999 = vmatpush2.bf16.msra.mxu0 0
      %2000 = vmatprep.subr.bf16.mxu0 0
      %2001 = vmatpush2.bf16.msra.mxu0 0
      %2002 = vmatprep.subr.bf16.mxu0 0
      %2003 = vmatpush2.bf16.msra.mxu0 0
      %2004 = vmatprep.subr.bf16.mxu0 0
      %2005 = vmatpush2.bf16.msra.mxu0 0
      %2006 = vmatprep.subr.bf16.mxu0 0
      %2007 = vmatpush2.bf16.msra.mxu0 0
      %2008 = vmatprep.subr.bf16.mxu0 0
      %2009 = vmatpush2.bf16.msra.mxu0 0
      %2010 = vmatprep.subr.bf16.mxu0 0
      %2011 = vmatpush2.bf16.msra.mxu0 0
      %2012 = vmatprep.subr.bf16.mxu0 0
      %2013 = vmatpush2.bf16.msra.mxu0 0
      %2014 = vmatprep.mubr.bf16.mxu0 0
      %2015 = vmatmul.mubr.bf16.gmra.mxu0 %v1977
      %v2016 = vpop.f32.mrf.mxu0
      %v2017 = vadd.f32 0.0, %v2016
      %v2018 = vpop.f32.mrf.mxu0
      %v2019 = vpop.f32.mrf.mxu0
      %v2020 = vpop.f32.mrf.mxu0
      %2021 = vdwg.mxu0
      %2022 = vrot.lane.b32.xlu0 %v530, 108
      %v2023 = vpop.permute.xlu0 %2022
      %v2025 = vsel %vm446, %v1920, 0
      %v2028 = vsel %vm459, %v2023, 0
      %2030 = vmatprep.subr.bf16.mxu0 0
      %2031 = vmatpush1.bf16.msra.mxu0 0
      %2032 = vmatprep.subr.bf16.mxu0 0
      %2033 = vmatpush1.bf16.msra.mxu0 0
      %2034 = vmatprep.subr.bf16.mxu0 0
      %2035 = vmatpush1.bf16.msra.mxu0 0
      %2036 = vmatprep.subr.bf16.mxu0 0
      %2037 = vmatpush1.bf16.msra.mxu0 0
      %2038 = vmatprep.subr.bf16.mxu0 0
      %2039 = vmatpush1.bf16.msra.mxu0 0
      %2040 = vmatprep.subr.bf16.mxu0 0
      %2041 = vmatpush1.bf16.msra.mxu0 0
      %2042 = vmatprep.subr.bf16.mxu0 0
      %2043 = vmatpush1.bf16.msra.mxu0 0
      %2044 = vmatprep.subr.bf16.mxu0 0
      %2045 = vmatpush1.bf16.msra.mxu0 %v2028
      %2046 = vmatprep.subr.bf16.mxu0 0
      %2047 = vmatpush2.bf16.msra.mxu0 0
      %2048 = vmatprep.subr.bf16.mxu0 0
      %2049 = vmatpush2.bf16.msra.mxu0 0
      %2050 = vmatprep.subr.bf16.mxu0 0
      %2051 = vmatpush2.bf16.msra.mxu0 0
      %2052 = vmatprep.subr.bf16.mxu0 0
      %2053 = vmatpush2.bf16.msra.mxu0 0
      %2054 = vmatprep.subr.bf16.mxu0 0
      %2055 = vmatpush2.bf16.msra.mxu0 0
      %2056 = vmatprep.subr.bf16.mxu0 0
      %2057 = vmatpush2.bf16.msra.mxu0 0
      %2058 = vmatprep.subr.bf16.mxu0 0
      %2059 = vmatpush2.bf16.msra.mxu0 0
      %2060 = vmatprep.subr.bf16.mxu0 0
      %2061 = vmatpush2.bf16.msra.mxu0 0
      %2062 = vmatprep.mubr.bf16.mxu0 0
      %2063 = vmatmul.mubr.bf16.gmra.mxu0 %v2025
      %v2064 = vpop.f32.mrf.mxu0
      %v2065 = vadd.f32 0.0, %v2064
      %v2066 = vpop.f32.mrf.mxu0
      %v2067 = vpop.f32.mrf.mxu0
      %v2068 = vpop.f32.mrf.mxu0
      %2069 = vdwg.mxu0
      %2070 = vrot.lane.b32.xlu0 %v531, 108
      %v2071 = vpop.permute.xlu0 %2070
      %v2073 = vsel %vm446, %v1921, 0
      %v2076 = vsel %vm459, %v2071, 0
      %2078 = vmatprep.subr.bf16.mxu0 0
      %2079 = vmatpush1.bf16.msra.mxu0 0
      %2080 = vmatprep.subr.bf16.mxu0 0
      %2081 = vmatpush1.bf16.msra.mxu0 0
      %2082 = vmatprep.subr.bf16.mxu0 0
      %2083 = vmatpush1.bf16.msra.mxu0 0
      %2084 = vmatprep.subr.bf16.mxu0 0
      %2085 = vmatpush1.bf16.msra.mxu0 0
      %2086 = vmatprep.subr.bf16.mxu0 0
      %2087 = vmatpush1.bf16.msra.mxu0 0
      %2088 = vmatprep.subr.bf16.mxu0 0
      %2089 = vmatpush1.bf16.msra.mxu0 0
      %2090 = vmatprep.subr.bf16.mxu0 0
      %2091 = vmatpush1.bf16.msra.mxu0 0
      %2092 = vmatprep.subr.bf16.mxu0 0
      %2093 = vmatpush1.bf16.msra.mxu0 %v2076
      %2094 = vmatprep.subr.bf16.mxu0 0
      %2095 = vmatpush2.bf16.msra.mxu0 0
      %2096 = vmatprep.subr.bf16.mxu0 0
      %2097 = vmatpush2.bf16.msra.mxu0 0
      %2098 = vmatprep.subr.bf16.mxu0 0
      %2099 = vmatpush2.bf16.msra.mxu0 0
      %2100 = vmatprep.subr.bf16.mxu0 0
      %2101 = vmatpush2.bf16.msra.mxu0 0
      %2102 = vmatprep.subr.bf16.mxu0 0
      %2103 = vmatpush2.bf16.msra.mxu0 0
      %2104 = vmatprep.subr.bf16.mxu0 0
      %2105 = vmatpush2.bf16.msra.mxu0 0
      %2106 = vmatprep.subr.bf16.mxu0 0
      %2107 = vmatpush2.bf16.msra.mxu0 0
      %2108 = vmatprep.subr.bf16.mxu0 0
      %2109 = vmatpush2.bf16.msra.mxu0 0
      %2110 = vmatprep.mubr.bf16.mxu0 0
      %2111 = vmatmul.mubr.bf16.gmra.mxu0 %v2073
      %v2112 = vpop.f32.mrf.mxu0
      %v2113 = vadd.f32 0.0, %v2112
      %v2114 = vpop.f32.mrf.mxu0
      %v2115 = vpop.f32.mrf.mxu0
      %v2116 = vpop.f32.mrf.mxu0
      %2117 = vdwg.mxu0
      %2118 = vrot.lane.b32.xlu0 %v532, 108
      %v2119 = vpop.permute.xlu0 %2118
      %v2121 = vsel %vm446, %v1922, 0
      %v2124 = vsel %vm459, %v2119, 0
      %2126 = vmatprep.subr.bf16.mxu0 0
      %2127 = vmatpush1.bf16.msra.mxu0 0
      %2128 = vmatprep.subr.bf16.mxu0 0
      %2129 = vmatpush1.bf16.msra.mxu0 0
      %2130 = vmatprep.subr.bf16.mxu0 0
      %2131 = vmatpush1.bf16.msra.mxu0 0
      %2132 = vmatprep.subr.bf16.mxu0 0
      %2133 = vmatpush1.bf16.msra.mxu0 0
      %2134 = vmatprep.subr.bf16.mxu0 0
      %2135 = vmatpush1.bf16.msra.mxu0 0
      %2136 = vmatprep.subr.bf16.mxu0 0
      %2137 = vmatpush1.bf16.msra.mxu0 0
      %2138 = vmatprep.subr.bf16.mxu0 0
      %2139 = vmatpush1.bf16.msra.mxu0 0
      %2140 = vmatprep.subr.bf16.mxu0 0
      %2141 = vmatpush1.bf16.msra.mxu0 %v2124
      %2142 = vmatprep.subr.bf16.mxu0 0
      %2143 = vmatpush2.bf16.msra.mxu0 0
      %2144 = vmatprep.subr.bf16.mxu0 0
      %2145 = vmatpush2.bf16.msra.mxu0 0
      %2146 = vmatprep.subr.bf16.mxu0 0
      %2147 = vmatpush2.bf16.msra.mxu0 0
      %2148 = vmatprep.subr.bf16.mxu0 0
      %2149 = vmatpush2.bf16.msra.mxu0 0
      %2150 = vmatprep.subr.bf16.mxu0 0
      %2151 = vmatpush2.bf16.msra.mxu0 0
      %2152 = vmatprep.subr.bf16.mxu0 0
      %2153 = vmatpush2.bf16.msra.mxu0 0
      %2154 = vmatprep.subr.bf16.mxu0 0
      %2155 = vmatpush2.bf16.msra.mxu0 0
      %2156 = vmatprep.subr.bf16.mxu0 0
      %2157 = vmatpush2.bf16.msra.mxu0 0
      %2158 = vmatprep.mubr.bf16.mxu0 0
      %2159 = vmatmul.mubr.bf16.gmra.mxu0 %v2121
      %v2160 = vpop.f32.mrf.mxu0
      %v2161 = vadd.f32 0.0, %v2160
      %v2162 = vpop.f32.mrf.mxu0
      %v2163 = vpop.f32.mrf.mxu0
      %v2164 = vpop.f32.mrf.mxu0
      %2165 = vdwg.mxu0
      %2166 = vrot.lane.b32.xlu0 %v533, 108
      %v2167 = vpop.permute.xlu0 %2166
      %v2169 = vsel %vm446, %v1923, 0
      %v2172 = vsel %vm459, %v2167, 0
      %2174 = vmatprep.subr.bf16.mxu0 0
      %2175 = vmatpush1.bf16.msra.mxu0 0
      %2176 = vmatprep.subr.bf16.mxu0 0
      %2177 = vmatpush1.bf16.msra.mxu0 0
      %2178 = vmatprep.subr.bf16.mxu0 0
      %2179 = vmatpush1.bf16.msra.mxu0 0
      %2180 = vmatprep.subr.bf16.mxu0 0
      %2181 = vmatpush1.bf16.msra.mxu0 0
      %2182 = vmatprep.subr.bf16.mxu0 0
      %2183 = vmatpush1.bf16.msra.mxu0 0
      %2184 = vmatprep.subr.bf16.mxu0 0
      %2185 = vmatpush1.bf16.msra.mxu0 0
      %2186 = vmatprep.subr.bf16.mxu0 0
      %2187 = vmatpush1.bf16.msra.mxu0 0
      %2188 = vmatprep.subr.bf16.mxu0 0
      %2189 = vmatpush1.bf16.msra.mxu0 %v2172
      %2190 = vmatprep.subr.bf16.mxu0 0
      %2191 = vmatpush2.bf16.msra.mxu0 0
      %2192 = vmatprep.subr.bf16.mxu0 0
      %2193 = vmatpush2.bf16.msra.mxu0 0
      %2194 = vmatprep.subr.bf16.mxu0 0
      %2195 = vmatpush2.bf16.msra.mxu0 0
      %2196 = vmatprep.subr.bf16.mxu0 0
      %2197 = vmatpush2.bf16.msra.mxu0 0
      %2198 = vmatprep.subr.bf16.mxu0 0
      %2199 = vmatpush2.bf16.msra.mxu0 0
      %2200 = vmatprep.subr.bf16.mxu0 0
      %2201 = vmatpush2.bf16.msra.mxu0 0
      %2202 = vmatprep.subr.bf16.mxu0 0
      %2203 = vmatpush2.bf16.msra.mxu0 0
      %2204 = vmatprep.subr.bf16.mxu0 0
      %2205 = vmatpush2.bf16.msra.mxu0 0
      %2206 = vmatprep.mubr.bf16.mxu0 0
      %2207 = vmatmul.mubr.bf16.gmra.mxu0 %v2169
      %v2208 = vpop.f32.mrf.mxu0
      %v2209 = vadd.f32 0.0, %v2208
      %v2210 = vpop.f32.mrf.mxu0
      %v2211 = vpop.f32.mrf.mxu0
      %v2212 = vpop.f32.mrf.mxu0
      %2213 = vdwg.mxu0
      %2214 = vrot.lane.b32.xlu0 %v534, 108
      %v2215 = vpop.permute.xlu0 %2214
      %v2217 = vsel %vm446, %v1924, 0
      %v2220 = vsel %vm459, %v2215, 0
      %2222 = vmatprep.subr.bf16.mxu0 0
      %2223 = vmatpush1.bf16.msra.mxu0 0
      %2224 = vmatprep.subr.bf16.mxu0 0
      %2225 = vmatpush1.bf16.msra.mxu0 0
      %2226 = vmatprep.subr.bf16.mxu0 0
      %2227 = vmatpush1.bf16.msra.mxu0 0
      %2228 = vmatprep.subr.bf16.mxu0 0
      %2229 = vmatpush1.bf16.msra.mxu0 0
      %2230 = vmatprep.subr.bf16.mxu0 0
      %2231 = vmatpush1.bf16.msra.mxu0 0
      %2232 = vmatprep.subr.bf16.mxu0 0
      %2233 = vmatpush1.bf16.msra.mxu0 0
      %2234 = vmatprep.subr.bf16.mxu0 0
      %2235 = vmatpush1.bf16.msra.mxu0 0
      %2236 = vmatprep.subr.bf16.mxu0 0
      %2237 = vmatpush1.bf16.msra.mxu0 %v2220
      %2238 = vmatprep.subr.bf16.mxu0 0
      %2239 = vmatpush2.bf16.msra.mxu0 0
      %2240 = vmatprep.subr.bf16.mxu0 0
      %2241 = vmatpush2.bf16.msra.mxu0 0
      %2242 = vmatprep.subr.bf16.mxu0 0
      %2243 = vmatpush2.bf16.msra.mxu0 0
      %2244 = vmatprep.subr.bf16.mxu0 0
      %2245 = vmatpush2.bf16.msra.mxu0 0
      %2246 = vmatprep.subr.bf16.mxu0 0
      %2247 = vmatpush2.bf16.msra.mxu0 0
      %2248 = vmatprep.subr.bf16.mxu0 0
      %2249 = vmatpush2.bf16.msra.mxu0 0
      %2250 = vmatprep.subr.bf16.mxu0 0
      %2251 = vmatpush2.bf16.msra.mxu0 0
      %2252 = vmatprep.subr.bf16.mxu0 0
      %2253 = vmatpush2.bf16.msra.mxu0 0
      %2254 = vmatprep.mubr.bf16.mxu0 0
      %2255 = vmatmul.mubr.bf16.gmra.mxu0 %v2217
      %v2256 = vpop.f32.mrf.mxu0
      %v2257 = vadd.f32 0.0, %v2256
      %v2258 = vpop.f32.mrf.mxu0
      %v2259 = vpop.f32.mrf.mxu0
      %v2260 = vpop.f32.mrf.mxu0
      %2261 = vdwg.mxu0
      %2262 = vrot.lane.b32.xlu0 %v535, 108
      %v2263 = vpop.permute.xlu0 %2262
      %v2265 = vsel %vm446, %v1925, 0
      %v2268 = vsel %vm459, %v2263, 0
      %2270 = vmatprep.subr.bf16.mxu0 0
      %2271 = vmatpush1.bf16.msra.mxu0 0
      %2272 = vmatprep.subr.bf16.mxu0 0
      %2273 = vmatpush1.bf16.msra.mxu0 0
      %2274 = vmatprep.subr.bf16.mxu0 0
      %2275 = vmatpush1.bf16.msra.mxu0 0
      %2276 = vmatprep.subr.bf16.mxu0 0
      %2277 = vmatpush1.bf16.msra.mxu0 0
      %2278 = vmatprep.subr.bf16.mxu0 0
      %2279 = vmatpush1.bf16.msra.mxu0 0
      %2280 = vmatprep.subr.bf16.mxu0 0
      %2281 = vmatpush1.bf16.msra.mxu0 0
      %2282 = vmatprep.subr.bf16.mxu0 0
      %2283 = vmatpush1.bf16.msra.mxu0 0
      %2284 = vmatprep.subr.bf16.mxu0 0
      %2285 = vmatpush1.bf16.msra.mxu0 %v2268
      %2286 = vmatprep.subr.bf16.mxu0 0
      %2287 = vmatpush2.bf16.msra.mxu0 0
      %2288 = vmatprep.subr.bf16.mxu0 0
      %2289 = vmatpush2.bf16.msra.mxu0 0
      %2290 = vmatprep.subr.bf16.mxu0 0
      %2291 = vmatpush2.bf16.msra.mxu0 0
      %2292 = vmatprep.subr.bf16.mxu0 0
      %2293 = vmatpush2.bf16.msra.mxu0 0
      %2294 = vmatprep.subr.bf16.mxu0 0
      %2295 = vmatpush2.bf16.msra.mxu0 0
      %2296 = vmatprep.subr.bf16.mxu0 0
      %2297 = vmatpush2.bf16.msra.mxu0 0
      %2298 = vmatprep.subr.bf16.mxu0 0
      %2299 = vmatpush2.bf16.msra.mxu0 0
      %2300 = vmatprep.subr.bf16.mxu0 0
      %2301 = vmatpush2.bf16.msra.mxu0 0
      %2302 = vmatprep.mubr.bf16.mxu0 0
      %2303 = vmatmul.mubr.bf16.gmra.mxu0 %v2265
      %v2304 = vpop.f32.mrf.mxu0
      %v2305 = vadd.f32 0.0, %v2304
      %v2306 = vpop.f32.mrf.mxu0
      %v2307 = vpop.f32.mrf.mxu0
      %v2308 = vpop.f32.mrf.mxu0
      %2309 = vdwg.mxu0
      %v2310 = vpack.c.bf16 %v2017, %v1969
      %v2311 = vpack.c.bf16 %v2113, %v2065
      %v2312 = vpack.c.bf16 %v2209, %v2161
      %v2313 = vpack.c.bf16 %v2305, %v2257
      %v2314 = vld [vmem:[%s3] sm:$0xc]
      %v2316 = vunpack.c.l.b16 %v2314
      %v2317 = vpack.c.b16 %v2316, %v2316
      %v2318 = vrot.slane %v2317, 2
      %v2320 = vsel %vm539, %v2310, 0
      %v2323 = vsel %vm539, %v2311, 0
      %v2326 = vsel %vm539, %v2312, 0
      %v2329 = vsel %vm539, %v2313, 0
      %vm2331 = vcmask 1041408
      %v2333 = vsel %vm2331, %v2318, 0
      %2335 = vmatprep.subr.bf16.mxu0 0
      %2336 = vmatpush1.bf16.msra.mxu0 0
      %2337 = vmatprep.subr.bf16.mxu0 0
      %2338 = vmatpush1.bf16.msra.mxu0 0
      %2339 = vmatprep.subr.bf16.mxu0 0
      %2340 = vmatpush1.bf16.msra.mxu0 0
      %2341 = vmatprep.subr.bf16.mxu0 0
      %2342 = vmatpush1.bf16.msra.mxu0 0
      %2343 = vmatprep.subr.bf16.mxu0 0
      %2344 = vmatpush1.bf16.msra.mxu0 0
      %2345 = vmatprep.subr.bf16.mxu0 0
      %2346 = vmatpush1.bf16.msra.mxu0 0
      %2347 = vmatprep.subr.bf16.mxu0 0
      %2348 = vmatpush1.bf16.msra.mxu0 0
      %2349 = vmatprep.subr.bf16.mxu0 0
      %2350 = vmatpush1.bf16.msra.mxu0 %v2333
      %2351 = vmatprep.subr.bf16.mxu0 0
      %2352 = vmatpush2.bf16.msra.mxu0 0
      %2353 = vmatprep.subr.bf16.mxu0 0
      %2354 = vmatpush2.bf16.msra.mxu0 0
      %2355 = vmatprep.subr.bf16.mxu0 0
      %2356 = vmatpush2.bf16.msra.mxu0 0
      %2357 = vmatprep.subr.bf16.mxu0 0
      %2358 = vmatpush2.bf16.msra.mxu0 0
      %2359 = vmatprep.subr.bf16.mxu0 0
      %2360 = vmatpush2.bf16.msra.mxu0 0
      %2361 = vmatprep.subr.bf16.mxu0 0
      %2362 = vmatpush2.bf16.msra.mxu0 0
      %2363 = vmatprep.subr.bf16.mxu0 0
      %2364 = vmatpush2.bf16.msra.mxu0 0
      %2365 = vmatprep.subr.bf16.mxu0 0
      %2366 = vmatpush2.bf16.msra.mxu0 0
      %2367 = vmatprep.mubr.bf16.mxu0 0
      %2368 = vmatmul.mubr.bf16.gmra.mxu0 %v2320
      %v2369 = vpop.f32.mrf.mxu0
      %v2370 = vadd.f32 0.0, %v2369
      %v2371 = vpop.f32.mrf.mxu0
      %v2372 = vpop.f32.mrf.mxu0
      %v2373 = vadd.f32 0.0, %v2372
      %v2374 = vpop.f32.mrf.mxu0
      %2375 = vmatprep.mubr.bf16.mxu0 0
      %2376 = vmatmul.mubr.bf16.gmra.mxu0 %v2323
      %v2377 = vpop.f32.mrf.mxu0
      %v2378 = vadd.f32 0.0, %v2377
      %v2379 = vpop.f32.mrf.mxu0
      %v2380 = vpop.f32.mrf.mxu0
      %v2381 = vadd.f32 0.0, %v2380
      %v2382 = vpop.f32.mrf.mxu0
      %2383 = vmatprep.mubr.bf16.mxu0 0
      %2384 = vmatmul.mubr.bf16.gmra.mxu0 %v2326
      %v2385 = vpop.f32.mrf.mxu0
      %v2386 = vadd.f32 0.0, %v2385
      %v2387 = vpop.f32.mrf.mxu0
      %v2388 = vpop.f32.mrf.mxu0
      %v2389 = vadd.f32 0.0, %v2388
      %v2390 = vpop.f32.mrf.mxu0
      %2391 = vmatprep.mubr.bf16.mxu0 0
      %2392 = vmatmul.mubr.bf16.gmra.mxu0 %v2329
      %v2393 = vpop.f32.mrf.mxu0
      %v2394 = vadd.f32 0.0, %v2393
      %v2395 = vpop.f32.mrf.mxu0
      %v2396 = vpop.f32.mrf.mxu0
      %v2397 = vadd.f32 0.0, %v2396
      %v2398 = vpop.f32.mrf.mxu0
      %2399 = vdwg.mxu0
      %v2401 = vsel %vm539, %v1417, 0
      %v2404 = vsel %vm539, %v1418, 0
      %v2407 = vsel %vm539, %v1419, 0
      %v2410 = vsel %vm539, %v1420, 0
      %v2413 = vsel %vm2331, %v1421, 0
      %2415 = vmatprep.subr.bf16.mxu0 0
      %2416 = vmatpush1.bf16.msra.mxu0 0
      %2417 = vmatprep.subr.bf16.mxu0 0
      %2418 = vmatpush1.bf16.msra.mxu0 0
      %2419 = vmatprep.subr.bf16.mxu0 0
      %2420 = vmatpush1.bf16.msra.mxu0 0
      %2421 = vmatprep.subr.bf16.mxu0 0
      %2422 = vmatpush1.bf16.msra.mxu0 0
      %2423 = vmatprep.subr.bf16.mxu0 0
      %2424 = vmatpush1.bf16.msra.mxu0 0
      %2425 = vmatprep.subr.bf16.mxu0 0
      %2426 = vmatpush1.bf16.msra.mxu0 0
      %2427 = vmatprep.subr.bf16.mxu0 0
      %2428 = vmatpush1.bf16.msra.mxu0 0
      %2429 = vmatprep.subr.bf16.mxu0 0
      %2430 = vmatpush1.bf16.msra.mxu0 %v2413
      %2431 = vmatprep.subr.bf16.mxu0 0
      %2432 = vmatpush2.bf16.msra.mxu0 0
      %2433 = vmatprep.subr.bf16.mxu0 0
      %2434 = vmatpush2.bf16.msra.mxu0 0
      %2435 = vmatprep.subr.bf16.mxu0 0
      %2436 = vmatpush2.bf16.msra.mxu0 0
      %2437 = vmatprep.subr.bf16.mxu0 0
      %2438 = vmatpush2.bf16.msra.mxu0 0
      %2439 = vmatprep.subr.bf16.mxu0 0
      %2440 = vmatpush2.bf16.msra.mxu0 0
      %2441 = vmatprep.subr.bf16.mxu0 0
      %2442 = vmatpush2.bf16.msra.mxu0 0
      %2443 = vmatprep.subr.bf16.mxu0 0
      %2444 = vmatpush2.bf16.msra.mxu0 0
      %2445 = vmatprep.subr.bf16.mxu0 0
      %2446 = vmatpush2.bf16.msra.mxu0 0
      %2447 = vmatprep.mubr.bf16.mxu0 0
      %2448 = vmatmul.mubr.bf16.gmra.mxu0 %v2401
      %v2449 = vpop.f32.mrf.mxu0
      %v2450 = vadd.f32 %v2370, %v2449
      %v2451 = vpop.f32.mrf.mxu0
      %v2452 = vpop.f32.mrf.mxu0
      %v2453 = vadd.f32 %v2373, %v2452
      %v2454 = vpop.f32.mrf.mxu0
      %2455 = vmatprep.mubr.bf16.mxu0 0
      %2456 = vmatmul.mubr.bf16.gmra.mxu0 %v2404
      %v2457 = vpop.f32.mrf.mxu0
      %v2458 = vadd.f32 %v2378, %v2457
      %v2459 = vpop.f32.mrf.mxu0
      %v2460 = vpop.f32.mrf.mxu0
      %v2461 = vadd.f32 %v2381, %v2460
      %v2462 = vpop.f32.mrf.mxu0
      %2463 = vmatprep.mubr.bf16.mxu0 0
      %2464 = vmatmul.mubr.bf16.gmra.mxu0 %v2407
      %v2465 = vpop.f32.mrf.mxu0
      %v2466 = vadd.f32 %v2386, %v2465
      %v2467 = vpop.f32.mrf.mxu0
      %v2468 = vpop.f32.mrf.mxu0
      %v2469 = vadd.f32 %v2389, %v2468
      %v2470 = vpop.f32.mrf.mxu0
      %2471 = vmatprep.mubr.bf16.mxu0 0
      %2472 = vmatmul.mubr.bf16.gmra.mxu0 %v2410
      %v2473 = vpop.f32.mrf.mxu0
      %v2474 = vadd.f32 %v2394, %v2473
      %v2475 = vpop.f32.mrf.mxu0
      %v2476 = vpop.f32.mrf.mxu0
      %v2477 = vadd.f32 %v2397, %v2476
      %v2478 = vpop.f32.mrf.mxu0
      %2479 = vdwg.mxu0
      %v2480 = vlaneseq
      %v2481 = vshrl.u32 %v2480, 7
      %v2482 = vsub.s32 0, %v2481
      %v2483 = vrot.slane %v428, %v2482
      %v2484 = vadd.f32 %v2450, %v2483
      %v2485 = vadd.f32 %v2453, %v2483
      %v2486 = vadd.f32 %v2458, %v2483
      %v2487 = vadd.f32 %v2461, %v2483
      %v2488 = vadd.f32 %v2466, %v2483
      %v2489 = vadd.f32 %v2469, %v2483
      %v2490 = vadd.f32 %v2474, %v2483
      %v2491 = vadd.f32 %v2477, %v2483
      %v2492 = vadd.f32 %v420, %v2484
      %v2493 = vadd.f32 %v421, %v2485
      %v2494 = vadd.f32 %v422, %v2486
      %v2495 = vadd.f32 %v423, %v2487
      %v2496 = vadd.f32 %v424, %v2488
      %v2497 = vadd.f32 %v425, %v2489
      %v2498 = vadd.f32 %v426, %v2490
      %v2499 = vadd.f32 %v427, %v2491
      %v2500 = vsel %vm446, %v2492, 0.0
      %2501 = vadd.xlane.f32.xlu0 %v2500
      %v2502 = vpop.xlane.xlu0 %2501
      %v2503 = vsel %vm446, %v2493, 0.0
      %2504 = vadd.xlane.f32.xlu0 %v2503
      %v2505 = vpop.xlane.xlu0 %2504
      %v2506 = vsel %vm446, %v2494, 0.0
      %2507 = vadd.xlane.f32.xlu0 %v2506
      %v2508 = vpop.xlane.xlu0 %2507
      %v2509 = vsel %vm446, %v2495, 0.0
      %2510 = vadd.xlane.f32.xlu0 %v2509
      %v2511 = vpop.xlane.xlu0 %2510
      %v2512 = vsel %vm446, %v2496, 0.0
      %2513 = vadd.xlane.f32.xlu0 %v2512
      %v2514 = vpop.xlane.xlu0 %2513
      %v2515 = vsel %vm446, %v2497, 0.0
      %2516 = vadd.xlane.f32.xlu0 %v2515
      %v2517 = vpop.xlane.xlu0 %2516
      %v2518 = vsel %vm446, %v2498, 0.0
      %2519 = vadd.xlane.f32.xlu0 %v2518
      %v2520 = vpop.xlane.xlu0 %2519
      %v2521 = vsel %vm446, %v2499, 0.0
      %2522 = vadd.xlane.f32.xlu0 %v2521
      %v2523 = vpop.xlane.xlu0 %2522
      %v2524 = vrcp.pop 8.0
      %v2525 = vmul.f32 %v2502, %v2524
      %v2526 = vmul.f32 %v2505, %v2524
      %v2527 = vmul.f32 %v2508, %v2524
      %v2528 = vmul.f32 %v2511, %v2524
      %v2529 = vmul.f32 %v2514, %v2524
      %v2530 = vmul.f32 %v2517, %v2524
      %v2531 = vmul.f32 %v2520, %v2524
      %v2532 = vmul.f32 %v2523, %v2524
      %v2533 = vsub.f32 %v2492, %v2525
      %v2534 = vsub.f32 %v2493, %v2526
      %v2535 = vsub.f32 %v2494, %v2527
      %v2536 = vsub.f32 %v2495, %v2528
      %v2537 = vsub.f32 %v2496, %v2529
      %v2538 = vsub.f32 %v2497, %v2530
      %v2539 = vsub.f32 %v2498, %v2531
      %v2540 = vsub.f32 %v2499, %v2532
      %v2541 = vmul.f32 %v2533, %v2533
      %v2542 = vmul.f32 %v2534, %v2534
      %v2543 = vmul.f32 %v2535, %v2535
      %v2544 = vmul.f32 %v2536, %v2536
      %v2545 = vmul.f32 %v2537, %v2537
      %v2546 = vmul.f32 %v2538, %v2538
      %v2547 = vmul.f32 %v2539, %v2539
      %v2548 = vmul.f32 %v2540, %v2540
      %v2549 = vsel %vm446, %v2541, 0.0
      %2550 = vadd.xlane.f32.xlu0 %v2549
      %v2551 = vpop.xlane.xlu0 %2550
      %v2552 = vsel %vm446, %v2542, 0.0
      %2553 = vadd.xlane.f32.xlu0 %v2552
      %v2554 = vpop.xlane.xlu0 %2553
      %v2555 = vsel %vm446, %v2543, 0.0
      %2556 = vadd.xlane.f32.xlu0 %v2555
      %v2557 = vpop.xlane.xlu0 %2556
      %v2558 = vsel %vm446, %v2544, 0.0
      %2559 = vadd.xlane.f32.xlu0 %v2558
      %v2560 = vpop.xlane.xlu0 %2559
      %v2561 = vsel %vm446, %v2545, 0.0
      %2562 = vadd.xlane.f32.xlu0 %v2561
      %v2563 = vpop.xlane.xlu0 %2562
      %v2564 = vsel %vm446, %v2546, 0.0
      %2565 = vadd.xlane.f32.xlu0 %v2564
      %v2566 = vpop.xlane.xlu0 %2565
      %v2567 = vsel %vm446, %v2547, 0.0
      %2568 = vadd.xlane.f32.xlu0 %v2567
      %v2569 = vpop.xlane.xlu0 %2568
      %v2570 = vsel %vm446, %v2548, 0.0
      %2571 = vadd.xlane.f32.xlu0 %v2570
      %v2572 = vpop.xlane.xlu0 %2571
      %v2573 = vmul.f32 %v2551, %v2524
      %v2574 = vmul.f32 %v2554, %v2524
      %v2575 = vmul.f32 %v2557, %v2524
      %v2576 = vmul.f32 %v2560, %v2524
      %v2577 = vmul.f32 %v2563, %v2524
      %v2578 = vmul.f32 %v2566, %v2524
      %v2579 = vmul.f32 %v2569, %v2524
      %v2580 = vmul.f32 %v2572, %v2524
      %v2581 = vadd.f32 %v2573, 1e-05
      %v2582 = vadd.f32 %v2574, 1e-05
      %v2583 = vadd.f32 %v2575, 1e-05
      %v2584 = vadd.f32 %v2576, 1e-05
      %v2585 = vadd.f32 %v2577, 1e-05
      %v2586 = vadd.f32 %v2578, 1e-05
      %v2587 = vadd.f32 %v2579, 1e-05
      %v2588 = vadd.f32 %v2580, 1e-05
      %v2589 = vrsqrt.pop %v2581
      %v2590 = vrsqrt.pop %v2582
      %v2591 = vrsqrt.pop %v2583
      %v2592 = vrsqrt.pop %v2584
      %v2593 = vrsqrt.pop %v2585
      %v2594 = vrsqrt.pop %v2586
      %v2595 = vrsqrt.pop %v2587
      %v2596 = vrsqrt.pop %v2588
      %v2597 = vmul.f32 %v2533, %v2589
      %v2598 = vmul.f32 %v2534, %v2590
      %v2599 = vmul.f32 %v2535, %v2591
      %v2600 = vmul.f32 %v2536, %v2592
      %v2601 = vmul.f32 %v2537, %v2593
      %v2602 = vmul.f32 %v2538, %v2594
      %v2603 = vmul.f32 %v2539, %v2595
      %v2604 = vmul.f32 %v2540, %v2596
      %v2605 = vlaneseq
      %v2606 = vshrl.u32 %v2605, 7
      %v2607 = vsub.s32 0, %v2606
      %v2608 = vrot.slane %v430, %v2607
      %v2609 = vmul.f32 %v2597, %v2608
      %v2610 = vmul.f32 %v2598, %v2608
      %v2611 = vmul.f32 %v2599, %v2608
      %v2612 = vmul.f32 %v2600, %v2608
      %v2613 = vmul.f32 %v2601, %v2608
      %v2614 = vmul.f32 %v2602, %v2608
      %v2615 = vmul.f32 %v2603, %v2608
      %v2616 = vmul.f32 %v2604, %v2608
      %v2617 = vlaneseq
      %v2618 = vshrl.u32 %v2617, 7
      %v2619 = vsub.s32 0, %v2618
      %v2620 = vrot.slane %v431, %v2619
      %v2621 = vadd.f32 %v2609, %v2620
      %v2622 = vadd.f32 %v2610, %v2620
      %v2623 = vadd.f32 %v2611, %v2620
      %v2624 = vadd.f32 %v2612, %v2620
      %v2625 = vadd.f32 %v2613, %v2620
      %v2626 = vadd.f32 %v2614, %v2620
      %v2627 = vadd.f32 %v2615, %v2620
      %v2628 = vadd.f32 %v2616, %v2620
      %v2629 = vpack.c.bf16 %v2622, %v2621
      %v2630 = vpack.c.bf16 %v2624, %v2623
      %v2631 = vpack.c.bf16 %v2626, %v2625
      %v2632 = vpack.c.bf16 %v2628, %v2627
      %v2633 = vld [vmem:[%s4] sm:$0xf]
      %v2634 = vld [vmem:[%s5] sm:$0x1]
      %v2636 = vlaneseq
      %v2637 = vshrl.u32 %v2636, 7
      %v2638 = vsub.s32 0, %v2637
      %v2639 = vrot.slane %v2634, %v2638
      %v2642 = vsel %vm446, %v2629, 0
      %v2645 = vsel %vm446, %v2630, 0
      %v2648 = vsel %vm446, %v2631, 0
      %v2651 = vsel %vm446, %v2632, 0
      %v2654 = vsel %vm459, %v2633, 0
      %2656 = vmatprep.subr.bf16.mxu0 0
      %2657 = vmatpush1.bf16.msra.mxu0 0
      %2658 = vmatprep.subr.bf16.mxu0 0
      %2659 = vmatpush1.bf16.msra.mxu0 0
      %2660 = vmatprep.subr.bf16.mxu0 0
      %2661 = vmatpush1.bf16.msra.mxu0 0
      %2662 = vmatprep.subr.bf16.mxu0 0
      %2663 = vmatpush1.bf16.msra.mxu0 0
      %2664 = vmatprep.subr.bf16.mxu0 0
      %2665 = vmatpush1.bf16.msra.mxu0 0
      %2666 = vmatprep.subr.bf16.mxu0 0
      %2667 = vmatpush1.bf16.msra.mxu0 0
      %2668 = vmatprep.subr.bf16.mxu0 0
      %2669 = vmatpush1.bf16.msra.mxu0 0
      %2670 = vmatprep.subr.bf16.mxu0 0
      %2671 = vmatpush1.bf16.msra.mxu0 %v2654
      %2672 = vmatprep.subr.bf16.mxu0 0
      %2673 = vmatpush2.bf16.msra.mxu0 0
      %2674 = vmatprep.subr.bf16.mxu0 0
      %2675 = vmatpush2.bf16.msra.mxu0 0
      %2676 = vmatprep.subr.bf16.mxu0 0
      %2677 = vmatpush2.bf16.msra.mxu0 0
      %2678 = vmatprep.subr.bf16.mxu0 0
      %2679 = vmatpush2.bf16.msra.mxu0 0
      %2680 = vmatprep.subr.bf16.mxu0 0
      %2681 = vmatpush2.bf16.msra.mxu0 0
      %2682 = vmatprep.subr.bf16.mxu0 0
      %2683 = vmatpush2.bf16.msra.mxu0 0
      %2684 = vmatprep.subr.bf16.mxu0 0
      %2685 = vmatpush2.bf16.msra.mxu0 0
      %2686 = vmatprep.subr.bf16.mxu0 0
      %2687 = vmatpush2.bf16.msra.mxu0 0
      %2688 = vmatprep.mubr.bf16.mxu0 0
      %2689 = vmatmul.mubr.bf16.gmra.mxu0 %v2642
      %v2690 = vpop.f32.mrf.mxu0
      %v2691 = vadd.f32 %v2639, %v2690
      %v2692 = vpop.f32.mrf.mxu0
      %v2693 = vpop.f32.mrf.mxu0
      %v2694 = vadd.f32 %v2639, %v2693
      %v2695 = vpop.f32.mrf.mxu0
      %2696 = vmatprep.mubr.bf16.mxu0 0
      %2697 = vmatmul.mubr.bf16.gmra.mxu0 %v2645
      %v2698 = vpop.f32.mrf.mxu0
      %v2699 = vadd.f32 %v2639, %v2698
      %v2700 = vpop.f32.mrf.mxu0
      %v2701 = vpop.f32.mrf.mxu0
      %v2702 = vadd.f32 %v2639, %v2701
      %v2703 = vpop.f32.mrf.mxu0
      %2704 = vmatprep.mubr.bf16.mxu0 0
      %2705 = vmatmul.mubr.bf16.gmra.mxu0 %v2648
      %v2706 = vpop.f32.mrf.mxu0
      %v2707 = vadd.f32 %v2639, %v2706
      %v2708 = vpop.f32.mrf.mxu0
      %v2709 = vpop.f32.mrf.mxu0
      %v2710 = vadd.f32 %v2639, %v2709
      %v2711 = vpop.f32.mrf.mxu0
      %2712 = vmatprep.mubr.bf16.mxu0 0
      %2713 = vmatmul.mubr.bf16.gmra.mxu0 %v2651
      %v2714 = vpop.f32.mrf.mxu0
      %v2715 = vadd.f32 %v2639, %v2714
      %v2716 = vpop.f32.mrf.mxu0
      %v2717 = vpop.f32.mrf.mxu0
      %v2718 = vadd.f32 %v2639, %v2717
      %v2719 = vpop.f32.mrf.mxu0
      %2720 = vdwg.mxu0
      %v2721 = vmul.f32 %v2691, %v2691
      %v2722 = vmul.f32 %v2694, %v2694
      %v2723 = vmul.f32 %v2699, %v2699
      %v2724 = vmul.f32 %v2702, %v2702
      %v2725 = vmul.f32 %v2707, %v2707
      %v2726 = vmul.f32 %v2710, %v2710
      %v2727 = vmul.f32 %v2715, %v2715
      %v2728 = vmul.f32 %v2718, %v2718
      %v2729 = vmul.f32 %v2691, %v2721
      %v2730 = vmul.f32 %v2694, %v2722
      %v2731 = vmul.f32 %v2699, %v2723
      %v2732 = vmul.f32 %v2702, %v2724
      %v2733 = vmul.f32 %v2707, %v2725
      %v2734 = vmul.f32 %v2710, %v2726
      %v2735 = vmul.f32 %v2715, %v2727
      %v2736 = vmul.f32 %v2718, %v2728
      %v2737 = vmul.f32 %v2729, 0.044715
      %v2738 = vmul.f32 %v2730, 0.044715
      %v2739 = vmul.f32 %v2731, 0.044715
      %v2740 = vmul.f32 %v2732, 0.044715
      %v2741 = vmul.f32 %v2733, 0.044715
      %v2742 = vmul.f32 %v2734, 0.044715
      %v2743 = vmul.f32 %v2735, 0.044715
      %v2744 = vmul.f32 %v2736, 0.044715
      %v2745 = vadd.f32 %v2691, %v2737
      %v2746 = vadd.f32 %v2694, %v2738
      %v2747 = vadd.f32 %v2699, %v2739
      %v2748 = vadd.f32 %v2702, %v2740
      %v2749 = vadd.f32 %v2707, %v2741
      %v2750 = vadd.f32 %v2710, %v2742
      %v2751 = vadd.f32 %v2715, %v2743
      %v2752 = vadd.f32 %v2718, %v2744
      %v2753 = vmul.f32 %v2745, 0.7978846
      %v2754 = vmul.f32 %v2746, 0.7978846
      %v2755 = vmul.f32 %v2747, 0.7978846
      %v2756 = vmul.f32 %v2748, 0.7978846
      %v2757 = vmul.f32 %v2749, 0.7978846
      %v2758 = vmul.f32 %v2750, 0.7978846
      %v2759 = vmul.f32 %v2751, 0.7978846
      %v2760 = vmul.f32 %v2752, 0.7978846
      %v2761 = vtanh.pop %v2753
      %v2762 = vtanh.pop %v2754
      %v2763 = vtanh.pop %v2755
      %v2764 = vtanh.pop %v2756
      %v2765 = vtanh.pop %v2757
      %v2766 = vtanh.pop %v2758
      %v2767 = vtanh.pop %v2759
      %v2768 = vtanh.pop %v2760
      %v2769 = vadd.f32 %v2761, 1.0
      %v2770 = vadd.f32 %v2762, 1.0
      %v2771 = vadd.f32 %v2763, 1.0
      %v2772 = vadd.f32 %v2764, 1.0
      %v2773 = vadd.f32 %v2765, 1.0
      %v2774 = vadd.f32 %v2766, 1.0
      %v2775 = vadd.f32 %v2767, 1.0
      %v2776 = vadd.f32 %v2768, 1.0
      %v2777 = vmul.f32 %v2769, 0.5
      %v2778 = vmul.f32 %v2770, 0.5
      %v2779 = vmul.f32 %v2771, 0.5
      %v2780 = vmul.f32 %v2772, 0.5
      %v2781 = vmul.f32 %v2773, 0.5
      %v2782 = vmul.f32 %v2774, 0.5
      %v2783 = vmul.f32 %v2775, 0.5
      %v2784 = vmul.f32 %v2776, 0.5
      %v2785 = vmul.f32 %v2691, %v2777
      %v2786 = vmul.f32 %v2694, %v2778
      %v2787 = vmul.f32 %v2699, %v2779
      %v2788 = vmul.f32 %v2702, %v2780
      %v2789 = vmul.f32 %v2707, %v2781
      %v2790 = vmul.f32 %v2710, %v2782
      %v2791 = vmul.f32 %v2715, %v2783
      %v2792 = vmul.f32 %v2718, %v2784
      %v2793 = vpack.c.bf16 %v2786, %v2785
      %v2794 = vpack.c.bf16 %v2788, %v2787
      %v2795 = vpack.c.bf16 %v2790, %v2789
      %v2796 = vpack.c.bf16 %v2792, %v2791
      %v2797 = vld [vmem:[%s6] sm:$0xf]
      %v2798 = vld [vmem:[%s6 + $0x4] sm:$0xf]
      %v2799 = vld [vmem:[%s6 + $0x8] sm:$0xf]
      %v2800 = vld [vmem:[%s6 + $0xc] sm:$0xf]
      %v2801 = vld [vmem:[%s6 + $0x10] sm:$0xf]
      %v2802 = vld [vmem:[%s6 + $0x14] sm:$0xf]
      %v2803 = vld [vmem:[%s6 + $0x18] sm:$0xf]
      %v2804 = vld [vmem:[%s6 + $0x1c] sm:$0xf]
      %v2805 = vlaneseq
      %v2806 = vshrl.u32 %v2805, 7
      %v2807 = vsub.s32 0, %v2806
      %v2808 = vrot.slane %v429, %v2807
      %v2817 = vunpack.c.l.b16 %v2797
      %v2818 = vunpack.c.l.b16 %v2798
      %v2819 = vunpack.c.l.b16 %v2799
      %v2820 = vunpack.c.l.b16 %v2800
      %v2821 = vunpack.c.l.b16 %v2801
      %v2822 = vunpack.c.l.b16 %v2802
      %v2823 = vunpack.c.l.b16 %v2803
      %v2824 = vunpack.c.l.b16 %v2804
      %v2825 = vpack.c.b16 %v2818, %v2817
      %v2826 = vpack.c.b16 %v2820, %v2819
      %v2827 = vpack.c.b16 %v2822, %v2821
      %v2828 = vpack.c.b16 %v2824, %v2823
      %vm2833 = vcmask 523264
      %v2835 = vsel %vm2833, %v2793, 0
      %v2838 = vsel %vm2833, %v2794, 0
      %v2841 = vsel %vm2833, %v2795, 0
      %v2844 = vsel %vm2833, %v2796, 0
      %2846 = vmatprep.subr.bf16.mxu0 0
      %2847 = vmatpush1.bf16.msra.mxu0 0
      %2848 = vmatprep.subr.bf16.mxu0 0
      %2849 = vmatpush1.bf16.msra.mxu0 0
      %2850 = vmatprep.subr.bf16.mxu0 0
      %2851 = vmatpush1.bf16.msra.mxu0 0
      %2852 = vmatprep.subr.bf16.mxu0 0
      %2853 = vmatpush1.bf16.msra.mxu0 0
      %2854 = vmatprep.subr.bf16.mxu0 0
      %2855 = vmatpush1.bf16.msra.mxu0 %v2828
      %2856 = vmatprep.subr.bf16.mxu0 0
      %2857 = vmatpush1.bf16.msra.mxu0 %v2827
      %2858 = vmatprep.subr.bf16.mxu0 0
      %2859 = vmatpush1.bf16.msra.mxu0 %v2826
      %2860 = vmatprep.subr.bf16.mxu0 0
      %2861 = vmatpush1.bf16.msra.mxu0 %v2825
      %2862 = vmatprep.subr.bf16.mxu0 0
      %2863 = vmatpush2.bf16.msra.mxu0 0
      %2864 = vmatprep.subr.bf16.mxu0 0
      %2865 = vmatpush2.bf16.msra.mxu0 0
      %2866 = vmatprep.subr.bf16.mxu0 0
      %2867 = vmatpush2.bf16.msra.mxu0 0
      %2868 = vmatprep.subr.bf16.mxu0 0
      %2869 = vmatpush2.bf16.msra.mxu0 0
      %2870 = vmatprep.subr.bf16.mxu0 0
      %2871 = vmatpush2.bf16.msra.mxu0 0
      %2872 = vmatprep.subr.bf16.mxu0 0
      %2873 = vmatpush2.bf16.msra.mxu0 0
      %2874 = vmatprep.subr.bf16.mxu0 0
      %2875 = vmatpush2.bf16.msra.mxu0 0
      %2876 = vmatprep.subr.bf16.mxu0 0
      %2877 = vmatpush2.bf16.msra.mxu0 0
      %2878 = vmatprep.mubr.bf16.mxu0 0
      %2879 = vmatmul.mubr.bf16.gmra.mxu0 %v2835
      %v2880 = vpop.f32.mrf.mxu0
      %v2881 = vadd.f32 %v2808, %v2880
      %v2882 = vpop.f32.mrf.mxu0
      %v2883 = vpop.f32.mrf.mxu0
      %v2884 = vadd.f32 %v2808, %v2883
      %v2885 = vpop.f32.mrf.mxu0
      %2886 = vmatprep.mubr.bf16.mxu0 0
      %2887 = vmatmul.mubr.bf16.gmra.mxu0 %v2838
      %v2888 = vpop.f32.mrf.mxu0
      %v2889 = vadd.f32 %v2808, %v2888
      %v2890 = vpop.f32.mrf.mxu0
      %v2891 = vpop.f32.mrf.mxu0
      %v2892 = vadd.f32 %v2808, %v2891
      %v2893 = vpop.f32.mrf.mxu0
      %2894 = vmatprep.mubr.bf16.mxu0 0
      %2895 = vmatmul.mubr.bf16.gmra.mxu0 %v2841
      %v2896 = vpop.f32.mrf.mxu0
      %v2897 = vadd.f32 %v2808, %v2896
      %v2898 = vpop.f32.mrf.mxu0
      %v2899 = vpop.f32.mrf.mxu0
      %v2900 = vadd.f32 %v2808, %v2899
      %v2901 = vpop.f32.mrf.mxu0
      %2902 = vmatprep.mubr.bf16.mxu0 0
      %2903 = vmatmul.mubr.bf16.gmra.mxu0 %v2844
      %v2904 = vpop.f32.mrf.mxu0
      %v2905 = vadd.f32 %v2808, %v2904
      %v2906 = vpop.f32.mrf.mxu0
      %v2907 = vpop.f32.mrf.mxu0
      %v2908 = vadd.f32 %v2808, %v2907
      %v2909 = vpop.f32.mrf.mxu0
      %2910 = vdwg.mxu0
      %v2911 = vadd.f32 %v2621, %v2881
      %v2912 = vadd.f32 %v2622, %v2884
      %v2913 = vadd.f32 %v2623, %v2889
      %v2914 = vadd.f32 %v2624, %v2892
      %v2915 = vadd.f32 %v2625, %v2897
      %v2916 = vadd.f32 %v2626, %v2900
      %v2917 = vadd.f32 %v2627, %v2905
      %v2918 = vadd.f32 %v2628, %v2908
      %v2919 = vsel %vm446, %v2911, 0.0
      %2920 = vadd.xlane.f32.xlu0 %v2919
      %v2921 = vpop.xlane.xlu0 %2920
      %v2922 = vsel %vm446, %v2912, 0.0
      %2923 = vadd.xlane.f32.xlu0 %v2922
      %v2924 = vpop.xlane.xlu0 %2923
      %v2925 = vsel %vm446, %v2913, 0.0
      %2926 = vadd.xlane.f32.xlu0 %v2925
      %v2927 = vpop.xlane.xlu0 %2926
      %v2928 = vsel %vm446, %v2914, 0.0
      %2929 = vadd.xlane.f32.xlu0 %v2928
      %v2930 = vpop.xlane.xlu0 %2929
      %v2931 = vsel %vm446, %v2915, 0.0
      %2932 = vadd.xlane.f32.xlu0 %v2931
      %v2933 = vpop.xlane.xlu0 %2932
      %v2934 = vsel %vm446, %v2916, 0.0
      %2935 = vadd.xlane.f32.xlu0 %v2934
      %v2936 = vpop.xlane.xlu0 %2935
      %v2937 = vsel %vm446, %v2917, 0.0
      %2938 = vadd.xlane.f32.xlu0 %v2937
      %v2939 = vpop.xlane.xlu0 %2938
      %v2940 = vsel %vm446, %v2918, 0.0
      %2941 = vadd.xlane.f32.xlu0 %v2940
      %v2942 = vpop.xlane.xlu0 %2941
      %v2943 = vmul.f32 %v2921, %v2524
      %v2944 = vmul.f32 %v2924, %v2524
      %v2945 = vmul.f32 %v2927, %v2524
      %v2946 = vmul.f32 %v2930, %v2524
      %v2947 = vmul.f32 %v2933, %v2524
      %v2948 = vmul.f32 %v2936, %v2524
      %v2949 = vmul.f32 %v2939, %v2524
      %v2950 = vmul.f32 %v2942, %v2524
      %v2951 = vsub.f32 %v2911, %v2943
      %v2952 = vsub.f32 %v2912, %v2944
      %v2953 = vsub.f32 %v2913, %v2945
      %v2954 = vsub.f32 %v2914, %v2946
      %v2955 = vsub.f32 %v2915, %v2947
      %v2956 = vsub.f32 %v2916, %v2948
      %v2957 = vsub.f32 %v2917, %v2949
      %v2958 = vsub.f32 %v2918, %v2950
      %v2959 = vmul.f32 %v2951, %v2951
      %v2960 = vmul.f32 %v2952, %v2952
      %v2961 = vmul.f32 %v2953, %v2953
      %v2962 = vmul.f32 %v2954, %v2954
      %v2963 = vmul.f32 %v2955, %v2955
      %v2964 = vmul.f32 %v2956, %v2956
      %v2965 = vmul.f32 %v2957, %v2957
      %v2966 = vmul.f32 %v2958, %v2958
      %v2967 = vsel %vm446, %v2959, 0.0
      %2968 = vadd.xlane.f32.xlu0 %v2967
      %v2969 = vpop.xlane.xlu0 %2968
      %v2970 = vsel %vm446, %v2960, 0.0
      %2971 = vadd.xlane.f32.xlu0 %v2970
      %v2972 = vpop.xlane.xlu0 %2971
      %v2973 = vsel %vm446, %v2961, 0.0
      %2974 = vadd.xlane.f32.xlu0 %v2973
      %v2975 = vpop.xlane.xlu0 %2974
      %v2976 = vsel %vm446, %v2962, 0.0
      %2977 = vadd.xlane.f32.xlu0 %v2976
      %v2978 = vpop.xlane.xlu0 %2977
      %v2979 = vsel %vm446, %v2963, 0.0
      %2980 = vadd.xlane.f32.xlu0 %v2979
      %v2981 = vpop.xlane.xlu0 %2980
      %v2982 = vsel %vm446, %v2964, 0.0
      %2983 = vadd.xlane.f32.xlu0 %v2982
      %v2984 = vpop.xlane.xlu0 %2983
      %v2985 = vsel %vm446, %v2965, 0.0
      %2986 = vadd.xlane.f32.xlu0 %v2985
      %v2987 = vpop.xlane.xlu0 %2986
      %v2988 = vsel %vm446, %v2966, 0.0
      %2989 = vadd.xlane.f32.xlu0 %v2988
      %v2990 = vpop.xlane.xlu0 %2989
      %v2991 = vmul.f32 %v2969, %v2524
      %v2992 = vmul.f32 %v2972, %v2524
      %v2993 = vmul.f32 %v2975, %v2524
      %v2994 = vmul.f32 %v2978, %v2524
      %v2995 = vmul.f32 %v2981, %v2524
      %v2996 = vmul.f32 %v2984, %v2524
      %v2997 = vmul.f32 %v2987, %v2524
      %v2998 = vmul.f32 %v2990, %v2524
      %v2999 = vadd.f32 %v2991, 1e-05
      %v3000 = vadd.f32 %v2992, 1e-05
      %v3001 = vadd.f32 %v2993, 1e-05
      %v3002 = vadd.f32 %v2994, 1e-05
      %v3003 = vadd.f32 %v2995, 1e-05
      %v3004 = vadd.f32 %v2996, 1e-05
      %v3005 = vadd.f32 %v2997, 1e-05
      %v3006 = vadd.f32 %v2998, 1e-05
      %v3007 = vrsqrt.pop %v2999
      %v3008 = vrsqrt.pop %v3000
      %v3009 = vrsqrt.pop %v3001
      %v3010 = vrsqrt.pop %v3002
      %v3011 = vrsqrt.pop %v3003
      %v3012 = vrsqrt.pop %v3004
      %v3013 = vrsqrt.pop %v3005
      %v3014 = vrsqrt.pop %v3006
      %v3015 = vmul.f32 %v2951, %v3007
      %v3016 = vmul.f32 %v2952, %v3008
      %v3017 = vmul.f32 %v2953, %v3009
      %v3018 = vmul.f32 %v2954, %v3010
      %v3019 = vmul.f32 %v2955, %v3011
      %v3020 = vmul.f32 %v2956, %v3012
      %v3021 = vmul.f32 %v2957, %v3013
      %v3022 = vmul.f32 %v2958, %v3014
      %v3023 = vlaneseq
      %v3024 = vshrl.u32 %v3023, 7
      %v3025 = vsub.s32 0, %v3024
      %v3026 = vrot.slane %v432, %v3025
      %v3027 = vmul.f32 %v3015, %v3026
      %v3028 = vmul.f32 %v3016, %v3026
      %v3029 = vmul.f32 %v3017, %v3026
      %v3030 = vmul.f32 %v3018, %v3026
      %v3031 = vmul.f32 %v3019, %v3026
      %v3032 = vmul.f32 %v3020, %v3026
      %v3033 = vmul.f32 %v3021, %v3026
      %v3034 = vmul.f32 %v3022, %v3026
      %v3035 = vlaneseq
      %v3036 = vshrl.u32 %v3035, 7
      %v3037 = vsub.s32 0, %v3036
      %v3038 = vrot.slane %v433, %v3037
      %v3039 = vadd.f32 %v3027, %v3038
      %v3040 = vadd.f32 %v3028, %v3038
      %v3041 = vadd.f32 %v3029, %v3038
      %v3042 = vadd.f32 %v3030, %v3038
      %v3043 = vadd.f32 %v3031, %v3038
      %v3044 = vadd.f32 %v3032, %v3038
      %v3045 = vadd.f32 %v3033, %v3038
      %v3046 = vadd.f32 %v3034, %v3038
      %v3047 = vpack.c.bf16 %v3040, %v3039
      %v3048 = vpack.c.bf16 %v3042, %v3041
      %v3049 = vpack.c.bf16 %v3044, %v3043
      %v3050 = vpack.c.bf16 %v3046, %v3045
      %v3055 = vunpack.c.l.b16 %v3047
      %v3056 = vunpack.c.h.b16 %v3047
      %v3057 = vunpack.c.l.b16 %v3048
      %v3058 = vunpack.c.h.b16 %v3048
      %v3059 = vunpack.c.l.b16 %v3049
      %v3060 = vunpack.c.h.b16 %v3049
      %v3061 = vunpack.c.l.b16 %v3050
      %v3062 = vunpack.c.h.b16 %v3050
      %v3063 = vpack.c.b16 %v3055, %v3055
      %v3064 = vpack.c.b16 %v3056, %v3056
      %v3065 = vpack.c.b16 %v3057, %v3057
      %v3066 = vpack.c.b16 %v3058, %v3058
      %v3067 = vpack.c.b16 %v3059, %v3059
      %v3068 = vpack.c.b16 %v3060, %v3060
      %v3069 = vpack.c.b16 %v3061, %v3061
      %v3070 = vpack.c.b16 %v3062, %v3062
      %vm3079 = vcmask 60416
      %3080 = vst.msk [vmem:[%s353] sm:$0xf] %vm3079, %v3063
      %3081 = vst.msk [vmem:[%s353 + $0x4] sm:$0xf] %vm3079, %v3064
      %3082 = vst.msk [vmem:[%s353 + $0x8] sm:$0xf] %vm3079, %v3065
      %3083 = vst.msk [vmem:[%s353 + $0xc] sm:$0xf] %vm3079, %v3066
      %3084 = vst.msk [vmem:[%s353 + $0x10] sm:$0xf] %vm3079, %v3067
      %3085 = vst.msk [vmem:[%s353 + $0x14] sm:$0xf] %vm3079, %v3068
      %3086 = vst.msk [vmem:[%s353 + $0x18] sm:$0xf] %vm3079, %v3069
      %3087 = vst.msk [vmem:[%s353 + $0x1c] sm:$0xf] %vm3079, %v3070
      %s3088 = smul.u32 8, %s20
      %p3089 = scmp.lt.s32.totalorder %s3088, 15
      %s3090 = scalar_select %p3089, %s3088, 15
      %s3091 = smul.addr %s3090, 4
      %s3092 = scalar_lea.vmem %s9, %s3091
      // Predicated region
      $region57: #{residual_block_forward.3} parent=55 // pred_check
        %p3093 = pneg %p237
      $region58: #{residual_block_forward.3} parent=55 // pred_check_branch
        %3095 = sbr.rel (%p3093) target = $region60
      $region59: #{residual_block_forward.3} parent=55 // pred_region
        %s3096 = smul.u32 8, %s20
      $region60: #{residual_block_forward.3} parent=55 // pred_fallthru
        _
    $region56: #{residual_block_forward.3} parent=5 // pred_fallthru
      _
    %p3097 = scmp.le.s32.totalorder 2, %s15
    // Predicated region
    $region61: #{residual_block_forward.3} parent=5 // pred_check
      %p3098 = pneg %p3097
    $region62: #{residual_block_forward.3} parent=5 // pred_check_branch
      %3100 = sbr.rel (%p3098) target = $region64
    $region63: #{residual_block_forward.3} parent=5 // pred_region
      %s3101 = ssub.s32 %s15, 2
      // Predicated region
      $region65: #{residual_block_forward.3} parent=63 // pred_check
        %p3102 = pneg %p243
      $region66: #{residual_block_forward.3} parent=63 // pred_check_branch
        %3104 = sbr.rel (%p3102) target = $region68
      $region67: #{residual_block_forward.3} parent=63 // pred_region
        %s3105 = smul.u32 8, %s21
        %p3106 = scmp.lt.s32.totalorder %s3105, 15
        %s3107 = scalar_select %p3106, %s3105, 15
        %s3108 = smul.addr %s3107, 4
        %s3109 = scalar_lea.vmem %s9, %s3108
      $region68: #{residual_block_forward.3} parent=63 // pred_fallthru
        _
    $region64: #{residual_block_forward.3} parent=5 // pred_fallthru
      _
  $region6: #{residual_block_forward.3} parent=0 // loop_footer
    %s19 = sadd.s32 1, %s15
  $region7: #{residual_block_forward.3} parent=0 // loop_footer_branch
    %14 = sbr.rel target = $region3
  $region8: #{residual_block_forward.3} parent=0 // loop_exit
    _

// kernel: residual_block_forward.4
$region0: #{residual_block_forward.4}
  #allocation0 [shape = 'u32[]', space=smem, size = 0x4, offset = 0x4, fixed_abs, tag = 'smem constant byte address 0x4 - core index']
  #allocation1 [shape = 'u32[144,128]{1,0:T(1,128)}', space=vmem, size = 0x12000, scoped, tag = 'internal scratch']
  %s0 = inlined_call_operand.vmem [shape: bf16[128,8], index: 0, kind: input, shape index: {}]
  %s1 = inlined_call_operand.vmem [shape: bf16[8,24], index: 1, kind: input, shape index: {}]
  %s2 = inlined_call_operand.vmem [shape: f32[1,24], index: 2, kind: input, shape index: {}]
  %s3 = inlined_call_operand.vmem [shape: bf16[8,8], index: 3, kind: input, shape index: {}]
  %s4 = inlined_call_operand.vmem [shape: bf16[8,64], index: 4, kind: input, shape index: {}]
  %s5 = inlined_call_operand.vmem [shape: f32[1,64], index: 5, kind: input, shape index: {}]
  %s6 = inlined_call_operand.vmem [shape: bf16[64,8], index: 6, kind: input, shape index: {}]
  %s7 = inlined_call_operand.vmem [shape: f32[6,8], index: 7, kind: input, shape index: {}]
  %s8 = inlined_call_operand.vmem [shape: bf16[8,128], index: 8, kind: output, shape index: {}]
  %s9 = sld [smem:[#allocation0]]
  $region42: #{residual_block_forward.4} parent=0
    _
  %s11 = ssub.s32 1, %s9
  %s12 = scalar_select 0, %s11, %s9
  // Predicated region
  $region2: #{residual_block_forward.4} parent=0 // pred_check
    _
  $region3: #{residual_block_forward.4} parent=0 // pred_check_branch
    %14 = sbr.rel (0) target = $region5
  $region4: #{residual_block_forward.4} parent=0 // pred_region
    _
  $region5: #{residual_block_forward.4} parent=0 // pred_fallthru
    _
  // Predicated region
  $region6: #{residual_block_forward.4} parent=0 // pred_check
    _
  $region7: #{residual_block_forward.4} parent=0 // pred_check_branch
    %16 = sbr.rel (0) target = $region9
  $region8: #{residual_block_forward.4} parent=0 // pred_region
    _
  $region9: #{residual_block_forward.4} parent=0 // pred_fallthru
    _
  // Predicated region
  $region10: #{residual_block_forward.4} parent=0 // pred_check
    _
  $region11: #{residual_block_forward.4} parent=0 // pred_check_branch
    %18 = sbr.rel (0) target = $region13
  $region12: #{residual_block_forward.4} parent=0 // pred_region
    _
  $region13: #{residual_block_forward.4} parent=0 // pred_fallthru
    _
  // Predicated region
  $region14: #{residual_block_forward.4} parent=0 // pred_check
    _
  $region15: #{residual_block_forward.4} parent=0 // pred_check_branch
    %20 = sbr.rel (0) target = $region17
  $region16: #{residual_block_forward.4} parent=0 // pred_region
    _
  $region17: #{residual_block_forward.4} parent=0 // pred_fallthru
    _
  // Predicated region
  $region18: #{residual_block_forward.4} parent=0 // pred_check
    _
  $region19: #{residual_block_forward.4} parent=0 // pred_check_branch
    %22 = sbr.rel (0) target = $region21
  $region20: #{residual_block_forward.4} parent=0 // pred_region
    _
  $region21: #{residual_block_forward.4} parent=0 // pred_fallthru
    _
  // Predicated region
  $region22: #{residual_block_forward.4} parent=0 // pred_check
    _
  $region23: #{residual_block_forward.4} parent=0 // pred_check_branch
    %24 = sbr.rel (0) target = $region25
  $region24: #{residual_block_forward.4} parent=0 // pred_region
    _
  $region25: #{residual_block_forward.4} parent=0 // pred_fallthru
    _
  // Predicated region
  $region26: #{residual_block_forward.4} parent=0 // pred_check
    _
  $region27: #{residual_block_forward.4} parent=0 // pred_check_branch
    %26 = sbr.rel (0) target = $region29
  $region28: #{residual_block_forward.4} parent=0 // pred_region
    _
  $region29: #{residual_block_forward.4} parent=0 // pred_fallthru
    _
  // Predicated region
  $region30: #{residual_block_forward.4} parent=0 // pred_check
    _
  $region31: #{residual_block_forward.4} parent=0 // pred_check_branch
    %28 = sbr.rel (0) target = $region33
  $region32: #{residual_block_forward.4} parent=0 // pred_region
    _
  $region33: #{residual_block_forward.4} parent=0 // pred_fallthru
    _
  %v30 = vld [vmem:[%s0] sm:$0xf]
  %v31 = vld [vmem:[%s0 + $0x4] sm:$0xf]
  %v32 = vld [vmem:[%s0 + $0x8] sm:$0xf]
  %v33 = vld [vmem:[%s0 + $0xc] sm:$0xf]
  %v34 = vld [vmem:[%s0 + $0x10] sm:$0xf]
  %v35 = vld [vmem:[%s0 + $0x14] sm:$0xf]
  %v36 = vld [vmem:[%s0 + $0x18] sm:$0xf]
  %v37 = vld [vmem:[%s0 + $0x1c] sm:$0xf]
  %v38 = vld [vmem:[%s0 + $0x20] sm:$0xf]
  %v39 = vld [vmem:[%s0 + $0x24] sm:$0xf]
  %v40 = vld [vmem:[%s0 + $0x28] sm:$0xf]
  %v41 = vld [vmem:[%s0 + $0x2c] sm:$0xf]
  %v42 = vld [vmem:[%s0 + $0x30] sm:$0xf]
  %v43 = vld [vmem:[%s0 + $0x34] sm:$0xf]
  %v44 = vld [vmem:[%s0 + $0x38] sm:$0xf]
  %v45 = vld [vmem:[%s0 + $0x3c] sm:$0xf]
  %v46 = vunpack.c.l.bf16 %v30
  %v47 = vunpack.c.l.bf16 %v31
  %v48 = vunpack.c.l.bf16 %v32
  %v49 = vunpack.c.l.bf16 %v33
  %v50 = vunpack.c.l.bf16 %v34
  %v51 = vunpack.c.l.bf16 %v35
  %v52 = vunpack.c.l.bf16 %v36
  %v53 = vunpack.c.l.bf16 %v37
  %v54 = vunpack.c.l.bf16 %v38
  %v55 = vunpack.c.l.bf16 %v39
  %v56 = vunpack.c.l.bf16 %v40
  %v57 = vunpack.c.l.bf16 %v41
  %v58 = vunpack.c.l.bf16 %v42
  %v59 = vunpack.c.l.bf16 %v43
  %v60 = vunpack.c.l.bf16 %v44
  %v61 = vunpack.c.l.bf16 %v45
  %v62 = vld [vmem:[%s7] sm:$0x1]
  %v63 = vld [vmem:[%s7 + $0x1] sm:$0x1]
  %v64 = vld [vmem:[%s7 + $0x2] sm:$0x1]
  %v65 = vld [vmem:[%s7 + $0x3] sm:$0x1]
  %v66 = vld [vmem:[%s7 + $0x4] sm:$0x1]
  %v67 = vld [vmem:[%s7 + $0x5] sm:$0x1]
  %v68 = vld [vmem:[%s1] sm:$0xf]
  %v69 = vld [vmem:[%s2] sm:$0x1]
  %v71 = vlaneseq
  %v72 = vshrl.u32 %v71, 7
  %v73 = vsub.s32 0, %v72
  %v74 = vrot.slane %v69, %v73
  %v92 = vunpack.c.l.b16 %v30
  %v93 = vunpack.c.l.b16 %v31
  %v94 = vunpack.c.l.b16 %v32
  %v95 = vunpack.c.l.b16 %v33
  %v96 = vunpack.c.l.b16 %v34
  %v97 = vunpack.c.l.b16 %v35
  %v98 = vunpack.c.l.b16 %v36
  %v99 = vunpack.c.l.b16 %v37
  %v100 = vunpack.c.l.b16 %v38
  %v101 = vunpack.c.l.b16 %v39
  %v102 = vunpack.c.l.b16 %v40
  %v103 = vunpack.c.l.b16 %v41
  %v104 = vunpack.c.l.b16 %v42
  %v105 = vunpack.c.l.b16 %v43
  %v106 = vunpack.c.l.b16 %v44
  %v107 = vunpack.c.l.b16 %v45
  %v108 = vpack.c.b16 %v93, %v92
  %v109 = vpack.c.b16 %v95, %v94
  %v110 = vpack.c.b16 %v97, %v96
  %v111 = vpack.c.b16 %v99, %v98
  %v112 = vpack.c.b16 %v101, %v100
  %v113 = vpack.c.b16 %v103, %v102
  %v114 = vpack.c.b16 %v105, %v104
  %v115 = vpack.c.b16 %v107, %v106
  %vm116 = vcmask 64512
  %v118 = vsel %vm116, %v108, 0
  %v121 = vsel %vm116, %v109, 0
  %v124 = vsel %vm116, %v110, 0
  %v127 = vsel %vm116, %v111, 0
  %v130 = vsel %vm116, %v112, 0
  %v133 = vsel %vm116, %v113, 0
  %v136 = vsel %vm116, %v114, 0
  %v139 = vsel %vm116, %v115, 0
  %vm141 = vcmask 1043456
  %v143 = vsel %vm141, %v68, 0
  %145 = vmatprep.subr.bf16.mxu0 0
  %146 = vmatpush1.bf16.msra.mxu0 0
  %147 = vmatprep.subr.bf16.mxu0 0
  %148 = vmatpush1.bf16.msra.mxu0 0
  %149 = vmatprep.subr.bf16.mxu0 0
  %150 = vmatpush1.bf16.msra.mxu0 0
  %151 = vmatprep.subr.bf16.mxu0 0
  %152 = vmatpush1.bf16.msra.mxu0 0
  %153 = vmatprep.subr.bf16.mxu0 0
  %154 = vmatpush1.bf16.msra.mxu0 0
  %155 = vmatprep.subr.bf16.mxu0 0
  %156 = vmatpush1.bf16.msra.mxu0 0
  %157 = vmatprep.subr.bf16.mxu0 0
  %158 = vmatpush1.bf16.msra.mxu0 0
  %159 = vmatprep.subr.bf16.mxu0 0
  %160 = vmatpush1.bf16.msra.mxu0 %v143
  %161 = vmatprep.subr.bf16.mxu0 0
  %162 = vmatpush2.bf16.msra.mxu0 0
  %163 = vmatprep.subr.bf16.mxu0 0
  %164 = vmatpush2.bf16.msra.mxu0 0
  %165 = vmatprep.subr.bf16.mxu0 0
  %166 = vmatpush2.bf16.msra.mxu0 0
  %167 = vmatprep.subr.bf16.mxu0 0
  %168 = vmatpush2.bf16.msra.mxu0 0
  %169 = vmatprep.subr.bf16.mxu0 0
  %170 = vmatpush2.bf16.msra.mxu0 0
  %171 = vmatprep.subr.bf16.mxu0 0
  %172 = vmatpush2.bf16.msra.mxu0 0
  %173 = vmatprep.subr.bf16.mxu0 0
  %174 = vmatpush2.bf16.msra.mxu0 0
  %175 = vmatprep.subr.bf16.mxu0 0
  %176 = vmatpush2.bf16.msra.mxu0 0
  %177 = vmatprep.mubr.bf16.mxu0 0
  %178 = vmatmul.mubr.bf16.gmra.mxu0 %v118
  %v179 = vpop.f32.mrf.mxu0
  %v180 = vadd.f32 %v74, %v179
  %v181 = vpop.f32.mrf.mxu0
  %v182 = vpop.f32.mrf.mxu0
  %v183 = vadd.f32 %v74, %v182
  %v184 = vpop.f32.mrf.mxu0
  %185 = vmatprep.mubr.bf16.mxu0 0
  %186 = vmatmul.mubr.bf16.gmra.mxu0 %v121
  %v187 = vpop.f32.mrf.mxu0
  %v188 = vadd.f32 %v74, %v187
  %v189 = vpop.f32.mrf.mxu0
  %v190 = vpop.f32.mrf.mxu0
  %v191 = vadd.f32 %v74, %v190
  %v192 = vpop.f32.mrf.mxu0
  %193 = vmatprep.mubr.bf16.mxu0 0
  %194 = vmatmul.mubr.bf16.gmra.mxu0 %v124
  %v195 = vpop.f32.mrf.mxu0
  %v196 = vadd.f32 %v74, %v195
  %v197 = vpop.f32.mrf.mxu0
  %v198 = vpop.f32.mrf.mxu0
  %v199 = vadd.f32 %v74, %v198
  %v200 = vpop.f32.mrf.mxu0
  %201 = vmatprep.mubr.bf16.mxu0 0
  %202 = vmatmul.mubr.bf16.gmra.mxu0 %v127
  %v203 = vpop.f32.mrf.mxu0
  %v204 = vadd.f32 %v74, %v203
  %v205 = vpop.f32.mrf.mxu0
  %v206 = vpop.f32.mrf.mxu0
  %v207 = vadd.f32 %v74, %v206
  %v208 = vpop.f32.mrf.mxu0
  %209 = vmatprep.mubr.bf16.mxu0 0
  %210 = vmatmul.mubr.bf16.gmra.mxu0 %v130
  %v211 = vpop.f32.mrf.mxu0
  %v212 = vadd.f32 %v74, %v211
  %v213 = vpop.f32.mrf.mxu0
  %v214 = vpop.f32.mrf.mxu0
  %v215 = vadd.f32 %v74, %v214
  %v216 = vpop.f32.mrf.mxu0
  %217 = vmatprep.mubr.bf16.mxu0 0
  %218 = vmatmul.mubr.bf16.gmra.mxu0 %v133
  %v219 = vpop.f32.mrf.mxu0
  %v220 = vadd.f32 %v74, %v219
  %v221 = vpop.f32.mrf.mxu0
  %v222 = vpop.f32.mrf.mxu0
  %v223 = vadd.f32 %v74, %v222
  %v224 = vpop.f32.mrf.mxu0
  %225 = vmatprep.mubr.bf16.mxu0 0
  %226 = vmatmul.mubr.bf16.gmra.mxu0 %v136
  %v227 = vpop.f32.mrf.mxu0
  %v228 = vadd.f32 %v74, %v227
  %v229 = vpop.f32.mrf.mxu0
  %v230 = vpop.f32.mrf.mxu0
  %v231 = vadd.f32 %v74, %v230
  %v232 = vpop.f32.mrf.mxu0
  %233 = vmatprep.mubr.bf16.mxu0 0
  %234 = vmatmul.mubr.bf16.gmra.mxu0 %v139
  %v235 = vpop.f32.mrf.mxu0
  %v236 = vadd.f32 %v74, %v235
  %v237 = vpop.f32.mrf.mxu0
  %v238 = vpop.f32.mrf.mxu0
  %v239 = vadd.f32 %v74, %v238
  %v240 = vpop.f32.mrf.mxu0
  %241 = vdwg.mxu0
  %v242 = vpack.c.bf16 %v180, %v180
  %v243 = vpack.c.bf16 %v183, %v183
  %v244 = vpack.c.bf16 %v188, %v188
  %v245 = vpack.c.bf16 %v191, %v191
  %v246 = vpack.c.bf16 %v196, %v196
  %v247 = vpack.c.bf16 %v199, %v199
  %v248 = vpack.c.bf16 %v204, %v204
  %v249 = vpack.c.bf16 %v207, %v207
  %v250 = vpack.c.bf16 %v212, %v212
  %v251 = vpack.c.bf16 %v215, %v215
  %v252 = vpack.c.bf16 %v220, %v220
  %v253 = vpack.c.bf16 %v223, %v223
  %v254 = vpack.c.bf16 %v228, %v228
  %v255 = vpack.c.bf16 %v231, %v231
  %v256 = vpack.c.bf16 %v236, %v236
  %v257 = vpack.c.bf16 %v239, %v239
  %259 = vrot.lane.b32.xlu0 %v242, 120
  %v260 = vpop.permute.xlu0 %259
  %vm261 = vcmask 31744
  %v263 = vsel %vm261, %v242, 0
  %v266 = vsel %vm261, %v260, 0
  %268 = vmatprep.subr.bf16.mxu0 0
  %269 = vmatpush1.bf16.xpose.msra.mxu0 0
  %270 = vmatprep.subr.bf16.mxu0 0
  %271 = vmatpush1.bf16.xpose.msra.mxu0 0
  %272 = vmatprep.subr.bf16.mxu0 0
  %273 = vmatpush1.bf16.xpose.msra.mxu0 0
  %274 = vmatprep.subr.bf16.mxu0 0
  %275 = vmatpush1.bf16.xpose.msra.mxu0 0
  %276 = vmatprep.subr.bf16.mxu0 0
  %277 = vmatpush1.bf16.xpose.msra.mxu0 0
  %278 = vmatprep.subr.bf16.mxu0 0
  %279 = vmatpush1.bf16.xpose.msra.mxu0 0
  %280 = vmatprep.subr.bf16.mxu0 0
  %281 = vmatpush1.bf16.xpose.msra.mxu0 0
  %282 = vmatprep.subr.bf16.mxu0 0
  %283 = vmatpush1.bf16.xpose.msra.mxu0 %v266
  %284 = vmatprep.subr.bf16.mxu0 0
  %285 = vmatpush2.bf16.xpose.msra.mxu0 0
  %286 = vmatprep.subr.bf16.mxu0 0
  %287 = vmatpush2.bf16.xpose.msra.mxu0 0
  %288 = vmatprep.subr.bf16.mxu0 0
  %289 = vmatpush2.bf16.xpose.msra.mxu0 0
  %290 = vmatprep.subr.bf16.mxu0 0
  %291 = vmatpush2.bf16.xpose.msra.mxu0 0
  %292 = vmatprep.subr.bf16.mxu0 0
  %293 = vmatpush2.bf16.xpose.msra.mxu0 0
  %294 = vmatprep.subr.bf16.mxu0 0
  %295 = vmatpush2.bf16.xpose.msra.mxu0 0
  %296 = vmatprep.subr.bf16.mxu0 0
  %297 = vmatpush2.bf16.xpose.msra.mxu0 0
  %298 = vmatprep.subr.bf16.mxu0 0
  %299 = vmatpush2.bf16.xpose.msra.mxu0 0
  %300 = vmatprep.mubr.bf16.mxu0 0
  %301 = vmatmul.mubr.bf16.gmra.mxu0 %v263
  %v302 = vpop.f32.mrf.mxu0
  %v303 = vadd.f32 0.0, %v302
  %v304 = vpop.f32.mrf.mxu0
  %v305 = vpop.f32.mrf.mxu0
  %v306 = vpop.f32.mrf.mxu0
  %307 = vdwg.mxu0
  %309 = vrot.lane.b32.xlu0 %v243, 120
  %v310 = vpop.permute.xlu0 %309
  %v312 = vsel %vm261, %v243, 0
  %v315 = vsel %vm261, %v310, 0
  %317 = vmatprep.subr.bf16.mxu0 0
  %318 = vmatpush1.bf16.xpose.msra.mxu0 0
  %319 = vmatprep.subr.bf16.mxu0 0
  %320 = vmatpush1.bf16.xpose.msra.mxu0 0
  %321 = vmatprep.subr.bf16.mxu0 0
  %322 = vmatpush1.bf16.xpose.msra.mxu0 0
  %323 = vmatprep.subr.bf16.mxu0 0
  %324 = vmatpush1.bf16.xpose.msra.mxu0 0
  %325 = vmatprep.subr.bf16.mxu0 0
  %326 = vmatpush1.bf16.xpose.msra.mxu0 0
  %327 = vmatprep.subr.bf16.mxu0 0
  %328 = vmatpush1.bf16.xpose.msra.mxu0 0
  %329 = vmatprep.subr.bf16.mxu0 0
  %330 = vmatpush1.bf16.xpose.msra.mxu0 0
  %331 = vmatprep.subr.bf16.mxu0 0
  %332 = vmatpush1.bf16.xpose.msra.mxu0 %v315
  %333 = vmatprep.subr.bf16.mxu0 0
  %334 = vmatpush2.bf16.xpose.msra.mxu0 0
  %335 = vmatprep.subr.bf16.mxu0 0
  %336 = vmatpush2.bf16.xpose.msra.mxu0 0
  %337 = vmatprep.subr.bf16.mxu0 0
  %338 = vmatpush2.bf16.xpose.msra.mxu0 0
  %339 = vmatprep.subr.bf16.mxu0 0
  %340 = vmatpush2.bf16.xpose.msra.mxu0 0
  %341 = vmatprep.subr.bf16.mxu0 0
  %342 = vmatpush2.bf16.xpose.msra.mxu0 0
  %343 = vmatprep.subr.bf16.mxu0 0
  %344 = vmatpush2.bf16.xpose.msra.mxu0 0
  %345 = vmatprep.subr.bf16.mxu0 0
  %346 = vmatpush2.bf16.xpose.msra.mxu0 0
  %347 = vmatprep.subr.bf16.mxu0 0
  %348 = vmatpush2.bf16.xpose.msra.mxu0 0
  %349 = vmatprep.mubr.bf16.mxu0 0
  %350 = vmatmul.mubr.bf16.gmra.mxu0 %v312
  %v351 = vpop.f32.mrf.mxu0
  %v352 = vadd.f32 0.0, %v351
  %v353 = vpop.f32.mrf.mxu0
  %v354 = vpop.f32.mrf.mxu0
  %v355 = vpop.f32.mrf.mxu0
  %356 = vdwg.mxu0
  %358 = vrot.lane.b32.xlu0 %v244, 120
  %v359 = vpop.permute.xlu0 %358
  %v361 = vsel %vm261, %v244, 0
  %v364 = vsel %vm261, %v359, 0
  %366 = vmatprep.subr.bf16.mxu0 0
  %367 = vmatpush1.bf16.xpose.msra.mxu0 0
  %368 = vmatprep.subr.bf16.mxu0 0
  %369 = vmatpush1.bf16.xpose.msra.mxu0 0
  %370 = vmatprep.subr.bf16.mxu0 0
  %371 = vmatpush1.bf16.xpose.msra.mxu0 0
  %372 = vmatprep.subr.bf16.mxu0 0
  %373 = vmatpush1.bf16.xpose.msra.mxu0 0
  %374 = vmatprep.subr.bf16.mxu0 0
  %375 = vmatpush1.bf16.xpose.msra.mxu0 0
  %376 = vmatprep.subr.bf16.mxu0 0
  %377 = vmatpush1.bf16.xpose.msra.mxu0 0
  %378 = vmatprep.subr.bf16.mxu0 0
  %379 = vmatpush1.bf16.xpose.msra.mxu0 0
  %380 = vmatprep.subr.bf16.mxu0 0
  %381 = vmatpush1.bf16.xpose.msra.mxu0 %v364
  %382 = vmatprep.subr.bf16.mxu0 0
  %383 = vmatpush2.bf16.xpose.msra.mxu0 0
  %384 = vmatprep.subr.bf16.mxu0 0
  %385 = vmatpush2.bf16.xpose.msra.mxu0 0
  %386 = vmatprep.subr.bf16.mxu0 0
  %387 = vmatpush2.bf16.xpose.msra.mxu0 0
  %388 = vmatprep.subr.bf16.mxu0 0
  %389 = vmatpush2.bf16.xpose.msra.mxu0 0
  %390 = vmatprep.subr.bf16.mxu0 0
  %391 = vmatpush2.bf16.xpose.msra.mxu0 0
  %392 = vmatprep.subr.bf16.mxu0 0
  %393 = vmatpush2.bf16.xpose.msra.mxu0 0
  %394 = vmatprep.subr.bf16.mxu0 0
  %395 = vmatpush2.bf16.xpose.msra.mxu0 0
  %396 = vmatprep.subr.bf16.mxu0 0
  %397 = vmatpush2.bf16.xpose.msra.mxu0 0
  %398 = vmatprep.mubr.bf16.mxu0 0
  %399 = vmatmul.mubr.bf16.gmra.mxu0 %v361
  %v400 = vpop.f32.mrf.mxu0
  %v401 = vadd.f32 0.0, %v400
  %v402 = vpop.f32.mrf.mxu0
  %v403 = vpop.f32.mrf.mxu0
  %v404 = vpop.f32.mrf.mxu0
  %405 = vdwg.mxu0
  %407 = vrot.lane.b32.xlu0 %v245, 120
  %v408 = vpop.permute.xlu0 %407
  %v410 = vsel %vm261, %v245, 0
  %v413 = vsel %vm261, %v408, 0
  %415 = vmatprep.subr.bf16.mxu0 0
  %416 = vmatpush1.bf16.xpose.msra.mxu0 0
  %417 = vmatprep.subr.bf16.mxu0 0
  %418 = vmatpush1.bf16.xpose.msra.mxu0 0
  %419 = vmatprep.subr.bf16.mxu0 0
  %420 = vmatpush1.bf16.xpose.msra.mxu0 0
  %421 = vmatprep.subr.bf16.mxu0 0
  %422 = vmatpush1.bf16.xpose.msra.mxu0 0
  %423 = vmatprep.subr.bf16.mxu0 0
  %424 = vmatpush1.bf16.xpose.msra.mxu0 0
  %425 = vmatprep.subr.bf16.mxu0 0
  %426 = vmatpush1.bf16.xpose.msra.mxu0 0
  %427 = vmatprep.subr.bf16.mxu0 0
  %428 = vmatpush1.bf16.xpose.msra.mxu0 0
  %429 = vmatprep.subr.bf16.mxu0 0
  %430 = vmatpush1.bf16.xpose.msra.mxu0 %v413
  %431 = vmatprep.subr.bf16.mxu0 0
  %432 = vmatpush2.bf16.xpose.msra.mxu0 0
  %433 = vmatprep.subr.bf16.mxu0 0
  %434 = vmatpush2.bf16.xpose.msra.mxu0 0
  %435 = vmatprep.subr.bf16.mxu0 0
  %436 = vmatpush2.bf16.xpose.msra.mxu0 0
  %437 = vmatprep.subr.bf16.mxu0 0
  %438 = vmatpush2.bf16.xpose.msra.mxu0 0
  %439 = vmatprep.subr.bf16.mxu0 0
  %440 = vmatpush2.bf16.xpose.msra.mxu0 0
  %441 = vmatprep.subr.bf16.mxu0 0
  %442 = vmatpush2.bf16.xpose.msra.mxu0 0
  %443 = vmatprep.subr.bf16.mxu0 0
  %444 = vmatpush2.bf16.xpose.msra.mxu0 0
  %445 = vmatprep.subr.bf16.mxu0 0
  %446 = vmatpush2.bf16.xpose.msra.mxu0 0
  %447 = vmatprep.mubr.bf16.mxu0 0
  %448 = vmatmul.mubr.bf16.gmra.mxu0 %v410
  %v449 = vpop.f32.mrf.mxu0
  %v450 = vadd.f32 0.0, %v449
  %v451 = vpop.f32.mrf.mxu0
  %v452 = vpop.f32.mrf.mxu0
  %v453 = vpop.f32.mrf.mxu0
  %454 = vdwg.mxu0
  %456 = vrot.lane.b32.xlu0 %v246, 120
  %v457 = vpop.permute.xlu0 %456
  %v459 = vsel %vm261, %v246, 0
  %v462 = vsel %vm261, %v457, 0
  %464 = vmatprep.subr.bf16.mxu0 0
  %465 = vmatpush1.bf16.xpose.msra.mxu0 0
  %466 = vmatprep.subr.bf16.mxu0 0
  %467 = vmatpush1.bf16.xpose.msra.mxu0 0
  %468 = vmatprep.subr.bf16.mxu0 0
  %469 = vmatpush1.bf16.xpose.msra.mxu0 0
  %470 = vmatprep.subr.bf16.mxu0 0
  %471 = vmatpush1.bf16.xpose.msra.mxu0 0
  %472 = vmatprep.subr.bf16.mxu0 0
  %473 = vmatpush1.bf16.xpose.msra.mxu0 0
  %474 = vmatprep.subr.bf16.mxu0 0
  %475 = vmatpush1.bf16.xpose.msra.mxu0 0
  %476 = vmatprep.subr.bf16.mxu0 0
  %477 = vmatpush1.bf16.xpose.msra.mxu0 0
  %478 = vmatprep.subr.bf16.mxu0 0
  %479 = vmatpush1.bf16.xpose.msra.mxu0 %v462
  %480 = vmatprep.subr.bf16.mxu0 0
  %481 = vmatpush2.bf16.xpose.msra.mxu0 0
  %482 = vmatprep.subr.bf16.mxu0 0
  %483 = vmatpush2.bf16.xpose.msra.mxu0 0
  %484 = vmatprep.subr.bf16.mxu0 0
  %485 = vmatpush2.bf16.xpose.msra.mxu0 0
  %486 = vmatprep.subr.bf16.mxu0 0
  %487 = vmatpush2.bf16.xpose.msra.mxu0 0
  %488 = vmatprep.subr.bf16.mxu0 0
  %489 = vmatpush2.bf16.xpose.msra.mxu0 0
  %490 = vmatprep.subr.bf16.mxu0 0
  %491 = vmatpush2.bf16.xpose.msra.mxu0 0
  %492 = vmatprep.subr.bf16.mxu0 0
  %493 = vmatpush2.bf16.xpose.msra.mxu0 0
  %494 = vmatprep.subr.bf16.mxu0 0
  %495 = vmatpush2.bf16.xpose.msra.mxu0 0
  %496 = vmatprep.mubr.bf16.mxu0 0
  %497 = vmatmul.mubr.bf16.gmra.mxu0 %v459
  %v498 = vpop.f32.mrf.mxu0
  %v499 = vadd.f32 0.0, %v498
  %v500 = vpop.f32.mrf.mxu0
  %v501 = vpop.f32.mrf.mxu0
  %v502 = vpop.f32.mrf.mxu0
  %503 = vdwg.mxu0
  %505 = vrot.lane.b32.xlu0 %v247, 120
  %v506 = vpop.permute.xlu0 %505
  %v508 = vsel %vm261, %v247, 0
  %v511 = vsel %vm261, %v506, 0
  %513 = vmatprep.subr.bf16.mxu0 0
  %514 = vmatpush1.bf16.xpose.msra.mxu0 0
  %515 = vmatprep.subr.bf16.mxu0 0
  %516 = vmatpush1.bf16.xpose.msra.mxu0 0
  %517 = vmatprep.subr.bf16.mxu0 0
  %518 = vmatpush1.bf16.xpose.msra.mxu0 0
  %519 = vmatprep.subr.bf16.mxu0 0
  %520 = vmatpush1.bf16.xpose.msra.mxu0 0
  %521 = vmatprep.subr.bf16.mxu0 0
  %522 = vmatpush1.bf16.xpose.msra.mxu0 0
  %523 = vmatprep.subr.bf16.mxu0 0
  %524 = vmatpush1.bf16.xpose.msra.mxu0 0
  %525 = vmatprep.subr.bf16.mxu0 0
  %526 = vmatpush1.bf16.xpose.msra.mxu0 0
  %527 = vmatprep.subr.bf16.mxu0 0
  %528 = vmatpush1.bf16.xpose.msra.mxu0 %v511
  %529 = vmatprep.subr.bf16.mxu0 0
  %530 = vmatpush2.bf16.xpose.msra.mxu0 0
  %531 = vmatprep.subr.bf16.mxu0 0
  %532 = vmatpush2.bf16.xpose.msra.mxu0 0
  %533 = vmatprep.subr.bf16.mxu0 0
  %534 = vmatpush2.bf16.xpose.msra.mxu0 0
  %535 = vmatprep.subr.bf16.mxu0 0
  %536 = vmatpush2.bf16.xpose.msra.mxu0 0
  %537 = vmatprep.subr.bf16.mxu0 0
  %538 = vmatpush2.bf16.xpose.msra.mxu0 0
  %539 = vmatprep.subr.bf16.mxu0 0
  %540 = vmatpush2.bf16.xpose.msra.mxu0 0
  %541 = vmatprep.subr.bf16.mxu0 0
  %542 = vmatpush2.bf16.xpose.msra.mxu0 0
  %543 = vmatprep.subr.bf16.mxu0 0
  %544 = vmatpush2.bf16.xpose.msra.mxu0 0
  %545 = vmatprep.mubr.bf16.mxu0 0
  %546 = vmatmul.mubr.bf16.gmra.mxu0 %v508
  %v547 = vpop.f32.mrf.mxu0
  %v548 = vadd.f32 0.0, %v547
  %v549 = vpop.f32.mrf.mxu0
  %v550 = vpop.f32.mrf.mxu0
  %v551 = vpop.f32.mrf.mxu0
  %552 = vdwg.mxu0
  %554 = vrot.lane.b32.xlu0 %v248, 120
  %v555 = vpop.permute.xlu0 %554
  %v557 = vsel %vm261, %v248, 0
  %v560 = vsel %vm261, %v555, 0
  %562 = vmatprep.subr.bf16.mxu0 0
  %563 = vmatpush1.bf16.xpose.msra.mxu0 0
  %564 = vmatprep.subr.bf16.mxu0 0
  %565 = vmatpush1.bf16.xpose.msra.mxu0 0
  %566 = vmatprep.subr.bf16.mxu0 0
  %567 = vmatpush1.bf16.xpose.msra.mxu0 0
  %568 = vmatprep.subr.bf16.mxu0 0
  %569 = vmatpush1.bf16.xpose.msra.mxu0 0
  %570 = vmatprep.subr.bf16.mxu0 0
  %571 = vmatpush1.bf16.xpose.msra.mxu0 0
  %572 = vmatprep.subr.bf16.mxu0 0
  %573 = vmatpush1.bf16.xpose.msra.mxu0 0
  %574 = vmatprep.subr.bf16.mxu0 0
  %575 = vmatpush1.bf16.xpose.msra.mxu0 0
  %576 = vmatprep.subr.bf16.mxu0 0
  %577 = vmatpush1.bf16.xpose.msra.mxu0 %v560
  %578 = vmatprep.subr.bf16.mxu0 0
  %579 = vmatpush2.bf16.xpose.msra.mxu0 0
  %580 = vmatprep.subr.bf16.mxu0 0
  %581 = vmatpush2.bf16.xpose.msra.mxu0 0
  %582 = vmatprep.subr.bf16.mxu0 0
  %583 = vmatpush2.bf16.xpose.msra.mxu0 0
  %584 = vmatprep.subr.bf16.mxu0 0
  %585 = vmatpush2.bf16.xpose.msra.mxu0 0
  %586 = vmatprep.subr.bf16.mxu0 0
  %587 = vmatpush2.bf16.xpose.msra.mxu0 0
  %588 = vmatprep.subr.bf16.mxu0 0
  %589 = vmatpush2.bf16.xpose.msra.mxu0 0
  %590 = vmatprep.subr.bf16.mxu0 0
  %591 = vmatpush2.bf16.xpose.msra.mxu0 0
  %592 = vmatprep.subr.bf16.mxu0 0
  %593 = vmatpush2.bf16.xpose.msra.mxu0 0
  %594 = vmatprep.mubr.bf16.mxu0 0
  %595 = vmatmul.mubr.bf16.gmra.mxu0 %v557
  %v596 = vpop.f32.mrf.mxu0
  %v597 = vadd.f32 0.0, %v596
  %v598 = vpop.f32.mrf.mxu0
  %v599 = vpop.f32.mrf.mxu0
  %v600 = vpop.f32.mrf.mxu0
  %601 = vdwg.mxu0
  %603 = vrot.lane.b32.xlu0 %v249, 120
  %v604 = vpop.permute.xlu0 %603
  %v606 = vsel %vm261, %v249, 0
  %v609 = vsel %vm261, %v604, 0
  %611 = vmatprep.subr.bf16.mxu0 0
  %612 = vmatpush1.bf16.xpose.msra.mxu0 0
  %613 = vmatprep.subr.bf16.mxu0 0
  %614 = vmatpush1.bf16.xpose.msra.mxu0 0
  %615 = vmatprep.subr.bf16.mxu0 0
  %616 = vmatpush1.bf16.xpose.msra.mxu0 0
  %617 = vmatprep.subr.bf16.mxu0 0
  %618 = vmatpush1.bf16.xpose.msra.mxu0 0
  %619 = vmatprep.subr.bf16.mxu0 0
  %620 = vmatpush1.bf16.xpose.msra.mxu0 0
  %621 = vmatprep.subr.bf16.mxu0 0
  %622 = vmatpush1.bf16.xpose.msra.mxu0 0
  %623 = vmatprep.subr.bf16.mxu0 0
  %624 = vmatpush1.bf16.xpose.msra.mxu0 0
  %625 = vmatprep.subr.bf16.mxu0 0
  %626 = vmatpush1.bf16.xpose.msra.mxu0 %v609
  %627 = vmatprep.subr.bf16.mxu0 0
  %628 = vmatpush2.bf16.xpose.msra.mxu0 0
  %629 = vmatprep.subr.bf16.mxu0 0
  %630 = vmatpush2.bf16.xpose.msra.mxu0 0
  %631 = vmatprep.subr.bf16.mxu0 0
  %632 = vmatpush2.bf16.xpose.msra.mxu0 0
  %633 = vmatprep.subr.bf16.mxu0 0
  %634 = vmatpush2.bf16.xpose.msra.mxu0 0
  %635 = vmatprep.subr.bf16.mxu0 0
  %636 = vmatpush2.bf16.xpose.msra.mxu0 0
  %637 = vmatprep.subr.bf16.mxu0 0
  %638 = vmatpush2.bf16.xpose.msra.mxu0 0
  %639 = vmatprep.subr.bf16.mxu0 0
  %640 = vmatpush2.bf16.xpose.msra.mxu0 0
  %641 = vmatprep.subr.bf16.mxu0 0
  %642 = vmatpush2.bf16.xpose.msra.mxu0 0
  %643 = vmatprep.mubr.bf16.mxu0 0
  %644 = vmatmul.mubr.bf16.gmra.mxu0 %v606
  %v645 = vpop.f32.mrf.mxu0
  %v646 = vadd.f32 0.0, %v645
  %v647 = vpop.f32.mrf.mxu0
  %v648 = vpop.f32.mrf.mxu0
  %v649 = vpop.f32.mrf.mxu0
  %650 = vdwg.mxu0
  %652 = vrot.lane.b32.xlu0 %v250, 120
  %v653 = vpop.permute.xlu0 %652
  %v655 = vsel %vm261, %v250, 0
  %v658 = vsel %vm261, %v653, 0
  %660 = vmatprep.subr.bf16.mxu0 0
  %661 = vmatpush1.bf16.xpose.msra.mxu0 0
  %662 = vmatprep.subr.bf16.mxu0 0
  %663 = vmatpush1.bf16.xpose.msra.mxu0 0
  %664 = vmatprep.subr.bf16.mxu0 0
  %665 = vmatpush1.bf16.xpose.msra.mxu0 0
  %666 = vmatprep.subr.bf16.mxu0 0
  %667 = vmatpush1.bf16.xpose.msra.mxu0 0
  %668 = vmatprep.subr.bf16.mxu0 0
  %669 = vmatpush1.bf16.xpose.msra.mxu0 0
  %670 = vmatprep.subr.bf16.mxu0 0
  %671 = vmatpush1.bf16.xpose.msra.mxu0 0
  %672 = vmatprep.subr.bf16.mxu0 0
  %673 = vmatpush1.bf16.xpose.msra.mxu0 0
  %674 = vmatprep.subr.bf16.mxu0 0
  %675 = vmatpush1.bf16.xpose.msra.mxu0 %v658
  %676 = vmatprep.subr.bf16.mxu0 0
  %677 = vmatpush2.bf16.xpose.msra.mxu0 0
  %678 = vmatprep.subr.bf16.mxu0 0
  %679 = vmatpush2.bf16.xpose.msra.mxu0 0
  %680 = vmatprep.subr.bf16.mxu0 0
  %681 = vmatpush2.bf16.xpose.msra.mxu0 0
  %682 = vmatprep.subr.bf16.mxu0 0
  %683 = vmatpush2.bf16.xpose.msra.mxu0 0
  %684 = vmatprep.subr.bf16.mxu0 0
  %685 = vmatpush2.bf16.xpose.msra.mxu0 0
  %686 = vmatprep.subr.bf16.mxu0 0
  %687 = vmatpush2.bf16.xpose.msra.mxu0 0
  %688 = vmatprep.subr.bf16.mxu0 0
  %689 = vmatpush2.bf16.xpose.msra.mxu0 0
  %690 = vmatprep.subr.bf16.mxu0 0
  %691 = vmatpush2.bf16.xpose.msra.mxu0 0
  %692 = vmatprep.mubr.bf16.mxu0 0
  %693 = vmatmul.mubr.bf16.gmra.mxu0 %v655
  %v694 = vpop.f32.mrf.mxu0
  %v695 = vadd.f32 0.0, %v694
  %v696 = vpop.f32.mrf.mxu0
  %v697 = vpop.f32.mrf.mxu0
  %v698 = vpop.f32.mrf.mxu0
  %699 = vdwg.mxu0
  %701 = vrot.lane.b32.xlu0 %v251, 120
  %v702 = vpop.permute.xlu0 %701
  %v704 = vsel %vm261, %v251, 0
  %v707 = vsel %vm261, %v702, 0
  %709 = vmatprep.subr.bf16.mxu0 0
  %710 = vmatpush1.bf16.xpose.msra.mxu0 0
  %711 = vmatprep.subr.bf16.mxu0 0
  %712 = vmatpush1.bf16.xpose.msra.mxu0 0
  %713 = vmatprep.subr.bf16.mxu0 0
  %714 = vmatpush1.bf16.xpose.msra.mxu0 0
  %715 = vmatprep.subr.bf16.mxu0 0
  %716 = vmatpush1.bf16.xpose.msra.mxu0 0
  %717 = vmatprep.subr.bf16.mxu0 0
  %718 = vmatpush1.bf16.xpose.msra.mxu0 0
  %719 = vmatprep.subr.bf16.mxu0 0
  %720 = vmatpush1.bf16.xpose.msra.mxu0 0
  %721 = vmatprep.subr.bf16.mxu0 0
  %722 = vmatpush1.bf16.xpose.msra.mxu0 0
  %723 = vmatprep.subr.bf16.mxu0 0
  %724 = vmatpush1.bf16.xpose.msra.mxu0 %v707
  %725 = vmatprep.subr.bf16.mxu0 0
  %726 = vmatpush2.bf16.xpose.msra.mxu0 0
  %727 = vmatprep.subr.bf16.mxu0 0
  %728 = vmatpush2.bf16.xpose.msra.mxu0 0
  %729 = vmatprep.subr.bf16.mxu0 0
  %730 = vmatpush2.bf16.xpose.msra.mxu0 0
  %731 = vmatprep.subr.bf16.mxu0 0
  %732 = vmatpush2.bf16.xpose.msra.mxu0 0
  %733 = vmatprep.subr.bf16.mxu0 0
  %734 = vmatpush2.bf16.xpose.msra.mxu0 0
  %735 = vmatprep.subr.bf16.mxu0 0
  %736 = vmatpush2.bf16.xpose.msra.mxu0 0
  %737 = vmatprep.subr.bf16.mxu0 0
  %738 = vmatpush2.bf16.xpose.msra.mxu0 0
  %739 = vmatprep.subr.bf16.mxu0 0
  %740 = vmatpush2.bf16.xpose.msra.mxu0 0
  %741 = vmatprep.mubr.bf16.mxu0 0
  %742 = vmatmul.mubr.bf16.gmra.mxu0 %v704
  %v743 = vpop.f32.mrf.mxu0
  %v744 = vadd.f32 0.0, %v743
  %v745 = vpop.f32.mrf.mxu0
  %v746 = vpop.f32.mrf.mxu0
  %v747 = vpop.f32.mrf.mxu0
  %748 = vdwg.mxu0
  %750 = vrot.lane.b32.xlu0 %v252, 120
  %v751 = vpop.permute.xlu0 %750
  %v753 = vsel %vm261, %v252, 0
  %v756 = vsel %vm261, %v751, 0
  %758 = vmatprep.subr.bf16.mxu0 0
  %759 = vmatpush1.bf16.xpose.msra.mxu0 0
  %760 = vmatprep.subr.bf16.mxu0 0
  %761 = vmatpush1.bf16.xpose.msra.mxu0 0
  %762 = vmatprep.subr.bf16.mxu0 0
  %763 = vmatpush1.bf16.xpose.msra.mxu0 0
  %764 = vmatprep.subr.bf16.mxu0 0
  %765 = vmatpush1.bf16.xpose.msra.mxu0 0
  %766 = vmatprep.subr.bf16.mxu0 0
  %767 = vmatpush1.bf16.xpose.msra.mxu0 0
  %768 = vmatprep.subr.bf16.mxu0 0
  %769 = vmatpush1.bf16.xpose.msra.mxu0 0
  %770 = vmatprep.subr.bf16.mxu0 0
  %771 = vmatpush1.bf16.xpose.msra.mxu0 0
  %772 = vmatprep.subr.bf16.mxu0 0
  %773 = vmatpush1.bf16.xpose.msra.mxu0 %v756
  %774 = vmatprep.subr.bf16.mxu0 0
  %775 = vmatpush2.bf16.xpose.msra.mxu0 0
  %776 = vmatprep.subr.bf16.mxu0 0
  %777 = vmatpush2.bf16.xpose.msra.mxu0 0
  %778 = vmatprep.subr.bf16.mxu0 0
  %779 = vmatpush2.bf16.xpose.msra.mxu0 0
  %780 = vmatprep.subr.bf16.mxu0 0
  %781 = vmatpush2.bf16.xpose.msra.mxu0 0
  %782 = vmatprep.subr.bf16.mxu0 0
  %783 = vmatpush2.bf16.xpose.msra.mxu0 0
  %784 = vmatprep.subr.bf16.mxu0 0
  %785 = vmatpush2.bf16.xpose.msra.mxu0 0
  %786 = vmatprep.subr.bf16.mxu0 0
  %787 = vmatpush2.bf16.xpose.msra.mxu0 0
  %788 = vmatprep.subr.bf16.mxu0 0
  %789 = vmatpush2.bf16.xpose.msra.mxu0 0
  %790 = vmatprep.mubr.bf16.mxu0 0
  %791 = vmatmul.mubr.bf16.gmra.mxu0 %v753
  %v792 = vpop.f32.mrf.mxu0
  %v793 = vadd.f32 0.0, %v792
  %v794 = vpop.f32.mrf.mxu0
  %v795 = vpop.f32.mrf.mxu0
  %v796 = vpop.f32.mrf.mxu0
  %797 = vdwg.mxu0
  %799 = vrot.lane.b32.xlu0 %v253, 120
  %v800 = vpop.permute.xlu0 %799
  %v802 = vsel %vm261, %v253, 0
  %v805 = vsel %vm261, %v800, 0
  %807 = vmatprep.subr.bf16.mxu0 0
  %808 = vmatpush1.bf16.xpose.msra.mxu0 0
  %809 = vmatprep.subr.bf16.mxu0 0
  %810 = vmatpush1.bf16.xpose.msra.mxu0 0
  %811 = vmatprep.subr.bf16.mxu0 0
  %812 = vmatpush1.bf16.xpose.msra.mxu0 0
  %813 = vmatprep.subr.bf16.mxu0 0
  %814 = vmatpush1.bf16.xpose.msra.mxu0 0
  %815 = vmatprep.subr.bf16.mxu0 0
  %816 = vmatpush1.bf16.xpose.msra.mxu0 0
  %817 = vmatprep.subr.bf16.mxu0 0
  %818 = vmatpush1.bf16.xpose.msra.mxu0 0
  %819 = vmatprep.subr.bf16.mxu0 0
  %820 = vmatpush1.bf16.xpose.msra.mxu0 0
  %821 = vmatprep.subr.bf16.mxu0 0
  %822 = vmatpush1.bf16.xpose.msra.mxu0 %v805
  %823 = vmatprep.subr.bf16.mxu0 0
  %824 = vmatpush2.bf16.xpose.msra.mxu0 0
  %825 = vmatprep.subr.bf16.mxu0 0
  %826 = vmatpush2.bf16.xpose.msra.mxu0 0
  %827 = vmatprep.subr.bf16.mxu0 0
  %828 = vmatpush2.bf16.xpose.msra.mxu0 0
  %829 = vmatprep.subr.bf16.mxu0 0
  %830 = vmatpush2.bf16.xpose.msra.mxu0 0
  %831 = vmatprep.subr.bf16.mxu0 0
  %832 = vmatpush2.bf16.xpose.msra.mxu0 0
  %833 = vmatprep.subr.bf16.mxu0 0
  %834 = vmatpush2.bf16.xpose.msra.mxu0 0
  %835 = vmatprep.subr.bf16.mxu0 0
  %836 = vmatpush2.bf16.xpose.msra.mxu0 0
  %837 = vmatprep.subr.bf16.mxu0 0
  %838 = vmatpush2.bf16.xpose.msra.mxu0 0
  %839 = vmatprep.mubr.bf16.mxu0 0
  %840 = vmatmul.mubr.bf16.gmra.mxu0 %v802
  %v841 = vpop.f32.mrf.mxu0
  %v842 = vadd.f32 0.0, %v841
  %v843 = vpop.f32.mrf.mxu0
  %v844 = vpop.f32.mrf.mxu0
  %v845 = vpop.f32.mrf.mxu0
  %846 = vdwg.mxu0
  %848 = vrot.lane.b32.xlu0 %v254, 120
  %v849 = vpop.permute.xlu0 %848
  %v851 = vsel %vm261, %v254, 0
  %v854 = vsel %vm261, %v849, 0
  %856 = vmatprep.subr.bf16.mxu0 0
  %857 = vmatpush1.bf16.xpose.msra.mxu0 0
  %858 = vmatprep.subr.bf16.mxu0 0
  %859 = vmatpush1.bf16.xpose.msra.mxu0 0
  %860 = vmatprep.subr.bf16.mxu0 0
  %861 = vmatpush1.bf16.xpose.msra.mxu0 0
  %862 = vmatprep.subr.bf16.mxu0 0
  %863 = vmatpush1.bf16.xpose.msra.mxu0 0
  %864 = vmatprep.subr.bf16.mxu0 0
  %865 = vmatpush1.bf16.xpose.msra.mxu0 0
  %866 = vmatprep.subr.bf16.mxu0 0
  %867 = vmatpush1.bf16.xpose.msra.mxu0 0
  %868 = vmatprep.subr.bf16.mxu0 0
  %869 = vmatpush1.bf16.xpose.msra.mxu0 0
  %870 = vmatprep.subr.bf16.mxu0 0
  %871 = vmatpush1.bf16.xpose.msra.mxu0 %v854
  %872 = vmatprep.subr.bf16.mxu0 0
  %873 = vmatpush2.bf16.xpose.msra.mxu0 0
  %874 = vmatprep.subr.bf16.mxu0 0
  %875 = vmatpush2.bf16.xpose.msra.mxu0 0
  %876 = vmatprep.subr.bf16.mxu0 0
  %877 = vmatpush2.bf16.xpose.msra.mxu0 0
  %878 = vmatprep.subr.bf16.mxu0 0
  %879 = vmatpush2.bf16.xpose.msra.mxu0 0
  %880 = vmatprep.subr.bf16.mxu0 0
  %881 = vmatpush2.bf16.xpose.msra.mxu0 0
  %882 = vmatprep.subr.bf16.mxu0 0
  %883 = vmatpush2.bf16.xpose.msra.mxu0 0
  %884 = vmatprep.subr.bf16.mxu0 0
  %885 = vmatpush2.bf16.xpose.msra.mxu0 0
  %886 = vmatprep.subr.bf16.mxu0 0
  %887 = vmatpush2.bf16.xpose.msra.mxu0 0
  %888 = vmatprep.mubr.bf16.mxu0 0
  %889 = vmatmul.mubr.bf16.gmra.mxu0 %v851
  %v890 = vpop.f32.mrf.mxu0
  %v891 = vadd.f32 0.0, %v890
  %v892 = vpop.f32.mrf.mxu0
  %v893 = vpop.f32.mrf.mxu0
  %v894 = vpop.f32.mrf.mxu0
  %895 = vdwg.mxu0
  %897 = vrot.lane.b32.xlu0 %v255, 120
  %v898 = vpop.permute.xlu0 %897
  %v900 = vsel %vm261, %v255, 0
  %v903 = vsel %vm261, %v898, 0
  %905 = vmatprep.subr.bf16.mxu0 0
  %906 = vmatpush1.bf16.xpose.msra.mxu0 0
  %907 = vmatprep.subr.bf16.mxu0 0
  %908 = vmatpush1.bf16.xpose.msra.mxu0 0
  %909 = vmatprep.subr.bf16.mxu0 0
  %910 = vmatpush1.bf16.xpose.msra.mxu0 0
  %911 = vmatprep.subr.bf16.mxu0 0
  %912 = vmatpush1.bf16.xpose.msra.mxu0 0
  %913 = vmatprep.subr.bf16.mxu0 0
  %914 = vmatpush1.bf16.xpose.msra.mxu0 0
  %915 = vmatprep.subr.bf16.mxu0 0
  %916 = vmatpush1.bf16.xpose.msra.mxu0 0
  %917 = vmatprep.subr.bf16.mxu0 0
  %918 = vmatpush1.bf16.xpose.msra.mxu0 0
  %919 = vmatprep.subr.bf16.mxu0 0
  %920 = vmatpush1.bf16.xpose.msra.mxu0 %v903
  %921 = vmatprep.subr.bf16.mxu0 0
  %922 = vmatpush2.bf16.xpose.msra.mxu0 0
  %923 = vmatprep.subr.bf16.mxu0 0
  %924 = vmatpush2.bf16.xpose.msra.mxu0 0
  %925 = vmatprep.subr.bf16.mxu0 0
  %926 = vmatpush2.bf16.xpose.msra.mxu0 0
  %927 = vmatprep.subr.bf16.mxu0 0
  %928 = vmatpush2.bf16.xpose.msra.mxu0 0
  %929 = vmatprep.subr.bf16.mxu0 0
  %930 = vmatpush2.bf16.xpose.msra.mxu0 0
  %931 = vmatprep.subr.bf16.mxu0 0
  %932 = vmatpush2.bf16.xpose.msra.mxu0 0
  %933 = vmatprep.subr.bf16.mxu0 0
  %934 = vmatpush2.bf16.xpose.msra.mxu0 0
  %935 = vmatprep.subr.bf16.mxu0 0
  %936 = vmatpush2.bf16.xpose.msra.mxu0 0
  %937 = vmatprep.mubr.bf16.mxu0 0
  %938 = vmatmul.mubr.bf16.gmra.mxu0 %v900
  %v939 = vpop.f32.mrf.mxu0
  %v940 = vadd.f32 0.0, %v939
  %v941 = vpop.f32.mrf.mxu0
  %v942 = vpop.f32.mrf.mxu0
  %v943 = vpop.f32.mrf.mxu0
  %944 = vdwg.mxu0
  %946 = vrot.lane.b32.xlu0 %v256, 120
  %v947 = vpop.permute.xlu0 %946
  %v949 = vsel %vm261, %v256, 0
  %v952 = vsel %vm261, %v947, 0
  %954 = vmatprep.subr.bf16.mxu0 0
  %955 = vmatpush1.bf16.xpose.msra.mxu0 0
  %956 = vmatprep.subr.bf16.mxu0 0
  %957 = vmatpush1.bf16.xpose.msra.mxu0 0
  %958 = vmatprep.subr.bf16.mxu0 0
  %959 = vmatpush1.bf16.xpose.msra.mxu0 0
  %960 = vmatprep.subr.bf16.mxu0 0
  %961 = vmatpush1.bf16.xpose.msra.mxu0 0
  %962 = vmatprep.subr.bf16.mxu0 0
  %963 = vmatpush1.bf16.xpose.msra.mxu0 0
  %964 = vmatprep.subr.bf16.mxu0 0
  %965 = vmatpush1.bf16.xpose.msra.mxu0 0
  %966 = vmatprep.subr.bf16.mxu0 0
  %967 = vmatpush1.bf16.xpose.msra.mxu0 0
  %968 = vmatprep.subr.bf16.mxu0 0
  %969 = vmatpush1.bf16.xpose.msra.mxu0 %v952
  %970 = vmatprep.subr.bf16.mxu0 0
  %971 = vmatpush2.bf16.xpose.msra.mxu0 0
  %972 = vmatprep.subr.bf16.mxu0 0
  %973 = vmatpush2.bf16.xpose.msra.mxu0 0
  %974 = vmatprep.subr.bf16.mxu0 0
  %975 = vmatpush2.bf16.xpose.msra.mxu0 0
  %976 = vmatprep.subr.bf16.mxu0 0
  %977 = vmatpush2.bf16.xpose.msra.mxu0 0
  %978 = vmatprep.subr.bf16.mxu0 0
  %979 = vmatpush2.bf16.xpose.msra.mxu0 0
  %980 = vmatprep.subr.bf16.mxu0 0
  %981 = vmatpush2.bf16.xpose.msra.mxu0 0
  %982 = vmatprep.subr.bf16.mxu0 0
  %983 = vmatpush2.bf16.xpose.msra.mxu0 0
  %984 = vmatprep.subr.bf16.mxu0 0
  %985 = vmatpush2.bf16.xpose.msra.mxu0 0
  %986 = vmatprep.mubr.bf16.mxu0 0
  %987 = vmatmul.mubr.bf16.gmra.mxu0 %v949
  %v988 = vpop.f32.mrf.mxu0
  %v989 = vadd.f32 0.0, %v988
  %v990 = vpop.f32.mrf.mxu0
  %v991 = vpop.f32.mrf.mxu0
  %v992 = vpop.f32.mrf.mxu0
  %993 = vdwg.mxu0
  %995 = vrot.lane.b32.xlu0 %v257, 120
  %v996 = vpop.permute.xlu0 %995
  %v998 = vsel %vm261, %v257, 0
  %v1001 = vsel %vm261, %v996, 0
  %1003 = vmatprep.subr.bf16.mxu0 0
  %1004 = vmatpush1.bf16.xpose.msra.mxu0 0
  %1005 = vmatprep.subr.bf16.mxu0 0
  %1006 = vmatpush1.bf16.xpose.msra.mxu0 0
  %1007 = vmatprep.subr.bf16.mxu0 0
  %1008 = vmatpush1.bf16.xpose.msra.mxu0 0
  %1009 = vmatprep.subr.bf16.mxu0 0
  %1010 = vmatpush1.bf16.xpose.msra.mxu0 0
  %1011 = vmatprep.subr.bf16.mxu0 0
  %1012 = vmatpush1.bf16.xpose.msra.mxu0 0
  %1013 = vmatprep.subr.bf16.mxu0 0
  %1014 = vmatpush1.bf16.xpose.msra.mxu0 0
  %1015 = vmatprep.subr.bf16.mxu0 0
  %1016 = vmatpush1.bf16.xpose.msra.mxu0 0
  %1017 = vmatprep.subr.bf16.mxu0 0
  %1018 = vmatpush1.bf16.xpose.msra.mxu0 %v1001
  %1019 = vmatprep.subr.bf16.mxu0 0
  %1020 = vmatpush2.bf16.xpose.msra.mxu0 0
  %1021 = vmatprep.subr.bf16.mxu0 0
  %1022 = vmatpush2.bf16.xpose.msra.mxu0 0
  %1023 = vmatprep.subr.bf16.mxu0 0
  %1024 = vmatpush2.bf16.xpose.msra.mxu0 0
  %1025 = vmatprep.subr.bf16.mxu0 0
  %1026 = vmatpush2.bf16.xpose.msra.mxu0 0
  %1027 = vmatprep.subr.bf16.mxu0 0
  %1028 = vmatpush2.bf16.xpose.msra.mxu0 0
  %1029 = vmatprep.subr.bf16.mxu0 0
  %1030 = vmatpush2.bf16.xpose.msra.mxu0 0
  %1031 = vmatprep.subr.bf16.mxu0 0
  %1032 = vmatpush2.bf16.xpose.msra.mxu0 0
  %1033 = vmatprep.subr.bf16.mxu0 0
  %1034 = vmatpush2.bf16.xpose.msra.mxu0 0
  %1035 = vmatprep.mubr.bf16.mxu0 0
  %1036 = vmatmul.mubr.bf16.gmra.mxu0 %v998
  %v1037 = vpop.f32.mrf.mxu0
  %v1038 = vadd.f32 0.0, %v1037
  %v1039 = vpop.f32.mrf.mxu0
  %v1040 = vpop.f32.mrf.mxu0
  %v1041 = vpop.f32.mrf.mxu0
  %1042 = vdwg.mxu0
  %v1043 = vmul.f32 %v303, 0.5
  %v1044 = vmul.f32 %v352, 0.5
  %v1045 = vmul.f32 %v401, 0.5
  %v1046 = vmul.f32 %v450, 0.5
  %v1047 = vmul.f32 %v499, 0.5
  %v1048 = vmul.f32 %v548, 0.5
  %v1049 = vmul.f32 %v597, 0.5
  %v1050 = vmul.f32 %v646, 0.5
  %v1051 = vmul.f32 %v695, 0.5
  %v1052 = vmul.f32 %v744, 0.5
  %v1053 = vmul.f32 %v793, 0.5
  %v1054 = vmul.f32 %v842, 0.5
  %v1055 = vmul.f32 %v891, 0.5
  %v1056 = vmul.f32 %v940, 0.5
  %v1057 = vmul.f32 %v989, 0.5
  %v1058 = vmul.f32 %v1038, 0.5
  %v1059 = vsel %vm116, %v1043, -inf
  %1060 = vmax.xlane.f32.xlu0 %v1059
  %v1061 = vpop.xlane.xlu0 %1060
  %v1062 = vsel %vm116, %v1044, -inf
  %1063 = vmax.xlane.f32.xlu0 %v1062
  %v1064 = vpop.xlane.xlu0 %1063
  %v1065 = vsel %vm116, %v1045, -inf
  %1066 = vmax.xlane.f32.xlu0 %v1065
  %v1067 = vpop.xlane.xlu0 %1066
  %v1068 = vsel %vm116, %v1046, -inf
  %1069 = vmax.xlane.f32.xlu0 %v1068
  %v1070 = vpop.xlane.xlu0 %1069
  %v1071 = vsel %vm116, %v1047, -inf
  %1072 = vmax.xlane.f32.xlu0 %v1071
  %v1073 = vpop.xlane.xlu0 %1072
  %v1074 = vsel %vm116, %v1048, -inf
  %1075 = vmax.xlane.f32.xlu0 %v1074
  %v1076 = vpop.xlane.xlu0 %1075
  %v1077 = vsel %vm116, %v1049, -inf
  %1078 = vmax.xlane.f32.xlu0 %v1077
  %v1079 = vpop.xlane.xlu0 %1078
  %v1080 = vsel %vm116, %v1050, -inf
  %1081 = vmax.xlane.f32.xlu0 %v1080
  %v1082 = vpop.xlane.xlu0 %1081
  %v1083 = vsel %vm116, %v1051, -inf
  %1084 = vmax.xlane.f32.xlu0 %v1083
  %v1085 = vpop.xlane.xlu0 %1084
  %v1086 = vsel %vm116, %v1052, -inf
  %1087 = vmax.xlane.f32.xlu0 %v1086
  %v1088 = vpop.xlane.xlu0 %1087
  %v1089 = vsel %vm116, %v1053, -inf
  %1090 = vmax.xlane.f32.xlu0 %v1089
  %v1091 = vpop.xlane.xlu0 %1090
  %v1092 = vsel %vm116, %v1054, -inf
  %1093 = vmax.xlane.f32.xlu0 %v1092
  %v1094 = vpop.xlane.xlu0 %1093
  %v1095 = vsel %vm116, %v1055, -inf
  %1096 = vmax.xlane.f32.xlu0 %v1095
  %v1097 = vpop.xlane.xlu0 %1096
  %v1098 = vsel %vm116, %v1056, -inf
  %1099 = vmax.xlane.f32.xlu0 %v1098
  %v1100 = vpop.xlane.xlu0 %1099
  %v1101 = vsel %vm116, %v1057, -inf
  %1102 = vmax.xlane.f32.xlu0 %v1101
  %v1103 = vpop.xlane.xlu0 %1102
  %v1104 = vsel %vm116, %v1058, -inf
  %1105 = vmax.xlane.f32.xlu0 %v1104
  %v1106 = vpop.xlane.xlu0 %1105
  %v1107 = vsub.f32 %v1043, %v1061
  %v1108 = vsub.f32 %v1044, %v1064
  %v1109 = vsub.f32 %v1045, %v1067
  %v1110 = vsub.f32 %v1046, %v1070
  %v1111 = vsub.f32 %v1047, %v1073
  %v1112 = vsub.f32 %v1048, %v1076
  %v1113 = vsub.f32 %v1049, %v1079
  %v1114 = vsub.f32 %v1050, %v1082
  %v1115 = vsub.f32 %v1051, %v1085
  %v1116 = vsub.f32 %v1052, %v1088
  %v1117 = vsub.f32 %v1053, %v1091
  %v1118 = vsub.f32 %v1054, %v1094
  %v1119 = vsub.f32 %v1055, %v1097
  %v1120 = vsub.f32 %v1056, %v1100
  %v1121 = vsub.f32 %v1057, %v1103
  %v1122 = vsub.f32 %v1058, %v1106
  %v1123 = vmul.f32 %v1107, 1.442695
  %v1124 = vpow.pop %v1123
  %v1125 = vmul.f32 %v1108, 1.442695
  %v1126 = vpow.pop %v1125
  %v1127 = vmul.f32 %v1109, 1.442695
  %v1128 = vpow.pop %v1127
  %v1129 = vmul.f32 %v1110, 1.442695
  %v1130 = vpow.pop %v1129
  %v1131 = vmul.f32 %v1111, 1.442695
  %v1132 = vpow.pop %v1131
  %v1133 = vmul.f32 %v1112, 1.442695
  %v1134 = vpow.pop %v1133
  %v1135 = vmul.f32 %v1113, 1.442695
  %v1136 = vpow.pop %v1135
  %v1137 = vmul.f32 %v1114, 1.442695
  %v1138 = vpow.pop %v1137
  %v1139 = vmul.f32 %v1115, 1.442695
  %v1140 = vpow.pop %v1139
  %v1141 = vmul.f32 %v1116, 1.442695
  %v1142 = vpow.pop %v1141
  %v1143 = vmul.f32 %v1117, 1.442695
  %v1144 = vpow.pop %v1143
  %v1145 = vmul.f32 %v1118, 1.442695
  %v1146 = vpow.pop %v1145
  %v1147 = vmul.f32 %v1119, 1.442695
  %v1148 = vpow.pop %v1147
  %v1149 = vmul.f32 %v1120, 1.442695
  %v1150 = vpow.pop %v1149
  %v1151 = vmul.f32 %v1121, 1.442695
  %v1152 = vpow.pop %v1151
  %v1153 = vmul.f32 %v1122, 1.442695
  %v1154 = vpow.pop %v1153
  %v1155 = vsel %vm116, %v1124, 0.0
  %1156 = vadd.xlane.f32.xlu0 %v1155
  %v1157 = vpop.xlane.xlu0 %1156
  %v1158 = vsel %vm116, %v1126, 0.0
  %1159 = vadd.xlane.f32.xlu0 %v1158
  %v1160 = vpop.xlane.xlu0 %1159
  %v1161 = vsel %vm116, %v1128, 0.0
  %1162 = vadd.xlane.f32.xlu0 %v1161
  %v1163 = vpop.xlane.xlu0 %1162
  %v1164 = vsel %vm116, %v1130, 0.0
  %1165 = vadd.xlane.f32.xlu0 %v1164
  %v1166 = vpop.xlane.xlu0 %1165
  %v1167 = vsel %vm116, %v1132, 0.0
  %1168 = vadd.xlane.f32.xlu0 %v1167
  %v1169 = vpop.xlane.xlu0 %1168
  %v1170 = vsel %vm116, %v1134, 0.0
  %1171 = vadd.xlane.f32.xlu0 %v1170
  %v1172 = vpop.xlane.xlu0 %1171
  %v1173 = vsel %vm116, %v1136, 0.0
  %1174 = vadd.xlane.f32.xlu0 %v1173
  %v1175 = vpop.xlane.xlu0 %1174
  %v1176 = vsel %vm116, %v1138, 0.0
  %1177 = vadd.xlane.f32.xlu0 %v1176
  %v1178 = vpop.xlane.xlu0 %1177
  %v1179 = vsel %vm116, %v1140, 0.0
  %1180 = vadd.xlane.f32.xlu0 %v1179
  %v1181 = vpop.xlane.xlu0 %1180
  %v1182 = vsel %vm116, %v1142, 0.0
  %1183 = vadd.xlane.f32.xlu0 %v1182
  %v1184 = vpop.xlane.xlu0 %1183
  %v1185 = vsel %vm116, %v1144, 0.0
  %1186 = vadd.xlane.f32.xlu0 %v1185
  %v1187 = vpop.xlane.xlu0 %1186
  %v1188 = vsel %vm116, %v1146, 0.0
  %1189 = vadd.xlane.f32.xlu0 %v1188
  %v1190 = vpop.xlane.xlu0 %1189
  %v1191 = vsel %vm116, %v1148, 0.0
  %1192 = vadd.xlane.f32.xlu0 %v1191
  %v1193 = vpop.xlane.xlu0 %1192
  %v1194 = vsel %vm116, %v1150, 0.0
  %1195 = vadd.xlane.f32.xlu0 %v1194
  %v1196 = vpop.xlane.xlu0 %1195
  %v1197 = vsel %vm116, %v1152, 0.0
  %1198 = vadd.xlane.f32.xlu0 %v1197
  %v1199 = vpop.xlane.xlu0 %1198
  %v1200 = vsel %vm116, %v1154, 0.0
  %1201 = vadd.xlane.f32.xlu0 %v1200
  %v1202 = vpop.xlane.xlu0 %1201
  %v1203 = vrcp.pop %v1157
  %v1204 = vrcp.pop %v1160
  %v1205 = vrcp.pop %v1163
  %v1206 = vrcp.pop %v1166
  %v1207 = vrcp.pop %v1169
  %v1208 = vrcp.pop %v1172
  %v1209 = vrcp.pop %v1175
  %v1210 = vrcp.pop %v1178
  %v1211 = vrcp.pop %v1181
  %v1212 = vrcp.pop %v1184
  %v1213 = vrcp.pop %v1187
  %v1214 = vrcp.pop %v1190
  %v1215 = vrcp.pop %v1193
  %v1216 = vrcp.pop %v1196
  %v1217 = vrcp.pop %v1199
  %v1218 = vrcp.pop %v1202
  %v1219 = vmul.f32 %v1124, %v1203
  %v1220 = vmul.f32 %v1126, %v1204
  %v1221 = vmul.f32 %v1128, %v1205
  %v1222 = vmul.f32 %v1130, %v1206
  %v1223 = vmul.f32 %v1132, %v1207
  %v1224 = vmul.f32 %v1134, %v1208
  %v1225 = vmul.f32 %v1136, %v1209
  %v1226 = vmul.f32 %v1138, %v1210
  %v1227 = vmul.f32 %v1140, %v1211
  %v1228 = vmul.f32 %v1142, %v1212
  %v1229 = vmul.f32 %v1144, %v1213
  %v1230 = vmul.f32 %v1146, %v1214
  %v1231 = vmul.f32 %v1148, %v1215
  %v1232 = vmul.f32 %v1150, %v1216
  %v1233 = vmul.f32 %v1152, %v1217
  %v1234 = vmul.f32 %v1154, %v1218
  %v1235 = vpack.c.bf16 %v1219, %v1219
  %v1236 = vpack.c.bf16 %v1220, %v1220
  %v1237 = vpack.c.bf16 %v1221, %v1221
  %v1238 = vpack.c.bf16 %v1222, %v1222
  %v1239 = vpack.c.bf16 %v1223, %v1223
  %v1240 = vpack.c.bf16 %v1224, %v1224
  %v1241 = vpack.c.bf16 %v1225, %v1225
  %v1242 = vpack.c.bf16 %v1226, %v1226
  %v1243 = vpack.c.bf16 %v1227, %v1227
  %v1244 = vpack.c.bf16 %v1228, %v1228
  %v1245 = vpack.c.bf16 %v1229, %v1229
  %v1246 = vpack.c.bf16 %v1230, %v1230
  %v1247 = vpack.c.bf16 %v1231, %v1231
  %v1248 = vpack.c.bf16 %v1232, %v1232
  %v1249 = vpack.c.bf16 %v1233, %v1233
  %v1250 = vpack.c.bf16 %v1234, %v1234
  %1251 = vrot.lane.b32.xlu0 %v242, 112
  %v1252 = vpop.permute.xlu0 %1251
  %v1254 = vsel %vm116, %v1235, 0
  %v1257 = vsel %vm141, %v1252, 0
  %1259 = vmatprep.subr.bf16.mxu0 0
  %1260 = vmatpush1.bf16.msra.mxu0 0
  %1261 = vmatprep.subr.bf16.mxu0 0
  %1262 = vmatpush1.bf16.msra.mxu0 0
  %1263 = vmatprep.subr.bf16.mxu0 0
  %1264 = vmatpush1.bf16.msra.mxu0 0
  %1265 = vmatprep.subr.bf16.mxu0 0
  %1266 = vmatpush1.bf16.msra.mxu0 0
  %1267 = vmatprep.subr.bf16.mxu0 0
  %1268 = vmatpush1.bf16.msra.mxu0 0
  %1269 = vmatprep.subr.bf16.mxu0 0
  %1270 = vmatpush1.bf16.msra.mxu0 0
  %1271 = vmatprep.subr.bf16.mxu0 0
  %1272 = vmatpush1.bf16.msra.mxu0 0
  %1273 = vmatprep.subr.bf16.mxu0 0
  %1274 = vmatpush1.bf16.msra.mxu0 %v1257
  %1275 = vmatprep.subr.bf16.mxu0 0
  %1276 = vmatpush2.bf16.msra.mxu0 0
  %1277 = vmatprep.subr.bf16.mxu0 0
  %1278 = vmatpush2.bf16.msra.mxu0 0
  %1279 = vmatprep.subr.bf16.mxu0 0
  %1280 = vmatpush2.bf16.msra.mxu0 0
  %1281 = vmatprep.subr.bf16.mxu0 0
  %1282 = vmatpush2.bf16.msra.mxu0 0
  %1283 = vmatprep.subr.bf16.mxu0 0
  %1284 = vmatpush2.bf16.msra.mxu0 0
  %1285 = vmatprep.subr.bf16.mxu0 0
  %1286 = vmatpush2.bf16.msra.mxu0 0
  %1287 = vmatprep.subr.bf16.mxu0 0
  %1288 = vmatpush2.bf16.msra.mxu0 0
  %1289 = vmatprep.subr.bf16.mxu0 0
  %1290 = vmatpush2.bf16.msra.mxu0 0
  %1291 = vmatprep.mubr.bf16.mxu0 0
  %1292 = vmatmul.mubr.bf16.gmra.mxu0 %v1254
  %v1293 = vpop.f32.mrf.mxu0
  %v1294 = vadd.f32 0.0, %v1293
  %v1295 = vpop.f32.mrf.mxu0
  %v1296 = vpop.f32.mrf.mxu0
  %v1297 = vpop.f32.mrf.mxu0
  %1298 = vdwg.mxu0
  %1299 = vrot.lane.b32.xlu0 %v243, 112
  %v1300 = vpop.permute.xlu0 %1299
  %v1302 = vsel %vm116, %v1236, 0
  %v1305 = vsel %vm141, %v1300, 0
  %1307 = vmatprep.subr.bf16.mxu0 0
  %1308 = vmatpush1.bf16.msra.mxu0 0
  %1309 = vmatprep.subr.bf16.mxu0 0
  %1310 = vmatpush1.bf16.msra.mxu0 0
  %1311 = vmatprep.subr.bf16.mxu0 0
  %1312 = vmatpush1.bf16.msra.mxu0 0
  %1313 = vmatprep.subr.bf16.mxu0 0
  %1314 = vmatpush1.bf16.msra.mxu0 0
  %1315 = vmatprep.subr.bf16.mxu0 0
  %1316 = vmatpush1.bf16.msra.mxu0 0
  %1317 = vmatprep.subr.bf16.mxu0 0
  %1318 = vmatpush1.bf16.msra.mxu0 0
  %1319 = vmatprep.subr.bf16.mxu0 0
  %1320 = vmatpush1.bf16.msra.mxu0 0
  %1321 = vmatprep.subr.bf16.mxu0 0
  %1322 = vmatpush1.bf16.msra.mxu0 %v1305
  %1323 = vmatprep.subr.bf16.mxu0 0
  %1324 = vmatpush2.bf16.msra.mxu0 0
  %1325 = vmatprep.subr.bf16.mxu0 0
  %1326 = vmatpush2.bf16.msra.mxu0 0
  %1327 = vmatprep.subr.bf16.mxu0 0
  %1328 = vmatpush2.bf16.msra.mxu0 0
  %1329 = vmatprep.subr.bf16.mxu0 0
  %1330 = vmatpush2.bf16.msra.mxu0 0
  %1331 = vmatprep.subr.bf16.mxu0 0
  %1332 = vmatpush2.bf16.msra.mxu0 0
  %1333 = vmatprep.subr.bf16.mxu0 0
  %1334 = vmatpush2.bf16.msra.mxu0 0
  %1335 = vmatprep.subr.bf16.mxu0 0
  %1336 = vmatpush2.bf16.msra.mxu0 0
  %1337 = vmatprep.subr.bf16.mxu0 0
  %1338 = vmatpush2.bf16.msra.mxu0 0
  %1339 = vmatprep.mubr.bf16.mxu0 0
  %1340 = vmatmul.mubr.bf16.gmra.mxu0 %v1302
  %v1341 = vpop.f32.mrf.mxu0
  %v1342 = vadd.f32 0.0, %v1341
  %v1343 = vpop.f32.mrf.mxu0
  %v1344 = vpop.f32.mrf.mxu0
  %v1345 = vpop.f32.mrf.mxu0
  %1346 = vdwg.mxu0
  %1347 = vrot.lane.b32.xlu0 %v244, 112
  %v1348 = vpop.permute.xlu0 %1347
  %v1350 = vsel %vm116, %v1237, 0
  %v1353 = vsel %vm141, %v1348, 0
  %1355 = vmatprep.subr.bf16.mxu0 0
  %1356 = vmatpush1.bf16.msra.mxu0 0
  %1357 = vmatprep.subr.bf16.mxu0 0
  %1358 = vmatpush1.bf16.msra.mxu0 0
  %1359 = vmatprep.subr.bf16.mxu0 0
  %1360 = vmatpush1.bf16.msra.mxu0 0
  %1361 = vmatprep.subr.bf16.mxu0 0
  %1362 = vmatpush1.bf16.msra.mxu0 0
  %1363 = vmatprep.subr.bf16.mxu0 0
  %1364 = vmatpush1.bf16.msra.mxu0 0
  %1365 = vmatprep.subr.bf16.mxu0 0
  %1366 = vmatpush1.bf16.msra.mxu0 0
  %1367 = vmatprep.subr.bf16.mxu0 0
  %1368 = vmatpush1.bf16.msra.mxu0 0
  %1369 = vmatprep.subr.bf16.mxu0 0
  %1370 = vmatpush1.bf16.msra.mxu0 %v1353
  %1371 = vmatprep.subr.bf16.mxu0 0
  %1372 = vmatpush2.bf16.msra.mxu0 0
  %1373 = vmatprep.subr.bf16.mxu0 0
  %1374 = vmatpush2.bf16.msra.mxu0 0
  %1375 = vmatprep.subr.bf16.mxu0 0
  %1376 = vmatpush2.bf16.msra.mxu0 0
  %1377 = vmatprep.subr.bf16.mxu0 0
  %1378 = vmatpush2.bf16.msra.mxu0 0
  %1379 = vmatprep.subr.bf16.mxu0 0
  %1380 = vmatpush2.bf16.msra.mxu0 0
  %1381 = vmatprep.subr.bf16.mxu0 0
  %1382 = vmatpush2.bf16.msra.mxu0 0
  %1383 = vmatprep.subr.bf16.mxu0 0
  %1384 = vmatpush2.bf16.msra.mxu0 0
  %1385 = vmatprep.subr.bf16.mxu0 0
  %1386 = vmatpush2.bf16.msra.mxu0 0
  %1387 = vmatprep.mubr.bf16.mxu0 0
  %1388 = vmatmul.mubr.bf16.gmra.mxu0 %v1350
  %v1389 = vpop.f32.mrf.mxu0
  %v1390 = vadd.f32 0.0, %v1389
  %v1391 = vpop.f32.mrf.mxu0
  %v1392 = vpop.f32.mrf.mxu0
  %v1393 = vpop.f32.mrf.mxu0
  %1394 = vdwg.mxu0
  %1395 = vrot.lane.b32.xlu0 %v245, 112
  %v1396 = vpop.permute.xlu0 %1395
  %v1398 = vsel %vm116, %v1238, 0
  %v1401 = vsel %vm141, %v1396, 0
  %1403 = vmatprep.subr.bf16.mxu0 0
  %1404 = vmatpush1.bf16.msra.mxu0 0
  %1405 = vmatprep.subr.bf16.mxu0 0
  %1406 = vmatpush1.bf16.msra.mxu0 0
  %1407 = vmatprep.subr.bf16.mxu0 0
  %1408 = vmatpush1.bf16.msra.mxu0 0
  %1409 = vmatprep.subr.bf16.mxu0 0
  %1410 = vmatpush1.bf16.msra.mxu0 0
  %1411 = vmatprep.subr.bf16.mxu0 0
  %1412 = vmatpush1.bf16.msra.mxu0 0
  %1413 = vmatprep.subr.bf16.mxu0 0
  %1414 = vmatpush1.bf16.msra.mxu0 0
  %1415 = vmatprep.subr.bf16.mxu0 0
  %1416 = vmatpush1.bf16.msra.mxu0 0
  %1417 = vmatprep.subr.bf16.mxu0 0
  %1418 = vmatpush1.bf16.msra.mxu0 %v1401
  %1419 = vmatprep.subr.bf16.mxu0 0
  %1420 = vmatpush2.bf16.msra.mxu0 0
  %1421 = vmatprep.subr.bf16.mxu0 0
  %1422 = vmatpush2.bf16.msra.mxu0 0
  %1423 = vmatprep.subr.bf16.mxu0 0
  %1424 = vmatpush2.bf16.msra.mxu0 0
  %1425 = vmatprep.subr.bf16.mxu0 0
  %1426 = vmatpush2.bf16.msra.mxu0 0
  %1427 = vmatprep.subr.bf16.mxu0 0
  %1428 = vmatpush2.bf16.msra.mxu0 0
  %1429 = vmatprep.subr.bf16.mxu0 0
  %1430 = vmatpush2.bf16.msra.mxu0 0
  %1431 = vmatprep.subr.bf16.mxu0 0
  %1432 = vmatpush2.bf16.msra.mxu0 0
  %1433 = vmatprep.subr.bf16.mxu0 0
  %1434 = vmatpush2.bf16.msra.mxu0 0
  %1435 = vmatprep.mubr.bf16.mxu0 0
  %1436 = vmatmul.mubr.bf16.gmra.mxu0 %v1398
  %v1437 = vpop.f32.mrf.mxu0
  %v1438 = vadd.f32 0.0, %v1437
  %v1439 = vpop.f32.mrf.mxu0
  %v1440 = vpop.f32.mrf.mxu0
  %v1441 = vpop.f32.mrf.mxu0
  %1442 = vdwg.mxu0
  %1443 = vrot.lane.b32.xlu0 %v246, 112
  %v1444 = vpop.permute.xlu0 %1443
  %v1446 = vsel %vm116, %v1239, 0
  %v1449 = vsel %vm141, %v1444, 0
  %1451 = vmatprep.subr.bf16.mxu0 0
  %1452 = vmatpush1.bf16.msra.mxu0 0
  %1453 = vmatprep.subr.bf16.mxu0 0
  %1454 = vmatpush1.bf16.msra.mxu0 0
  %1455 = vmatprep.subr.bf16.mxu0 0
  %1456 = vmatpush1.bf16.msra.mxu0 0
  %1457 = vmatprep.subr.bf16.mxu0 0
  %1458 = vmatpush1.bf16.msra.mxu0 0
  %1459 = vmatprep.subr.bf16.mxu0 0
  %1460 = vmatpush1.bf16.msra.mxu0 0
  %1461 = vmatprep.subr.bf16.mxu0 0
  %1462 = vmatpush1.bf16.msra.mxu0 0
  %1463 = vmatprep.subr.bf16.mxu0 0
  %1464 = vmatpush1.bf16.msra.mxu0 0
  %1465 = vmatprep.subr.bf16.mxu0 0
  %1466 = vmatpush1.bf16.msra.mxu0 %v1449
  %1467 = vmatprep.subr.bf16.mxu0 0
  %1468 = vmatpush2.bf16.msra.mxu0 0
  %1469 = vmatprep.subr.bf16.mxu0 0
  %1470 = vmatpush2.bf16.msra.mxu0 0
  %1471 = vmatprep.subr.bf16.mxu0 0
  %1472 = vmatpush2.bf16.msra.mxu0 0
  %1473 = vmatprep.subr.bf16.mxu0 0
  %1474 = vmatpush2.bf16.msra.mxu0 0
  %1475 = vmatprep.subr.bf16.mxu0 0
  %1476 = vmatpush2.bf16.msra.mxu0 0
  %1477 = vmatprep.subr.bf16.mxu0 0
  %1478 = vmatpush2.bf16.msra.mxu0 0
  %1479 = vmatprep.subr.bf16.mxu0 0
  %1480 = vmatpush2.bf16.msra.mxu0 0
  %1481 = vmatprep.subr.bf16.mxu0 0
  %1482 = vmatpush2.bf16.msra.mxu0 0
  %1483 = vmatprep.mubr.bf16.mxu0 0
  %1484 = vmatmul.mubr.bf16.gmra.mxu0 %v1446
  %v1485 = vpop.f32.mrf.mxu0
  %v1486 = vadd.f32 0.0, %v1485
  %v1487 = vpop.f32.mrf.mxu0
  %v1488 = vpop.f32.mrf.mxu0
  %v1489 = vpop.f32.mrf.mxu0
  %1490 = vdwg.mxu0
  %1491 = vrot.lane.b32.xlu0 %v247, 112
  %v1492 = vpop.permute.xlu0 %1491
  %v1494 = vsel %vm116, %v1240, 0
  %v1497 = vsel %vm141, %v1492, 0
  %1499 = vmatprep.subr.bf16.mxu0 0
  %1500 = vmatpush1.bf16.msra.mxu0 0
  %1501 = vmatprep.subr.bf16.mxu0 0
  %1502 = vmatpush1.bf16.msra.mxu0 0
  %1503 = vmatprep.subr.bf16.mxu0 0
  %1504 = vmatpush1.bf16.msra.mxu0 0
  %1505 = vmatprep.subr.bf16.mxu0 0
  %1506 = vmatpush1.bf16.msra.mxu0 0
  %1507 = vmatprep.subr.bf16.mxu0 0
  %1508 = vmatpush1.bf16.msra.mxu0 0
  %1509 = vmatprep.subr.bf16.mxu0 0
  %1510 = vmatpush1.bf16.msra.mxu0 0
  %1511 = vmatprep.subr.bf16.mxu0 0
  %1512 = vmatpush1.bf16.msra.mxu0 0
  %1513 = vmatprep.subr.bf16.mxu0 0
  %1514 = vmatpush1.bf16.msra.mxu0 %v1497
  %1515 = vmatprep.subr.bf16.mxu0 0
  %1516 = vmatpush2.bf16.msra.mxu0 0
  %1517 = vmatprep.subr.bf16.mxu0 0
  %1518 = vmatpush2.bf16.msra.mxu0 0
  %1519 = vmatprep.subr.bf16.mxu0 0
  %1520 = vmatpush2.bf16.msra.mxu0 0
  %1521 = vmatprep.subr.bf16.mxu0 0
  %1522 = vmatpush2.bf16.msra.mxu0 0
  %1523 = vmatprep.subr.bf16.mxu0 0
  %1524 = vmatpush2.bf16.msra.mxu0 0
  %1525 = vmatprep.subr.bf16.mxu0 0
  %1526 = vmatpush2.bf16.msra.mxu0 0
  %1527 = vmatprep.subr.bf16.mxu0 0
  %1528 = vmatpush2.bf16.msra.mxu0 0
  %1529 = vmatprep.subr.bf16.mxu0 0
  %1530 = vmatpush2.bf16.msra.mxu0 0
  %1531 = vmatprep.mubr.bf16.mxu0 0
  %1532 = vmatmul.mubr.bf16.gmra.mxu0 %v1494
  %v1533 = vpop.f32.mrf.mxu0
  %v1534 = vadd.f32 0.0, %v1533
  %v1535 = vpop.f32.mrf.mxu0
  %v1536 = vpop.f32.mrf.mxu0
  %v1537 = vpop.f32.mrf.mxu0
  %1538 = vdwg.mxu0
  %1539 = vrot.lane.b32.xlu0 %v248, 112
  %v1540 = vpop.permute.xlu0 %1539
  %v1542 = vsel %vm116, %v1241, 0
  %v1545 = vsel %vm141, %v1540, 0
  %1547 = vmatprep.subr.bf16.mxu0 0
  %1548 = vmatpush1.bf16.msra.mxu0 0
  %1549 = vmatprep.subr.bf16.mxu0 0
  %1550 = vmatpush1.bf16.msra.mxu0 0
  %1551 = vmatprep.subr.bf16.mxu0 0
  %1552 = vmatpush1.bf16.msra.mxu0 0
  %1553 = vmatprep.subr.bf16.mxu0 0
  %1554 = vmatpush1.bf16.msra.mxu0 0
  %1555 = vmatprep.subr.bf16.mxu0 0
  %1556 = vmatpush1.bf16.msra.mxu0 0
  %1557 = vmatprep.subr.bf16.mxu0 0
  %1558 = vmatpush1.bf16.msra.mxu0 0
  %1559 = vmatprep.subr.bf16.mxu0 0
  %1560 = vmatpush1.bf16.msra.mxu0 0
  %1561 = vmatprep.subr.bf16.mxu0 0
  %1562 = vmatpush1.bf16.msra.mxu0 %v1545
  %1563 = vmatprep.subr.bf16.mxu0 0
  %1564 = vmatpush2.bf16.msra.mxu0 0
  %1565 = vmatprep.subr.bf16.mxu0 0
  %1566 = vmatpush2.bf16.msra.mxu0 0
  %1567 = vmatprep.subr.bf16.mxu0 0
  %1568 = vmatpush2.bf16.msra.mxu0 0
  %1569 = vmatprep.subr.bf16.mxu0 0
  %1570 = vmatpush2.bf16.msra.mxu0 0
  %1571 = vmatprep.subr.bf16.mxu0 0
  %1572 = vmatpush2.bf16.msra.mxu0 0
  %1573 = vmatprep.subr.bf16.mxu0 0
  %1574 = vmatpush2.bf16.msra.mxu0 0
  %1575 = vmatprep.subr.bf16.mxu0 0
  %1576 = vmatpush2.bf16.msra.mxu0 0
  %1577 = vmatprep.subr.bf16.mxu0 0
  %1578 = vmatpush2.bf16.msra.mxu0 0
  %1579 = vmatprep.mubr.bf16.mxu0 0
  %1580 = vmatmul.mubr.bf16.gmra.mxu0 %v1542
  %v1581 = vpop.f32.mrf.mxu0
  %v1582 = vadd.f32 0.0, %v1581
  %v1583 = vpop.f32.mrf.mxu0
  %v1584 = vpop.f32.mrf.mxu0
  %v1585 = vpop.f32.mrf.mxu0
  %1586 = vdwg.mxu0
  %1587 = vrot.lane.b32.xlu0 %v249, 112
  %v1588 = vpop.permute.xlu0 %1587
  %v1590 = vsel %vm116, %v1242, 0
  %v1593 = vsel %vm141, %v1588, 0
  %1595 = vmatprep.subr.bf16.mxu0 0
  %1596 = vmatpush1.bf16.msra.mxu0 0
  %1597 = vmatprep.subr.bf16.mxu0 0
  %1598 = vmatpush1.bf16.msra.mxu0 0
  %1599 = vmatprep.subr.bf16.mxu0 0
  %1600 = vmatpush1.bf16.msra.mxu0 0
  %1601 = vmatprep.subr.bf16.mxu0 0
  %1602 = vmatpush1.bf16.msra.mxu0 0
  %1603 = vmatprep.subr.bf16.mxu0 0
  %1604 = vmatpush1.bf16.msra.mxu0 0
  %1605 = vmatprep.subr.bf16.mxu0 0
  %1606 = vmatpush1.bf16.msra.mxu0 0
  %1607 = vmatprep.subr.bf16.mxu0 0
  %1608 = vmatpush1.bf16.msra.mxu0 0
  %1609 = vmatprep.subr.bf16.mxu0 0
  %1610 = vmatpush1.bf16.msra.mxu0 %v1593
  %1611 = vmatprep.subr.bf16.mxu0 0
  %1612 = vmatpush2.bf16.msra.mxu0 0
  %1613 = vmatprep.subr.bf16.mxu0 0
  %1614 = vmatpush2.bf16.msra.mxu0 0
  %1615 = vmatprep.subr.bf16.mxu0 0
  %1616 = vmatpush2.bf16.msra.mxu0 0
  %1617 = vmatprep.subr.bf16.mxu0 0
  %1618 = vmatpush2.bf16.msra.mxu0 0
  %1619 = vmatprep.subr.bf16.mxu0 0
  %1620 = vmatpush2.bf16.msra.mxu0 0
  %1621 = vmatprep.subr.bf16.mxu0 0
  %1622 = vmatpush2.bf16.msra.mxu0 0
  %1623 = vmatprep.subr.bf16.mxu0 0
  %1624 = vmatpush2.bf16.msra.mxu0 0
  %1625 = vmatprep.subr.bf16.mxu0 0
  %1626 = vmatpush2.bf16.msra.mxu0 0
  %1627 = vmatprep.mubr.bf16.mxu0 0
  %1628 = vmatmul.mubr.bf16.gmra.mxu0 %v1590
  %v1629 = vpop.f32.mrf.mxu0
  %v1630 = vadd.f32 0.0, %v1629
  %v1631 = vpop.f32.mrf.mxu0
  %v1632 = vpop.f32.mrf.mxu0
  %v1633 = vpop.f32.mrf.mxu0
  %1634 = vdwg.mxu0
  %1635 = vrot.lane.b32.xlu0 %v250, 112
  %v1636 = vpop.permute.xlu0 %1635
  %v1638 = vsel %vm116, %v1243, 0
  %v1641 = vsel %vm141, %v1636, 0
  %1643 = vmatprep.subr.bf16.mxu0 0
  %1644 = vmatpush1.bf16.msra.mxu0 0
  %1645 = vmatprep.subr.bf16.mxu0 0
  %1646 = vmatpush1.bf16.msra.mxu0 0
  %1647 = vmatprep.subr.bf16.mxu0 0
  %1648 = vmatpush1.bf16.msra.mxu0 0
  %1649 = vmatprep.subr.bf16.mxu0 0
  %1650 = vmatpush1.bf16.msra.mxu0 0
  %1651 = vmatprep.subr.bf16.mxu0 0
  %1652 = vmatpush1.bf16.msra.mxu0 0
  %1653 = vmatprep.subr.bf16.mxu0 0
  %1654 = vmatpush1.bf16.msra.mxu0 0
  %1655 = vmatprep.subr.bf16.mxu0 0
  %1656 = vmatpush1.bf16.msra.mxu0 0
  %1657 = vmatprep.subr.bf16.mxu0 0
  %1658 = vmatpush1.bf16.msra.mxu0 %v1641
  %1659 = vmatprep.subr.bf16.mxu0 0
  %1660 = vmatpush2.bf16.msra.mxu0 0
  %1661 = vmatprep.subr.bf16.mxu0 0
  %1662 = vmatpush2.bf16.msra.mxu0 0
  %1663 = vmatprep.subr.bf16.mxu0 0
  %1664 = vmatpush2.bf16.msra.mxu0 0
  %1665 = vmatprep.subr.bf16.mxu0 0
  %1666 = vmatpush2.bf16.msra.mxu0 0
  %1667 = vmatprep.subr.bf16.mxu0 0
  %1668 = vmatpush2.bf16.msra.mxu0 0
  %1669 = vmatprep.subr.bf16.mxu0 0
  %1670 = vmatpush2.bf16.msra.mxu0 0
  %1671 = vmatprep.subr.bf16.mxu0 0
  %1672 = vmatpush2.bf16.msra.mxu0 0
  %1673 = vmatprep.subr.bf16.mxu0 0
  %1674 = vmatpush2.bf16.msra.mxu0 0
  %1675 = vmatprep.mubr.bf16.mxu0 0
  %1676 = vmatmul.mubr.bf16.gmra.mxu0 %v1638
  %v1677 = vpop.f32.mrf.mxu0
  %v1678 = vadd.f32 0.0, %v1677
  %v1679 = vpop.f32.mrf.mxu0
  %v1680 = vpop.f32.mrf.mxu0
  %v1681 = vpop.f32.mrf.mxu0
  %1682 = vdwg.mxu0
  %1683 = vrot.lane.b32.xlu0 %v251, 112
  %v1684 = vpop.permute.xlu0 %1683
  %v1686 = vsel %vm116, %v1244, 0
  %v1689 = vsel %vm141, %v1684, 0
  %1691 = vmatprep.subr.bf16.mxu0 0
  %1692 = vmatpush1.bf16.msra.mxu0 0
  %1693 = vmatprep.subr.bf16.mxu0 0
  %1694 = vmatpush1.bf16.msra.mxu0 0
  %1695 = vmatprep.subr.bf16.mxu0 0
  %1696 = vmatpush1.bf16.msra.mxu0 0
  %1697 = vmatprep.subr.bf16.mxu0 0
  %1698 = vmatpush1.bf16.msra.mxu0 0
  %1699 = vmatprep.subr.bf16.mxu0 0
  %1700 = vmatpush1.bf16.msra.mxu0 0
  %1701 = vmatprep.subr.bf16.mxu0 0
  %1702 = vmatpush1.bf16.msra.mxu0 0
  %1703 = vmatprep.subr.bf16.mxu0 0
  %1704 = vmatpush1.bf16.msra.mxu0 0
  %1705 = vmatprep.subr.bf16.mxu0 0
  %1706 = vmatpush1.bf16.msra.mxu0 %v1689
  %1707 = vmatprep.subr.bf16.mxu0 0
  %1708 = vmatpush2.bf16.msra.mxu0 0
  %1709 = vmatprep.subr.bf16.mxu0 0
  %1710 = vmatpush2.bf16.msra.mxu0 0
  %1711 = vmatprep.subr.bf16.mxu0 0
  %1712 = vmatpush2.bf16.msra.mxu0 0
  %1713 = vmatprep.subr.bf16.mxu0 0
  %1714 = vmatpush2.bf16.msra.mxu0 0
  %1715 = vmatprep.subr.bf16.mxu0 0
  %1716 = vmatpush2.bf16.msra.mxu0 0
  %1717 = vmatprep.subr.bf16.mxu0 0
  %1718 = vmatpush2.bf16.msra.mxu0 0
  %1719 = vmatprep.subr.bf16.mxu0 0
  %1720 = vmatpush2.bf16.msra.mxu0 0
  %1721 = vmatprep.subr.bf16.mxu0 0
  %1722 = vmatpush2.bf16.msra.mxu0 0
  %1723 = vmatprep.mubr.bf16.mxu0 0
  %1724 = vmatmul.mubr.bf16.gmra.mxu0 %v1686
  %v1725 = vpop.f32.mrf.mxu0
  %v1726 = vadd.f32 0.0, %v1725
  %v1727 = vpop.f32.mrf.mxu0
  %v1728 = vpop.f32.mrf.mxu0
  %v1729 = vpop.f32.mrf.mxu0
  %1730 = vdwg.mxu0
  %1731 = vrot.lane.b32.xlu0 %v252, 112
  %v1732 = vpop.permute.xlu0 %1731
  %v1734 = vsel %vm116, %v1245, 0
  %v1737 = vsel %vm141, %v1732, 0
  %1739 = vmatprep.subr.bf16.mxu0 0
  %1740 = vmatpush1.bf16.msra.mxu0 0
  %1741 = vmatprep.subr.bf16.mxu0 0
  %1742 = vmatpush1.bf16.msra.mxu0 0
  %1743 = vmatprep.subr.bf16.mxu0 0
  %1744 = vmatpush1.bf16.msra.mxu0 0
  %1745 = vmatprep.subr.bf16.mxu0 0
  %1746 = vmatpush1.bf16.msra.mxu0 0
  %1747 = vmatprep.subr.bf16.mxu0 0
  %1748 = vmatpush1.bf16.msra.mxu0 0
  %1749 = vmatprep.subr.bf16.mxu0 0
  %1750 = vmatpush1.bf16.msra.mxu0 0
  %1751 = vmatprep.subr.bf16.mxu0 0
  %1752 = vmatpush1.bf16.msra.mxu0 0
  %1753 = vmatprep.subr.bf16.mxu0 0
  %1754 = vmatpush1.bf16.msra.mxu0 %v1737
  %1755 = vmatprep.subr.bf16.mxu0 0
  %1756 = vmatpush2.bf16.msra.mxu0 0
  %1757 = vmatprep.subr.bf16.mxu0 0
  %1758 = vmatpush2.bf16.msra.mxu0 0
  %1759 = vmatprep.subr.bf16.mxu0 0
  %1760 = vmatpush2.bf16.msra.mxu0 0
  %1761 = vmatprep.subr.bf16.mxu0 0
  %1762 = vmatpush2.bf16.msra.mxu0 0
  %1763 = vmatprep.subr.bf16.mxu0 0
  %1764 = vmatpush2.bf16.msra.mxu0 0
  %1765 = vmatprep.subr.bf16.mxu0 0
  %1766 = vmatpush2.bf16.msra.mxu0 0
  %1767 = vmatprep.subr.bf16.mxu0 0
  %1768 = vmatpush2.bf16.msra.mxu0 0
  %1769 = vmatprep.subr.bf16.mxu0 0
  %1770 = vmatpush2.bf16.msra.mxu0 0
  %1771 = vmatprep.mubr.bf16.mxu0 0
  %1772 = vmatmul.mubr.bf16.gmra.mxu0 %v1734
  %v1773 = vpop.f32.mrf.mxu0
  %v1774 = vadd.f32 0.0, %v1773
  %v1775 = vpop.f32.mrf.mxu0
  %v1776 = vpop.f32.mrf.mxu0
  %v1777 = vpop.f32.mrf.mxu0
  %1778 = vdwg.mxu0
  %1779 = vrot.lane.b32.xlu0 %v253, 112
  %v1780 = vpop.permute.xlu0 %1779
  %v1782 = vsel %vm116, %v1246, 0
  %v1785 = vsel %vm141, %v1780, 0
  %1787 = vmatprep.subr.bf16.mxu0 0
  %1788 = vmatpush1.bf16.msra.mxu0 0
  %1789 = vmatprep.subr.bf16.mxu0 0
  %1790 = vmatpush1.bf16.msra.mxu0 0
  %1791 = vmatprep.subr.bf16.mxu0 0
  %1792 = vmatpush1.bf16.msra.mxu0 0
  %1793 = vmatprep.subr.bf16.mxu0 0
  %1794 = vmatpush1.bf16.msra.mxu0 0
  %1795 = vmatprep.subr.bf16.mxu0 0
  %1796 = vmatpush1.bf16.msra.mxu0 0
  %1797 = vmatprep.subr.bf16.mxu0 0
  %1798 = vmatpush1.bf16.msra.mxu0 0
  %1799 = vmatprep.subr.bf16.mxu0 0
  %1800 = vmatpush1.bf16.msra.mxu0 0
  %1801 = vmatprep.subr.bf16.mxu0 0
  %1802 = vmatpush1.bf16.msra.mxu0 %v1785
  %1803 = vmatprep.subr.bf16.mxu0 0
  %1804 = vmatpush2.bf16.msra.mxu0 0
  %1805 = vmatprep.subr.bf16.mxu0 0
  %1806 = vmatpush2.bf16.msra.mxu0 0
  %1807 = vmatprep.subr.bf16.mxu0 0
  %1808 = vmatpush2.bf16.msra.mxu0 0
  %1809 = vmatprep.subr.bf16.mxu0 0
  %1810 = vmatpush2.bf16.msra.mxu0 0
  %1811 = vmatprep.subr.bf16.mxu0 0
  %1812 = vmatpush2.bf16.msra.mxu0 0
  %1813 = vmatprep.subr.bf16.mxu0 0
  %1814 = vmatpush2.bf16.msra.mxu0 0
  %1815 = vmatprep.subr.bf16.mxu0 0
  %1816 = vmatpush2.bf16.msra.mxu0 0
  %1817 = vmatprep.subr.bf16.mxu0 0
  %1818 = vmatpush2.bf16.msra.mxu0 0
  %1819 = vmatprep.mubr.bf16.mxu0 0
  %1820 = vmatmul.mubr.bf16.gmra.mxu0 %v1782
  %v1821 = vpop.f32.mrf.mxu0
  %v1822 = vadd.f32 0.0, %v1821
  %v1823 = vpop.f32.mrf.mxu0
  %v1824 = vpop.f32.mrf.mxu0
  %v1825 = vpop.f32.mrf.mxu0
  %1826 = vdwg.mxu0
  %1827 = vrot.lane.b32.xlu0 %v254, 112
  %v1828 = vpop.permute.xlu0 %1827
  %v1830 = vsel %vm116, %v1247, 0
  %v1833 = vsel %vm141, %v1828, 0
  %1835 = vmatprep.subr.bf16.mxu0 0
  %1836 = vmatpush1.bf16.msra.mxu0 0
  %1837 = vmatprep.subr.bf16.mxu0 0
  %1838 = vmatpush1.bf16.msra.mxu0 0
  %1839 = vmatprep.subr.bf16.mxu0 0
  %1840 = vmatpush1.bf16.msra.mxu0 0
  %1841 = vmatprep.subr.bf16.mxu0 0
  %1842 = vmatpush1.bf16.msra.mxu0 0
  %1843 = vmatprep.subr.bf16.mxu0 0
  %1844 = vmatpush1.bf16.msra.mxu0 0
  %1845 = vmatprep.subr.bf16.mxu0 0
  %1846 = vmatpush1.bf16.msra.mxu0 0
  %1847 = vmatprep.subr.bf16.mxu0 0
  %1848 = vmatpush1.bf16.msra.mxu0 0
  %1849 = vmatprep.subr.bf16.mxu0 0
  %1850 = vmatpush1.bf16.msra.mxu0 %v1833
  %1851 = vmatprep.subr.bf16.mxu0 0
  %1852 = vmatpush2.bf16.msra.mxu0 0
  %1853 = vmatprep.subr.bf16.mxu0 0
  %1854 = vmatpush2.bf16.msra.mxu0 0
  %1855 = vmatprep.subr.bf16.mxu0 0
  %1856 = vmatpush2.bf16.msra.mxu0 0
  %1857 = vmatprep.subr.bf16.mxu0 0
  %1858 = vmatpush2.bf16.msra.mxu0 0
  %1859 = vmatprep.subr.bf16.mxu0 0
  %1860 = vmatpush2.bf16.msra.mxu0 0
  %1861 = vmatprep.subr.bf16.mxu0 0
  %1862 = vmatpush2.bf16.msra.mxu0 0
  %1863 = vmatprep.subr.bf16.mxu0 0
  %1864 = vmatpush2.bf16.msra.mxu0 0
  %1865 = vmatprep.subr.bf16.mxu0 0
  %1866 = vmatpush2.bf16.msra.mxu0 0
  %1867 = vmatprep.mubr.bf16.mxu0 0
  %1868 = vmatmul.mubr.bf16.gmra.mxu0 %v1830
  %v1869 = vpop.f32.mrf.mxu0
  %v1870 = vadd.f32 0.0, %v1869
  %v1871 = vpop.f32.mrf.mxu0
  %v1872 = vpop.f32.mrf.mxu0
  %v1873 = vpop.f32.mrf.mxu0
  %1874 = vdwg.mxu0
  %1875 = vrot.lane.b32.xlu0 %v255, 112
  %v1876 = vpop.permute.xlu0 %1875
  %v1878 = vsel %vm116, %v1248, 0
  %v1881 = vsel %vm141, %v1876, 0
  %1883 = vmatprep.subr.bf16.mxu0 0
  %1884 = vmatpush1.bf16.msra.mxu0 0
  %1885 = vmatprep.subr.bf16.mxu0 0
  %1886 = vmatpush1.bf16.msra.mxu0 0
  %1887 = vmatprep.subr.bf16.mxu0 0
  %1888 = vmatpush1.bf16.msra.mxu0 0
  %1889 = vmatprep.subr.bf16.mxu0 0
  %1890 = vmatpush1.bf16.msra.mxu0 0
  %1891 = vmatprep.subr.bf16.mxu0 0
  %1892 = vmatpush1.bf16.msra.mxu0 0
  %1893 = vmatprep.subr.bf16.mxu0 0
  %1894 = vmatpush1.bf16.msra.mxu0 0
  %1895 = vmatprep.subr.bf16.mxu0 0
  %1896 = vmatpush1.bf16.msra.mxu0 0
  %1897 = vmatprep.subr.bf16.mxu0 0
  %1898 = vmatpush1.bf16.msra.mxu0 %v1881
  %1899 = vmatprep.subr.bf16.mxu0 0
  %1900 = vmatpush2.bf16.msra.mxu0 0
  %1901 = vmatprep.subr.bf16.mxu0 0
  %1902 = vmatpush2.bf16.msra.mxu0 0
  %1903 = vmatprep.subr.bf16.mxu0 0
  %1904 = vmatpush2.bf16.msra.mxu0 0
  %1905 = vmatprep.subr.bf16.mxu0 0
  %1906 = vmatpush2.bf16.msra.mxu0 0
  %1907 = vmatprep.subr.bf16.mxu0 0
  %1908 = vmatpush2.bf16.msra.mxu0 0
  %1909 = vmatprep.subr.bf16.mxu0 0
  %1910 = vmatpush2.bf16.msra.mxu0 0
  %1911 = vmatprep.subr.bf16.mxu0 0
  %1912 = vmatpush2.bf16.msra.mxu0 0
  %1913 = vmatprep.subr.bf16.mxu0 0
  %1914 = vmatpush2.bf16.msra.mxu0 0
  %1915 = vmatprep.mubr.bf16.mxu0 0
  %1916 = vmatmul.mubr.bf16.gmra.mxu0 %v1878
  %v1917 = vpop.f32.mrf.mxu0
  %v1918 = vadd.f32 0.0, %v1917
  %v1919 = vpop.f32.mrf.mxu0
  %v1920 = vpop.f32.mrf.mxu0
  %v1921 = vpop.f32.mrf.mxu0
  %1922 = vdwg.mxu0
  %1923 = vrot.lane.b32.xlu0 %v256, 112
  %v1924 = vpop.permute.xlu0 %1923
  %v1926 = vsel %vm116, %v1249, 0
  %v1929 = vsel %vm141, %v1924, 0
  %1931 = vmatprep.subr.bf16.mxu0 0
  %1932 = vmatpush1.bf16.msra.mxu0 0
  %1933 = vmatprep.subr.bf16.mxu0 0
  %1934 = vmatpush1.bf16.msra.mxu0 0
  %1935 = vmatprep.subr.bf16.mxu0 0
  %1936 = vmatpush1.bf16.msra.mxu0 0
  %1937 = vmatprep.subr.bf16.mxu0 0
  %1938 = vmatpush1.bf16.msra.mxu0 0
  %1939 = vmatprep.subr.bf16.mxu0 0
  %1940 = vmatpush1.bf16.msra.mxu0 0
  %1941 = vmatprep.subr.bf16.mxu0 0
  %1942 = vmatpush1.bf16.msra.mxu0 0
  %1943 = vmatprep.subr.bf16.mxu0 0
  %1944 = vmatpush1.bf16.msra.mxu0 0
  %1945 = vmatprep.subr.bf16.mxu0 0
  %1946 = vmatpush1.bf16.msra.mxu0 %v1929
  %1947 = vmatprep.subr.bf16.mxu0 0
  %1948 = vmatpush2.bf16.msra.mxu0 0
  %1949 = vmatprep.subr.bf16.mxu0 0
  %1950 = vmatpush2.bf16.msra.mxu0 0
  %1951 = vmatprep.subr.bf16.mxu0 0
  %1952 = vmatpush2.bf16.msra.mxu0 0
  %1953 = vmatprep.subr.bf16.mxu0 0
  %1954 = vmatpush2.bf16.msra.mxu0 0
  %1955 = vmatprep.subr.bf16.mxu0 0
  %1956 = vmatpush2.bf16.msra.mxu0 0
  %1957 = vmatprep.subr.bf16.mxu0 0
  %1958 = vmatpush2.bf16.msra.mxu0 0
  %1959 = vmatprep.subr.bf16.mxu0 0
  %1960 = vmatpush2.bf16.msra.mxu0 0
  %1961 = vmatprep.subr.bf16.mxu0 0
  %1962 = vmatpush2.bf16.msra.mxu0 0
  %1963 = vmatprep.mubr.bf16.mxu0 0
  %1964 = vmatmul.mubr.bf16.gmra.mxu0 %v1926
  %v1965 = vpop.f32.mrf.mxu0
  %v1966 = vadd.f32 0.0, %v1965
  %v1967 = vpop.f32.mrf.mxu0
  %v1968 = vpop.f32.mrf.mxu0
  %v1969 = vpop.f32.mrf.mxu0
  %1970 = vdwg.mxu0
  %1971 = vrot.lane.b32.xlu0 %v257, 112
  %v1972 = vpop.permute.xlu0 %1971
  %v1974 = vsel %vm116, %v1250, 0
  %v1977 = vsel %vm141, %v1972, 0
  %1979 = vmatprep.subr.bf16.mxu0 0
  %1980 = vmatpush1.bf16.msra.mxu0 0
  %1981 = vmatprep.subr.bf16.mxu0 0
  %1982 = vmatpush1.bf16.msra.mxu0 0
  %1983 = vmatprep.subr.bf16.mxu0 0
  %1984 = vmatpush1.bf16.msra.mxu0 0
  %1985 = vmatprep.subr.bf16.mxu0 0
  %1986 = vmatpush1.bf16.msra.mxu0 0
  %1987 = vmatprep.subr.bf16.mxu0 0
  %1988 = vmatpush1.bf16.msra.mxu0 0
  %1989 = vmatprep.subr.bf16.mxu0 0
  %1990 = vmatpush1.bf16.msra.mxu0 0
  %1991 = vmatprep.subr.bf16.mxu0 0
  %1992 = vmatpush1.bf16.msra.mxu0 0
  %1993 = vmatprep.subr.bf16.mxu0 0
  %1994 = vmatpush1.bf16.msra.mxu0 %v1977
  %1995 = vmatprep.subr.bf16.mxu0 0
  %1996 = vmatpush2.bf16.msra.mxu0 0
  %1997 = vmatprep.subr.bf16.mxu0 0
  %1998 = vmatpush2.bf16.msra.mxu0 0
  %1999 = vmatprep.subr.bf16.mxu0 0
  %2000 = vmatpush2.bf16.msra.mxu0 0
  %2001 = vmatprep.subr.bf16.mxu0 0
  %2002 = vmatpush2.bf16.msra.mxu0 0
  %2003 = vmatprep.subr.bf16.mxu0 0
  %2004 = vmatpush2.bf16.msra.mxu0 0
  %2005 = vmatprep.subr.bf16.mxu0 0
  %2006 = vmatpush2.bf16.msra.mxu0 0
  %2007 = vmatprep.subr.bf16.mxu0 0
  %2008 = vmatpush2.bf16.msra.mxu0 0
  %2009 = vmatprep.subr.bf16.mxu0 0
  %2010 = vmatpush2.bf16.msra.mxu0 0
  %2011 = vmatprep.mubr.bf16.mxu0 0
  %2012 = vmatmul.mubr.bf16.gmra.mxu0 %v1974
  %v2013 = vpop.f32.mrf.mxu0
  %v2014 = vadd.f32 0.0, %v2013
  %v2015 = vpop.f32.mrf.mxu0
  %v2016 = vpop.f32.mrf.mxu0
  %v2017 = vpop.f32.mrf.mxu0
  %2018 = vdwg.mxu0
  %v2019 = vpack.c.bf16 %v1342, %v1294
  %v2020 = vpack.c.bf16 %v1438, %v1390
  %v2021 = vpack.c.bf16 %v1534, %v1486
  %v2022 = vpack.c.bf16 %v1630, %v1582
  %v2023 = vpack.c.bf16 %v1726, %v1678
  %v2024 = vpack.c.bf16 %v1822, %v1774
  %v2025 = vpack.c.bf16 %v1918, %v1870
  %v2026 = vpack.c.bf16 %v2014, %v1966
  %v2027 = vld [vmem:[%s3] sm:$0x3]
  %2028 = vrot.lane.b32.xlu0 %v242, 124
  %v2029 = vpop.permute.xlu0 %2028
  %2030 = vrot.lane.b32.xlu0 %v242, 116
  %v2031 = vpop.permute.xlu0 %2030
  %v2033 = vsel %vm261, %v2029, 0
  %v2036 = vsel %vm261, %v2031, 0
  %2038 = vmatprep.subr.bf16.mxu0 0
  %2039 = vmatpush1.bf16.xpose.msra.mxu0 0
  %2040 = vmatprep.subr.bf16.mxu0 0
  %2041 = vmatpush1.bf16.xpose.msra.mxu0 0
  %2042 = vmatprep.subr.bf16.mxu0 0
  %2043 = vmatpush1.bf16.xpose.msra.mxu0 0
  %2044 = vmatprep.subr.bf16.mxu0 0
  %2045 = vmatpush1.bf16.xpose.msra.mxu0 0
  %2046 = vmatprep.subr.bf16.mxu0 0
  %2047 = vmatpush1.bf16.xpose.msra.mxu0 0
  %2048 = vmatprep.subr.bf16.mxu0 0
  %2049 = vmatpush1.bf16.xpose.msra.mxu0 0
  %2050 = vmatprep.subr.bf16.mxu0 0
  %2051 = vmatpush1.bf16.xpose.msra.mxu0 0
  %2052 = vmatprep.subr.bf16.mxu0 0
  %2053 = vmatpush1.bf16.xpose.msra.mxu0 %v2036
  %2054 = vmatprep.subr.bf16.mxu0 0
  %2055 = vmatpush2.bf16.xpose.msra.mxu0 0
  %2056 = vmatprep.subr.bf16.mxu0 0
  %2057 = vmatpush2.bf16.xpose.msra.mxu0 0
  %2058 = vmatprep.subr.bf16.mxu0 0
  %2059 = vmatpush2.bf16.xpose.msra.mxu0 0
  %2060 = vmatprep.subr.bf16.mxu0 0
  %2061 = vmatpush2.bf16.xpose.msra.mxu0 0
  %2062 = vmatprep.subr.bf16.mxu0 0
  %2063 = vmatpush2.bf16.xpose.msra.mxu0 0
  %2064 = vmatprep.subr.bf16.mxu0 0
  %2065 = vmatpush2.bf16.xpose.msra.mxu0 0
  %2066 = vmatprep.subr.bf16.mxu0 0
  %2067 = vmatpush2.bf16.xpose.msra.mxu0 0
  %2068 = vmatprep.subr.bf16.mxu0 0
  %2069 = vmatpush2.bf16.xpose.msra.mxu0 0
  %2070 = vmatprep.mubr.bf16.mxu0 0
  %2071 = vmatmul.mubr.bf16.gmra.mxu0 %v2033
  %v2072 = vpop.f32.mrf.mxu0
  %v2073 = vadd.f32 0.0, %v2072
  %v2074 = vpop.f32.mrf.mxu0
  %v2075 = vpop.f32.mrf.mxu0
  %v2076 = vpop.f32.mrf.mxu0
  %2077 = vdwg.mxu0
  %2078 = vrot.lane.b32.xlu0 %v243, 124
  %v2079 = vpop.permute.xlu0 %2078
  %2080 = vrot.lane.b32.xlu0 %v243, 116
  %v2081 = vpop.permute.xlu0 %2080
  %v2083 = vsel %vm261, %v2079, 0
  %v2086 = vsel %vm261, %v2081, 0
  %2088 = vmatprep.subr.bf16.mxu0 0
  %2089 = vmatpush1.bf16.xpose.msra.mxu0 0
  %2090 = vmatprep.subr.bf16.mxu0 0
  %2091 = vmatpush1.bf16.xpose.msra.mxu0 0
  %2092 = vmatprep.subr.bf16.mxu0 0
  %2093 = vmatpush1.bf16.xpose.msra.mxu0 0
  %2094 = vmatprep.subr.bf16.mxu0 0
  %2095 = vmatpush1.bf16.xpose.msra.mxu0 0
  %2096 = vmatprep.subr.bf16.mxu0 0
  %2097 = vmatpush1.bf16.xpose.msra.mxu0 0
  %2098 = vmatprep.subr.bf16.mxu0 0
  %2099 = vmatpush1.bf16.xpose.msra.mxu0 0
  %2100 = vmatprep.subr.bf16.mxu0 0
  %2101 = vmatpush1.bf16.xpose.msra.mxu0 0
  %2102 = vmatprep.subr.bf16.mxu0 0
  %2103 = vmatpush1.bf16.xpose.msra.mxu0 %v2086
  %2104 = vmatprep.subr.bf16.mxu0 0
  %2105 = vmatpush2.bf16.xpose.msra.mxu0 0
  %2106 = vmatprep.subr.bf16.mxu0 0
  %2107 = vmatpush2.bf16.xpose.msra.mxu0 0
  %2108 = vmatprep.subr.bf16.mxu0 0
  %2109 = vmatpush2.bf16.xpose.msra.mxu0 0
  %2110 = vmatprep.subr.bf16.mxu0 0
  %2111 = vmatpush2.bf16.xpose.msra.mxu0 0
  %2112 = vmatprep.subr.bf16.mxu0 0
  %2113 = vmatpush2.bf16.xpose.msra.mxu0 0
  %2114 = vmatprep.subr.bf16.mxu0 0
  %2115 = vmatpush2.bf16.xpose.msra.mxu0 0
  %2116 = vmatprep.subr.bf16.mxu0 0
  %2117 = vmatpush2.bf16.xpose.msra.mxu0 0
  %2118 = vmatprep.subr.bf16.mxu0 0
  %2119 = vmatpush2.bf16.xpose.msra.mxu0 0
  %2120 = vmatprep.mubr.bf16.mxu0 0
  %2121 = vmatmul.mubr.bf16.gmra.mxu0 %v2083
  %v2122 = vpop.f32.mrf.mxu0
  %v2123 = vadd.f32 0.0, %v2122
  %v2124 = vpop.f32.mrf.mxu0
  %v2125 = vpop.f32.mrf.mxu0
  %v2126 = vpop.f32.mrf.mxu0
  %2127 = vdwg.mxu0
  %2128 = vrot.lane.b32.xlu0 %v244, 124
  %v2129 = vpop.permute.xlu0 %2128
  %2130 = vrot.lane.b32.xlu0 %v244, 116
  %v2131 = vpop.permute.xlu0 %2130
  %v2133 = vsel %vm261, %v2129, 0
  %v2136 = vsel %vm261, %v2131, 0
  %2138 = vmatprep.subr.bf16.mxu0 0
  %2139 = vmatpush1.bf16.xpose.msra.mxu0 0
  %2140 = vmatprep.subr.bf16.mxu0 0
  %2141 = vmatpush1.bf16.xpose.msra.mxu0 0
  %2142 = vmatprep.subr.bf16.mxu0 0
  %2143 = vmatpush1.bf16.xpose.msra.mxu0 0
  %2144 = vmatprep.subr.bf16.mxu0 0
  %2145 = vmatpush1.bf16.xpose.msra.mxu0 0
  %2146 = vmatprep.subr.bf16.mxu0 0
  %2147 = vmatpush1.bf16.xpose.msra.mxu0 0
  %2148 = vmatprep.subr.bf16.mxu0 0
  %2149 = vmatpush1.bf16.xpose.msra.mxu0 0
  %2150 = vmatprep.subr.bf16.mxu0 0
  %2151 = vmatpush1.bf16.xpose.msra.mxu0 0
  %2152 = vmatprep.subr.bf16.mxu0 0
  %2153 = vmatpush1.bf16.xpose.msra.mxu0 %v2136
  %2154 = vmatprep.subr.bf16.mxu0 0
  %2155 = vmatpush2.bf16.xpose.msra.mxu0 0
  %2156 = vmatprep.subr.bf16.mxu0 0
  %2157 = vmatpush2.bf16.xpose.msra.mxu0 0
  %2158 = vmatprep.subr.bf16.mxu0 0
  %2159 = vmatpush2.bf16.xpose.msra.mxu0 0
  %2160 = vmatprep.subr.bf16.mxu0 0
  %2161 = vmatpush2.bf16.xpose.msra.mxu0 0
  %2162 = vmatprep.subr.bf16.mxu0 0
  %2163 = vmatpush2.bf16.xpose.msra.mxu0 0
  %2164 = vmatprep.subr.bf16.mxu0 0
  %2165 = vmatpush2.bf16.xpose.msra.mxu0 0
  %2166 = vmatprep.subr.bf16.mxu0 0
  %2167 = vmatpush2.bf16.xpose.msra.mxu0 0
  %2168 = vmatprep.subr.bf16.mxu0 0
  %2169 = vmatpush2.bf16.xpose.msra.mxu0 0
  %2170 = vmatprep.mubr.bf16.mxu0 0
  %2171 = vmatmul.mubr.bf16.gmra.mxu0 %v2133
  %v2172 = vpop.f32.mrf.mxu0
  %v2173 = vadd.f32 0.0, %v2172
  %v2174 = vpop.f32.mrf.mxu0
  %v2175 = vpop.f32.mrf.mxu0
  %v2176 = vpop.f32.mrf.mxu0
  %2177 = vdwg.mxu0
  %2178 = vrot.lane.b32.xlu0 %v245, 124
  %v2179 = vpop.permute.xlu0 %2178
  %2180 = vrot.lane.b32.xlu0 %v245, 116
  %v2181 = vpop.permute.xlu0 %2180
  %v2183 = vsel %vm261, %v2179, 0
  %v2186 = vsel %vm261, %v2181, 0
  %2188 = vmatprep.subr.bf16.mxu0 0
  %2189 = vmatpush1.bf16.xpose.msra.mxu0 0
  %2190 = vmatprep.subr.bf16.mxu0 0
  %2191 = vmatpush1.bf16.xpose.msra.mxu0 0
  %2192 = vmatprep.subr.bf16.mxu0 0
  %2193 = vmatpush1.bf16.xpose.msra.mxu0 0
  %2194 = vmatprep.subr.bf16.mxu0 0
  %2195 = vmatpush1.bf16.xpose.msra.mxu0 0
  %2196 = vmatprep.subr.bf16.mxu0 0
  %2197 = vmatpush1.bf16.xpose.msra.mxu0 0
  %2198 = vmatprep.subr.bf16.mxu0 0
  %2199 = vmatpush1.bf16.xpose.msra.mxu0 0
  %2200 = vmatprep.subr.bf16.mxu0 0
  %2201 = vmatpush1.bf16.xpose.msra.mxu0 0
  %2202 = vmatprep.subr.bf16.mxu0 0
  %2203 = vmatpush1.bf16.xpose.msra.mxu0 %v2186
  %2204 = vmatprep.subr.bf16.mxu0 0
  %2205 = vmatpush2.bf16.xpose.msra.mxu0 0
  %2206 = vmatprep.subr.bf16.mxu0 0
  %2207 = vmatpush2.bf16.xpose.msra.mxu0 0
  %2208 = vmatprep.subr.bf16.mxu0 0
  %2209 = vmatpush2.bf16.xpose.msra.mxu0 0
  %2210 = vmatprep.subr.bf16.mxu0 0
  %2211 = vmatpush2.bf16.xpose.msra.mxu0 0
  %2212 = vmatprep.subr.bf16.mxu0 0
  %2213 = vmatpush2.bf16.xpose.msra.mxu0 0
  %2214 = vmatprep.subr.bf16.mxu0 0
  %2215 = vmatpush2.bf16.xpose.msra.mxu0 0
  %2216 = vmatprep.subr.bf16.mxu0 0
  %2217 = vmatpush2.bf16.xpose.msra.mxu0 0
  %2218 = vmatprep.subr.bf16.mxu0 0
  %2219 = vmatpush2.bf16.xpose.msra.mxu0 0
  %2220 = vmatprep.mubr.bf16.mxu0 0
  %2221 = vmatmul.mubr.bf16.gmra.mxu0 %v2183
  %v2222 = vpop.f32.mrf.mxu0
  %v2223 = vadd.f32 0.0, %v2222
  %v2224 = vpop.f32.mrf.mxu0
  %v2225 = vpop.f32.mrf.mxu0
  %v2226 = vpop.f32.mrf.mxu0
  %2227 = vdwg.mxu0
  %2228 = vrot.lane.b32.xlu0 %v246, 124
  %v2229 = vpop.permute.xlu0 %2228
  %2230 = vrot.lane.b32.xlu0 %v246, 116
  %v2231 = vpop.permute.xlu0 %2230
  %v2233 = vsel %vm261, %v2229, 0
  %v2236 = vsel %vm261, %v2231, 0
  %2238 = vmatprep.subr.bf16.mxu0 0
  %2239 = vmatpush1.bf16.xpose.msra.mxu0 0
  %2240 = vmatprep.subr.bf16.mxu0 0
  %2241 = vmatpush1.bf16.xpose.msra.mxu0 0
  %2242 = vmatprep.subr.bf16.mxu0 0
  %2243 = vmatpush1.bf16.xpose.msra.mxu0 0
  %2244 = vmatprep.subr.bf16.mxu0 0
  %2245 = vmatpush1.bf16.xpose.msra.mxu0 0
  %2246 = vmatprep.subr.bf16.mxu0 0
  %2247 = vmatpush1.bf16.xpose.msra.mxu0 0
  %2248 = vmatprep.subr.bf16.mxu0 0
  %2249 = vmatpush1.bf16.xpose.msra.mxu0 0
  %2250 = vmatprep.subr.bf16.mxu0 0
  %2251 = vmatpush1.bf16.xpose.msra.mxu0 0
  %2252 = vmatprep.subr.bf16.mxu0 0
  %2253 = vmatpush1.bf16.xpose.msra.mxu0 %v2236
  %2254 = vmatprep.subr.bf16.mxu0 0
  %2255 = vmatpush2.bf16.xpose.msra.mxu0 0
  %2256 = vmatprep.subr.bf16.mxu0 0
  %2257 = vmatpush2.bf16.xpose.msra.mxu0 0
  %2258 = vmatprep.subr.bf16.mxu0 0
  %2259 = vmatpush2.bf16.xpose.msra.mxu0 0
  %2260 = vmatprep.subr.bf16.mxu0 0
  %2261 = vmatpush2.bf16.xpose.msra.mxu0 0
  %2262 = vmatprep.subr.bf16.mxu0 0
  %2263 = vmatpush2.bf16.xpose.msra.mxu0 0
  %2264 = vmatprep.subr.bf16.mxu0 0
  %2265 = vmatpush2.bf16.xpose.msra.mxu0 0
  %2266 = vmatprep.subr.bf16.mxu0 0
  %2267 = vmatpush2.bf16.xpose.msra.mxu0 0
  %2268 = vmatprep.subr.bf16.mxu0 0
  %2269 = vmatpush2.bf16.xpose.msra.mxu0 0
  %2270 = vmatprep.mubr.bf16.mxu0 0
  %2271 = vmatmul.mubr.bf16.gmra.mxu0 %v2233
  %v2272 = vpop.f32.mrf.mxu0
  %v2273 = vadd.f32 0.0, %v2272
  %v2274 = vpop.f32.mrf.mxu0
  %v2275 = vpop.f32.mrf.mxu0
  %v2276 = vpop.f32.mrf.mxu0
  %2277 = vdwg.mxu0
  %2278 = vrot.lane.b32.xlu0 %v247, 124
  %v2279 = vpop.permute.xlu0 %2278
  %2280 = vrot.lane.b32.xlu0 %v247, 116
  %v2281 = vpop.permute.xlu0 %2280
  %v2283 = vsel %vm261, %v2279, 0
  %v2286 = vsel %vm261, %v2281, 0
  %2288 = vmatprep.subr.bf16.mxu0 0
  %2289 = vmatpush1.bf16.xpose.msra.mxu0 0
  %2290 = vmatprep.subr.bf16.mxu0 0
  %2291 = vmatpush1.bf16.xpose.msra.mxu0 0
  %2292 = vmatprep.subr.bf16.mxu0 0
  %2293 = vmatpush1.bf16.xpose.msra.mxu0 0
  %2294 = vmatprep.subr.bf16.mxu0 0
  %2295 = vmatpush1.bf16.xpose.msra.mxu0 0
  %2296 = vmatprep.subr.bf16.mxu0 0
  %2297 = vmatpush1.bf16.xpose.msra.mxu0 0
  %2298 = vmatprep.subr.bf16.mxu0 0
  %2299 = vmatpush1.bf16.xpose.msra.mxu0 0
  %2300 = vmatprep.subr.bf16.mxu0 0
  %2301 = vmatpush1.bf16.xpose.msra.mxu0 0
  %2302 = vmatprep.subr.bf16.mxu0 0
  %2303 = vmatpush1.bf16.xpose.msra.mxu0 %v2286
  %2304 = vmatprep.subr.bf16.mxu0 0
  %2305 = vmatpush2.bf16.xpose.msra.mxu0 0
  %2306 = vmatprep.subr.bf16.mxu0 0
  %2307 = vmatpush2.bf16.xpose.msra.mxu0 0
  %2308 = vmatprep.subr.bf16.mxu0 0
  %2309 = vmatpush2.bf16.xpose.msra.mxu0 0
  %2310 = vmatprep.subr.bf16.mxu0 0
  %2311 = vmatpush2.bf16.xpose.msra.mxu0 0
  %2312 = vmatprep.subr.bf16.mxu0 0
  %2313 = vmatpush2.bf16.xpose.msra.mxu0 0
  %2314 = vmatprep.subr.bf16.mxu0 0
  %2315 = vmatpush2.bf16.xpose.msra.mxu0 0
  %2316 = vmatprep.subr.bf16.mxu0 0
  %2317 = vmatpush2.bf16.xpose.msra.mxu0 0
  %2318 = vmatprep.subr.bf16.mxu0 0
  %2319 = vmatpush2.bf16.xpose.msra.mxu0 0
  %2320 = vmatprep.mubr.bf16.mxu0 0
  %2321 = vmatmul.mubr.bf16.gmra.mxu0 %v2283
  %v2322 = vpop.f32.mrf.mxu0
  %v2323 = vadd.f32 0.0, %v2322
  %v2324 = vpop.f32.mrf.mxu0
  %v2325 = vpop.f32.mrf.mxu0
  %v2326 = vpop.f32.mrf.mxu0
  %2327 = vdwg.mxu0
  %2328 = vrot.lane.b32.xlu0 %v248, 124
  %v2329 = vpop.permute.xlu0 %2328
  %2330 = vrot.lane.b32.xlu0 %v248, 116
  %v2331 = vpop.permute.xlu0 %2330
  %v2333 = vsel %vm261, %v2329, 0
  %v2336 = vsel %vm261, %v2331, 0
  %2338 = vmatprep.subr.bf16.mxu0 0
  %2339 = vmatpush1.bf16.xpose.msra.mxu0 0
  %2340 = vmatprep.subr.bf16.mxu0 0
  %2341 = vmatpush1.bf16.xpose.msra.mxu0 0
  %2342 = vmatprep.subr.bf16.mxu0 0
  %2343 = vmatpush1.bf16.xpose.msra.mxu0 0
  %2344 = vmatprep.subr.bf16.mxu0 0
  %2345 = vmatpush1.bf16.xpose.msra.mxu0 0
  %2346 = vmatprep.subr.bf16.mxu0 0
  %2347 = vmatpush1.bf16.xpose.msra.mxu0 0
  %2348 = vmatprep.subr.bf16.mxu0 0
  %2349 = vmatpush1.bf16.xpose.msra.mxu0 0
  %2350 = vmatprep.subr.bf16.mxu0 0
  %2351 = vmatpush1.bf16.xpose.msra.mxu0 0
  %2352 = vmatprep.subr.bf16.mxu0 0
  %2353 = vmatpush1.bf16.xpose.msra.mxu0 %v2336
  %2354 = vmatprep.subr.bf16.mxu0 0
  %2355 = vmatpush2.bf16.xpose.msra.mxu0 0
  %2356 = vmatprep.subr.bf16.mxu0 0
  %2357 = vmatpush2.bf16.xpose.msra.mxu0 0
  %2358 = vmatprep.subr.bf16.mxu0 0
  %2359 = vmatpush2.bf16.xpose.msra.mxu0 0
  %2360 = vmatprep.subr.bf16.mxu0 0
  %2361 = vmatpush2.bf16.xpose.msra.mxu0 0
  %2362 = vmatprep.subr.bf16.mxu0 0
  %2363 = vmatpush2.bf16.xpose.msra.mxu0 0
  %2364 = vmatprep.subr.bf16.mxu0 0
  %2365 = vmatpush2.bf16.xpose.msra.mxu0 0
  %2366 = vmatprep.subr.bf16.mxu0 0
  %2367 = vmatpush2.bf16.xpose.msra.mxu0 0
  %2368 = vmatprep.subr.bf16.mxu0 0
  %2369 = vmatpush2.bf16.xpose.msra.mxu0 0
  %2370 = vmatprep.mubr.bf16.mxu0 0
  %2371 = vmatmul.mubr.bf16.gmra.mxu0 %v2333
  %v2372 = vpop.f32.mrf.mxu0
  %v2373 = vadd.f32 0.0, %v2372
  %v2374 = vpop.f32.mrf.mxu0
  %v2375 = vpop.f32.mrf.mxu0
  %v2376 = vpop.f32.mrf.mxu0
  %2377 = vdwg.mxu0
  %2378 = vrot.lane.b32.xlu0 %v249, 124
  %v2379 = vpop.permute.xlu0 %2378
  %2380 = vrot.lane.b32.xlu0 %v249, 116
  %v2381 = vpop.permute.xlu0 %2380
  %v2383 = vsel %vm261, %v2379, 0
  %v2386 = vsel %vm261, %v2381, 0
  %2388 = vmatprep.subr.bf16.mxu0 0
  %2389 = vmatpush1.bf16.xpose.msra.mxu0 0
  %2390 = vmatprep.subr.bf16.mxu0 0
  %2391 = vmatpush1.bf16.xpose.msra.mxu0 0
  %2392 = vmatprep.subr.bf16.mxu0 0
  %2393 = vmatpush1.bf16.xpose.msra.mxu0 0
  %2394 = vmatprep.subr.bf16.mxu0 0
  %2395 = vmatpush1.bf16.xpose.msra.mxu0 0
  %2396 = vmatprep.subr.bf16.mxu0 0
  %2397 = vmatpush1.bf16.xpose.msra.mxu0 0
  %2398 = vmatprep.subr.bf16.mxu0 0
  %2399 = vmatpush1.bf16.xpose.msra.mxu0 0
  %2400 = vmatprep.subr.bf16.mxu0 0
  %2401 = vmatpush1.bf16.xpose.msra.mxu0 0
  %2402 = vmatprep.subr.bf16.mxu0 0
  %2403 = vmatpush1.bf16.xpose.msra.mxu0 %v2386
  %2404 = vmatprep.subr.bf16.mxu0 0
  %2405 = vmatpush2.bf16.xpose.msra.mxu0 0
  %2406 = vmatprep.subr.bf16.mxu0 0
  %2407 = vmatpush2.bf16.xpose.msra.mxu0 0
  %2408 = vmatprep.subr.bf16.mxu0 0
  %2409 = vmatpush2.bf16.xpose.msra.mxu0 0
  %2410 = vmatprep.subr.bf16.mxu0 0
  %2411 = vmatpush2.bf16.xpose.msra.mxu0 0
  %2412 = vmatprep.subr.bf16.mxu0 0
  %2413 = vmatpush2.bf16.xpose.msra.mxu0 0
  %2414 = vmatprep.subr.bf16.mxu0 0
  %2415 = vmatpush2.bf16.xpose.msra.mxu0 0
  %2416 = vmatprep.subr.bf16.mxu0 0
  %2417 = vmatpush2.bf16.xpose.msra.mxu0 0
  %2418 = vmatprep.subr.bf16.mxu0 0
  %2419 = vmatpush2.bf16.xpose.msra.mxu0 0
  %2420 = vmatprep.mubr.bf16.mxu0 0
  %2421 = vmatmul.mubr.bf16.gmra.mxu0 %v2383
  %v2422 = vpop.f32.mrf.mxu0
  %v2423 = vadd.f32 0.0, %v2422
  %v2424 = vpop.f32.mrf.mxu0
  %v2425 = vpop.f32.mrf.mxu0
  %v2426 = vpop.f32.mrf.mxu0
  %2427 = vdwg.mxu0
  %2428 = vrot.lane.b32.xlu0 %v250, 124
  %v2429 = vpop.permute.xlu0 %2428
  %2430 = vrot.lane.b32.xlu0 %v250, 116
  %v2431 = vpop.permute.xlu0 %2430
  %v2433 = vsel %vm261, %v2429, 0
  %v2436 = vsel %vm261, %v2431, 0
  %2438 = vmatprep.subr.bf16.mxu0 0
  %2439 = vmatpush1.bf16.xpose.msra.mxu0 0
  %2440 = vmatprep.subr.bf16.mxu0 0
  %2441 = vmatpush1.bf16.xpose.msra.mxu0 0
  %2442 = vmatprep.subr.bf16.mxu0 0
  %2443 = vmatpush1.bf16.xpose.msra.mxu0 0
  %2444 = vmatprep.subr.bf16.mxu0 0
  %2445 = vmatpush1.bf16.xpose.msra.mxu0 0
  %2446 = vmatprep.subr.bf16.mxu0 0
  %2447 = vmatpush1.bf16.xpose.msra.mxu0 0
  %2448 = vmatprep.subr.bf16.mxu0 0
  %2449 = vmatpush1.bf16.xpose.msra.mxu0 0
  %2450 = vmatprep.subr.bf16.mxu0 0
  %2451 = vmatpush1.bf16.xpose.msra.mxu0 0
  %2452 = vmatprep.subr.bf16.mxu0 0
  %2453 = vmatpush1.bf16.xpose.msra.mxu0 %v2436
  %2454 = vmatprep.subr.bf16.mxu0 0
  %2455 = vmatpush2.bf16.xpose.msra.mxu0 0
  %2456 = vmatprep.subr.bf16.mxu0 0
  %2457 = vmatpush2.bf16.xpose.msra.mxu0 0
  %2458 = vmatprep.subr.bf16.mxu0 0
  %2459 = vmatpush2.bf16.xpose.msra.mxu0 0
  %2460 = vmatprep.subr.bf16.mxu0 0
  %2461 = vmatpush2.bf16.xpose.msra.mxu0 0
  %2462 = vmatprep.subr.bf16.mxu0 0
  %2463 = vmatpush2.bf16.xpose.msra.mxu0 0
  %2464 = vmatprep.subr.bf16.mxu0 0
  %2465 = vmatpush2.bf16.xpose.msra.mxu0 0
  %2466 = vmatprep.subr.bf16.mxu0 0
  %2467 = vmatpush2.bf16.xpose.msra.mxu0 0
  %2468 = vmatprep.subr.bf16.mxu0 0
  %2469 = vmatpush2.bf16.xpose.msra.mxu0 0
  %2470 = vmatprep.mubr.bf16.mxu0 0
  %2471 = vmatmul.mubr.bf16.gmra.mxu0 %v2433
  %v2472 = vpop.f32.mrf.mxu0
  %v2473 = vadd.f32 0.0, %v2472
  %v2474 = vpop.f32.mrf.mxu0
  %v2475 = vpop.f32.mrf.mxu0
  %v2476 = vpop.f32.mrf.mxu0
  %2477 = vdwg.mxu0
  %2478 = vrot.lane.b32.xlu0 %v251, 124
  %v2479 = vpop.permute.xlu0 %2478
  %2480 = vrot.lane.b32.xlu0 %v251, 116
  %v2481 = vpop.permute.xlu0 %2480
  %v2483 = vsel %vm261, %v2479, 0
  %v2486 = vsel %vm261, %v2481, 0
  %2488 = vmatprep.subr.bf16.mxu0 0
  %2489 = vmatpush1.bf16.xpose.msra.mxu0 0
  %2490 = vmatprep.subr.bf16.mxu0 0
  %2491 = vmatpush1.bf16.xpose.msra.mxu0 0
  %2492 = vmatprep.subr.bf16.mxu0 0
  %2493 = vmatpush1.bf16.xpose.msra.mxu0 0
  %2494 = vmatprep.subr.bf16.mxu0 0
  %2495 = vmatpush1.bf16.xpose.msra.mxu0 0
  %2496 = vmatprep.subr.bf16.mxu0 0
  %2497 = vmatpush1.bf16.xpose.msra.mxu0 0
  %2498 = vmatprep.subr.bf16.mxu0 0
  %2499 = vmatpush1.bf16.xpose.msra.mxu0 0
  %2500 = vmatprep.subr.bf16.mxu0 0
  %2501 = vmatpush1.bf16.xpose.msra.mxu0 0
  %2502 = vmatprep.subr.bf16.mxu0 0
  %2503 = vmatpush1.bf16.xpose.msra.mxu0 %v2486
  %2504 = vmatprep.subr.bf16.mxu0 0
  %2505 = vmatpush2.bf16.xpose.msra.mxu0 0
  %2506 = vmatprep.subr.bf16.mxu0 0
  %2507 = vmatpush2.bf16.xpose.msra.mxu0 0
  %2508 = vmatprep.subr.bf16.mxu0 0
  %2509 = vmatpush2.bf16.xpose.msra.mxu0 0
  %2510 = vmatprep.subr.bf16.mxu0 0
  %2511 = vmatpush2.bf16.xpose.msra.mxu0 0
  %2512 = vmatprep.subr.bf16.mxu0 0
  %2513 = vmatpush2.bf16.xpose.msra.mxu0 0
  %2514 = vmatprep.subr.bf16.mxu0 0
  %2515 = vmatpush2.bf16.xpose.msra.mxu0 0
  %2516 = vmatprep.subr.bf16.mxu0 0
  %2517 = vmatpush2.bf16.xpose.msra.mxu0 0
  %2518 = vmatprep.subr.bf16.mxu0 0
  %2519 = vmatpush2.bf16.xpose.msra.mxu0 0
  %2520 = vmatprep.mubr.bf16.mxu0 0
  %2521 = vmatmul.mubr.bf16.gmra.mxu0 %v2483
  %v2522 = vpop.f32.mrf.mxu0
  %v2523 = vadd.f32 0.0, %v2522
  %v2524 = vpop.f32.mrf.mxu0
  %v2525 = vpop.f32.mrf.mxu0
  %v2526 = vpop.f32.mrf.mxu0
  %2527 = vdwg.mxu0
  %2528 = vrot.lane.b32.xlu0 %v252, 124
  %v2529 = vpop.permute.xlu0 %2528
  %2530 = vrot.lane.b32.xlu0 %v252, 116
  %v2531 = vpop.permute.xlu0 %2530
  %v2533 = vsel %vm261, %v2529, 0
  %v2536 = vsel %vm261, %v2531, 0
  %2538 = vmatprep.subr.bf16.mxu0 0
  %2539 = vmatpush1.bf16.xpose.msra.mxu0 0
  %2540 = vmatprep.subr.bf16.mxu0 0
  %2541 = vmatpush1.bf16.xpose.msra.mxu0 0
  %2542 = vmatprep.subr.bf16.mxu0 0
  %2543 = vmatpush1.bf16.xpose.msra.mxu0 0
  %2544 = vmatprep.subr.bf16.mxu0 0
  %2545 = vmatpush1.bf16.xpose.msra.mxu0 0
  %2546 = vmatprep.subr.bf16.mxu0 0
  %2547 = vmatpush1.bf16.xpose.msra.mxu0 0
  %2548 = vmatprep.subr.bf16.mxu0 0
  %2549 = vmatpush1.bf16.xpose.msra.mxu0 0
  %2550 = vmatprep.subr.bf16.mxu0 0
  %2551 = vmatpush1.bf16.xpose.msra.mxu0 0
  %2552 = vmatprep.subr.bf16.mxu0 0
  %2553 = vmatpush1.bf16.xpose.msra.mxu0 %v2536
  %2554 = vmatprep.subr.bf16.mxu0 0
  %2555 = vmatpush2.bf16.xpose.msra.mxu0 0
  %2556 = vmatprep.subr.bf16.mxu0 0
  %2557 = vmatpush2.bf16.xpose.msra.mxu0 0
  %2558 = vmatprep.subr.bf16.mxu0 0
  %2559 = vmatpush2.bf16.xpose.msra.mxu0 0
  %2560 = vmatprep.subr.bf16.mxu0 0
  %2561 = vmatpush2.bf16.xpose.msra.mxu0 0
  %2562 = vmatprep.subr.bf16.mxu0 0
  %2563 = vmatpush2.bf16.xpose.msra.mxu0 0
  %2564 = vmatprep.subr.bf16.mxu0 0
  %2565 = vmatpush2.bf16.xpose.msra.mxu0 0
  %2566 = vmatprep.subr.bf16.mxu0 0
  %2567 = vmatpush2.bf16.xpose.msra.mxu0 0
  %2568 = vmatprep.subr.bf16.mxu0 0
  %2569 = vmatpush2.bf16.xpose.msra.mxu0 0
  %2570 = vmatprep.mubr.bf16.mxu0 0
  %2571 = vmatmul.mubr.bf16.gmra.mxu0 %v2533
  %v2572 = vpop.f32.mrf.mxu0
  %v2573 = vadd.f32 0.0, %v2572
  %v2574 = vpop.f32.mrf.mxu0
  %v2575 = vpop.f32.mrf.mxu0
  %v2576 = vpop.f32.mrf.mxu0
  %2577 = vdwg.mxu0
  %2578 = vrot.lane.b32.xlu0 %v253, 124
  %v2579 = vpop.permute.xlu0 %2578
  %2580 = vrot.lane.b32.xlu0 %v253, 116
  %v2581 = vpop.permute.xlu0 %2580
  %v2583 = vsel %vm261, %v2579, 0
  %v2586 = vsel %vm261, %v2581, 0
  %2588 = vmatprep.subr.bf16.mxu0 0
  %2589 = vmatpush1.bf16.xpose.msra.mxu0 0
  %2590 = vmatprep.subr.bf16.mxu0 0
  %2591 = vmatpush1.bf16.xpose.msra.mxu0 0
  %2592 = vmatprep.subr.bf16.mxu0 0
  %2593 = vmatpush1.bf16.xpose.msra.mxu0 0
  %2594 = vmatprep.subr.bf16.mxu0 0
  %2595 = vmatpush1.bf16.xpose.msra.mxu0 0
  %2596 = vmatprep.subr.bf16.mxu0 0
  %2597 = vmatpush1.bf16.xpose.msra.mxu0 0
  %2598 = vmatprep.subr.bf16.mxu0 0
  %2599 = vmatpush1.bf16.xpose.msra.mxu0 0
  %2600 = vmatprep.subr.bf16.mxu0 0
  %2601 = vmatpush1.bf16.xpose.msra.mxu0 0
  %2602 = vmatprep.subr.bf16.mxu0 0
  %2603 = vmatpush1.bf16.xpose.msra.mxu0 %v2586
  %2604 = vmatprep.subr.bf16.mxu0 0
  %2605 = vmatpush2.bf16.xpose.msra.mxu0 0
  %2606 = vmatprep.subr.bf16.mxu0 0
  %2607 = vmatpush2.bf16.xpose.msra.mxu0 0
  %2608 = vmatprep.subr.bf16.mxu0 0
  %2609 = vmatpush2.bf16.xpose.msra.mxu0 0
  %2610 = vmatprep.subr.bf16.mxu0 0
  %2611 = vmatpush2.bf16.xpose.msra.mxu0 0
  %2612 = vmatprep.subr.bf16.mxu0 0
  %2613 = vmatpush2.bf16.xpose.msra.mxu0 0
  %2614 = vmatprep.subr.bf16.mxu0 0
  %2615 = vmatpush2.bf16.xpose.msra.mxu0 0
  %2616 = vmatprep.subr.bf16.mxu0 0
  %2617 = vmatpush2.bf16.xpose.msra.mxu0 0
  %2618 = vmatprep.subr.bf16.mxu0 0
  %2619 = vmatpush2.bf16.xpose.msra.mxu0 0
  %2620 = vmatprep.mubr.bf16.mxu0 0
  %2621 = vmatmul.mubr.bf16.gmra.mxu0 %v2583
  %v2622 = vpop.f32.mrf.mxu0
  %v2623 = vadd.f32 0.0, %v2622
  %v2624 = vpop.f32.mrf.mxu0
  %v2625 = vpop.f32.mrf.mxu0
  %v2626 = vpop.f32.mrf.mxu0
  %2627 = vdwg.mxu0
  %2628 = vrot.lane.b32.xlu0 %v254, 124
  %v2629 = vpop.permute.xlu0 %2628
  %2630 = vrot.lane.b32.xlu0 %v254, 116
  %v2631 = vpop.permute.xlu0 %2630
  %v2633 = vsel %vm261, %v2629, 0
  %v2636 = vsel %vm261, %v2631, 0
  %2638 = vmatprep.subr.bf16.mxu0 0
  %2639 = vmatpush1.bf16.xpose.msra.mxu0 0
  %2640 = vmatprep.subr.bf16.mxu0 0
  %2641 = vmatpush1.bf16.xpose.msra.mxu0 0
  %2642 = vmatprep.subr.bf16.mxu0 0
  %2643 = vmatpush1.bf16.xpose.msra.mxu0 0
  %2644 = vmatprep.subr.bf16.mxu0 0
  %2645 = vmatpush1.bf16.xpose.msra.mxu0 0
  %2646 = vmatprep.subr.bf16.mxu0 0
  %2647 = vmatpush1.bf16.xpose.msra.mxu0 0
  %2648 = vmatprep.subr.bf16.mxu0 0
  %2649 = vmatpush1.bf16.xpose.msra.mxu0 0
  %2650 = vmatprep.subr.bf16.mxu0 0
  %2651 = vmatpush1.bf16.xpose.msra.mxu0 0
  %2652 = vmatprep.subr.bf16.mxu0 0
  %2653 = vmatpush1.bf16.xpose.msra.mxu0 %v2636
  %2654 = vmatprep.subr.bf16.mxu0 0
  %2655 = vmatpush2.bf16.xpose.msra.mxu0 0
  %2656 = vmatprep.subr.bf16.mxu0 0
  %2657 = vmatpush2.bf16.xpose.msra.mxu0 0
  %2658 = vmatprep.subr.bf16.mxu0 0
  %2659 = vmatpush2.bf16.xpose.msra.mxu0 0
  %2660 = vmatprep.subr.bf16.mxu0 0
  %2661 = vmatpush2.bf16.xpose.msra.mxu0 0
  %2662 = vmatprep.subr.bf16.mxu0 0
  %2663 = vmatpush2.bf16.xpose.msra.mxu0 0
  %2664 = vmatprep.subr.bf16.mxu0 0
  %2665 = vmatpush2.bf16.xpose.msra.mxu0 0
  %2666 = vmatprep.subr.bf16.mxu0 0
  %2667 = vmatpush2.bf16.xpose.msra.mxu0 0
  %2668 = vmatprep.subr.bf16.mxu0 0
  %2669 = vmatpush2.bf16.xpose.msra.mxu0 0
  %2670 = vmatprep.mubr.bf16.mxu0 0
  %2671 = vmatmul.mubr.bf16.gmra.mxu0 %v2633
  %v2672 = vpop.f32.mrf.mxu0
  %v2673 = vadd.f32 0.0, %v2672
  %v2674 = vpop.f32.mrf.mxu0
  %v2675 = vpop.f32.mrf.mxu0
  %v2676 = vpop.f32.mrf.mxu0
  %2677 = vdwg.mxu0
  %2678 = vrot.lane.b32.xlu0 %v255, 124
  %v2679 = vpop.permute.xlu0 %2678
  %2680 = vrot.lane.b32.xlu0 %v255, 116
  %v2681 = vpop.permute.xlu0 %2680
  %v2683 = vsel %vm261, %v2679, 0
  %v2686 = vsel %vm261, %v2681, 0
  %2688 = vmatprep.subr.bf16.mxu0 0
  %2689 = vmatpush1.bf16.xpose.msra.mxu0 0
  %2690 = vmatprep.subr.bf16.mxu0 0
  %2691 = vmatpush1.bf16.xpose.msra.mxu0 0
  %2692 = vmatprep.subr.bf16.mxu0 0
  %2693 = vmatpush1.bf16.xpose.msra.mxu0 0
  %2694 = vmatprep.subr.bf16.mxu0 0
  %2695 = vmatpush1.bf16.xpose.msra.mxu0 0
  %2696 = vmatprep.subr.bf16.mxu0 0
  %2697 = vmatpush1.bf16.xpose.msra.mxu0 0
  %2698 = vmatprep.subr.bf16.mxu0 0
  %2699 = vmatpush1.bf16.xpose.msra.mxu0 0
  %2700 = vmatprep.subr.bf16.mxu0 0
  %2701 = vmatpush1.bf16.xpose.msra.mxu0 0
  %2702 = vmatprep.subr.bf16.mxu0 0
  %2703 = vmatpush1.bf16.xpose.msra.mxu0 %v2686
  %2704 = vmatprep.subr.bf16.mxu0 0
  %2705 = vmatpush2.bf16.xpose.msra.mxu0 0
  %2706 = vmatprep.subr.bf16.mxu0 0
  %2707 = vmatpush2.bf16.xpose.msra.mxu0 0
  %2708 = vmatprep.subr.bf16.mxu0 0
  %2709 = vmatpush2.bf16.xpose.msra.mxu0 0
  %2710 = vmatprep.subr.bf16.mxu0 0
  %2711 = vmatpush2.bf16.xpose.msra.mxu0 0
  %2712 = vmatprep.subr.bf16.mxu0 0
  %2713 = vmatpush2.bf16.xpose.msra.mxu0 0
  %2714 = vmatprep.subr.bf16.mxu0 0
  %2715 = vmatpush2.bf16.xpose.msra.mxu0 0
  %2716 = vmatprep.subr.bf16.mxu0 0
  %2717 = vmatpush2.bf16.xpose.msra.mxu0 0
  %2718 = vmatprep.subr.bf16.mxu0 0
  %2719 = vmatpush2.bf16.xpose.msra.mxu0 0
  %2720 = vmatprep.mubr.bf16.mxu0 0
  %2721 = vmatmul.mubr.bf16.gmra.mxu0 %v2683
  %v2722 = vpop.f32.mrf.mxu0
  %v2723 = vadd.f32 0.0, %v2722
  %v2724 = vpop.f32.mrf.mxu0
  %v2725 = vpop.f32.mrf.mxu0
  %v2726 = vpop.f32.mrf.mxu0
  %2727 = vdwg.mxu0
  %2728 = vrot.lane.b32.xlu0 %v256, 124
  %v2729 = vpop.permute.xlu0 %2728
  %2730 = vrot.lane.b32.xlu0 %v256, 116
  %v2731 = vpop.permute.xlu0 %2730
  %v2733 = vsel %vm261, %v2729, 0
  %v2736 = vsel %vm261, %v2731, 0
  %2738 = vmatprep.subr.bf16.mxu0 0
  %2739 = vmatpush1.bf16.xpose.msra.mxu0 0
  %2740 = vmatprep.subr.bf16.mxu0 0
  %2741 = vmatpush1.bf16.xpose.msra.mxu0 0
  %2742 = vmatprep.subr.bf16.mxu0 0
  %2743 = vmatpush1.bf16.xpose.msra.mxu0 0
  %2744 = vmatprep.subr.bf16.mxu0 0
  %2745 = vmatpush1.bf16.xpose.msra.mxu0 0
  %2746 = vmatprep.subr.bf16.mxu0 0
  %2747 = vmatpush1.bf16.xpose.msra.mxu0 0
  %2748 = vmatprep.subr.bf16.mxu0 0
  %2749 = vmatpush1.bf16.xpose.msra.mxu0 0
  %2750 = vmatprep.subr.bf16.mxu0 0
  %2751 = vmatpush1.bf16.xpose.msra.mxu0 0
  %2752 = vmatprep.subr.bf16.mxu0 0
  %2753 = vmatpush1.bf16.xpose.msra.mxu0 %v2736
  %2754 = vmatprep.subr.bf16.mxu0 0
  %2755 = vmatpush2.bf16.xpose.msra.mxu0 0
  %2756 = vmatprep.subr.bf16.mxu0 0
  %2757 = vmatpush2.bf16.xpose.msra.mxu0 0
  %2758 = vmatprep.subr.bf16.mxu0 0
  %2759 = vmatpush2.bf16.xpose.msra.mxu0 0
  %2760 = vmatprep.subr.bf16.mxu0 0
  %2761 = vmatpush2.bf16.xpose.msra.mxu0 0
  %2762 = vmatprep.subr.bf16.mxu0 0
  %2763 = vmatpush2.bf16.xpose.msra.mxu0 0
  %2764 = vmatprep.subr.bf16.mxu0 0
  %2765 = vmatpush2.bf16.xpose.msra.mxu0 0
  %2766 = vmatprep.subr.bf16.mxu0 0
  %2767 = vmatpush2.bf16.xpose.msra.mxu0 0
  %2768 = vmatprep.subr.bf16.mxu0 0
  %2769 = vmatpush2.bf16.xpose.msra.mxu0 0
  %2770 = vmatprep.mubr.bf16.mxu0 0
  %2771 = vmatmul.mubr.bf16.gmra.mxu0 %v2733
  %v2772 = vpop.f32.mrf.mxu0
  %v2773 = vadd.f32 0.0, %v2772
  %v2774 = vpop.f32.mrf.mxu0
  %v2775 = vpop.f32.mrf.mxu0
  %v2776 = vpop.f32.mrf.mxu0
  %2777 = vdwg.mxu0
  %2778 = vrot.lane.b32.xlu0 %v257, 124
  %v2779 = vpop.permute.xlu0 %2778
  %2780 = vrot.lane.b32.xlu0 %v257, 116
  %v2781 = vpop.permute.xlu0 %2780
  %v2783 = vsel %vm261, %v2779, 0
  %v2786 = vsel %vm261, %v2781, 0
  %2788 = vmatprep.subr.bf16.mxu0 0
  %2789 = vmatpush1.bf16.xpose.msra.mxu0 0
  %2790 = vmatprep.subr.bf16.mxu0 0
  %2791 = vmatpush1.bf16.xpose.msra.mxu0 0
  %2792 = vmatprep.subr.bf16.mxu0 0
  %2793 = vmatpush1.bf16.xpose.msra.mxu0 0
  %2794 = vmatprep.subr.bf16.mxu0 0
  %2795 = vmatpush1.bf16.xpose.msra.mxu0 0
  %2796 = vmatprep.subr.bf16.mxu0 0
  %2797 = vmatpush1.bf16.xpose.msra.mxu0 0
  %2798 = vmatprep.subr.bf16.mxu0 0
  %2799 = vmatpush1.bf16.xpose.msra.mxu0 0
  %2800 = vmatprep.subr.bf16.mxu0 0
  %2801 = vmatpush1.bf16.xpose.msra.mxu0 0
  %2802 = vmatprep.subr.bf16.mxu0 0
  %2803 = vmatpush1.bf16.xpose.msra.mxu0 %v2786
  %2804 = vmatprep.subr.bf16.mxu0 0
  %2805 = vmatpush2.bf16.xpose.msra.mxu0 0
  %2806 = vmatprep.subr.bf16.mxu0 0
  %2807 = vmatpush2.bf16.xpose.msra.mxu0 0
  %2808 = vmatprep.subr.bf16.mxu0 0
  %2809 = vmatpush2.bf16.xpose.msra.mxu0 0
  %2810 = vmatprep.subr.bf16.mxu0 0
  %2811 = vmatpush2.bf16.xpose.msra.mxu0 0
  %2812 = vmatprep.subr.bf16.mxu0 0
  %2813 = vmatpush2.bf16.xpose.msra.mxu0 0
  %2814 = vmatprep.subr.bf16.mxu0 0
  %2815 = vmatpush2.bf16.xpose.msra.mxu0 0
  %2816 = vmatprep.subr.bf16.mxu0 0
  %2817 = vmatpush2.bf16.xpose.msra.mxu0 0
  %2818 = vmatprep.subr.bf16.mxu0 0
  %2819 = vmatpush2.bf16.xpose.msra.mxu0 0
  %2820 = vmatprep.mubr.bf16.mxu0 0
  %2821 = vmatmul.mubr.bf16.gmra.mxu0 %v2783
  %v2822 = vpop.f32.mrf.mxu0
  %v2823 = vadd.f32 0.0, %v2822
  %v2824 = vpop.f32.mrf.mxu0
  %v2825 = vpop.f32.mrf.mxu0
  %v2826 = vpop.f32.mrf.mxu0
  %2827 = vdwg.mxu0
  %v2828 = vmul.f32 %v2073, 0.5
  %v2829 = vmul.f32 %v2123, 0.5
  %v2830 = vmul.f32 %v2173, 0.5
  %v2831 = vmul.f32 %v2223, 0.5
  %v2832 = vmul.f32 %v2273, 0.5
  %v2833 = vmul.f32 %v2323, 0.5
  %v2834 = vmul.f32 %v2373, 0.5
  %v2835 = vmul.f32 %v2423, 0.5
  %v2836 = vmul.f32 %v2473, 0.5
  %v2837 = vmul.f32 %v2523, 0.5
  %v2838 = vmul.f32 %v2573, 0.5
  %v2839 = vmul.f32 %v2623, 0.5
  %v2840 = vmul.f32 %v2673, 0.5
  %v2841 = vmul.f32 %v2723, 0.5
  %v2842 = vmul.f32 %v2773, 0.5
  %v2843 = vmul.f32 %v2823, 0.5
  %v2844 = vsel %vm116, %v2828, -inf
  %2845 = vmax.xlane.f32.xlu0 %v2844
  %v2846 = vpop.xlane.xlu0 %2845
  %v2847 = vsel %vm116, %v2829, -inf
  %2848 = vmax.xlane.f32.xlu0 %v2847
  %v2849 = vpop.xlane.xlu0 %2848
  %v2850 = vsel %vm116, %v2830, -inf
  %2851 = vmax.xlane.f32.xlu0 %v2850
  %v2852 = vpop.xlane.xlu0 %2851
  %v2853 = vsel %vm116, %v2831, -inf
  %2854 = vmax.xlane.f32.xlu0 %v2853
  %v2855 = vpop.xlane.xlu0 %2854
  %v2856 = vsel %vm116, %v2832, -inf
  %2857 = vmax.xlane.f32.xlu0 %v2856
  %v2858 = vpop.xlane.xlu0 %2857
  %v2859 = vsel %vm116, %v2833, -inf
  %2860 = vmax.xlane.f32.xlu0 %v2859
  %v2861 = vpop.xlane.xlu0 %2860
  %v2862 = vsel %vm116, %v2834, -inf
  %2863 = vmax.xlane.f32.xlu0 %v2862
  %v2864 = vpop.xlane.xlu0 %2863
  %v2865 = vsel %vm116, %v2835, -inf
  %2866 = vmax.xlane.f32.xlu0 %v2865
  %v2867 = vpop.xlane.xlu0 %2866
  %v2868 = vsel %vm116, %v2836, -inf
  %2869 = vmax.xlane.f32.xlu0 %v2868
  %v2870 = vpop.xlane.xlu0 %2869
  %v2871 = vsel %vm116, %v2837, -inf
  %2872 = vmax.xlane.f32.xlu0 %v2871
  %v2873 = vpop.xlane.xlu0 %2872
  %v2874 = vsel %vm116, %v2838, -inf
  %2875 = vmax.xlane.f32.xlu0 %v2874
  %v2876 = vpop.xlane.xlu0 %2875
  %v2877 = vsel %vm116, %v2839, -inf
  %2878 = vmax.xlane.f32.xlu0 %v2877
  %v2879 = vpop.xlane.xlu0 %2878
  %v2880 = vsel %vm116, %v2840, -inf
  %2881 = vmax.xlane.f32.xlu0 %v2880
  %v2882 = vpop.xlane.xlu0 %2881
  %v2883 = vsel %vm116, %v2841, -inf
  %2884 = vmax.xlane.f32.xlu0 %v2883
  %v2885 = vpop.xlane.xlu0 %2884
  %v2886 = vsel %vm116, %v2842, -inf
  %2887 = vmax.xlane.f32.xlu0 %v2886
  %v2888 = vpop.xlane.xlu0 %2887
  %v2889 = vsel %vm116, %v2843, -inf
  %2890 = vmax.xlane.f32.xlu0 %v2889
  %v2891 = vpop.xlane.xlu0 %2890
  %v2892 = vsub.f32 %v2828, %v2846
  %v2893 = vsub.f32 %v2829, %v2849
  %v2894 = vsub.f32 %v2830, %v2852
  %v2895 = vsub.f32 %v2831, %v2855
  %v2896 = vsub.f32 %v2832, %v2858
  %v2897 = vsub.f32 %v2833, %v2861
  %v2898 = vsub.f32 %v2834, %v2864
  %v2899 = vsub.f32 %v2835, %v2867
  %v2900 = vsub.f32 %v2836, %v2870
  %v2901 = vsub.f32 %v2837, %v2873
  %v2902 = vsub.f32 %v2838, %v2876
  %v2903 = vsub.f32 %v2839, %v2879
  %v2904 = vsub.f32 %v2840, %v2882
  %v2905 = vsub.f32 %v2841, %v2885
  %v2906 = vsub.f32 %v2842, %v2888
  %v2907 = vsub.f32 %v2843, %v2891
  %v2908 = vmul.f32 %v2892, 1.442695
  %v2909 = vpow.pop %v2908
  %v2910 = vmul.f32 %v2893, 1.442695
  %v2911 = vpow.pop %v2910
  %v2912 = vmul.f32 %v2894, 1.442695
  %v2913 = vpow.pop %v2912
  %v2914 = vmul.f32 %v2895, 1.442695
  %v2915 = vpow.pop %v2914
  %v2916 = vmul.f32 %v2896, 1.442695
  %v2917 = vpow.pop %v2916
  %v2918 = vmul.f32 %v2897, 1.442695
  %v2919 = vpow.pop %v2918
  %v2920 = vmul.f32 %v2898, 1.442695
  %v2921 = vpow.pop %v2920
  %v2922 = vmul.f32 %v2899, 1.442695
  %v2923 = vpow.pop %v2922
  %v2924 = vmul.f32 %v2900, 1.442695
  %v2925 = vpow.pop %v2924
  %v2926 = vmul.f32 %v2901, 1.442695
  %v2927 = vpow.pop %v2926
  %v2928 = vmul.f32 %v2902, 1.442695
  %v2929 = vpow.pop %v2928
  %v2930 = vmul.f32 %v2903, 1.442695
  %v2931 = vpow.pop %v2930
  %v2932 = vmul.f32 %v2904, 1.442695
  %v2933 = vpow.pop %v2932
  %v2934 = vmul.f32 %v2905, 1.442695
  %v2935 = vpow.pop %v2934
  %v2936 = vmul.f32 %v2906, 1.442695
  %v2937 = vpow.pop %v2936
  %v2938 = vmul.f32 %v2907, 1.442695
  %v2939 = vpow.pop %v2938
  %v2940 = vsel %vm116, %v2909, 0.0
  %2941 = vadd.xlane.f32.xlu0 %v2940
  %v2942 = vpop.xlane.xlu0 %2941
  %v2943 = vsel %vm116, %v2911, 0.0
  %2944 = vadd.xlane.f32.xlu0 %v2943
  %v2945 = vpop.xlane.xlu0 %2944
  %v2946 = vsel %vm116, %v2913, 0.0
  %2947 = vadd.xlane.f32.xlu0 %v2946
  %v2948 = vpop.xlane.xlu0 %2947
  %v2949 = vsel %vm116, %v2915, 0.0
  %2950 = vadd.xlane.f32.xlu0 %v2949
  %v2951 = vpop.xlane.xlu0 %2950
  %v2952 = vsel %vm116, %v2917, 0.0
  %2953 = vadd.xlane.f32.xlu0 %v2952
  %v2954 = vpop.xlane.xlu0 %2953
  %v2955 = vsel %vm116, %v2919, 0.0
  %2956 = vadd.xlane.f32.xlu0 %v2955
  %v2957 = vpop.xlane.xlu0 %2956
  %v2958 = vsel %vm116, %v2921, 0.0
  %2959 = vadd.xlane.f32.xlu0 %v2958
  %v2960 = vpop.xlane.xlu0 %2959
  %v2961 = vsel %vm116, %v2923, 0.0
  %2962 = vadd.xlane.f32.xlu0 %v2961
  %v2963 = vpop.xlane.xlu0 %2962
  %v2964 = vsel %vm116, %v2925, 0.0
  %2965 = vadd.xlane.f32.xlu0 %v2964
  %v2966 = vpop.xlane.xlu0 %2965
  %v2967 = vsel %vm116, %v2927, 0.0
  %2968 = vadd.xlane.f32.xlu0 %v2967
  %v2969 = vpop.xlane.xlu0 %2968
  %v2970 = vsel %vm116, %v2929, 0.0
  %2971 = vadd.xlane.f32.xlu0 %v2970
  %v2972 = vpop.xlane.xlu0 %2971
  %v2973 = vsel %vm116, %v2931, 0.0
  %2974 = vadd.xlane.f32.xlu0 %v2973
  %v2975 = vpop.xlane.xlu0 %2974
  %v2976 = vsel %vm116, %v2933, 0.0
  %2977 = vadd.xlane.f32.xlu0 %v2976
  %v2978 = vpop.xlane.xlu0 %2977
  %v2979 = vsel %vm116, %v2935, 0.0
  %2980 = vadd.xlane.f32.xlu0 %v2979
  %v2981 = vpop.xlane.xlu0 %2980
  %v2982 = vsel %vm116, %v2937, 0.0
  %2983 = vadd.xlane.f32.xlu0 %v2982
  %v2984 = vpop.xlane.xlu0 %2983
  %v2985 = vsel %vm116, %v2939, 0.0
  %2986 = vadd.xlane.f32.xlu0 %v2985
  %v2987 = vpop.xlane.xlu0 %2986
  %v2988 = vrcp.pop %v2942
  %v2989 = vrcp.pop %v2945
  %v2990 = vrcp.pop %v2948
  %v2991 = vrcp.pop %v2951
  %v2992 = vrcp.pop %v2954
  %v2993 = vrcp.pop %v2957
  %v2994 = vrcp.pop %v2960
  %v2995 = vrcp.pop %v2963
  %v2996 = vrcp.pop %v2966
  %v2997 = vrcp.pop %v2969
  %v2998 = vrcp.pop %v2972
  %v2999 = vrcp.pop %v2975
  %v3000 = vrcp.pop %v2978
  %v3001 = vrcp.pop %v2981
  %v3002 = vrcp.pop %v2984
  %v3003 = vrcp.pop %v2987
  %v3004 = vmul.f32 %v2909, %v2988
  %v3005 = vmul.f32 %v2911, %v2989
  %v3006 = vmul.f32 %v2913, %v2990
  %v3007 = vmul.f32 %v2915, %v2991
  %v3008 = vmul.f32 %v2917, %v2992
  %v3009 = vmul.f32 %v2919, %v2993
  %v3010 = vmul.f32 %v2921, %v2994
  %v3011 = vmul.f32 %v2923, %v2995
  %v3012 = vmul.f32 %v2925, %v2996
  %v3013 = vmul.f32 %v2927, %v2997
  %v3014 = vmul.f32 %v2929, %v2998
  %v3015 = vmul.f32 %v2931, %v2999
  %v3016 = vmul.f32 %v2933, %v3000
  %v3017 = vmul.f32 %v2935, %v3001
  %v3018 = vmul.f32 %v2937, %v3002
  %v3019 = vmul.f32 %v2939, %v3003
  %v3020 = vpack.c.bf16 %v3004, %v3004
  %v3021 = vpack.c.bf16 %v3005, %v3005
  %v3022 = vpack.c.bf16 %v3006, %v3006
  %v3023 = vpack.c.bf16 %v3007, %v3007
  %v3024 = vpack.c.bf16 %v3008, %v3008
  %v3025 = vpack.c.bf16 %v3009, %v3009
  %v3026 = vpack.c.bf16 %v3010, %v3010
  %v3027 = vpack.c.bf16 %v3011, %v3011
  %v3028 = vpack.c.bf16 %v3012, %v3012
  %v3029 = vpack.c.bf16 %v3013, %v3013
  %v3030 = vpack.c.bf16 %v3014, %v3014
  %v3031 = vpack.c.bf16 %v3015, %v3015
  %v3032 = vpack.c.bf16 %v3016, %v3016
  %v3033 = vpack.c.bf16 %v3017, %v3017
  %v3034 = vpack.c.bf16 %v3018, %v3018
  %v3035 = vpack.c.bf16 %v3019, %v3019
  %3036 = vrot.lane.b32.xlu0 %v242, 108
  %v3037 = vpop.permute.xlu0 %3036
  %v3039 = vsel %vm116, %v3020, 0
  %v3042 = vsel %vm141, %v3037, 0
  %3044 = vmatprep.subr.bf16.mxu0 0
  %3045 = vmatpush1.bf16.msra.mxu0 0
  %3046 = vmatprep.subr.bf16.mxu0 0
  %3047 = vmatpush1.bf16.msra.mxu0 0
  %3048 = vmatprep.subr.bf16.mxu0 0
  %3049 = vmatpush1.bf16.msra.mxu0 0
  %3050 = vmatprep.subr.bf16.mxu0 0
  %3051 = vmatpush1.bf16.msra.mxu0 0
  %3052 = vmatprep.subr.bf16.mxu0 0
  %3053 = vmatpush1.bf16.msra.mxu0 0
  %3054 = vmatprep.subr.bf16.mxu0 0
  %3055 = vmatpush1.bf16.msra.mxu0 0
  %3056 = vmatprep.subr.bf16.mxu0 0
  %3057 = vmatpush1.bf16.msra.mxu0 0
  %3058 = vmatprep.subr.bf16.mxu0 0
  %3059 = vmatpush1.bf16.msra.mxu0 %v3042
  %3060 = vmatprep.subr.bf16.mxu0 0
  %3061 = vmatpush2.bf16.msra.mxu0 0
  %3062 = vmatprep.subr.bf16.mxu0 0
  %3063 = vmatpush2.bf16.msra.mxu0 0
  %3064 = vmatprep.subr.bf16.mxu0 0
  %3065 = vmatpush2.bf16.msra.mxu0 0
  %3066 = vmatprep.subr.bf16.mxu0 0
  %3067 = vmatpush2.bf16.msra.mxu0 0
  %3068 = vmatprep.subr.bf16.mxu0 0
  %3069 = vmatpush2.bf16.msra.mxu0 0
  %3070 = vmatprep.subr.bf16.mxu0 0
  %3071 = vmatpush2.bf16.msra.mxu0 0
  %3072 = vmatprep.subr.bf16.mxu0 0
  %3073 = vmatpush2.bf16.msra.mxu0 0
  %3074 = vmatprep.subr.bf16.mxu0 0
  %3075 = vmatpush2.bf16.msra.mxu0 0
  %3076 = vmatprep.mubr.bf16.mxu0 0
  %3077 = vmatmul.mubr.bf16.gmra.mxu0 %v3039
  %v3078 = vpop.f32.mrf.mxu0
  %v3079 = vadd.f32 0.0, %v3078
  %v3080 = vpop.f32.mrf.mxu0
  %v3081 = vpop.f32.mrf.mxu0
  %v3082 = vpop.f32.mrf.mxu0
  %3083 = vdwg.mxu0
  %3084 = vrot.lane.b32.xlu0 %v243, 108
  %v3085 = vpop.permute.xlu0 %3084
  %v3087 = vsel %vm116, %v3021, 0
  %v3090 = vsel %vm141, %v3085, 0
  %3092 = vmatprep.subr.bf16.mxu0 0
  %3093 = vmatpush1.bf16.msra.mxu0 0
  %3094 = vmatprep.subr.bf16.mxu0 0
  %3095 = vmatpush1.bf16.msra.mxu0 0
  %3096 = vmatprep.subr.bf16.mxu0 0
  %3097 = vmatpush1.bf16.msra.mxu0 0
  %3098 = vmatprep.subr.bf16.mxu0 0
  %3099 = vmatpush1.bf16.msra.mxu0 0
  %3100 = vmatprep.subr.bf16.mxu0 0
  %3101 = vmatpush1.bf16.msra.mxu0 0
  %3102 = vmatprep.subr.bf16.mxu0 0
  %3103 = vmatpush1.bf16.msra.mxu0 0
  %3104 = vmatprep.subr.bf16.mxu0 0
  %3105 = vmatpush1.bf16.msra.mxu0 0
  %3106 = vmatprep.subr.bf16.mxu0 0
  %3107 = vmatpush1.bf16.msra.mxu0 %v3090
  %3108 = vmatprep.subr.bf16.mxu0 0
  %3109 = vmatpush2.bf16.msra.mxu0 0
  %3110 = vmatprep.subr.bf16.mxu0 0
  %3111 = vmatpush2.bf16.msra.mxu0 0
  %3112 = vmatprep.subr.bf16.mxu0 0
  %3113 = vmatpush2.bf16.msra.mxu0 0
  %3114 = vmatprep.subr.bf16.mxu0 0
  %3115 = vmatpush2.bf16.msra.mxu0 0
  %3116 = vmatprep.subr.bf16.mxu0 0
  %3117 = vmatpush2.bf16.msra.mxu0 0
  %3118 = vmatprep.subr.bf16.mxu0 0
  %3119 = vmatpush2.bf16.msra.mxu0 0
  %3120 = vmatprep.subr.bf16.mxu0 0
  %3121 = vmatpush2.bf16.msra.mxu0 0
  %3122 = vmatprep.subr.bf16.mxu0 0
  %3123 = vmatpush2.bf16.msra.mxu0 0
  %3124 = vmatprep.mubr.bf16.mxu0 0
  %3125 = vmatmul.mubr.bf16.gmra.mxu0 %v3087
  %v3126 = vpop.f32.mrf.mxu0
  %v3127 = vadd.f32 0.0, %v3126
  %v3128 = vpop.f32.mrf.mxu0
  %v3129 = vpop.f32.mrf.mxu0
  %v3130 = vpop.f32.mrf.mxu0
  %3131 = vdwg.mxu0
  %3132 = vrot.lane.b32.xlu0 %v244, 108
  %v3133 = vpop.permute.xlu0 %3132
  %v3135 = vsel %vm116, %v3022, 0
  %v3138 = vsel %vm141, %v3133, 0
  %3140 = vmatprep.subr.bf16.mxu0 0
  %3141 = vmatpush1.bf16.msra.mxu0 0
  %3142 = vmatprep.subr.bf16.mxu0 0
  %3143 = vmatpush1.bf16.msra.mxu0 0
  %3144 = vmatprep.subr.bf16.mxu0 0
  %3145 = vmatpush1.bf16.msra.mxu0 0
  %3146 = vmatprep.subr.bf16.mxu0 0
  %3147 = vmatpush1.bf16.msra.mxu0 0
  %3148 = vmatprep.subr.bf16.mxu0 0
  %3149 = vmatpush1.bf16.msra.mxu0 0
  %3150 = vmatprep.subr.bf16.mxu0 0
  %3151 = vmatpush1.bf16.msra.mxu0 0
  %3152 = vmatprep.subr.bf16.mxu0 0
  %3153 = vmatpush1.bf16.msra.mxu0 0
  %3154 = vmatprep.subr.bf16.mxu0 0
  %3155 = vmatpush1.bf16.msra.mxu0 %v3138
  %3156 = vmatprep.subr.bf16.mxu0 0
  %3157 = vmatpush2.bf16.msra.mxu0 0
  %3158 = vmatprep.subr.bf16.mxu0 0
  %3159 = vmatpush2.bf16.msra.mxu0 0
  %3160 = vmatprep.subr.bf16.mxu0 0
  %3161 = vmatpush2.bf16.msra.mxu0 0
  %3162 = vmatprep.subr.bf16.mxu0 0
  %3163 = vmatpush2.bf16.msra.mxu0 0
  %3164 = vmatprep.subr.bf16.mxu0 0
  %3165 = vmatpush2.bf16.msra.mxu0 0
  %3166 = vmatprep.subr.bf16.mxu0 0
  %3167 = vmatpush2.bf16.msra.mxu0 0
  %3168 = vmatprep.subr.bf16.mxu0 0
  %3169 = vmatpush2.bf16.msra.mxu0 0
  %3170 = vmatprep.subr.bf16.mxu0 0
  %3171 = vmatpush2.bf16.msra.mxu0 0
  %3172 = vmatprep.mubr.bf16.mxu0 0
  %3173 = vmatmul.mubr.bf16.gmra.mxu0 %v3135
  %v3174 = vpop.f32.mrf.mxu0
  %v3175 = vadd.f32 0.0, %v3174
  %v3176 = vpop.f32.mrf.mxu0
  %v3177 = vpop.f32.mrf.mxu0
  %v3178 = vpop.f32.mrf.mxu0
  %3179 = vdwg.mxu0
  %3180 = vrot.lane.b32.xlu0 %v245, 108
  %v3181 = vpop.permute.xlu0 %3180
  %v3183 = vsel %vm116, %v3023, 0
  %v3186 = vsel %vm141, %v3181, 0
  %3188 = vmatprep.subr.bf16.mxu0 0
  %3189 = vmatpush1.bf16.msra.mxu0 0
  %3190 = vmatprep.subr.bf16.mxu0 0
  %3191 = vmatpush1.bf16.msra.mxu0 0
  %3192 = vmatprep.subr.bf16.mxu0 0
  %3193 = vmatpush1.bf16.msra.mxu0 0
  %3194 = vmatprep.subr.bf16.mxu0 0
  %3195 = vmatpush1.bf16.msra.mxu0 0
  %3196 = vmatprep.subr.bf16.mxu0 0
  %3197 = vmatpush1.bf16.msra.mxu0 0
  %3198 = vmatprep.subr.bf16.mxu0 0
  %3199 = vmatpush1.bf16.msra.mxu0 0
  %3200 = vmatprep.subr.bf16.mxu0 0
  %3201 = vmatpush1.bf16.msra.mxu0 0
  %3202 = vmatprep.subr.bf16.mxu0 0
  %3203 = vmatpush1.bf16.msra.mxu0 %v3186
  %3204 = vmatprep.subr.bf16.mxu0 0
  %3205 = vmatpush2.bf16.msra.mxu0 0
  %3206 = vmatprep.subr.bf16.mxu0 0
  %3207 = vmatpush2.bf16.msra.mxu0 0
  %3208 = vmatprep.subr.bf16.mxu0 0
  %3209 = vmatpush2.bf16.msra.mxu0 0
  %3210 = vmatprep.subr.bf16.mxu0 0
  %3211 = vmatpush2.bf16.msra.mxu0 0
  %3212 = vmatprep.subr.bf16.mxu0 0
  %3213 = vmatpush2.bf16.msra.mxu0 0
  %3214 = vmatprep.subr.bf16.mxu0 0
  %3215 = vmatpush2.bf16.msra.mxu0 0
  %3216 = vmatprep.subr.bf16.mxu0 0
  %3217 = vmatpush2.bf16.msra.mxu0 0
  %3218 = vmatprep.subr.bf16.mxu0 0
  %3219 = vmatpush2.bf16.msra.mxu0 0
  %3220 = vmatprep.mubr.bf16.mxu0 0
  %3221 = vmatmul.mubr.bf16.gmra.mxu0 %v3183
  %v3222 = vpop.f32.mrf.mxu0
  %v3223 = vadd.f32 0.0, %v3222
  %v3224 = vpop.f32.mrf.mxu0
  %v3225 = vpop.f32.mrf.mxu0
  %v3226 = vpop.f32.mrf.mxu0
  %3227 = vdwg.mxu0
  %3228 = vrot.lane.b32.xlu0 %v246, 108
  %v3229 = vpop.permute.xlu0 %3228
  %v3231 = vsel %vm116, %v3024, 0
  %v3234 = vsel %vm141, %v3229, 0
  %3236 = vmatprep.subr.bf16.mxu0 0
  %3237 = vmatpush1.bf16.msra.mxu0 0
  %3238 = vmatprep.subr.bf16.mxu0 0
  %3239 = vmatpush1.bf16.msra.mxu0 0
  %3240 = vmatprep.subr.bf16.mxu0 0
  %3241 = vmatpush1.bf16.msra.mxu0 0
  %3242 = vmatprep.subr.bf16.mxu0 0
  %3243 = vmatpush1.bf16.msra.mxu0 0
  %3244 = vmatprep.subr.bf16.mxu0 0
  %3245 = vmatpush1.bf16.msra.mxu0 0
  %3246 = vmatprep.subr.bf16.mxu0 0
  %3247 = vmatpush1.bf16.msra.mxu0 0
  %3248 = vmatprep.subr.bf16.mxu0 0
  %3249 = vmatpush1.bf16.msra.mxu0 0
  %3250 = vmatprep.subr.bf16.mxu0 0
  %3251 = vmatpush1.bf16.msra.mxu0 %v3234
  %3252 = vmatprep.subr.bf16.mxu0 0
  %3253 = vmatpush2.bf16.msra.mxu0 0
  %3254 = vmatprep.subr.bf16.mxu0 0
  %3255 = vmatpush2.bf16.msra.mxu0 0
  %3256 = vmatprep.subr.bf16.mxu0 0
  %3257 = vmatpush2.bf16.msra.mxu0 0
  %3258 = vmatprep.subr.bf16.mxu0 0
  %3259 = vmatpush2.bf16.msra.mxu0 0
  %3260 = vmatprep.subr.bf16.mxu0 0
  %3261 = vmatpush2.bf16.msra.mxu0 0
  %3262 = vmatprep.subr.bf16.mxu0 0
  %3263 = vmatpush2.bf16.msra.mxu0 0
  %3264 = vmatprep.subr.bf16.mxu0 0
  %3265 = vmatpush2.bf16.msra.mxu0 0
  %3266 = vmatprep.subr.bf16.mxu0 0
  %3267 = vmatpush2.bf16.msra.mxu0 0
  %3268 = vmatprep.mubr.bf16.mxu0 0
  %3269 = vmatmul.mubr.bf16.gmra.mxu0 %v3231
  %v3270 = vpop.f32.mrf.mxu0
  %v3271 = vadd.f32 0.0, %v3270
  %v3272 = vpop.f32.mrf.mxu0
  %v3273 = vpop.f32.mrf.mxu0
  %v3274 = vpop.f32.mrf.mxu0
  %3275 = vdwg.mxu0
  %3276 = vrot.lane.b32.xlu0 %v247, 108
  %v3277 = vpop.permute.xlu0 %3276
  %v3279 = vsel %vm116, %v3025, 0
  %v3282 = vsel %vm141, %v3277, 0
  %3284 = vmatprep.subr.bf16.mxu0 0
  %3285 = vmatpush1.bf16.msra.mxu0 0
  %3286 = vmatprep.subr.bf16.mxu0 0
  %3287 = vmatpush1.bf16.msra.mxu0 0
  %3288 = vmatprep.subr.bf16.mxu0 0
  %3289 = vmatpush1.bf16.msra.mxu0 0
  %3290 = vmatprep.subr.bf16.mxu0 0
  %3291 = vmatpush1.bf16.msra.mxu0 0
  %3292 = vmatprep.subr.bf16.mxu0 0
  %3293 = vmatpush1.bf16.msra.mxu0 0
  %3294 = vmatprep.subr.bf16.mxu0 0
  %3295 = vmatpush1.bf16.msra.mxu0 0
  %3296 = vmatprep.subr.bf16.mxu0 0
  %3297 = vmatpush1.bf16.msra.mxu0 0
  %3298 = vmatprep.subr.bf16.mxu0 0
  %3299 = vmatpush1.bf16.msra.mxu0 %v3282
  %3300 = vmatprep.subr.bf16.mxu0 0
  %3301 = vmatpush2.bf16.msra.mxu0 0
  %3302 = vmatprep.subr.bf16.mxu0 0
  %3303 = vmatpush2.bf16.msra.mxu0 0
  %3304 = vmatprep.subr.bf16.mxu0 0
  %3305 = vmatpush2.bf16.msra.mxu0 0
  %3306 = vmatprep.subr.bf16.mxu0 0
  %3307 = vmatpush2.bf16.msra.mxu0 0
  %3308 = vmatprep.subr.bf16.mxu0 0
  %3309 = vmatpush2.bf16.msra.mxu0 0
  %3310 = vmatprep.subr.bf16.mxu0 0
  %3311 = vmatpush2.bf16.msra.mxu0 0
  %3312 = vmatprep.subr.bf16.mxu0 0
  %3313 = vmatpush2.bf16.msra.mxu0 0
  %3314 = vmatprep.subr.bf16.mxu0 0
  %3315 = vmatpush2.bf16.msra.mxu0 0
  %3316 = vmatprep.mubr.bf16.mxu0 0
  %3317 = vmatmul.mubr.bf16.gmra.mxu0 %v3279
  %v3318 = vpop.f32.mrf.mxu0
  %v3319 = vadd.f32 0.0, %v3318
  %v3320 = vpop.f32.mrf.mxu0
  %v3321 = vpop.f32.mrf.mxu0
  %v3322 = vpop.f32.mrf.mxu0
  %3323 = vdwg.mxu0
  %3324 = vrot.lane.b32.xlu0 %v248, 108
  %v3325 = vpop.permute.xlu0 %3324
  %v3327 = vsel %vm116, %v3026, 0
  %v3330 = vsel %vm141, %v3325, 0
  %3332 = vmatprep.subr.bf16.mxu0 0
  %3333 = vmatpush1.bf16.msra.mxu0 0
  %3334 = vmatprep.subr.bf16.mxu0 0
  %3335 = vmatpush1.bf16.msra.mxu0 0
  %3336 = vmatprep.subr.bf16.mxu0 0
  %3337 = vmatpush1.bf16.msra.mxu0 0
  %3338 = vmatprep.subr.bf16.mxu0 0
  %3339 = vmatpush1.bf16.msra.mxu0 0
  %3340 = vmatprep.subr.bf16.mxu0 0
  %3341 = vmatpush1.bf16.msra.mxu0 0
  %3342 = vmatprep.subr.bf16.mxu0 0
  %3343 = vmatpush1.bf16.msra.mxu0 0
  %3344 = vmatprep.subr.bf16.mxu0 0
  %3345 = vmatpush1.bf16.msra.mxu0 0
  %3346 = vmatprep.subr.bf16.mxu0 0
  %3347 = vmatpush1.bf16.msra.mxu0 %v3330
  %3348 = vmatprep.subr.bf16.mxu0 0
  %3349 = vmatpush2.bf16.msra.mxu0 0
  %3350 = vmatprep.subr.bf16.mxu0 0
  %3351 = vmatpush2.bf16.msra.mxu0 0
  %3352 = vmatprep.subr.bf16.mxu0 0
  %3353 = vmatpush2.bf16.msra.mxu0 0
  %3354 = vmatprep.subr.bf16.mxu0 0
  %3355 = vmatpush2.bf16.msra.mxu0 0
  %3356 = vmatprep.subr.bf16.mxu0 0
  %3357 = vmatpush2.bf16.msra.mxu0 0
  %3358 = vmatprep.subr.bf16.mxu0 0
  %3359 = vmatpush2.bf16.msra.mxu0 0
  %3360 = vmatprep.subr.bf16.mxu0 0
  %3361 = vmatpush2.bf16.msra.mxu0 0
  %3362 = vmatprep.subr.bf16.mxu0 0
  %3363 = vmatpush2.bf16.msra.mxu0 0
  %3364 = vmatprep.mubr.bf16.mxu0 0
  %3365 = vmatmul.mubr.bf16.gmra.mxu0 %v3327
  %v3366 = vpop.f32.mrf.mxu0
  %v3367 = vadd.f32 0.0, %v3366
  %v3368 = vpop.f32.mrf.mxu0
  %v3369 = vpop.f32.mrf.mxu0
  %v3370 = vpop.f32.mrf.mxu0
  %3371 = vdwg.mxu0
  %3372 = vrot.lane.b32.xlu0 %v249, 108
  %v3373 = vpop.permute.xlu0 %3372
  %v3375 = vsel %vm116, %v3027, 0
  %v3378 = vsel %vm141, %v3373, 0
  %3380 = vmatprep.subr.bf16.mxu0 0
  %3381 = vmatpush1.bf16.msra.mxu0 0
  %3382 = vmatprep.subr.bf16.mxu0 0
  %3383 = vmatpush1.bf16.msra.mxu0 0
  %3384 = vmatprep.subr.bf16.mxu0 0
  %3385 = vmatpush1.bf16.msra.mxu0 0
  %3386 = vmatprep.subr.bf16.mxu0 0
  %3387 = vmatpush1.bf16.msra.mxu0 0
  %3388 = vmatprep.subr.bf16.mxu0 0
  %3389 = vmatpush1.bf16.msra.mxu0 0
  %3390 = vmatprep.subr.bf16.mxu0 0
  %3391 = vmatpush1.bf16.msra.mxu0 0
  %3392 = vmatprep.subr.bf16.mxu0 0
  %3393 = vmatpush1.bf16.msra.mxu0 0
  %3394 = vmatprep.subr.bf16.mxu0 0
  %3395 = vmatpush1.bf16.msra.mxu0 %v3378
  %3396 = vmatprep.subr.bf16.mxu0 0
  %3397 = vmatpush2.bf16.msra.mxu0 0
  %3398 = vmatprep.subr.bf16.mxu0 0
  %3399 = vmatpush2.bf16.msra.mxu0 0
  %3400 = vmatprep.subr.bf16.mxu0 0
  %3401 = vmatpush2.bf16.msra.mxu0 0
  %3402 = vmatprep.subr.bf16.mxu0 0
  %3403 = vmatpush2.bf16.msra.mxu0 0
  %3404 = vmatprep.subr.bf16.mxu0 0
  %3405 = vmatpush2.bf16.msra.mxu0 0
  %3406 = vmatprep.subr.bf16.mxu0 0
  %3407 = vmatpush2.bf16.msra.mxu0 0
  %3408 = vmatprep.subr.bf16.mxu0 0
  %3409 = vmatpush2.bf16.msra.mxu0 0
  %3410 = vmatprep.subr.bf16.mxu0 0
  %3411 = vmatpush2.bf16.msra.mxu0 0
  %3412 = vmatprep.mubr.bf16.mxu0 0
  %3413 = vmatmul.mubr.bf16.gmra.mxu0 %v3375
  %v3414 = vpop.f32.mrf.mxu0
  %v3415 = vadd.f32 0.0, %v3414
  %v3416 = vpop.f32.mrf.mxu0
  %v3417 = vpop.f32.mrf.mxu0
  %v3418 = vpop.f32.mrf.mxu0
  %3419 = vdwg.mxu0
  %3420 = vrot.lane.b32.xlu0 %v250, 108
  %v3421 = vpop.permute.xlu0 %3420
  %v3423 = vsel %vm116, %v3028, 0
  %v3426 = vsel %vm141, %v3421, 0
  %3428 = vmatprep.subr.bf16.mxu0 0
  %3429 = vmatpush1.bf16.msra.mxu0 0
  %3430 = vmatprep.subr.bf16.mxu0 0
  %3431 = vmatpush1.bf16.msra.mxu0 0
  %3432 = vmatprep.subr.bf16.mxu0 0
  %3433 = vmatpush1.bf16.msra.mxu0 0
  %3434 = vmatprep.subr.bf16.mxu0 0
  %3435 = vmatpush1.bf16.msra.mxu0 0
  %3436 = vmatprep.subr.bf16.mxu0 0
  %3437 = vmatpush1.bf16.msra.mxu0 0
  %3438 = vmatprep.subr.bf16.mxu0 0
  %3439 = vmatpush1.bf16.msra.mxu0 0
  %3440 = vmatprep.subr.bf16.mxu0 0
  %3441 = vmatpush1.bf16.msra.mxu0 0
  %3442 = vmatprep.subr.bf16.mxu0 0
  %3443 = vmatpush1.bf16.msra.mxu0 %v3426
  %3444 = vmatprep.subr.bf16.mxu0 0
  %3445 = vmatpush2.bf16.msra.mxu0 0
  %3446 = vmatprep.subr.bf16.mxu0 0
  %3447 = vmatpush2.bf16.msra.mxu0 0
  %3448 = vmatprep.subr.bf16.mxu0 0
  %3449 = vmatpush2.bf16.msra.mxu0 0
  %3450 = vmatprep.subr.bf16.mxu0 0
  %3451 = vmatpush2.bf16.msra.mxu0 0
  %3452 = vmatprep.subr.bf16.mxu0 0
  %3453 = vmatpush2.bf16.msra.mxu0 0
  %3454 = vmatprep.subr.bf16.mxu0 0
  %3455 = vmatpush2.bf16.msra.mxu0 0
  %3456 = vmatprep.subr.bf16.mxu0 0
  %3457 = vmatpush2.bf16.msra.mxu0 0
  %3458 = vmatprep.subr.bf16.mxu0 0
  %3459 = vmatpush2.bf16.msra.mxu0 0
  %3460 = vmatprep.mubr.bf16.mxu0 0
  %3461 = vmatmul.mubr.bf16.gmra.mxu0 %v3423
  %v3462 = vpop.f32.mrf.mxu0
  %v3463 = vadd.f32 0.0, %v3462
  %v3464 = vpop.f32.mrf.mxu0
  %v3465 = vpop.f32.mrf.mxu0
  %v3466 = vpop.f32.mrf.mxu0
  %3467 = vdwg.mxu0
  %3468 = vrot.lane.b32.xlu0 %v251, 108
  %v3469 = vpop.permute.xlu0 %3468
  %v3471 = vsel %vm116, %v3029, 0
  %v3474 = vsel %vm141, %v3469, 0
  %3476 = vmatprep.subr.bf16.mxu0 0
  %3477 = vmatpush1.bf16.msra.mxu0 0
  %3478 = vmatprep.subr.bf16.mxu0 0
  %3479 = vmatpush1.bf16.msra.mxu0 0
  %3480 = vmatprep.subr.bf16.mxu0 0
  %3481 = vmatpush1.bf16.msra.mxu0 0
  %3482 = vmatprep.subr.bf16.mxu0 0
  %3483 = vmatpush1.bf16.msra.mxu0 0
  %3484 = vmatprep.subr.bf16.mxu0 0
  %3485 = vmatpush1.bf16.msra.mxu0 0
  %3486 = vmatprep.subr.bf16.mxu0 0
  %3487 = vmatpush1.bf16.msra.mxu0 0
  %3488 = vmatprep.subr.bf16.mxu0 0
  %3489 = vmatpush1.bf16.msra.mxu0 0
  %3490 = vmatprep.subr.bf16.mxu0 0
  %3491 = vmatpush1.bf16.msra.mxu0 %v3474
  %3492 = vmatprep.subr.bf16.mxu0 0
  %3493 = vmatpush2.bf16.msra.mxu0 0
  %3494 = vmatprep.subr.bf16.mxu0 0
  %3495 = vmatpush2.bf16.msra.mxu0 0
  %3496 = vmatprep.subr.bf16.mxu0 0
  %3497 = vmatpush2.bf16.msra.mxu0 0
  %3498 = vmatprep.subr.bf16.mxu0 0
  %3499 = vmatpush2.bf16.msra.mxu0 0
  %3500 = vmatprep.subr.bf16.mxu0 0
  %3501 = vmatpush2.bf16.msra.mxu0 0
  %3502 = vmatprep.subr.bf16.mxu0 0
  %3503 = vmatpush2.bf16.msra.mxu0 0
  %3504 = vmatprep.subr.bf16.mxu0 0
  %3505 = vmatpush2.bf16.msra.mxu0 0
  %3506 = vmatprep.subr.bf16.mxu0 0
  %3507 = vmatpush2.bf16.msra.mxu0 0
  %3508 = vmatprep.mubr.bf16.mxu0 0
  %3509 = vmatmul.mubr.bf16.gmra.mxu0 %v3471
  %v3510 = vpop.f32.mrf.mxu0
  %v3511 = vadd.f32 0.0, %v3510
  %v3512 = vpop.f32.mrf.mxu0
  %v3513 = vpop.f32.mrf.mxu0
  %v3514 = vpop.f32.mrf.mxu0
  %3515 = vdwg.mxu0
  %3516 = vrot.lane.b32.xlu0 %v252, 108
  %v3517 = vpop.permute.xlu0 %3516
  %v3519 = vsel %vm116, %v3030, 0
  %v3522 = vsel %vm141, %v3517, 0
  %3524 = vmatprep.subr.bf16.mxu0 0
  %3525 = vmatpush1.bf16.msra.mxu0 0
  %3526 = vmatprep.subr.bf16.mxu0 0
  %3527 = vmatpush1.bf16.msra.mxu0 0
  %3528 = vmatprep.subr.bf16.mxu0 0
  %3529 = vmatpush1.bf16.msra.mxu0 0
  %3530 = vmatprep.subr.bf16.mxu0 0
  %3531 = vmatpush1.bf16.msra.mxu0 0
  %3532 = vmatprep.subr.bf16.mxu0 0
  %3533 = vmatpush1.bf16.msra.mxu0 0
  %3534 = vmatprep.subr.bf16.mxu0 0
  %3535 = vmatpush1.bf16.msra.mxu0 0
  %3536 = vmatprep.subr.bf16.mxu0 0
  %3537 = vmatpush1.bf16.msra.mxu0 0
  %3538 = vmatprep.subr.bf16.mxu0 0
  %3539 = vmatpush1.bf16.msra.mxu0 %v3522
  %3540 = vmatprep.subr.bf16.mxu0 0
  %3541 = vmatpush2.bf16.msra.mxu0 0
  %3542 = vmatprep.subr.bf16.mxu0 0
  %3543 = vmatpush2.bf16.msra.mxu0 0
  %3544 = vmatprep.subr.bf16.mxu0 0
  %3545 = vmatpush2.bf16.msra.mxu0 0
  %3546 = vmatprep.subr.bf16.mxu0 0
  %3547 = vmatpush2.bf16.msra.mxu0 0
  %3548 = vmatprep.subr.bf16.mxu0 0
  %3549 = vmatpush2.bf16.msra.mxu0 0
  %3550 = vmatprep.subr.bf16.mxu0 0
  %3551 = vmatpush2.bf16.msra.mxu0 0
  %3552 = vmatprep.subr.bf16.mxu0 0
  %3553 = vmatpush2.bf16.msra.mxu0 0
  %3554 = vmatprep.subr.bf16.mxu0 0
  %3555 = vmatpush2.bf16.msra.mxu0 0
  %3556 = vmatprep.mubr.bf16.mxu0 0
  %3557 = vmatmul.mubr.bf16.gmra.mxu0 %v3519
  %v3558 = vpop.f32.mrf.mxu0
  %v3559 = vadd.f32 0.0, %v3558
  %v3560 = vpop.f32.mrf.mxu0
  %v3561 = vpop.f32.mrf.mxu0
  %v3562 = vpop.f32.mrf.mxu0
  %3563 = vdwg.mxu0
  %3564 = vrot.lane.b32.xlu0 %v253, 108
  %v3565 = vpop.permute.xlu0 %3564
  %v3567 = vsel %vm116, %v3031, 0
  %v3570 = vsel %vm141, %v3565, 0
  %3572 = vmatprep.subr.bf16.mxu0 0
  %3573 = vmatpush1.bf16.msra.mxu0 0
  %3574 = vmatprep.subr.bf16.mxu0 0
  %3575 = vmatpush1.bf16.msra.mxu0 0
  %3576 = vmatprep.subr.bf16.mxu0 0
  %3577 = vmatpush1.bf16.msra.mxu0 0
  %3578 = vmatprep.subr.bf16.mxu0 0
  %3579 = vmatpush1.bf16.msra.mxu0 0
  %3580 = vmatprep.subr.bf16.mxu0 0
  %3581 = vmatpush1.bf16.msra.mxu0 0
  %3582 = vmatprep.subr.bf16.mxu0 0
  %3583 = vmatpush1.bf16.msra.mxu0 0
  %3584 = vmatprep.subr.bf16.mxu0 0
  %3585 = vmatpush1.bf16.msra.mxu0 0
  %3586 = vmatprep.subr.bf16.mxu0 0
  %3587 = vmatpush1.bf16.msra.mxu0 %v3570
  %3588 = vmatprep.subr.bf16.mxu0 0
  %3589 = vmatpush2.bf16.msra.mxu0 0
  %3590 = vmatprep.subr.bf16.mxu0 0
  %3591 = vmatpush2.bf16.msra.mxu0 0
  %3592 = vmatprep.subr.bf16.mxu0 0
  %3593 = vmatpush2.bf16.msra.mxu0 0
  %3594 = vmatprep.subr.bf16.mxu0 0
  %3595 = vmatpush2.bf16.msra.mxu0 0
  %3596 = vmatprep.subr.bf16.mxu0 0
  %3597 = vmatpush2.bf16.msra.mxu0 0
  %3598 = vmatprep.subr.bf16.mxu0 0
  %3599 = vmatpush2.bf16.msra.mxu0 0
  %3600 = vmatprep.subr.bf16.mxu0 0
  %3601 = vmatpush2.bf16.msra.mxu0 0
  %3602 = vmatprep.subr.bf16.mxu0 0
  %3603 = vmatpush2.bf16.msra.mxu0 0
  %3604 = vmatprep.mubr.bf16.mxu0 0
  %3605 = vmatmul.mubr.bf16.gmra.mxu0 %v3567
  %v3606 = vpop.f32.mrf.mxu0
  %v3607 = vadd.f32 0.0, %v3606
  %v3608 = vpop.f32.mrf.mxu0
  %v3609 = vpop.f32.mrf.mxu0
  %v3610 = vpop.f32.mrf.mxu0
  %3611 = vdwg.mxu0
  %3612 = vrot.lane.b32.xlu0 %v254, 108
  %v3613 = vpop.permute.xlu0 %3612
  %v3615 = vsel %vm116, %v3032, 0
  %v3618 = vsel %vm141, %v3613, 0
  %3620 = vmatprep.subr.bf16.mxu0 0
  %3621 = vmatpush1.bf16.msra.mxu0 0
  %3622 = vmatprep.subr.bf16.mxu0 0
  %3623 = vmatpush1.bf16.msra.mxu0 0
  %3624 = vmatprep.subr.bf16.mxu0 0
  %3625 = vmatpush1.bf16.msra.mxu0 0
  %3626 = vmatprep.subr.bf16.mxu0 0
  %3627 = vmatpush1.bf16.msra.mxu0 0
  %3628 = vmatprep.subr.bf16.mxu0 0
  %3629 = vmatpush1.bf16.msra.mxu0 0
  %3630 = vmatprep.subr.bf16.mxu0 0
  %3631 = vmatpush1.bf16.msra.mxu0 0
  %3632 = vmatprep.subr.bf16.mxu0 0
  %3633 = vmatpush1.bf16.msra.mxu0 0
  %3634 = vmatprep.subr.bf16.mxu0 0
  %3635 = vmatpush1.bf16.msra.mxu0 %v3618
  %3636 = vmatprep.subr.bf16.mxu0 0
  %3637 = vmatpush2.bf16.msra.mxu0 0
  %3638 = vmatprep.subr.bf16.mxu0 0
  %3639 = vmatpush2.bf16.msra.mxu0 0
  %3640 = vmatprep.subr.bf16.mxu0 0
  %3641 = vmatpush2.bf16.msra.mxu0 0
  %3642 = vmatprep.subr.bf16.mxu0 0
  %3643 = vmatpush2.bf16.msra.mxu0 0
  %3644 = vmatprep.subr.bf16.mxu0 0
  %3645 = vmatpush2.bf16.msra.mxu0 0
  %3646 = vmatprep.subr.bf16.mxu0 0
  %3647 = vmatpush2.bf16.msra.mxu0 0
  %3648 = vmatprep.subr.bf16.mxu0 0
  %3649 = vmatpush2.bf16.msra.mxu0 0
  %3650 = vmatprep.subr.bf16.mxu0 0
  %3651 = vmatpush2.bf16.msra.mxu0 0
  %3652 = vmatprep.mubr.bf16.mxu0 0
  %3653 = vmatmul.mubr.bf16.gmra.mxu0 %v3615
  %v3654 = vpop.f32.mrf.mxu0
  %v3655 = vadd.f32 0.0, %v3654
  %v3656 = vpop.f32.mrf.mxu0
  %v3657 = vpop.f32.mrf.mxu0
  %v3658 = vpop.f32.mrf.mxu0
  %3659 = vdwg.mxu0
  %3660 = vrot.lane.b32.xlu0 %v255, 108
  %v3661 = vpop.permute.xlu0 %3660
  %v3663 = vsel %vm116, %v3033, 0
  %v3666 = vsel %vm141, %v3661, 0
  %3668 = vmatprep.subr.bf16.mxu0 0
  %3669 = vmatpush1.bf16.msra.mxu0 0
  %3670 = vmatprep.subr.bf16.mxu0 0
  %3671 = vmatpush1.bf16.msra.mxu0 0
  %3672 = vmatprep.subr.bf16.mxu0 0
  %3673 = vmatpush1.bf16.msra.mxu0 0
  %3674 = vmatprep.subr.bf16.mxu0 0
  %3675 = vmatpush1.bf16.msra.mxu0 0
  %3676 = vmatprep.subr.bf16.mxu0 0
  %3677 = vmatpush1.bf16.msra.mxu0 0
  %3678 = vmatprep.subr.bf16.mxu0 0
  %3679 = vmatpush1.bf16.msra.mxu0 0
  %3680 = vmatprep.subr.bf16.mxu0 0
  %3681 = vmatpush1.bf16.msra.mxu0 0
  %3682 = vmatprep.subr.bf16.mxu0 0
  %3683 = vmatpush1.bf16.msra.mxu0 %v3666
  %3684 = vmatprep.subr.bf16.mxu0 0
  %3685 = vmatpush2.bf16.msra.mxu0 0
  %3686 = vmatprep.subr.bf16.mxu0 0
  %3687 = vmatpush2.bf16.msra.mxu0 0
  %3688 = vmatprep.subr.bf16.mxu0 0
  %3689 = vmatpush2.bf16.msra.mxu0 0
  %3690 = vmatprep.subr.bf16.mxu0 0
  %3691 = vmatpush2.bf16.msra.mxu0 0
  %3692 = vmatprep.subr.bf16.mxu0 0
  %3693 = vmatpush2.bf16.msra.mxu0 0
  %3694 = vmatprep.subr.bf16.mxu0 0
  %3695 = vmatpush2.bf16.msra.mxu0 0
  %3696 = vmatprep.subr.bf16.mxu0 0
  %3697 = vmatpush2.bf16.msra.mxu0 0
  %3698 = vmatprep.subr.bf16.mxu0 0
  %3699 = vmatpush2.bf16.msra.mxu0 0
  %3700 = vmatprep.mubr.bf16.mxu0 0
  %3701 = vmatmul.mubr.bf16.gmra.mxu0 %v3663
  %v3702 = vpop.f32.mrf.mxu0
  %v3703 = vadd.f32 0.0, %v3702
  %v3704 = vpop.f32.mrf.mxu0
  %v3705 = vpop.f32.mrf.mxu0
  %v3706 = vpop.f32.mrf.mxu0
  %3707 = vdwg.mxu0
  %3708 = vrot.lane.b32.xlu0 %v256, 108
  %v3709 = vpop.permute.xlu0 %3708
  %v3711 = vsel %vm116, %v3034, 0
  %v3714 = vsel %vm141, %v3709, 0
  %3716 = vmatprep.subr.bf16.mxu0 0
  %3717 = vmatpush1.bf16.msra.mxu0 0
  %3718 = vmatprep.subr.bf16.mxu0 0
  %3719 = vmatpush1.bf16.msra.mxu0 0
  %3720 = vmatprep.subr.bf16.mxu0 0
  %3721 = vmatpush1.bf16.msra.mxu0 0
  %3722 = vmatprep.subr.bf16.mxu0 0
  %3723 = vmatpush1.bf16.msra.mxu0 0
  %3724 = vmatprep.subr.bf16.mxu0 0
  %3725 = vmatpush1.bf16.msra.mxu0 0
  %3726 = vmatprep.subr.bf16.mxu0 0
  %3727 = vmatpush1.bf16.msra.mxu0 0
  %3728 = vmatprep.subr.bf16.mxu0 0
  %3729 = vmatpush1.bf16.msra.mxu0 0
  %3730 = vmatprep.subr.bf16.mxu0 0
  %3731 = vmatpush1.bf16.msra.mxu0 %v3714
  %3732 = vmatprep.subr.bf16.mxu0 0
  %3733 = vmatpush2.bf16.msra.mxu0 0
  %3734 = vmatprep.subr.bf16.mxu0 0
  %3735 = vmatpush2.bf16.msra.mxu0 0
  %3736 = vmatprep.subr.bf16.mxu0 0
  %3737 = vmatpush2.bf16.msra.mxu0 0
  %3738 = vmatprep.subr.bf16.mxu0 0
  %3739 = vmatpush2.bf16.msra.mxu0 0
  %3740 = vmatprep.subr.bf16.mxu0 0
  %3741 = vmatpush2.bf16.msra.mxu0 0
  %3742 = vmatprep.subr.bf16.mxu0 0
  %3743 = vmatpush2.bf16.msra.mxu0 0
  %3744 = vmatprep.subr.bf16.mxu0 0
  %3745 = vmatpush2.bf16.msra.mxu0 0
  %3746 = vmatprep.subr.bf16.mxu0 0
  %3747 = vmatpush2.bf16.msra.mxu0 0
  %3748 = vmatprep.mubr.bf16.mxu0 0
  %3749 = vmatmul.mubr.bf16.gmra.mxu0 %v3711
  %v3750 = vpop.f32.mrf.mxu0
  %v3751 = vadd.f32 0.0, %v3750
  %v3752 = vpop.f32.mrf.mxu0
  %v3753 = vpop.f32.mrf.mxu0
  %v3754 = vpop.f32.mrf.mxu0
  %3755 = vdwg.mxu0
  %3756 = vrot.lane.b32.xlu0 %v257, 108
  %v3757 = vpop.permute.xlu0 %3756
  %v3759 = vsel %vm116, %v3035, 0
  %v3762 = vsel %vm141, %v3757, 0
  %3764 = vmatprep.subr.bf16.mxu0 0
  %3765 = vmatpush1.bf16.msra.mxu0 0
  %3766 = vmatprep.subr.bf16.mxu0 0
  %3767 = vmatpush1.bf16.msra.mxu0 0
  %3768 = vmatprep.subr.bf16.mxu0 0
  %3769 = vmatpush1.bf16.msra.mxu0 0
  %3770 = vmatprep.subr.bf16.mxu0 0
  %3771 = vmatpush1.bf16.msra.mxu0 0
  %3772 = vmatprep.subr.bf16.mxu0 0
  %3773 = vmatpush1.bf16.msra.mxu0 0
  %3774 = vmatprep.subr.bf16.mxu0 0
  %3775 = vmatpush1.bf16.msra.mxu0 0
  %3776 = vmatprep.subr.bf16.mxu0 0
  %3777 = vmatpush1.bf16.msra.mxu0 0
  %3778 = vmatprep.subr.bf16.mxu0 0
  %3779 = vmatpush1.bf16.msra.mxu0 %v3762
  %3780 = vmatprep.subr.bf16.mxu0 0
  %3781 = vmatpush2.bf16.msra.mxu0 0
  %3782 = vmatprep.subr.bf16.mxu0 0
  %3783 = vmatpush2.bf16.msra.mxu0 0
  %3784 = vmatprep.subr.bf16.mxu0 0
  %3785 = vmatpush2.bf16.msra.mxu0 0
  %3786 = vmatprep.subr.bf16.mxu0 0
  %3787 = vmatpush2.bf16.msra.mxu0 0
  %3788 = vmatprep.subr.bf16.mxu0 0
  %3789 = vmatpush2.bf16.msra.mxu0 0
  %3790 = vmatprep.subr.bf16.mxu0 0
  %3791 = vmatpush2.bf16.msra.mxu0 0
  %3792 = vmatprep.subr.bf16.mxu0 0
  %3793 = vmatpush2.bf16.msra.mxu0 0
  %3794 = vmatprep.subr.bf16.mxu0 0
  %3795 = vmatpush2.bf16.msra.mxu0 0
  %3796 = vmatprep.mubr.bf16.mxu0 0
  %3797 = vmatmul.mubr.bf16.gmra.mxu0 %v3759
  %v3798 = vpop.f32.mrf.mxu0
  %v3799 = vadd.f32 0.0, %v3798
  %v3800 = vpop.f32.mrf.mxu0
  %v3801 = vpop.f32.mrf.mxu0
  %v3802 = vpop.f32.mrf.mxu0
  %3803 = vdwg.mxu0
  %v3804 = vpack.c.bf16 %v3127, %v3079
  %v3805 = vpack.c.bf16 %v3223, %v3175
  %v3806 = vpack.c.bf16 %v3319, %v3271
  %v3807 = vpack.c.bf16 %v3415, %v3367
  %v3808 = vpack.c.bf16 %v3511, %v3463
  %v3809 = vpack.c.bf16 %v3607, %v3559
  %v3810 = vpack.c.bf16 %v3703, %v3655
  %v3811 = vpack.c.bf16 %v3799, %v3751
  %v3812 = vld [vmem:[%s3] sm:$0xc]
  %v3814 = vunpack.c.l.b16 %v3812
  %v3815 = vpack.c.b16 %v3814, %v3814
  %v3816 = vrot.slane %v3815, 2
  %v3818 = vsel %vm261, %v3804, 0
  %v3821 = vsel %vm261, %v3805, 0
  %v3824 = vsel %vm261, %v3806, 0
  %v3827 = vsel %vm261, %v3807, 0
  %v3830 = vsel %vm261, %v3808, 0
  %v3833 = vsel %vm261, %v3809, 0
  %v3836 = vsel %vm261, %v3810, 0
  %v3839 = vsel %vm261, %v3811, 0
  %vm3841 = vcmask 1041408
  %v3843 = vsel %vm3841, %v3816, 0
  %3845 = vmatprep.subr.bf16.mxu0 0
  %3846 = vmatpush1.bf16.msra.mxu0 0
  %3847 = vmatprep.subr.bf16.mxu0 0
  %3848 = vmatpush1.bf16.msra.mxu0 0
  %3849 = vmatprep.subr.bf16.mxu0 0
  %3850 = vmatpush1.bf16.msra.mxu0 0
  %3851 = vmatprep.subr.bf16.mxu0 0
  %3852 = vmatpush1.bf16.msra.mxu0 0
  %3853 = vmatprep.subr.bf16.mxu0 0
  %3854 = vmatpush1.bf16.msra.mxu0 0
  %3855 = vmatprep.subr.bf16.mxu0 0
  %3856 = vmatpush1.bf16.msra.mxu0 0
  %3857 = vmatprep.subr.bf16.mxu0 0
  %3858 = vmatpush1.bf16.msra.mxu0 0
  %3859 = vmatprep.subr.bf16.mxu0 0
  %3860 = vmatpush1.bf16.msra.mxu0 %v3843
  %3861 = vmatprep.subr.bf16.mxu0 0
  %3862 = vmatpush2.bf16.msra.mxu0 0
  %3863 = vmatprep.subr.bf16.mxu0 0
  %3864 = vmatpush2.bf16.msra.mxu0 0
  %3865 = vmatprep.subr.bf16.mxu0 0
  %3866 = vmatpush2.bf16.msra.mxu0 0
  %3867 = vmatprep.subr.bf16.mxu0 0
  %3868 = vmatpush2.bf16.msra.mxu0 0
  %3869 = vmatprep.subr.bf16.mxu0 0
  %3870 = vmatpush2.bf16.msra.mxu0 0
  %3871 = vmatprep.subr.bf16.mxu0 0
  %3872 = vmatpush2.bf16.msra.mxu0 0
  %3873 = vmatprep.subr.bf16.mxu0 0
  %3874 = vmatpush2.bf16.msra.mxu0 0
  %3875 = vmatprep.subr.bf16.mxu0 0
  %3876 = vmatpush2.bf16.msra.mxu0 0
  %3877 = vmatprep.mubr.bf16.mxu0 0
  %3878 = vmatmul.mubr.bf16.gmra.mxu0 %v3818
  %v3879 = vpop.f32.mrf.mxu0
  %v3880 = vadd.f32 0.0, %v3879
  %v3881 = vpop.f32.mrf.mxu0
  %v3882 = vpop.f32.mrf.mxu0
  %v3883 = vadd.f32 0.0, %v3882
  %v3884 = vpop.f32.mrf.mxu0
  %3885 = vmatprep.mubr.bf16.mxu0 0
  %3886 = vmatmul.mubr.bf16.gmra.mxu0 %v3821
  %v3887 = vpop.f32.mrf.mxu0
  %v3888 = vadd.f32 0.0, %v3887
  %v3889 = vpop.f32.mrf.mxu0
  %v3890 = vpop.f32.mrf.mxu0
  %v3891 = vadd.f32 0.0, %v3890
  %v3892 = vpop.f32.mrf.mxu0
  %3893 = vmatprep.mubr.bf16.mxu0 0
  %3894 = vmatmul.mubr.bf16.gmra.mxu0 %v3824
  %v3895 = vpop.f32.mrf.mxu0
  %v3896 = vadd.f32 0.0, %v3895
  %v3897 = vpop.f32.mrf.mxu0
  %v3898 = vpop.f32.mrf.mxu0
  %v3899 = vadd.f32 0.0, %v3898
  %v3900 = vpop.f32.mrf.mxu0
  %3901 = vmatprep.mubr.bf16.mxu0 0
  %3902 = vmatmul.mubr.bf16.gmra.mxu0 %v3827
  %v3903 = vpop.f32.mrf.mxu0
  %v3904 = vadd.f32 0.0, %v3903
  %v3905 = vpop.f32.mrf.mxu0
  %v3906 = vpop.f32.mrf.mxu0
  %v3907 = vadd.f32 0.0, %v3906
  %v3908 = vpop.f32.mrf.mxu0
  %3909 = vmatprep.mubr.bf16.mxu0 0
  %3910 = vmatmul.mubr.bf16.gmra.mxu0 %v3830
  %v3911 = vpop.f32.mrf.mxu0
  %v3912 = vadd.f32 0.0, %v3911
  %v3913 = vpop.f32.mrf.mxu0
  %v3914 = vpop.f32.mrf.mxu0
  %v3915 = vadd.f32 0.0, %v3914
  %v3916 = vpop.f32.mrf.mxu0
  %3917 = vmatprep.mubr.bf16.mxu0 0
  %3918 = vmatmul.mubr.bf16.gmra.mxu0 %v3833
  %v3919 = vpop.f32.mrf.mxu0
  %v3920 = vadd.f32 0.0, %v3919
  %v3921 = vpop.f32.mrf.mxu0
  %v3922 = vpop.f32.mrf.mxu0
  %v3923 = vadd.f32 0.0, %v3922
  %v3924 = vpop.f32.mrf.mxu0
  %3925 = vmatprep.mubr.bf16.mxu0 0
  %3926 = vmatmul.mubr.bf16.gmra.mxu0 %v3836
  %v3927 = vpop.f32.mrf.mxu0
  %v3928 = vadd.f32 0.0, %v3927
  %v3929 = vpop.f32.mrf.mxu0
  %v3930 = vpop.f32.mrf.mxu0
  %v3931 = vadd.f32 0.0, %v3930
  %v3932 = vpop.f32.mrf.mxu0
  %3933 = vmatprep.mubr.bf16.mxu0 0
  %3934 = vmatmul.mubr.bf16.gmra.mxu0 %v3839
  %v3935 = vpop.f32.mrf.mxu0
  %v3936 = vadd.f32 0.0, %v3935
  %v3937 = vpop.f32.mrf.mxu0
  %v3938 = vpop.f32.mrf.mxu0
  %v3939 = vadd.f32 0.0, %v3938
  %v3940 = vpop.f32.mrf.mxu0
  %3941 = vdwg.mxu0
  %v3943 = vsel %vm261, %v2019, 0
  %v3946 = vsel %vm261, %v2020, 0
  %v3949 = vsel %vm261, %v2021, 0
  %v3952 = vsel %vm261, %v2022, 0
  %v3955 = vsel %vm261, %v2023, 0
  %v3958 = vsel %vm261, %v2024, 0
  %v3961 = vsel %vm261, %v2025, 0
  %v3964 = vsel %vm261, %v2026, 0
  %v3967 = vsel %vm3841, %v2027, 0
  %3969 = vmatprep.subr.bf16.mxu0 0
  %3970 = vmatpush1.bf16.msra.mxu0 0
  %3971 = vmatprep.subr.bf16.mxu0 0
  %3972 = vmatpush1.bf16.msra.mxu0 0
  %3973 = vmatprep.subr.bf16.mxu0 0
  %3974 = vmatpush1.bf16.msra.mxu0 0
  %3975 = vmatprep.subr.bf16.mxu0 0
  %3976 = vmatpush1.bf16.msra.mxu0 0
  %3977 = vmatprep.subr.bf16.mxu0 0
  %3978 = vmatpush1.bf16.msra.mxu0 0
  %3979 = vmatprep.subr.bf16.mxu0 0
  %3980 = vmatpush1.bf16.msra.mxu0 0
  %3981 = vmatprep.subr.bf16.mxu0 0
  %3982 = vmatpush1.bf16.msra.mxu0 0
  %3983 = vmatprep.subr.bf16.mxu0 0
  %3984 = vmatpush1.bf16.msra.mxu0 %v3967
  %3985 = vmatprep.subr.bf16.mxu0 0
  %3986 = vmatpush2.bf16.msra.mxu0 0
  %3987 = vmatprep.subr.bf16.mxu0 0
  %3988 = vmatpush2.bf16.msra.mxu0 0
  %3989 = vmatprep.subr.bf16.mxu0 0
  %3990 = vmatpush2.bf16.msra.mxu0 0
  %3991 = vmatprep.subr.bf16.mxu0 0
  %3992 = vmatpush2.bf16.msra.mxu0 0
  %3993 = vmatprep.subr.bf16.mxu0 0
  %3994 = vmatpush2.bf16.msra.mxu0 0
  %3995 = vmatprep.subr.bf16.mxu0 0
  %3996 = vmatpush2.bf16.msra.mxu0 0
  %3997 = vmatprep.subr.bf16.mxu0 0
  %3998 = vmatpush2.bf16.msra.mxu0 0
  %3999 = vmatprep.subr.bf16.mxu0 0
  %4000 = vmatpush2.bf16.msra.mxu0 0
  %4001 = vmatprep.mubr.bf16.mxu0 0
  %4002 = vmatmul.mubr.bf16.gmra.mxu0 %v3943
  %v4003 = vpop.f32.mrf.mxu0
  %v4004 = vadd.f32 %v3880, %v4003
  %v4005 = vpop.f32.mrf.mxu0
  %v4006 = vpop.f32.mrf.mxu0
  %v4007 = vadd.f32 %v3883, %v4006
  %v4008 = vpop.f32.mrf.mxu0
  %4009 = vmatprep.mubr.bf16.mxu0 0
  %4010 = vmatmul.mubr.bf16.gmra.mxu0 %v3946
  %v4011 = vpop.f32.mrf.mxu0
  %v4012 = vadd.f32 %v3888, %v4011
  %v4013 = vpop.f32.mrf.mxu0
  %v4014 = vpop.f32.mrf.mxu0
  %v4015 = vadd.f32 %v3891, %v4014
  %v4016 = vpop.f32.mrf.mxu0
  %4017 = vmatprep.mubr.bf16.mxu0 0
  %4018 = vmatmul.mubr.bf16.gmra.mxu0 %v3949
  %v4019 = vpop.f32.mrf.mxu0
  %v4020 = vadd.f32 %v3896, %v4019
  %v4021 = vpop.f32.mrf.mxu0
  %v4022 = vpop.f32.mrf.mxu0
  %v4023 = vadd.f32 %v3899, %v4022
  %v4024 = vpop.f32.mrf.mxu0
  %4025 = vmatprep.mubr.bf16.mxu0 0
  %4026 = vmatmul.mubr.bf16.gmra.mxu0 %v3952
  %v4027 = vpop.f32.mrf.mxu0
  %v4028 = vadd.f32 %v3904, %v4027
  %v4029 = vpop.f32.mrf.mxu0
  %v4030 = vpop.f32.mrf.mxu0
  %v4031 = vadd.f32 %v3907, %v4030
  %v4032 = vpop.f32.mrf.mxu0
  %4033 = vmatprep.mubr.bf16.mxu0 0
  %4034 = vmatmul.mubr.bf16.gmra.mxu0 %v3955
  %v4035 = vpop.f32.mrf.mxu0
  %v4036 = vadd.f32 %v3912, %v4035
  %v4037 = vpop.f32.mrf.mxu0
  %v4038 = vpop.f32.mrf.mxu0
  %v4039 = vadd.f32 %v3915, %v4038
  %v4040 = vpop.f32.mrf.mxu0
  %4041 = vmatprep.mubr.bf16.mxu0 0
  %4042 = vmatmul.mubr.bf16.gmra.mxu0 %v3958
  %v4043 = vpop.f32.mrf.mxu0
  %v4044 = vadd.f32 %v3920, %v4043
  %v4045 = vpop.f32.mrf.mxu0
  %v4046 = vpop.f32.mrf.mxu0
  %v4047 = vadd.f32 %v3923, %v4046
  %v4048 = vpop.f32.mrf.mxu0
  %4049 = vmatprep.mubr.bf16.mxu0 0
  %4050 = vmatmul.mubr.bf16.gmra.mxu0 %v3961
  %v4051 = vpop.f32.mrf.mxu0
  %v4052 = vadd.f32 %v3928, %v4051
  %v4053 = vpop.f32.mrf.mxu0
  %v4054 = vpop.f32.mrf.mxu0
  %v4055 = vadd.f32 %v3931, %v4054
  %v4056 = vpop.f32.mrf.mxu0
  %4057 = vmatprep.mubr.bf16.mxu0 0
  %4058 = vmatmul.mubr.bf16.gmra.mxu0 %v3964
  %v4059 = vpop.f32.mrf.mxu0
  %v4060 = vadd.f32 %v3936, %v4059
  %v4061 = vpop.f32.mrf.mxu0
  %v4062 = vpop.f32.mrf.mxu0
  %v4063 = vadd.f32 %v3939, %v4062
  %v4064 = vpop.f32.mrf.mxu0
  %4065 = vdwg.mxu0
  %v4066 = vlaneseq
  %v4067 = vshrl.u32 %v4066, 7
  %v4068 = vsub.s32 0, %v4067
  %v4069 = vrot.slane %v62, %v4068
  %v4070 = vadd.f32 %v4004, %v4069
  %v4071 = vadd.f32 %v4007, %v4069
  %v4072 = vadd.f32 %v4012, %v4069
  %v4073 = vadd.f32 %v4015, %v4069
  %v4074 = vadd.f32 %v4020, %v4069
  %v4075 = vadd.f32 %v4023, %v4069
  %v4076 = vadd.f32 %v4028, %v4069
  %v4077 = vadd.f32 %v4031, %v4069
  %v4078 = vadd.f32 %v4036, %v4069
  %v4079 = vadd.f32 %v4039, %v4069
  %v4080 = vadd.f32 %v4044, %v4069
  %v4081 = vadd.f32 %v4047, %v4069
  %v4082 = vadd.f32 %v4052, %v4069
  %v4083 = vadd.f32 %v4055, %v4069
  %v4084 = vadd.f32 %v4060, %v4069
  %v4085 = vadd.f32 %v4063, %v4069
  %v4086 = vadd.f32 %v46, %v4070
  %v4087 = vadd.f32 %v47, %v4071
  %v4088 = vadd.f32 %v48, %v4072
  %v4089 = vadd.f32 %v49, %v4073
  %v4090 = vadd.f32 %v50, %v4074
  %v4091 = vadd.f32 %v51, %v4075
  %v4092 = vadd.f32 %v52, %v4076
  %v4093 = vadd.f32 %v53, %v4077
  %v4094 = vadd.f32 %v54, %v4078
  %v4095 = vadd.f32 %v55, %v4079
  %v4096 = vadd.f32 %v56, %v4080
  %v4097 = vadd.f32 %v57, %v4081
  %v4098 = vadd.f32 %v58, %v4082
  %v4099 = vadd.f32 %v59, %v4083
  %v4100 = vadd.f32 %v60, %v4084
  %v4101 = vadd.f32 %v61, %v4085
  %v4102 = vsel %vm116, %v4086, 0.0
  %4103 = vadd.xlane.f32.xlu0 %v4102
  %v4104 = vpop.xlane.xlu0 %4103
  %v4105 = vsel %vm116, %v4087, 0.0
  %4106 = vadd.xlane.f32.xlu0 %v4105
  %v4107 = vpop.xlane.xlu0 %4106
  %v4108 = vsel %vm116, %v4088, 0.0
  %4109 = vadd.xlane.f32.xlu0 %v4108
  %v4110 = vpop.xlane.xlu0 %4109
  %v4111 = vsel %vm116, %v4089, 0.0
  %4112 = vadd.xlane.f32.xlu0 %v4111
  %v4113 = vpop.xlane.xlu0 %4112
  %v4114 = vsel %vm116, %v4090, 0.0
  %4115 = vadd.xlane.f32.xlu0 %v4114
  %v4116 = vpop.xlane.xlu0 %4115
  %v4117 = vsel %vm116, %v4091, 0.0
  %4118 = vadd.xlane.f32.xlu0 %v4117
  %v4119 = vpop.xlane.xlu0 %4118
  %v4120 = vsel %vm116, %v4092, 0.0
  %4121 = vadd.xlane.f32.xlu0 %v4120
  %v4122 = vpop.xlane.xlu0 %4121
  %v4123 = vsel %vm116, %v4093, 0.0
  %4124 = vadd.xlane.f32.xlu0 %v4123
  %v4125 = vpop.xlane.xlu0 %4124
  %v4126 = vsel %vm116, %v4094, 0.0
  %4127 = vadd.xlane.f32.xlu0 %v4126
  %v4128 = vpop.xlane.xlu0 %4127
  %v4129 = vsel %vm116, %v4095, 0.0
  %4130 = vadd.xlane.f32.xlu0 %v4129
  %v4131 = vpop.xlane.xlu0 %4130
  %v4132 = vsel %vm116, %v4096, 0.0
  %4133 = vadd.xlane.f32.xlu0 %v4132
  %v4134 = vpop.xlane.xlu0 %4133
  %v4135 = vsel %vm116, %v4097, 0.0
  %4136 = vadd.xlane.f32.xlu0 %v4135
  %v4137 = vpop.xlane.xlu0 %4136
  %v4138 = vsel %vm116, %v4098, 0.0
  %4139 = vadd.xlane.f32.xlu0 %v4138
  %v4140 = vpop.xlane.xlu0 %4139
  %v4141 = vsel %vm116, %v4099, 0.0
  %4142 = vadd.xlane.f32.xlu0 %v4141
  %v4143 = vpop.xlane.xlu0 %4142
  %v4144 = vsel %vm116, %v4100, 0.0
  %4145 = vadd.xlane.f32.xlu0 %v4144
  %v4146 = vpop.xlane.xlu0 %4145
  %v4147 = vsel %vm116, %v4101, 0.0
  %4148 = vadd.xlane.f32.xlu0 %v4147
  %v4149 = vpop.xlane.xlu0 %4148
  %v4150 = vrcp.pop 8.0
  %v4151 = vmul.f32 %v4104, %v4150
  %v4152 = vmul.f32 %v4107, %v4150
  %v4153 = vmul.f32 %v4110, %v4150
  %v4154 = vmul.f32 %v4113, %v4150
  %v4155 = vmul.f32 %v4116, %v4150
  %v4156 = vmul.f32 %v4119, %v4150
  %v4157 = vmul.f32 %v4122, %v4150
  %v4158 = vmul.f32 %v4125, %v4150
  %v4159 = vmul.f32 %v4128, %v4150
  %v4160 = vmul.f32 %v4131, %v4150
  %v4161 = vmul.f32 %v4134, %v4150
  %v4162 = vmul.f32 %v4137, %v4150
  %v4163 = vmul.f32 %v4140, %v4150
  %v4164 = vmul.f32 %v4143, %v4150
  %v4165 = vmul.f32 %v4146, %v4150
  %v4166 = vmul.f32 %v4149, %v4150
  %v4167 = vsub.f32 %v4086, %v4151
  %v4168 = vsub.f32 %v4087, %v4152
  %v4169 = vsub.f32 %v4088, %v4153
  %v4170 = vsub.f32 %v4089, %v4154
  %v4171 = vsub.f32 %v4090, %v4155
  %v4172 = vsub.f32 %v4091, %v4156
  %v4173 = vsub.f32 %v4092, %v4157
  %v4174 = vsub.f32 %v4093, %v4158
  %v4175 = vsub.f32 %v4094, %v4159
  %v4176 = vsub.f32 %v4095, %v4160
  %v4177 = vsub.f32 %v4096, %v4161
  %v4178 = vsub.f32 %v4097, %v4162
  %v4179 = vsub.f32 %v4098, %v4163
  %v4180 = vsub.f32 %v4099, %v4164
  %v4181 = vsub.f32 %v4100, %v4165
  %v4182 = vsub.f32 %v4101, %v4166
  %v4183 = vmul.f32 %v4167, %v4167
  %v4184 = vmul.f32 %v4168, %v4168
  %v4185 = vmul.f32 %v4169, %v4169
  %v4186 = vmul.f32 %v4170, %v4170
  %v4187 = vmul.f32 %v4171, %v4171
  %v4188 = vmul.f32 %v4172, %v4172
  %v4189 = vmul.f32 %v4173, %v4173
  %v4190 = vmul.f32 %v4174, %v4174
  %v4191 = vmul.f32 %v4175, %v4175
  %v4192 = vmul.f32 %v4176, %v4176
  %v4193 = vmul.f32 %v4177, %v4177
  %v4194 = vmul.f32 %v4178, %v4178
  %v4195 = vmul.f32 %v4179, %v4179
  %v4196 = vmul.f32 %v4180, %v4180
  %v4197 = vmul.f32 %v4181, %v4181
  %v4198 = vmul.f32 %v4182, %v4182
  %v4199 = vsel %vm116, %v4183, 0.0
  %4200 = vadd.xlane.f32.xlu0 %v4199
  %v4201 = vpop.xlane.xlu0 %4200
  %v4202 = vsel %vm116, %v4184, 0.0
  %4203 = vadd.xlane.f32.xlu0 %v4202
  %v4204 = vpop.xlane.xlu0 %4203
  %v4205 = vsel %vm116, %v4185, 0.0
  %4206 = vadd.xlane.f32.xlu0 %v4205
  %v4207 = vpop.xlane.xlu0 %4206
  %v4208 = vsel %vm116, %v4186, 0.0
  %4209 = vadd.xlane.f32.xlu0 %v4208
  %v4210 = vpop.xlane.xlu0 %4209
  %v4211 = vsel %vm116, %v4187, 0.0
  %4212 = vadd.xlane.f32.xlu0 %v4211
  %v4213 = vpop.xlane.xlu0 %4212
  %v4214 = vsel %vm116, %v4188, 0.0
  %4215 = vadd.xlane.f32.xlu0 %v4214
  %v4216 = vpop.xlane.xlu0 %4215
  %v4217 = vsel %vm116, %v4189, 0.0
  %4218 = vadd.xlane.f32.xlu0 %v4217
  %v4219 = vpop.xlane.xlu0 %4218
  %v4220 = vsel %vm116, %v4190, 0.0
  %4221 = vadd.xlane.f32.xlu0 %v4220
  %v4222 = vpop.xlane.xlu0 %4221
  %v4223 = vsel %vm116, %v4191, 0.0
  %4224 = vadd.xlane.f32.xlu0 %v4223
  %v4225 = vpop.xlane.xlu0 %4224
  %v4226 = vsel %vm116, %v4192, 0.0
  %4227 = vadd.xlane.f32.xlu0 %v4226
  %v4228 = vpop.xlane.xlu0 %4227
  %v4229 = vsel %vm116, %v4193, 0.0
  %4230 = vadd.xlane.f32.xlu0 %v4229
  %v4231 = vpop.xlane.xlu0 %4230
  %v4232 = vsel %vm116, %v4194, 0.0
  %4233 = vadd.xlane.f32.xlu0 %v4232
  %v4234 = vpop.xlane.xlu0 %4233
  %v4235 = vsel %vm116, %v4195, 0.0
  %4236 = vadd.xlane.f32.xlu0 %v4235
  %v4237 = vpop.xlane.xlu0 %4236
  %v4238 = vsel %vm116, %v4196, 0.0
  %4239 = vadd.xlane.f32.xlu0 %v4238
  %v4240 = vpop.xlane.xlu0 %4239
  %v4241 = vsel %vm116, %v4197, 0.0
  %4242 = vadd.xlane.f32.xlu0 %v4241
  %v4243 = vpop.xlane.xlu0 %4242
  %v4244 = vsel %vm116, %v4198, 0.0
  %4245 = vadd.xlane.f32.xlu0 %v4244
  %v4246 = vpop.xlane.xlu0 %4245
  %v4247 = vmul.f32 %v4201, %v4150
  %v4248 = vmul.f32 %v4204, %v4150
  %v4249 = vmul.f32 %v4207, %v4150
  %v4250 = vmul.f32 %v4210, %v4150
  %v4251 = vmul.f32 %v4213, %v4150
  %v4252 = vmul.f32 %v4216, %v4150
  %v4253 = vmul.f32 %v4219, %v4150
  %v4254 = vmul.f32 %v4222, %v4150
  %v4255 = vmul.f32 %v4225, %v4150
  %v4256 = vmul.f32 %v4228, %v4150
  %v4257 = vmul.f32 %v4231, %v4150
  %v4258 = vmul.f32 %v4234, %v4150
  %v4259 = vmul.f32 %v4237, %v4150
  %v4260 = vmul.f32 %v4240, %v4150
  %v4261 = vmul.f32 %v4243, %v4150
  %v4262 = vmul.f32 %v4246, %v4150
  %v4263 = vadd.f32 %v4247, 1e-05
  %v4264 = vadd.f32 %v4248, 1e-05
  %v4265 = vadd.f32 %v4249, 1e-05
  %v4266 = vadd.f32 %v4250, 1e-05
  %v4267 = vadd.f32 %v4251, 1e-05
  %v4268 = vadd.f32 %v4252, 1e-05
  %v4269 = vadd.f32 %v4253, 1e-05
  %v4270 = vadd.f32 %v4254, 1e-05
  %v4271 = vadd.f32 %v4255, 1e-05
  %v4272 = vadd.f32 %v4256, 1e-05
  %v4273 = vadd.f32 %v4257, 1e-05
  %v4274 = vadd.f32 %v4258, 1e-05
  %v4275 = vadd.f32 %v4259, 1e-05
  %v4276 = vadd.f32 %v4260, 1e-05
  %v4277 = vadd.f32 %v4261, 1e-05
  %v4278 = vadd.f32 %v4262, 1e-05
  %v4279 = vrsqrt.pop %v4263
  %v4280 = vrsqrt.pop %v4264
  %v4281 = vrsqrt.pop %v4265
  %v4282 = vrsqrt.pop %v4266
  %v4283 = vrsqrt.pop %v4267
  %v4284 = vrsqrt.pop %v4268
  %v4285 = vrsqrt.pop %v4269
  %v4286 = vrsqrt.pop %v4270
  %v4287 = vrsqrt.pop %v4271
  %v4288 = vrsqrt.pop %v4272
  %v4289 = vrsqrt.pop %v4273
  %v4290 = vrsqrt.pop %v4274
  %v4291 = vrsqrt.pop %v4275
  %v4292 = vrsqrt.pop %v4276
  %v4293 = vrsqrt.pop %v4277
  %v4294 = vrsqrt.pop %v4278
  %v4295 = vmul.f32 %v4167, %v4279
  %v4296 = vmul.f32 %v4168, %v4280
  %v4297 = vmul.f32 %v4169, %v4281
  %v4298 = vmul.f32 %v4170, %v4282
  %v4299 = vmul.f32 %v4171, %v4283
  %v4300 = vmul.f32 %v4172, %v4284
  %v4301 = vmul.f32 %v4173, %v4285
  %v4302 = vmul.f32 %v4174, %v4286
  %v4303 = vmul.f32 %v4175, %v4287
  %v4304 = vmul.f32 %v4176, %v4288
  %v4305 = vmul.f32 %v4177, %v4289
  %v4306 = vmul.f32 %v4178, %v4290
  %v4307 = vmul.f32 %v4179, %v4291
  %v4308 = vmul.f32 %v4180, %v4292
  %v4309 = vmul.f32 %v4181, %v4293
  %v4310 = vmul.f32 %v4182, %v4294
  %v4311 = vlaneseq
  %v4312 = vshrl.u32 %v4311, 7
  %v4313 = vsub.s32 0, %v4312
  %v4314 = vrot.slane %v64, %v4313
  %v4315 = vmul.f32 %v4295, %v4314
  %v4316 = vmul.f32 %v4296, %v4314
  %v4317 = vmul.f32 %v4297, %v4314
  %v4318 = vmul.f32 %v4298, %v4314
  %v4319 = vmul.f32 %v4299, %v4314
  %v4320 = vmul.f32 %v4300, %v4314
  %v4321 = vmul.f32 %v4301, %v4314
  %v4322 = vmul.f32 %v4302, %v4314
  %v4323 = vmul.f32 %v4303, %v4314
  %v4324 = vmul.f32 %v4304, %v4314
  %v4325 = vmul.f32 %v4305, %v4314
  %v4326 = vmul.f32 %v4306, %v4314
  %v4327 = vmul.f32 %v4307, %v4314
  %v4328 = vmul.f32 %v4308, %v4314
  %v4329 = vmul.f32 %v4309, %v4314
  %v4330 = vmul.f32 %v4310, %v4314
  %v4331 = vlaneseq
  %v4332 = vshrl.u32 %v4331, 7
  %v4333 = vsub.s32 0, %v4332
  %v4334 = vrot.slane %v65, %v4333
  %v4335 = vadd.f32 %v4315, %v4334
  %v4336 = vadd.f32 %v4316, %v4334
  %v4337 = vadd.f32 %v4317, %v4334
  %v4338 = vadd.f32 %v4318, %v4334
  %v4339 = vadd.f32 %v4319, %v4334
  %v4340 = vadd.f32 %v4320, %v4334
  %v4341 = vadd.f32 %v4321, %v4334
  %v4342 = vadd.f32 %v4322, %v4334
  %v4343 = vadd.f32 %v4323, %v4334
  %v4344 = vadd.f32 %v4324, %v4334
  %v4345 = vadd.f32 %v4325, %v4334
  %v4346 = vadd.f32 %v4326, %v4334
  %v4347 = vadd.f32 %v4327, %v4334
  %v4348 = vadd.f32 %v4328, %v4334
  %v4349 = vadd.f32 %v4329, %v4334
  %v4350 = vadd.f32 %v4330, %v4334
  %v4351 = vpack.c.bf16 %v4336, %v4335
  %v4352 = vpack.c.bf16 %v4338, %v4337
  %v4353 = vpack.c.bf16 %v4340, %v4339
  %v4354 = vpack.c.bf16 %v4342, %v4341
  %v4355 = vpack.c.bf16 %v4344, %v4343
  %v4356 = vpack.c.bf16 %v4346, %v4345
  %v4357 = vpack.c.bf16 %v4348, %v4347
  %v4358 = vpack.c.bf16 %v4350, %v4349
  %v4359 = vld [vmem:[%s4] sm:$0xf]
  %v4360 = vld [vmem:[%s5] sm:$0x1]
  %v4362 = vlaneseq
  %v4363 = vshrl.u32 %v4362, 7
  %v4364 = vsub.s32 0, %v4363
  %v4365 = vrot.slane %v4360, %v4364
  %v4368 = vsel %vm116, %v4351, 0
  %v4371 = vsel %vm116, %v4352, 0
  %v4374 = vsel %vm116, %v4353, 0
  %v4377 = vsel %vm116, %v4354, 0
  %v4380 = vsel %vm116, %v4355, 0
  %v4383 = vsel %vm116, %v4356, 0
  %v4386 = vsel %vm116, %v4357, 0
  %v4389 = vsel %vm116, %v4358, 0
  %v4392 = vsel %vm141, %v4359, 0
  %4394 = vmatprep.subr.bf16.mxu0 0
  %4395 = vmatpush1.bf16.msra.mxu0 0
  %4396 = vmatprep.subr.bf16.mxu0 0
  %4397 = vmatpush1.bf16.msra.mxu0 0
  %4398 = vmatprep.subr.bf16.mxu0 0
  %4399 = vmatpush1.bf16.msra.mxu0 0
  %4400 = vmatprep.subr.bf16.mxu0 0
  %4401 = vmatpush1.bf16.msra.mxu0 0
  %4402 = vmatprep.subr.bf16.mxu0 0
  %4403 = vmatpush1.bf16.msra.mxu0 0
  %4404 = vmatprep.subr.bf16.mxu0 0
  %4405 = vmatpush1.bf16.msra.mxu0 0
  %4406 = vmatprep.subr.bf16.mxu0 0
  %4407 = vmatpush1.bf16.msra.mxu0 0
  %4408 = vmatprep.subr.bf16.mxu0 0
  %4409 = vmatpush1.bf16.msra.mxu0 %v4392
  %4410 = vmatprep.subr.bf16.mxu0 0
  %4411 = vmatpush2.bf16.msra.mxu0 0
  %4412 = vmatprep.subr.bf16.mxu0 0
  %4413 = vmatpush2.bf16.msra.mxu0 0
  %4414 = vmatprep.subr.bf16.mxu0 0
  %4415 = vmatpush2.bf16.msra.mxu0 0
  %4416 = vmatprep.subr.bf16.mxu0 0
  %4417 = vmatpush2.bf16.msra.mxu0 0
  %4418 = vmatprep.subr.bf16.mxu0 0
  %4419 = vmatpush2.bf16.msra.mxu0 0
  %4420 = vmatprep.subr.bf16.mxu0 0
  %4421 = vmatpush2.bf16.msra.mxu0 0
  %4422 = vmatprep.subr.bf16.mxu0 0
  %4423 = vmatpush2.bf16.msra.mxu0 0
  %4424 = vmatprep.subr.bf16.mxu0 0
  %4425 = vmatpush2.bf16.msra.mxu0 0
  %4426 = vmatprep.mubr.bf16.mxu0 0
  %4427 = vmatmul.mubr.bf16.gmra.mxu0 %v4368
  %v4428 = vpop.f32.mrf.mxu0
  %v4429 = vadd.f32 %v4365, %v4428
  %v4430 = vpop.f32.mrf.mxu0
  %v4431 = vpop.f32.mrf.mxu0
  %v4432 = vadd.f32 %v4365, %v4431
  %v4433 = vpop.f32.mrf.mxu0
  %4434 = vmatprep.mubr.bf16.mxu0 0
  %4435 = vmatmul.mubr.bf16.gmra.mxu0 %v4371
  %v4436 = vpop.f32.mrf.mxu0
  %v4437 = vadd.f32 %v4365, %v4436
  %v4438 = vpop.f32.mrf.mxu0
  %v4439 = vpop.f32.mrf.mxu0
  %v4440 = vadd.f32 %v4365, %v4439
  %v4441 = vpop.f32.mrf.mxu0
  %4442 = vmatprep.mubr.bf16.mxu0 0
  %4443 = vmatmul.mubr.bf16.gmra.mxu0 %v4374
  %v4444 = vpop.f32.mrf.mxu0
  %v4445 = vadd.f32 %v4365, %v4444
  %v4446 = vpop.f32.mrf.mxu0
  %v4447 = vpop.f32.mrf.mxu0
  %v4448 = vadd.f32 %v4365, %v4447
  %v4449 = vpop.f32.mrf.mxu0
  %4450 = vmatprep.mubr.bf16.mxu0 0
  %4451 = vmatmul.mubr.bf16.gmra.mxu0 %v4377
  %v4452 = vpop.f32.mrf.mxu0
  %v4453 = vadd.f32 %v4365, %v4452
  %v4454 = vpop.f32.mrf.mxu0
  %v4455 = vpop.f32.mrf.mxu0
  %v4456 = vadd.f32 %v4365, %v4455
  %v4457 = vpop.f32.mrf.mxu0
  %4458 = vmatprep.mubr.bf16.mxu0 0
  %4459 = vmatmul.mubr.bf16.gmra.mxu0 %v4380
  %v4460 = vpop.f32.mrf.mxu0
  %v4461 = vadd.f32 %v4365, %v4460
  %v4462 = vpop.f32.mrf.mxu0
  %v4463 = vpop.f32.mrf.mxu0
  %v4464 = vadd.f32 %v4365, %v4463
  %v4465 = vpop.f32.mrf.mxu0
  %4466 = vmatprep.mubr.bf16.mxu0 0
  %4467 = vmatmul.mubr.bf16.gmra.mxu0 %v4383
  %v4468 = vpop.f32.mrf.mxu0
  %v4469 = vadd.f32 %v4365, %v4468
  %v4470 = vpop.f32.mrf.mxu0
  %v4471 = vpop.f32.mrf.mxu0
  %v4472 = vadd.f32 %v4365, %v4471
  %v4473 = vpop.f32.mrf.mxu0
  %4474 = vmatprep.mubr.bf16.mxu0 0
  %4475 = vmatmul.mubr.bf16.gmra.mxu0 %v4386
  %v4476 = vpop.f32.mrf.mxu0
  %v4477 = vadd.f32 %v4365, %v4476
  %v4478 = vpop.f32.mrf.mxu0
  %v4479 = vpop.f32.mrf.mxu0
  %v4480 = vadd.f32 %v4365, %v4479
  %v4481 = vpop.f32.mrf.mxu0
  %4482 = vmatprep.mubr.bf16.mxu0 0
  %4483 = vmatmul.mubr.bf16.gmra.mxu0 %v4389
  %v4484 = vpop.f32.mrf.mxu0
  %v4485 = vadd.f32 %v4365, %v4484
  %v4486 = vpop.f32.mrf.mxu0
  %v4487 = vpop.f32.mrf.mxu0
  %v4488 = vadd.f32 %v4365, %v4487
  %v4489 = vpop.f32.mrf.mxu0
  %4490 = vdwg.mxu0
  %v4491 = vmul.f32 %v4429, %v4429
  %v4492 = vmul.f32 %v4432, %v4432
  %v4493 = vmul.f32 %v4437, %v4437
  %v4494 = vmul.f32 %v4440, %v4440
  %v4495 = vmul.f32 %v4445, %v4445
  %v4496 = vmul.f32 %v4448, %v4448
  %v4497 = vmul.f32 %v4453, %v4453
  %v4498 = vmul.f32 %v4456, %v4456
  %v4499 = vmul.f32 %v4461, %v4461
  %v4500 = vmul.f32 %v4464, %v4464
  %v4501 = vmul.f32 %v4469, %v4469
  %v4502 = vmul.f32 %v4472, %v4472
  %v4503 = vmul.f32 %v4477, %v4477
  %v4504 = vmul.f32 %v4480, %v4480
  %v4505 = vmul.f32 %v4485, %v4485
  %v4506 = vmul.f32 %v4488, %v4488
  %v4507 = vmul.f32 %v4429, %v4491
  %v4508 = vmul.f32 %v4432, %v4492
  %v4509 = vmul.f32 %v4437, %v4493
  %v4510 = vmul.f32 %v4440, %v4494
  %v4511 = vmul.f32 %v4445, %v4495
  %v4512 = vmul.f32 %v4448, %v4496
  %v4513 = vmul.f32 %v4453, %v4497
  %v4514 = vmul.f32 %v4456, %v4498
  %v4515 = vmul.f32 %v4461, %v4499
  %v4516 = vmul.f32 %v4464, %v4500
  %v4517 = vmul.f32 %v4469, %v4501
  %v4518 = vmul.f32 %v4472, %v4502
  %v4519 = vmul.f32 %v4477, %v4503
  %v4520 = vmul.f32 %v4480, %v4504
  %v4521 = vmul.f32 %v4485, %v4505
  %v4522 = vmul.f32 %v4488, %v4506
  %v4523 = vmul.f32 %v4507, 0.044715
  %v4524 = vmul.f32 %v4508, 0.044715
  %v4525 = vmul.f32 %v4509, 0.044715
  %v4526 = vmul.f32 %v4510, 0.044715
  %v4527 = vmul.f32 %v4511, 0.044715
  %v4528 = vmul.f32 %v4512, 0.044715
  %v4529 = vmul.f32 %v4513, 0.044715
  %v4530 = vmul.f32 %v4514, 0.044715
  %v4531 = vmul.f32 %v4515, 0.044715
  %v4532 = vmul.f32 %v4516, 0.044715
  %v4533 = vmul.f32 %v4517, 0.044715
  %v4534 = vmul.f32 %v4518, 0.044715
  %v4535 = vmul.f32 %v4519, 0.044715
  %v4536 = vmul.f32 %v4520, 0.044715
  %v4537 = vmul.f32 %v4521, 0.044715
  %v4538 = vmul.f32 %v4522, 0.044715
  %v4539 = vadd.f32 %v4429, %v4523
  %v4540 = vadd.f32 %v4432, %v4524
  %v4541 = vadd.f32 %v4437, %v4525
  %v4542 = vadd.f32 %v4440, %v4526
  %v4543 = vadd.f32 %v4445, %v4527
  %v4544 = vadd.f32 %v4448, %v4528
  %v4545 = vadd.f32 %v4453, %v4529
  %v4546 = vadd.f32 %v4456, %v4530
  %v4547 = vadd.f32 %v4461, %v4531
  %v4548 = vadd.f32 %v4464, %v4532
  %v4549 = vadd.f32 %v4469, %v4533
  %v4550 = vadd.f32 %v4472, %v4534
  %v4551 = vadd.f32 %v4477, %v4535
  %v4552 = vadd.f32 %v4480, %v4536
  %v4553 = vadd.f32 %v4485, %v4537
  %v4554 = vadd.f32 %v4488, %v4538
  %v4555 = vmul.f32 %v4539, 0.7978846
  %v4556 = vmul.f32 %v4540, 0.7978846
  %v4557 = vmul.f32 %v4541, 0.7978846
  %v4558 = vmul.f32 %v4542, 0.7978846
  %v4559 = vmul.f32 %v4543, 0.7978846
  %v4560 = vmul.f32 %v4544, 0.7978846
  %v4561 = vmul.f32 %v4545, 0.7978846
  %v4562 = vmul.f32 %v4546, 0.7978846
  %v4563 = vmul.f32 %v4547, 0.7978846
  %v4564 = vmul.f32 %v4548, 0.7978846
  %v4565 = vmul.f32 %v4549, 0.7978846
  %v4566 = vmul.f32 %v4550, 0.7978846
  %v4567 = vmul.f32 %v4551, 0.7978846
  %v4568 = vmul.f32 %v4552, 0.7978846
  %v4569 = vmul.f32 %v4553, 0.7978846
  %v4570 = vmul.f32 %v4554, 0.7978846
  %v4571 = vtanh.pop %v4555
  %v4572 = vtanh.pop %v4556
  %v4573 = vtanh.pop %v4557
  %v4574 = vtanh.pop %v4558
  %v4575 = vtanh.pop %v4559
  %v4576 = vtanh.pop %v4560
  %v4577 = vtanh.pop %v4561
  %v4578 = vtanh.pop %v4562
  %v4579 = vtanh.pop %v4563
  %v4580 = vtanh.pop %v4564
  %v4581 = vtanh.pop %v4565
  %v4582 = vtanh.pop %v4566
  %v4583 = vtanh.pop %v4567
  %v4584 = vtanh.pop %v4568
  %v4585 = vtanh.pop %v4569
  %v4586 = vtanh.pop %v4570
  %v4587 = vadd.f32 %v4571, 1.0
  %v4588 = vadd.f32 %v4572, 1.0
  %v4589 = vadd.f32 %v4573, 1.0
  %v4590 = vadd.f32 %v4574, 1.0
  %v4591 = vadd.f32 %v4575, 1.0
  %v4592 = vadd.f32 %v4576, 1.0
  %v4593 = vadd.f32 %v4577, 1.0
  %v4594 = vadd.f32 %v4578, 1.0
  %v4595 = vadd.f32 %v4579, 1.0
  %v4596 = vadd.f32 %v4580, 1.0
  %v4597 = vadd.f32 %v4581, 1.0
  %v4598 = vadd.f32 %v4582, 1.0
  %v4599 = vadd.f32 %v4583, 1.0
  %v4600 = vadd.f32 %v4584, 1.0
  %v4601 = vadd.f32 %v4585, 1.0
  %v4602 = vadd.f32 %v4586, 1.0
  %v4603 = vmul.f32 %v4587, 0.5
  %v4604 = vmul.f32 %v4588, 0.5
  %v4605 = vmul.f32 %v4589, 0.5
  %v4606 = vmul.f32 %v4590, 0.5
  %v4607 = vmul.f32 %v4591, 0.5
  %v4608 = vmul.f32 %v4592, 0.5
  %v4609 = vmul.f32 %v4593, 0.5
  %v4610 = vmul.f32 %v4594, 0.5
  %v4611 = vmul.f32 %v4595, 0.5
  %v4612 = vmul.f32 %v4596, 0.5
  %v4613 = vmul.f32 %v4597, 0.5
  %v4614 = vmul.f32 %v4598, 0.5
  %v4615 = vmul.f32 %v4599, 0.5
  %v4616 = vmul.f32 %v4600, 0.5
  %v4617 = vmul.f32 %v4601, 0.5
  %v4618 = vmul.f32 %v4602, 0.5
  %v4619 = vmul.f32 %v4429, %v4603
  %v4620 = vmul.f32 %v4432, %v4604
  %v4621 = vmul.f32 %v4437, %v4605
  %v4622 = vmul.f32 %v4440, %v4606
  %v4623 = vmul.f32 %v4445, %v4607
  %v4624 = vmul.f32 %v4448, %v4608
  %v4625 = vmul.f32 %v4453, %v4609
  %v4626 = vmul.f32 %v4456, %v4610
  %v4627 = vmul.f32 %v4461, %v4611
  %v4628 = vmul.f32 %v4464, %v4612
  %v4629 = vmul.f32 %v4469, %v4613
  %v4630 = vmul.f32 %v4472, %v4614
  %v4631 = vmul.f32 %v4477, %v4615
  %v4632 = vmul.f32 %v4480, %v4616
  %v4633 = vmul.f32 %v4485, %v4617
  %v4634 = vmul.f32 %v4488, %v4618
  %v4635 = vpack.c.bf16 %v4620, %v4619
  %v4636 = vpack.c.bf16 %v4622, %v4621
  %v4637 = vpack.c.bf16 %v4624, %v4623
  %v4638 = vpack.c.bf16 %v4626, %v4625
  %v4639 = vpack.c.bf16 %v4628, %v4627
  %v4640 = vpack.c.bf16 %v4630, %v4629
  %v4641 = vpack.c.bf16 %v4632, %v4631
  %v4642 = vpack.c.bf16 %v4634, %v4633
  %v4643 = vld [vmem:[%s6] sm:$0xf]
  %v4644 = vld [vmem:[%s6 + $0x4] sm:$0xf]
  %v4645 = vld [vmem:[%s6 + $0x8] sm:$0xf]
  %v4646 = vld [vmem:[%s6 + $0xc] sm:$0xf]
  %v4647 = vld [vmem:[%s6 + $0x10] sm:$0xf]
  %v4648 = vld [vmem:[%s6 + $0x14] sm:$0xf]
  %v4649 = vld [vmem:[%s6 + $0x18] sm:$0xf]
  %v4650 = vld [vmem:[%s6 + $0x1c] sm:$0xf]
  %v4651 = vlaneseq
  %v4652 = vshrl.u32 %v4651, 7
  %v4653 = vsub.s32 0, %v4652
  %v4654 = vrot.slane %v63, %v4653
  %v4663 = vunpack.c.l.b16 %v4643
  %v4664 = vunpack.c.l.b16 %v4644
  %v4665 = vunpack.c.l.b16 %v4645
  %v4666 = vunpack.c.l.b16 %v4646
  %v4667 = vunpack.c.l.b16 %v4647
  %v4668 = vunpack.c.l.b16 %v4648
  %v4669 = vunpack.c.l.b16 %v4649
  %v4670 = vunpack.c.l.b16 %v4650
  %v4671 = vpack.c.b16 %v4664, %v4663
  %v4672 = vpack.c.b16 %v4666, %v4665
  %v4673 = vpack.c.b16 %v4668, %v4667
  %v4674 = vpack.c.b16 %v4670, %v4669
  %vm4679 = vcmask 523264
  %v4681 = vsel %vm4679, %v4635, 0
  %v4684 = vsel %vm4679, %v4636, 0
  %v4687 = vsel %vm4679, %v4637, 0
  %v4690 = vsel %vm4679, %v4638, 0
  %v4693 = vsel %vm4679, %v4639, 0
  %v4696 = vsel %vm4679, %v4640, 0
  %v4699 = vsel %vm4679, %v4641, 0
  %v4702 = vsel %vm4679, %v4642, 0
  %4704 = vmatprep.subr.bf16.mxu0 0
  %4705 = vmatpush1.bf16.msra.mxu0 0
  %4706 = vmatprep.subr.bf16.mxu0 0
  %4707 = vmatpush1.bf16.msra.mxu0 0
  %4708 = vmatprep.subr.bf16.mxu0 0
  %4709 = vmatpush1.bf16.msra.mxu0 0
  %4710 = vmatprep.subr.bf16.mxu0 0
  %4711 = vmatpush1.bf16.msra.mxu0 0
  %4712 = vmatprep.subr.bf16.mxu0 0
  %4713 = vmatpush1.bf16.msra.mxu0 %v4674
  %4714 = vmatprep.subr.bf16.mxu0 0
  %4715 = vmatpush1.bf16.msra.mxu0 %v4673
  %4716 = vmatprep.subr.bf16.mxu0 0
  %4717 = vmatpush1.bf16.msra.mxu0 %v4672
  %4718 = vmatprep.subr.bf16.mxu0 0
  %4719 = vmatpush1.bf16.msra.mxu0 %v4671
  %4720 = vmatprep.subr.bf16.mxu0 0
  %4721 = vmatpush2.bf16.msra.mxu0 0
  %4722 = vmatprep.subr.bf16.mxu0 0
  %4723 = vmatpush2.bf16.msra.mxu0 0
  %4724 = vmatprep.subr.bf16.mxu0 0
  %4725 = vmatpush2.bf16.msra.mxu0 0
  %4726 = vmatprep.subr.bf16.mxu0 0
  %4727 = vmatpush2.bf16.msra.mxu0 0
  %4728 = vmatprep.subr.bf16.mxu0 0
  %4729 = vmatpush2.bf16.msra.mxu0 0
  %4730 = vmatprep.subr.bf16.mxu0 0
  %4731 = vmatpush2.bf16.msra.mxu0 0
  %4732 = vmatprep.subr.bf16.mxu0 0
  %4733 = vmatpush2.bf16.msra.mxu0 0
  %4734 = vmatprep.subr.bf16.mxu0 0
  %4735 = vmatpush2.bf16.msra.mxu0 0
  %4736 = vmatprep.mubr.bf16.mxu0 0
  %4737 = vmatmul.mubr.bf16.gmra.mxu0 %v4681
  %v4738 = vpop.f32.mrf.mxu0
  %v4739 = vadd.f32 %v4654, %v4738
  %v4740 = vpop.f32.mrf.mxu0
  %v4741 = vpop.f32.mrf.mxu0
  %v4742 = vadd.f32 %v4654, %v4741
  %v4743 = vpop.f32.mrf.mxu0
  %4744 = vmatprep.mubr.bf16.mxu0 0
  %4745 = vmatmul.mubr.bf16.gmra.mxu0 %v4684
  %v4746 = vpop.f32.mrf.mxu0
  %v4747 = vadd.f32 %v4654, %v4746
  %v4748 = vpop.f32.mrf.mxu0
  %v4749 = vpop.f32.mrf.mxu0
  %v4750 = vadd.f32 %v4654, %v4749
  %v4751 = vpop.f32.mrf.mxu0
  %4752 = vmatprep.mubr.bf16.mxu0 0
  %4753 = vmatmul.mubr.bf16.gmra.mxu0 %v4687
  %v4754 = vpop.f32.mrf.mxu0
  %v4755 = vadd.f32 %v4654, %v4754
  %v4756 = vpop.f32.mrf.mxu0
  %v4757 = vpop.f32.mrf.mxu0
  %v4758 = vadd.f32 %v4654, %v4757
  %v4759 = vpop.f32.mrf.mxu0
  %4760 = vmatprep.mubr.bf16.mxu0 0
  %4761 = vmatmul.mubr.bf16.gmra.mxu0 %v4690
  %v4762 = vpop.f32.mrf.mxu0
  %v4763 = vadd.f32 %v4654, %v4762
  %v4764 = vpop.f32.mrf.mxu0
  %v4765 = vpop.f32.mrf.mxu0
  %v4766 = vadd.f32 %v4654, %v4765
  %v4767 = vpop.f32.mrf.mxu0
  %4768 = vmatprep.mubr.bf16.mxu0 0
  %4769 = vmatmul.mubr.bf16.gmra.mxu0 %v4693
  %v4770 = vpop.f32.mrf.mxu0
  %v4771 = vadd.f32 %v4654, %v4770
  %v4772 = vpop.f32.mrf.mxu0
  %v4773 = vpop.f32.mrf.mxu0
  %v4774 = vadd.f32 %v4654, %v4773
  %v4775 = vpop.f32.mrf.mxu0
  %4776 = vmatprep.mubr.bf16.mxu0 0
  %4777 = vmatmul.mubr.bf16.gmra.mxu0 %v4696
  %v4778 = vpop.f32.mrf.mxu0
  %v4779 = vadd.f32 %v4654, %v4778
  %v4780 = vpop.f32.mrf.mxu0
  %v4781 = vpop.f32.mrf.mxu0
  %v4782 = vadd.f32 %v4654, %v4781
  %v4783 = vpop.f32.mrf.mxu0
  %4784 = vmatprep.mubr.bf16.mxu0 0
  %4785 = vmatmul.mubr.bf16.gmra.mxu0 %v4699
  %v4786 = vpop.f32.mrf.mxu0
  %v4787 = vadd.f32 %v4654, %v4786
  %v4788 = vpop.f32.mrf.mxu0
  %v4789 = vpop.f32.mrf.mxu0
  %v4790 = vadd.f32 %v4654, %v4789
  %v4791 = vpop.f32.mrf.mxu0
  %4792 = vmatprep.mubr.bf16.mxu0 0
  %4793 = vmatmul.mubr.bf16.gmra.mxu0 %v4702
  %v4794 = vpop.f32.mrf.mxu0
  %v4795 = vadd.f32 %v4654, %v4794
  %v4796 = vpop.f32.mrf.mxu0
  %v4797 = vpop.f32.mrf.mxu0
  %v4798 = vadd.f32 %v4654, %v4797
  %v4799 = vpop.f32.mrf.mxu0
  %4800 = vdwg.mxu0
  %v4801 = vadd.f32 %v4335, %v4739
  %v4802 = vadd.f32 %v4336, %v4742
  %v4803 = vadd.f32 %v4337, %v4747
  %v4804 = vadd.f32 %v4338, %v4750
  %v4805 = vadd.f32 %v4339, %v4755
  %v4806 = vadd.f32 %v4340, %v4758
  %v4807 = vadd.f32 %v4341, %v4763
  %v4808 = vadd.f32 %v4342, %v4766
  %v4809 = vadd.f32 %v4343, %v4771
  %v4810 = vadd.f32 %v4344, %v4774
  %v4811 = vadd.f32 %v4345, %v4779
  %v4812 = vadd.f32 %v4346, %v4782
  %v4813 = vadd.f32 %v4347, %v4787
  %v4814 = vadd.f32 %v4348, %v4790
  %v4815 = vadd.f32 %v4349, %v4795
  %v4816 = vadd.f32 %v4350, %v4798
  %v4817 = vsel %vm116, %v4801, 0.0
  %4818 = vadd.xlane.f32.xlu0 %v4817
  %v4819 = vpop.xlane.xlu0 %4818
  %v4820 = vsel %vm116, %v4802, 0.0
  %4821 = vadd.xlane.f32.xlu0 %v4820
  %v4822 = vpop.xlane.xlu0 %4821
  %v4823 = vsel %vm116, %v4803, 0.0
  %4824 = vadd.xlane.f32.xlu0 %v4823
  %v4825 = vpop.xlane.xlu0 %4824
  %v4826 = vsel %vm116, %v4804, 0.0
  %4827 = vadd.xlane.f32.xlu0 %v4826
  %v4828 = vpop.xlane.xlu0 %4827
  %v4829 = vsel %vm116, %v4805, 0.0
  %4830 = vadd.xlane.f32.xlu0 %v4829
  %v4831 = vpop.xlane.xlu0 %4830
  %v4832 = vsel %vm116, %v4806, 0.0
  %4833 = vadd.xlane.f32.xlu0 %v4832
  %v4834 = vpop.xlane.xlu0 %4833
  %v4835 = vsel %vm116, %v4807, 0.0
  %4836 = vadd.xlane.f32.xlu0 %v4835
  %v4837 = vpop.xlane.xlu0 %4836
  %v4838 = vsel %vm116, %v4808, 0.0
  %4839 = vadd.xlane.f32.xlu0 %v4838
  %v4840 = vpop.xlane.xlu0 %4839
  %v4841 = vsel %vm116, %v4809, 0.0
  %4842 = vadd.xlane.f32.xlu0 %v4841
  %v4843 = vpop.xlane.xlu0 %4842
  %v4844 = vsel %vm116, %v4810, 0.0
  %4845 = vadd.xlane.f32.xlu0 %v4844
  %v4846 = vpop.xlane.xlu0 %4845
  %v4847 = vsel %vm116, %v4811, 0.0
  %4848 = vadd.xlane.f32.xlu0 %v4847
  %v4849 = vpop.xlane.xlu0 %4848
  %v4850 = vsel %vm116, %v4812, 0.0
  %4851 = vadd.xlane.f32.xlu0 %v4850
  %v4852 = vpop.xlane.xlu0 %4851
  %v4853 = vsel %vm116, %v4813, 0.0
  %4854 = vadd.xlane.f32.xlu0 %v4853
  %v4855 = vpop.xlane.xlu0 %4854
  %v4856 = vsel %vm116, %v4814, 0.0
  %4857 = vadd.xlane.f32.xlu0 %v4856
  %v4858 = vpop.xlane.xlu0 %4857
  %v4859 = vsel %vm116, %v4815, 0.0
  %4860 = vadd.xlane.f32.xlu0 %v4859
  %v4861 = vpop.xlane.xlu0 %4860
  %v4862 = vsel %vm116, %v4816, 0.0
  %4863 = vadd.xlane.f32.xlu0 %v4862
  %v4864 = vpop.xlane.xlu0 %4863
  %v4865 = vmul.f32 %v4819, %v4150
  %v4866 = vmul.f32 %v4822, %v4150
  %v4867 = vmul.f32 %v4825, %v4150
  %v4868 = vmul.f32 %v4828, %v4150
  %v4869 = vmul.f32 %v4831, %v4150
  %v4870 = vmul.f32 %v4834, %v4150
  %v4871 = vmul.f32 %v4837, %v4150
  %v4872 = vmul.f32 %v4840, %v4150
  %v4873 = vmul.f32 %v4843, %v4150
  %v4874 = vmul.f32 %v4846, %v4150
  %v4875 = vmul.f32 %v4849, %v4150
  %v4876 = vmul.f32 %v4852, %v4150
  %v4877 = vmul.f32 %v4855, %v4150
  %v4878 = vmul.f32 %v4858, %v4150
  %v4879 = vmul.f32 %v4861, %v4150
  %v4880 = vmul.f32 %v4864, %v4150
  %v4881 = vsub.f32 %v4801, %v4865
  %v4882 = vsub.f32 %v4802, %v4866
  %v4883 = vsub.f32 %v4803, %v4867
  %v4884 = vsub.f32 %v4804, %v4868
  %v4885 = vsub.f32 %v4805, %v4869
  %v4886 = vsub.f32 %v4806, %v4870
  %v4887 = vsub.f32 %v4807, %v4871
  %v4888 = vsub.f32 %v4808, %v4872
  %v4889 = vsub.f32 %v4809, %v4873
  %v4890 = vsub.f32 %v4810, %v4874
  %v4891 = vsub.f32 %v4811, %v4875
  %v4892 = vsub.f32 %v4812, %v4876
  %v4893 = vsub.f32 %v4813, %v4877
  %v4894 = vsub.f32 %v4814, %v4878
  %v4895 = vsub.f32 %v4815, %v4879
  %v4896 = vsub.f32 %v4816, %v4880
  %v4897 = vmul.f32 %v4881, %v4881
  %v4898 = vmul.f32 %v4882, %v4882
  %v4899 = vmul.f32 %v4883, %v4883
  %v4900 = vmul.f32 %v4884, %v4884
  %v4901 = vmul.f32 %v4885, %v4885
  %v4902 = vmul.f32 %v4886, %v4886
  %v4903 = vmul.f32 %v4887, %v4887
  %v4904 = vmul.f32 %v4888, %v4888
  %v4905 = vmul.f32 %v4889, %v4889
  %v4906 = vmul.f32 %v4890, %v4890
  %v4907 = vmul.f32 %v4891, %v4891
  %v4908 = vmul.f32 %v4892, %v4892
  %v4909 = vmul.f32 %v4893, %v4893
  %v4910 = vmul.f32 %v4894, %v4894
  %v4911 = vmul.f32 %v4895, %v4895
  %v4912 = vmul.f32 %v4896, %v4896
  %v4913 = vsel %vm116, %v4897, 0.0
  %4914 = vadd.xlane.f32.xlu0 %v4913
  %v4915 = vpop.xlane.xlu0 %4914
  %v4916 = vsel %vm116, %v4898, 0.0
  %4917 = vadd.xlane.f32.xlu0 %v4916
  %v4918 = vpop.xlane.xlu0 %4917
  %v4919 = vsel %vm116, %v4899, 0.0
  %4920 = vadd.xlane.f32.xlu0 %v4919
  %v4921 = vpop.xlane.xlu0 %4920
  %v4922 = vsel %vm116, %v4900, 0.0
  %4923 = vadd.xlane.f32.xlu0 %v4922
  %v4924 = vpop.xlane.xlu0 %4923
  %v4925 = vsel %vm116, %v4901, 0.0
  %4926 = vadd.xlane.f32.xlu0 %v4925
  %v4927 = vpop.xlane.xlu0 %4926
  %v4928 = vsel %vm116, %v4902, 0.0
  %4929 = vadd.xlane.f32.xlu0 %v4928
  %v4930 = vpop.xlane.xlu0 %4929
  %v4931 = vsel %vm116, %v4903, 0.0
  %4932 = vadd.xlane.f32.xlu0 %v4931
  %v4933 = vpop.xlane.xlu0 %4932
  %v4934 = vsel %vm116, %v4904, 0.0
  %4935 = vadd.xlane.f32.xlu0 %v4934
  %v4936 = vpop.xlane.xlu0 %4935
  %v4937 = vsel %vm116, %v4905, 0.0
  %4938 = vadd.xlane.f32.xlu0 %v4937
  %v4939 = vpop.xlane.xlu0 %4938
  %v4940 = vsel %vm116, %v4906, 0.0
  %4941 = vadd.xlane.f32.xlu0 %v4940
  %v4942 = vpop.xlane.xlu0 %4941
  %v4943 = vsel %vm116, %v4907, 0.0
  %4944 = vadd.xlane.f32.xlu0 %v4943
  %v4945 = vpop.xlane.xlu0 %4944
  %v4946 = vsel %vm116, %v4908, 0.0
  %4947 = vadd.xlane.f32.xlu0 %v4946
  %v4948 = vpop.xlane.xlu0 %4947
  %v4949 = vsel %vm116, %v4909, 0.0
  %4950 = vadd.xlane.f32.xlu0 %v4949
  %v4951 = vpop.xlane.xlu0 %4950
  %v4952 = vsel %vm116, %v4910, 0.0
  %4953 = vadd.xlane.f32.xlu0 %v4952
  %v4954 = vpop.xlane.xlu0 %4953
  %v4955 = vsel %vm116, %v4911, 0.0
  %4956 = vadd.xlane.f32.xlu0 %v4955
  %v4957 = vpop.xlane.xlu0 %4956
  %v4958 = vsel %vm116, %v4912, 0.0
  %4959 = vadd.xlane.f32.xlu0 %v4958
  %v4960 = vpop.xlane.xlu0 %4959
  %v4961 = vmul.f32 %v4915, %v4150
  %v4962 = vmul.f32 %v4918, %v4150
  %v4963 = vmul.f32 %v4921, %v4150
  %v4964 = vmul.f32 %v4924, %v4150
  %v4965 = vmul.f32 %v4927, %v4150
  %v4966 = vmul.f32 %v4930, %v4150
  %v4967 = vmul.f32 %v4933, %v4150
  %v4968 = vmul.f32 %v4936, %v4150
  %v4969 = vmul.f32 %v4939, %v4150
  %v4970 = vmul.f32 %v4942, %v4150
  %v4971 = vmul.f32 %v4945, %v4150
  %v4972 = vmul.f32 %v4948, %v4150
  %v4973 = vmul.f32 %v4951, %v4150
  %v4974 = vmul.f32 %v4954, %v4150
  %v4975 = vmul.f32 %v4957, %v4150
  %v4976 = vmul.f32 %v4960, %v4150
  %v4977 = vadd.f32 %v4961, 1e-05
  %v4978 = vadd.f32 %v4962, 1e-05
  %v4979 = vadd.f32 %v4963, 1e-05
  %v4980 = vadd.f32 %v4964, 1e-05
  %v4981 = vadd.f32 %v4965, 1e-05
  %v4982 = vadd.f32 %v4966, 1e-05
  %v4983 = vadd.f32 %v4967, 1e-05
  %v4984 = vadd.f32 %v4968, 1e-05
  %v4985 = vadd.f32 %v4969, 1e-05
  %v4986 = vadd.f32 %v4970, 1e-05
  %v4987 = vadd.f32 %v4971, 1e-05
  %v4988 = vadd.f32 %v4972, 1e-05
  %v4989 = vadd.f32 %v4973, 1e-05
  %v4990 = vadd.f32 %v4974, 1e-05
  %v4991 = vadd.f32 %v4975, 1e-05
  %v4992 = vadd.f32 %v4976, 1e-05
  %v4993 = vrsqrt.pop %v4977
  %v4994 = vrsqrt.pop %v4978
  %v4995 = vrsqrt.pop %v4979
  %v4996 = vrsqrt.pop %v4980
  %v4997 = vrsqrt.pop %v4981
  %v4998 = vrsqrt.pop %v4982
  %v4999 = vrsqrt.pop %v4983
  %v5000 = vrsqrt.pop %v4984
  %v5001 = vrsqrt.pop %v4985
  %v5002 = vrsqrt.pop %v4986
  %v5003 = vrsqrt.pop %v4987
  %v5004 = vrsqrt.pop %v4988
  %v5005 = vrsqrt.pop %v4989
  %v5006 = vrsqrt.pop %v4990
  %v5007 = vrsqrt.pop %v4991
  %v5008 = vrsqrt.pop %v4992
  %v5009 = vmul.f32 %v4881, %v4993
  %v5010 = vmul.f32 %v4882, %v4994
  %v5011 = vmul.f32 %v4883, %v4995
  %v5012 = vmul.f32 %v4884, %v4996
  %v5013 = vmul.f32 %v4885, %v4997
  %v5014 = vmul.f32 %v4886, %v4998
  %v5015 = vmul.f32 %v4887, %v4999
  %v5016 = vmul.f32 %v4888, %v5000
  %v5017 = vmul.f32 %v4889, %v5001
  %v5018 = vmul.f32 %v4890, %v5002
  %v5019 = vmul.f32 %v4891, %v5003
  %v5020 = vmul.f32 %v4892, %v5004
  %v5021 = vmul.f32 %v4893, %v5005
  %v5022 = vmul.f32 %v4894, %v5006
  %v5023 = vmul.f32 %v4895, %v5007
  %v5024 = vmul.f32 %v4896, %v5008
  %v5025 = vlaneseq
  %v5026 = vshrl.u32 %v5025, 7
  %v5027 = vsub.s32 0, %v5026
  %v5028 = vrot.slane %v66, %v5027
  %v5029 = vmul.f32 %v5009, %v5028
  %v5030 = vmul.f32 %v5010, %v5028
  %v5031 = vmul.f32 %v5011, %v5028
  %v5032 = vmul.f32 %v5012, %v5028
  %v5033 = vmul.f32 %v5013, %v5028
  %v5034 = vmul.f32 %v5014, %v5028
  %v5035 = vmul.f32 %v5015, %v5028
  %v5036 = vmul.f32 %v5016, %v5028
  %v5037 = vmul.f32 %v5017, %v5028
  %v5038 = vmul.f32 %v5018, %v5028
  %v5039 = vmul.f32 %v5019, %v5028
  %v5040 = vmul.f32 %v5020, %v5028
  %v5041 = vmul.f32 %v5021, %v5028
  %v5042 = vmul.f32 %v5022, %v5028
  %v5043 = vmul.f32 %v5023, %v5028
  %v5044 = vmul.f32 %v5024, %v5028
  %v5045 = vlaneseq
  %v5046 = vshrl.u32 %v5045, 7
  %v5047 = vsub.s32 0, %v5046
  %v5048 = vrot.slane %v67, %v5047
  %v5049 = vadd.f32 %v5029, %v5048
  %v5050 = vadd.f32 %v5030, %v5048
  %v5051 = vadd.f32 %v5031, %v5048
  %v5052 = vadd.f32 %v5032, %v5048
  %v5053 = vadd.f32 %v5033, %v5048
  %v5054 = vadd.f32 %v5034, %v5048
  %v5055 = vadd.f32 %v5035, %v5048
  %v5056 = vadd.f32 %v5036, %v5048
  %v5057 = vadd.f32 %v5037, %v5048
  %v5058 = vadd.f32 %v5038, %v5048
  %v5059 = vadd.f32 %v5039, %v5048
  %v5060 = vadd.f32 %v5040, %v5048
  %v5061 = vadd.f32 %v5041, %v5048
  %v5062 = vadd.f32 %v5042, %v5048
  %v5063 = vadd.f32 %v5043, %v5048
  %v5064 = vadd.f32 %v5044, %v5048
  %5065 = vxpose.xlu0.b32.start [1/16] %v5049, 128
  %5066 = vxpose.xlu0.b32.cont [2/16] %v5050, 128
  %5067 = vxpose.xlu0.b32.cont [3/16] %v5051, 128
  %5068 = vxpose.xlu0.b32.cont [4/16] %v5052, 128
  %5069 = vxpose.xlu0.b32.cont [5/16] %v5053, 128
  %5070 = vxpose.xlu0.b32.cont [6/16] %v5054, 128
  %5071 = vxpose.xlu0.b32.cont [7/16] %v5055, 128
  %5072 = vxpose.xlu0.b32.cont [8/16] %v5056, 128
  %5073 = vxpose.xlu0.b32.cont [9/16] %v5057, 128
  %5074 = vxpose.xlu0.b32.cont [10/16] %v5058, 128
  %5075 = vxpose.xlu0.b32.cont [11/16] %v5059, 128
  %5076 = vxpose.xlu0.b32.cont [12/16] %v5060, 128
  %5077 = vxpose.xlu0.b32.cont [13/16] %v5061, 128
  %5078 = vxpose.xlu0.b32.cont [14/16] %v5062, 128
  %5079 = vxpose.xlu0.b32.cont [15/16] %v5063, 128
  %5080 = vxpose.xlu0.b32.end [16/16] %v5064, 128
  %v5081 = vpop.trf.xlu0
  %v5082 = vpop.trf.xlu0
  %v5083 = vpop.trf.xlu0
  %v5084 = vpop.trf.xlu0
  %v5085 = vpop.trf.xlu0
  %v5086 = vpop.trf.xlu0
  %v5087 = vpop.trf.xlu0
  %v5088 = vpop.trf.xlu0
  %v5089 = vpop.trf.xlu0
  %v5090 = vpop.trf.xlu0
  %v5091 = vpop.trf.xlu0
  %v5092 = vpop.trf.xlu0
  %v5093 = vpop.trf.xlu0
  %v5094 = vpop.trf.xlu0
  %v5095 = vpop.trf.xlu0
  %v5096 = vpop.trf.xlu0
  %v5097 = vpack.c.bf16 %v5081, %v5081
  %5098 = vst [vmem:[%s8] sm:$0xf] %v5097
  // Predicated region
  $region34: #{residual_block_forward.4} parent=0 // pred_check
    _
  $region35: #{residual_block_forward.4} parent=0 // pred_check_branch
    %5100 = sbr.rel (0) target = $region37
  $region36: #{residual_block_forward.4} parent=0 // pred_region
    _
  $region37: #{residual_block_forward.4} parent=0 // pred_fallthru
    _
  // Predicated region
  $region38: #{residual_block_forward.4} parent=0 // pred_check
    _
  $region39: #{residual_block_forward.4} parent=0 // pred_check_branch
    %5102 = sbr.rel (0) target = $region41
  $region40: #{residual_block_forward.4} parent=0 // pred_region
    _
  $region41: #{residual_block_forward.4} parent=0 // pred_fallthru
    _

</llo_original>
